<compile_context>
chip_gen: v6e
topology: v6e:2x2x1
jax: 0.10.0
libtpu: 0.0.40
codegen_flags: <defaults>
</compile_context>

<pallas_src>
import functools

import jax
import jax.numpy as jnp
from jax.experimental import pallas as pl
from jax.experimental.pallas import tpu as pltpu


# ----------------------------------------------------------------------------
# Kernels
# ----------------------------------------------------------------------------

def fused_pointwise_kernel(xp_ref, wm_ref, wp_ref, b_ref, o_ref, acc_ref, *,
                           th, W, Cin):
    """Fused stage-1 of InceptionA: every conv that reads the block input.

    xp_ref : (1, H+2, W+2, Cin) bf16  zero-padded (pad=1) NHWC input
    wm_ref : (Cin, Cpad)        bf16  folded 1x1 weights [5x5-red | 3x3-red | 1x1] (padded)
    wp_ref : (Cin, Cpad)        bf16  folded pool-proj weights (avg 1/9 already folded in)
    b_ref  : (1, Cpad)          f32   folded BN biases
    o_ref  : (1, th, W, Cpad)   bf16  lane-dense output slab (one row tile)
    acc_ref: (th*W, Cpad)       f32   VMEM accumulator
    """
    r0 = pl.program_id(1) * th
    m = th * W
    cpad = o_ref.shape[-1]

    # 1x1 branches: one matmul on the un-padded center rows of this tile.
    xc = xp_ref[0, pl.ds(r0 + 1, th), 1:1 + W, :]                     # (th, W, Cin)
    acc_ref[...] = jnp.dot(xc.reshape(m, Cin), wm_ref[...],
                           preferred_element_type=jnp.float32)

    # Pool branch: 3x3 sum-pool (count_include_pad; /9 folded into wp), f32 accumulation.
    ps = jnp.zeros((th, W, Cin), jnp.float32)
    for dh in range(3):
        for dw in range(3):
            ps = ps + xp_ref[0, pl.ds(r0 + dh, th), dw:dw + W, :].astype(jnp.float32)
    acc_ref[...] += jnp.dot(ps.astype(jnp.bfloat16).reshape(m, Cin), wp_ref[...],
                            preferred_element_type=jnp.float32)

    y = jnp.maximum(acc_ref[...] + b_ref[...], 0.0)                   # folded-BN bias + ReLU
    o_ref[0] = y.reshape(th, W, cpad).astype(o_ref.dtype)


def conv_kernel(xp_ref, w_ref, b_ref, o_ref, acc_ref, *, th, Wo, Cin, KH, KW):
    """KxK conv (stride 1) + folded-BN bias + ReLU; KW taps folded into the MXU K dim.

    xp_ref : (1, Ho+KH-1, Wo+KW-1, Cin) bf16  zero-padded NHWC input
    w_ref  : (KH, KW*Cin, Cpad)         bf16  folded weights (Cout padded to 128 lanes)
    b_ref  : (1, Cpad)                  f32
    o_ref  : (1, th, Wo, Cpad)          bf16
    acc_ref: (th*Wo, Cpad)              f32   VMEM accumulator
    """
    r0 = pl.program_id(1) * th
    m = th * Wo
    cpad = o_ref.shape[-1]

    acc_ref[...] = jnp.zeros_like(acc_ref)
    for kh in range(KH):
        # im2col along W: lane-concat the KW shifted slices -> (th*Wo, KW*Cin) per matmul.
        patch = jnp.concatenate(
            [xp_ref[0, pl.ds(r0 + kh, th), kw:kw + Wo, :] for kw in range(KW)],
            axis=-1).reshape(m, KW * Cin)
        acc_ref[...] += jnp.dot(patch, w_ref[kh],
                                preferred_element_type=jnp.float32)

    y = jnp.maximum(acc_ref[...] + b_ref[...], 0.0)
    o_ref[0] = y.reshape(th, Wo, cpad).astype(o_ref.dtype)


# ----------------------------------------------------------------------------
# pallas_call wrappers
# ----------------------------------------------------------------------------

def _stage1(xp, wm, wp, bias, *, th):
    N, Hp, Wp, Cin = xp.shape
    H, W = Hp - 2, Wp - 2
    cpad = wm.shape[-1]
    nh = H // th
    kern = functools.partial(fused_pointwise_kernel, th=th, W=W, Cin=Cin)
    return pl.pallas_call(
        kern,
        out_shape=jax.ShapeDtypeStruct((N, H, W, cpad), jnp.bfloat16),
        grid=(N, nh),
        in_specs=[
            pl.BlockSpec((1, Hp, Wp, Cin), lambda n, h: (n, 0, 0, 0)),
            pl.BlockSpec((Cin, cpad), lambda n, h: (0, 0)),
            pl.BlockSpec((Cin, cpad), lambda n, h: (0, 0)),
            pl.BlockSpec((1, cpad), lambda n, h: (0, 0)),
        ],
        out_specs=pl.BlockSpec((1, th, W, cpad), lambda n, h: (n, h, 0, 0)),
        scratch_shapes=[pltpu.VMEM((th * W, cpad), jnp.float32)],
        compiler_params=pltpu.CompilerParams(
            dimension_semantics=("parallel", "parallel")),
    )(xp, wm, wp, bias)


def _conv_stage(xp, w, bias, *, KH, KW, th):
    N, Hp, Wp, Cin = xp.shape
    Ho, Wo = Hp - KH + 1, Wp - KW + 1
    cpad = w.shape[-1]
    nh = Ho // th
    kern = functools.partial(conv_kernel, th=th, Wo=Wo, Cin=Cin, KH=KH, KW=KW)
    return pl.pallas_call(
        kern,
        out_shape=jax.ShapeDtypeStruct((N, Ho, Wo, cpad), jnp.bfloat16),
        grid=(N, nh),
        in_specs=[
            pl.BlockSpec((1, Hp, Wp, Cin), lambda n, h: (n, 0, 0, 0)),
            pl.BlockSpec((KH, KW * Cin, cpad), lambda n, h: (0, 0, 0)),
            pl.BlockSpec((1, cpad), lambda n, h: (0, 0)),
        ],
        out_specs=pl.BlockSpec((1, th, Wo, cpad), lambda n, h: (n, h, 0, 0)),
        scratch_shapes=[pltpu.VMEM((th * Wo, cpad), jnp.float32)],
        compiler_params=pltpu.CompilerParams(
            dimension_semantics=("parallel", "parallel")),
    )(xp, w, bias)


# ----------------------------------------------------------------------------
# Weight preparation (BN folding, layout packing)
# ----------------------------------------------------------------------------

def _fold_bn(w, gamma, beta, mean, var, eps):
    scale = gamma / jnp.sqrt(var + eps)
    return w * scale[:, None, None, None], beta - mean * scale


def _pack_conv(wf, bias, cpad):
    """(Cout, Cin, KH, KW) -> (KH, KW*Cin, Cpad) bf16 matching the in-kernel im2col layout."""
    cout, cin, kh, kw = wf.shape
    w = jnp.transpose(wf, (2, 3, 1, 0)).reshape(kh, kw * cin, cout)
    w = jnp.pad(w, ((0, 0), (0, 0), (0, cpad - cout))).astype(jnp.bfloat16)
    b = jnp.pad(bias, (0, cpad - cout)).reshape(1, cpad).astype(jnp.float32)
    return w, b


def _round_up(x, m):
    return (x + m - 1) // m * m


def _pick_row_tile(h, max_tile=8):
    for t in range(min(max_tile, h), 0, -1):
        if h % t == 0:
            return t
    return h


# ----------------------------------------------------------------------------
# InceptionA forward
# ----------------------------------------------------------------------------

def inception_a_forward(x_nchw, params, eps=1e-3):
    """InceptionA forward (eval-mode BN). NCHW in / NCHW out."""
    N, Cin, H, W = x_nchw.shape
    th = _pick_row_tile(H)

    # Fold BatchNorm into every conv.
    w_b1, b_b1 = _fold_bn(*params["b1"], eps)
    w_b5r, b_b5r = _fold_bn(*params["b5_1"], eps)
    w_b5, b_b5 = _fold_bn(*params["b5_2"], eps)
    w_b3r, b_b3r = _fold_bn(*params["b3_1"], eps)
    w_b3a, b_b3a = _fold_bn(*params["b3_2"], eps)
    w_b3b, b_b3b = _fold_bn(*params["b3_3"], eps)
    w_bp, b_bp = _fold_bn(*params["bp"], eps)

    n5, n3, n1, npool = w_b5r.shape[0], w_b3r.shape[0], w_b1.shape[0], w_bp.shape[0]
    off5, off3, off1, offp = 0, n5, n5 + n3, n5 + n3 + n1
    c1p = _round_up(offp + npool, 128)                       # lane-dense fused stage-1 slab

    def cin_cout(w):                                         # (Cout, Cin, 1, 1) -> (Cin, Cout)
        return jnp.transpose(w[:, :, 0, 0], (1, 0))

    w_main = jnp.zeros((Cin, c1p), jnp.float32)
    w_main = w_main.at[:, off5:off5 + n5].set(cin_cout(w_b5r))
    w_main = w_main.at[:, off3:off3 + n3].set(cin_cout(w_b3r))
    w_main = w_main.at[:, off1:off1 + n1].set(cin_cout(w_b1))
    w_pool = jnp.zeros((Cin, c1p), jnp.float32)
    w_pool = w_pool.at[:, offp:offp + npool].set(cin_cout(w_bp) / 9.0)   # fold avg-pool 1/9
    bias_fused = jnp.zeros((c1p,), jnp.float32)
    bias_fused = bias_fused.at[off5:off5 + n5].set(b_b5r)
    bias_fused = bias_fused.at[off3:off3 + n3].set(b_b3r)
    bias_fused = bias_fused.at[off1:off1 + n1].set(b_b1)
    bias_fused = bias_fused.at[offp:offp + npool].set(b_bp)
    w_main = w_main.astype(jnp.bfloat16)
    w_pool = w_pool.astype(jnp.bfloat16)
    bias_fused = bias_fused.reshape(1, c1p)

    # One NCHW->NHWC transpose + pad(1) + bf16 cast at the module boundary.
    x_nhwc = jnp.transpose(x_nchw, (0, 2, 3, 1))
    xp1 = jnp.pad(x_nhwc, ((0, 0), (1, 1), (1, 1), (0, 0))).astype(jnp.bfloat16)

    # Stage 1: fused [5x5-reduce | 3x3dbl-reduce | 1x1 | pool-proj] -> one lane-dense slab.
    out_a = _stage1(xp1, w_main, w_pool, bias_fused, th=th)

    # Branch 5x5: 5x5 conv (48 -> 64), pad 2.
    w5, bias5 = _pack_conv(w_b5, b_b5, _round_up(w_b5.shape[0], 128))
    xb = jnp.pad(out_a[..., off5:off5 + n5], ((0, 0), (2, 2), (2, 2), (0, 0)))
    out_b = _conv_stage(xb, w5, bias5, KH=5, KW=5, th=th)

    # Branch 3x3dbl: two 3x3 convs (64 -> 96 -> 96), pad 1.
    w3a, bias3a = _pack_conv(w_b3a, b_b3a, _round_up(w_b3a.shape[0], 128))
    xc = jnp.pad(out_a[..., off3:off3 + n3], ((0, 0), (1, 1), (1, 1), (0, 0)))
    out_c = _conv_stage(xc, w3a, bias3a, KH=3, KW=3, th=th)

    w3b, bias3b = _pack_conv(w_b3b, b_b3b, _round_up(w_b3b.shape[0], 128))
    xd = jnp.pad(out_c[..., :w_b3a.shape[0]], ((0, 0), (1, 1), (1, 1), (0, 0)))
    out_d = _conv_stage(xd, w3b, bias3b, KH=3, KW=3, th=th)

    # torch.cat([branch1x1, branch5x5, branch3x3dbl, branch_pool], dim=1)
    y = jnp.concatenate([
        out_a[..., off1:off1 + n1],
        out_b[..., :w_b5.shape[0]],
        out_d[..., :w_b3b.shape[0]],
        out_a[..., offp:offp + npool],
    ], axis=-1).astype(jnp.float32)
    return jnp.transpose(y, (0, 3, 1, 2))                    # NHWC -> NCHW


# ----------------------------------------------------------------------------
# Pure-JAX f32 reference (mirrors the PyTorch module)
# ----------------------------------------------------------------------------

def _basic_conv_ref(x, w, gamma, beta, mean, var, *, padding, eps=1e-3):
    y = jax.lax.conv_general_dilated(
        x, w, window_strides=(1, 1),
        padding=[(padding, padding), (padding, padding)],
        dimension_numbers=("NCHW", "OIHW", "NCHW"))
    s = gamma / jnp.sqrt(var + eps)
    y = y * s[None, :, None, None] + (beta - mean * s)[None, :, None, None]
    return jnp.maximum(y, 0.0)


def _inception_a_ref(x, params):
    b1 = _basic_conv_ref(x, *params["b1"], padding=0)
    b5 = _basic_conv_ref(x, *params["b5_1"], padding=0)
    b5 = _basic_conv_ref(b5, *params["b5_2"], padding=2)
    b3 = _basic_conv_ref(x, *params["b3_1"], padding=0)
    b3 = _basic_conv_ref(b3, *params["b3_2"], padding=1)
    b3 = _basic_conv_ref(b3, *params["b3_3"], padding=1)
    xp = jnp.pad(x, ((0, 0), (0, 0), (1, 1), (1, 1)))
    pool = jax.lax.reduce_window(xp, 0.0, jax.lax.add,
                                 (1, 1, 3, 3), (1, 1, 1, 1), "VALID") / 9.0
    bp = _basic_conv_ref(pool, *params["bp"], padding=0)
    return jnp.concatenate([b1, b5, b3, bp], axis=1)


# ----------------------------------------------------------------------------
# Self-test
# ----------------------------------------------------------------------------

def _make_bc_params(key, cin, cout, k):
    kw, kg, kb, km, kv = jax.random.split(key, 5)
    fan_in = cin * k * k
    w = jax.random.normal(kw, (cout, cin, k, k), jnp.float32) * fan_in ** -0.5
    gamma = jax.random.uniform(kg, (cout,), minval=0.5, maxval=1.5, dtype=jnp.float32)
    beta = jax.random.normal(kb, (cout,), jnp.float32) * 0.1
    mean = jax.random.normal(km, (cout,), jnp.float32) * 0.1
    var = jax.random.uniform(kv, (cout,), minval=0.5, maxval=1.5, dtype=jnp.float32)
    return (w, gamma, beta, mean, var)


if __name__ == "__main__":
    key = jax.random.PRNGKey(0)
    keys = jax.random.split(key, 8)
    N, Cin, H, W = 2, 16, 16, 16
    pool_features = 32

    params = {
        "b1":   _make_bc_params(keys[0], Cin, 64, 1),
        "b5_1": _make_bc_params(keys[1], Cin, 48, 1),
        "b5_2": _make_bc_params(keys[2], 48, 64, 5),
        "b3_1": _make_bc_params(keys[3], Cin, 64, 1),
        "b3_2": _make_bc_params(keys[4], 64, 96, 3),
        "b3_3": _make_bc_params(keys[5], 96, 96, 3),
        "bp":   _make_bc_params(keys[6], Cin, pool_features, 1),
    }
    x = jax.random.normal(keys[7], (N, Cin, H, W), jnp.float32)

    fwd = jax.jit(inception_a_forward)
    out = jax.block_until_ready(fwd(x, params))

    ref = _inception_a_ref(x, params)
    assert out.shape == (N, 64 + 64 + 96 + pool_features, H, W), out.shape
    # bf16 MXU operands -> allow input-rounding error vs the pure-f32 reference.
    assert jnp.allclose(out, ref, atol=5e-2, rtol=5e-2), (
        f"mismatch vs JAX reference: max abs err = {jnp.max(jnp.abs(out - ref))}")
    print("KERNEL_OK")
</pallas_src>

<mosaic_0001>
module attributes {stable_mosaic.version = 11 : i64} {
  func.func @fused_pointwise_kernel(%arg0: i32, %arg1: i32, %arg2: memref<1x18x18x16xbf16, #tpu.memory_space<vmem>>, %arg3: memref<16x256xbf16, #tpu.memory_space<vmem>>, %arg4: memref<16x256xbf16, #tpu.memory_space<vmem>>, %arg5: memref<1x256xf32, #tpu.memory_space<vmem>>, %arg6: memref<1x8x16x256xbf16, #tpu.memory_space<vmem>>, %arg7: memref<128x256xf32, #tpu.memory_space<vmem>>) attributes {dimension_semantics = [#tpu.dimension_semantics<parallel>, #tpu.dimension_semantics<parallel>], iteration_bounds = array<i64: 2, 2>, scalar_prefetch = 0 : i64, scratch_operands = 1 : i64, tpu.core_type = #tpu.core_type<tc>, window_params = [{transform_indices = @transform_0, window_bounds = array<i64: 1, 18, 18, 16>}, {pipeline_mode = #tpu.pipeline_mode<synchronous>, transform_indices = @transform_1, window_bounds = array<i64: 16, 256>}, {pipeline_mode = #tpu.pipeline_mode<synchronous>, transform_indices = @transform_2, window_bounds = array<i64: 16, 256>}, {pipeline_mode = #tpu.pipeline_mode<synchronous>, transform_indices = @transform_3, window_bounds = array<i64: 1, 256>}, {transform_indices = @transform_4, window_bounds = array<i64: 1, 8, 16, 256>}]} {
    %c8_i32 = arith.constant 8 : i32
    %0 = arith.muli %arg1, %c8_i32 : i32
    %c1_i32 = arith.constant 1 : i32
    %1 = arith.addi %0, %c1_i32 : i32
    %c0 = arith.constant 0 : index
    %2 = arith.index_cast %1 : i32 to index
    %c1 = arith.constant 1 : index
    %c0_0 = arith.constant 0 : index
    %3 = vector.load %arg2[%c0, %2, %c1, %c0_0] : memref<1x18x18x16xbf16, #tpu.memory_space<vmem>>, vector<1x8x16x16xbf16>
    %4 = vector.shape_cast %3 : vector<1x8x16x16xbf16> to vector<8x16x16xbf16>
    %5 = vector.shape_cast %4 : vector<8x16x16xbf16> to vector<128x16xbf16>
    %c0_1 = arith.constant 0 : index
    %c0_2 = arith.constant 0 : index
    %6 = vector.load %arg3[%c0_1, %c0_2] : memref<16x256xbf16, #tpu.memory_space<vmem>>, vector<16x256xbf16>
    %cst = arith.constant dense<0.000000e+00> : vector<128x256xf32>
    %7 = tpu.matmul %5, %6, %cst {dimension_numbers = #tpu.dot_dimension_numbers<[1], [0], [0], [1], [0, 0, 1, 1], [], []>} : vector<128x16xbf16>, vector<16x256xbf16>, vector<128x256xf32> -> vector<128x256xf32>
    %c0_3 = arith.constant 0 : index
    %c0_4 = arith.constant 0 : index
    %8 = vector.load %arg7[%c0_3, %c0_4] : memref<128x256xf32, #tpu.memory_space<vmem>>, vector<128x256xf32>
    tpu.vector_store %arg7[%c0_3, %c0_4], %7 {strides = array<i32>} : memref<128x256xf32, #tpu.memory_space<vmem>>, vector<128x256xf32>,
    %cst_5 = arith.constant 0.000000e+00 : f32
    %9 = vector.broadcast %cst_5 : f32 to vector<8x16x16xf32>
    %c0_i32 = arith.constant 0 : i32
    %10 = arith.addi %0, %c0_i32 : i32
    %c0_6 = arith.constant 0 : index
    %11 = arith.index_cast %10 : i32 to index
    %c0_7 = arith.constant 0 : index
    %c0_8 = arith.constant 0 : index
    %12 = vector.load %arg2[%c0_6, %11, %c0_7, %c0_8] : memref<1x18x18x16xbf16, #tpu.memory_space<vmem>>, vector<1x8x16x16xbf16>
    %13 = vector.shape_cast %12 : vector<1x8x16x16xbf16> to vector<8x16x16xbf16>
    %14 = arith.extf %13 : vector<8x16x16xbf16> to vector<8x16x16xf32>
    %15 = arith.addf %9, %14 : vector<8x16x16xf32>
    %c0_i32_9 = arith.constant 0 : i32
    %16 = arith.addi %0, %c0_i32_9 : i32
    %c0_10 = arith.constant 0 : index
    %17 = arith.index_cast %16 : i32 to index
    %c1_11 = arith.constant 1 : index
    %c0_12 = arith.constant 0 : index
    %18 = vector.load %arg2[%c0_10, %17, %c1_11, %c0_12] : memref<1x18x18x16xbf16, #tpu.memory_space<vmem>>, vector<1x8x16x16xbf16>
    %19 = vector.shape_cast %18 : vector<1x8x16x16xbf16> to vector<8x16x16xbf16>
    %20 = arith.extf %19 : vector<8x16x16xbf16> to vector<8x16x16xf32>
    %21 = arith.addf %15, %20 : vector<8x16x16xf32>
    %c0_i32_13 = arith.constant 0 : i32
    %22 = arith.addi %0, %c0_i32_13 : i32
    %c0_14 = arith.constant 0 : index
    %23 = arith.index_cast %22 : i32 to index
    %c2 = arith.constant 2 : index
    %c0_15 = arith.constant 0 : index
    %24 = vector.load %arg2[%c0_14, %23, %c2, %c0_15] : memref<1x18x18x16xbf16, #tpu.memory_space<vmem>>, vector<1x8x16x16xbf16>
    %25 = vector.shape_cast %24 : vector<1x8x16x16xbf16> to vector<8x16x16xbf16>
    %26 = arith.extf %25 : vector<8x16x16xbf16> to vector<8x16x16xf32>
    %27 = arith.addf %21, %26 : vector<8x16x16xf32>
    %c1_i32_16 = arith.constant 1 : i32
    %28 = arith.addi %0, %c1_i32_16 : i32
    %c0_17 = arith.constant 0 : index
    %29 = arith.index_cast %28 : i32 to index
    %c0_18 = arith.constant 0 : index
    %c0_19 = arith.constant 0 : index
    %30 = vector.load %arg2[%c0_17, %29, %c0_18, %c0_19] : memref<1x18x18x16xbf16, #tpu.memory_space<vmem>>, vector<1x8x16x16xbf16>
    %31 = vector.shape_cast %30 : vector<1x8x16x16xbf16> to vector<8x16x16xbf16>
    %32 = arith.extf %31 : vector<8x16x16xbf16> to vector<8x16x16xf32>
    %33 = arith.addf %27, %32 : vector<8x16x16xf32>
    %c1_i32_20 = arith.constant 1 : i32
    %34 = arith.addi %0, %c1_i32_20 : i32
    %c0_21 = arith.constant 0 : index
    %35 = arith.index_cast %34 : i32 to index
    %c1_22 = arith.constant 1 : index
    %c0_23 = arith.constant 0 : index
    %36 = vector.load %arg2[%c0_21, %35, %c1_22, %c0_23] : memref<1x18x18x16xbf16, #tpu.memory_space<vmem>>, vector<1x8x16x16xbf16>
    %37 = vector.shape_cast %36 : vector<1x8x16x16xbf16> to vector<8x16x16xbf16>
    %38 = arith.extf %37 : vector<8x16x16xbf16> to vector<8x16x16xf32>
    %39 = arith.addf %33, %38 : vector<8x16x16xf32>
    %c1_i32_24 = arith.constant 1 : i32
    %40 = arith.addi %0, %c1_i32_24 : i32
    %c0_25 = arith.constant 0 : index
    %41 = arith.index_cast %40 : i32 to index
    %c2_26 = arith.constant 2 : index
    %c0_27 = arith.constant 0 : index
    %42 = vector.load %arg2[%c0_25, %41, %c2_26, %c0_27] : memref<1x18x18x16xbf16, #tpu.memory_space<vmem>>, vector<1x8x16x16xbf16>
    %43 = vector.shape_cast %42 : vector<1x8x16x16xbf16> to vector<8x16x16xbf16>
    %44 = arith.extf %43 : vector<8x16x16xbf16> to vector<8x16x16xf32>
    %45 = arith.addf %39, %44 : vector<8x16x16xf32>
    %c2_i32 = arith.constant 2 : i32
    %46 = arith.addi %0, %c2_i32 : i32
    %c0_28 = arith.constant 0 : index
    %47 = arith.index_cast %46 : i32 to index
    %c0_29 = arith.constant 0 : index
    %c0_30 = arith.constant 0 : index
    %48 = vector.load %arg2[%c0_28, %47, %c0_29, %c0_30] : memref<1x18x18x16xbf16, #tpu.memory_space<vmem>>, vector<1x8x16x16xbf16>
    %49 = vector.shape_cast %48 : vector<1x8x16x16xbf16> to vector<8x16x16xbf16>
    %50 = arith.extf %49 : vector<8x16x16xbf16> to vector<8x16x16xf32>
    %51 = arith.addf %45, %50 : vector<8x16x16xf32>
    %c2_i32_31 = arith.constant 2 : i32
    %52 = arith.addi %0, %c2_i32_31 : i32
    %c0_32 = arith.constant 0 : index
    %53 = arith.index_cast %52 : i32 to index
    %c1_33 = arith.constant 1 : index
    %c0_34 = arith.constant 0 : index
    %54 = vector.load %arg2[%c0_32, %53, %c1_33, %c0_34] : memref<1x18x18x16xbf16, #tpu.memory_space<vmem>>, vector<1x8x16x16xbf16>
    %55 = vector.shape_cast %54 : vector<1x8x16x16xbf16> to vector<8x16x16xbf16>
    %56 = arith.extf %55 : vector<8x16x16xbf16> to vector<8x16x16xf32>
    %57 = arith.addf %51, %56 : vector<8x16x16xf32>
    %c2_i32_35 = arith.constant 2 : i32
    %58 = arith.addi %0, %c2_i32_35 : i32
    %c0_36 = arith.constant 0 : index
    %59 = arith.index_cast %58 : i32 to index
    %c2_37 = arith.constant 2 : index
    %c0_38 = arith.constant 0 : index
    %60 = vector.load %arg2[%c0_36, %59, %c2_37, %c0_38] : memref<1x18x18x16xbf16, #tpu.memory_space<vmem>>, vector<1x8x16x16xbf16>
    %61 = vector.shape_cast %60 : vector<1x8x16x16xbf16> to vector<8x16x16xbf16>
    %62 = arith.extf %61 : vector<8x16x16xbf16> to vector<8x16x16xf32>
    %63 = arith.addf %57, %62 : vector<8x16x16xf32>
    %c0_39 = arith.constant 0 : index
    %c0_40 = arith.constant 0 : index
    %64 = vector.load %arg7[%c0_39, %c0_40] : memref<128x256xf32, #tpu.memory_space<vmem>>, vector<128x256xf32>
    %65 = arith.truncf %63 : vector<8x16x16xf32> to vector<8x16x16xbf16>
    %66 = vector.shape_cast %65 : vector<8x16x16xbf16> to vector<128x16xbf16>
    %c0_41 = arith.constant 0 : index
    %c0_42 = arith.constant 0 : index
    %67 = vector.load %arg4[%c0_41, %c0_42] : memref<16x256xbf16, #tpu.memory_space<vmem>>, vector<16x256xbf16>
    %cst_43 = arith.constant dense<0.000000e+00> : vector<128x256xf32>
    %68 = tpu.matmul %66, %67, %cst_43 {dimension_numbers = #tpu.dot_dimension_numbers<[1], [0], [0], [1], [0, 0, 1, 1], [], []>} : vector<128x16xbf16>, vector<16x256xbf16>, vector<128x256xf32> -> vector<128x256xf32>
    %69 = arith.addf %64, %68 : vector<128x256xf32>
    %c0_44 = arith.constant 0 : index
    %c0_45 = arith.constant 0 : index
    %70 = vector.load %arg7[%c0_44, %c0_45] : memref<128x256xf32, #tpu.memory_space<vmem>>, vector<128x256xf32>
    tpu.vector_store %arg7[%c0_44, %c0_45], %69 {strides = array<i32>} : memref<128x256xf32, #tpu.memory_space<vmem>>, vector<128x256xf32>,
    %c0_46 = arith.constant 0 : index
    %c0_47 = arith.constant 0 : index
    %71 = vector.load %arg7[%c0_46, %c0_47] : memref<128x256xf32, #tpu.memory_space<vmem>>, vector<128x256xf32>
    %c0_48 = arith.constant 0 : index
    %c0_49 = arith.constant 0 : index
    %72 = vector.load %arg5[%c0_48, %c0_49] : memref<1x256xf32, #tpu.memory_space<vmem>>, vector<1x256xf32>
    %73 = vector.broadcast %72 : vector<1x256xf32> to vector<128x256xf32>
    %74 = arith.addf %71, %73 : vector<128x256xf32>
    %cst_50 = arith.constant 0.000000e+00 : f32
    %75 = vector.broadcast %cst_50 : f32 to vector<128x256xf32>
    %76 = arith.maximumf %74, %75 : vector<128x256xf32>
    %77 = vector.shape_cast %76 : vector<128x256xf32> to vector<8x16x256xf32>
    %78 = arith.truncf %77 : vector<8x16x256xf32> to vector<8x16x256xbf16>
    %c0_51 = arith.constant 0 : index
    %c0_52 = arith.constant 0 : index
    %c0_53 = arith.constant 0 : index
    %c0_54 = arith.constant 0 : index
    %79 = vector.load %arg6[%c0_51, %c0_52, %c0_53, %c0_54] : memref<1x8x16x256xbf16, #tpu.memory_space<vmem>>, vector<1x8x16x256xbf16>
    %80 = vector.shape_cast %79 : vector<1x8x16x256xbf16> to vector<8x16x256xbf16>
    %81 = vector.shape_cast %78 : vector<8x16x256xbf16> to vector<1x8x16x256xbf16>
    tpu.vector_store %arg6[%c0_51, %c0_52, %c0_53, %c0_54], %81 {strides = array<i32>} : memref<1x8x16x256xbf16, #tpu.memory_space<vmem>>, vector<1x8x16x256xbf16>,
    return
  }
  func.func @transform_0(%arg0: i32, %arg1: i32) -> (i32, i32, i32, i32) {
    %c0_i32 = arith.constant 0 : i32
    %c0_i32_0 = arith.constant 0 : i32
    %c0_i32_1 = arith.constant 0 : i32
    %c0_i32_2 = arith.constant 0 : i32
    return %arg0, %c0_i32, %c0_i32_0, %c0_i32_1 : i32, i32, i32, i32
  }
  func.func @transform_1(%arg0: i32, %arg1: i32) -> (i32, i32) {
    %c0_i32 = arith.constant 0 : i32
    %c0_i32_0 = arith.constant 0 : i32
    %c0_i32_1 = arith.constant 0 : i32
    return %c0_i32, %c0_i32_0 : i32, i32
  }
  func.func @transform_2(%arg0: i32, %arg1: i32) -> (i32, i32) {
    %c0_i32 = arith.constant 0 : i32
    %c0_i32_0 = arith.constant 0 : i32
    %c0_i32_1 = arith.constant 0 : i32
    return %c0_i32, %c0_i32_0 : i32, i32
  }
  func.func @transform_3(%arg0: i32, %arg1: i32) -> (i32, i32) {
    %c0_i32 = arith.constant 0 : i32
    %c0_i32_0 = arith.constant 0 : i32
    %c0_i32_1 = arith.constant 0 : i32
    return %c0_i32, %c0_i32_0 : i32, i32
  }
  func.func @transform_4(%arg0: i32, %arg1: i32) -> (i32, i32, i32, i32) {
    %c0_i32 = arith.constant 0 : i32
    %c0_i32_0 = arith.constant 0 : i32
    %c0_i32_1 = arith.constant 0 : i32
    return %arg0, %arg1, %c0_i32, %c0_i32_0 : i32, i32, i32, i32
  }
}

module attributes {stable_mosaic.version = 11 : i64} {
  func.func @conv_kernel(%arg0: i32, %arg1: i32, %arg2: memref<1x18x18x64xbf16, #tpu.memory_space<vmem>>, %arg3: memref<3x192x128xbf16, #tpu.memory_space<vmem>>, %arg4: memref<1x128xf32, #tpu.memory_space<vmem>>, %arg5: memref<1x8x16x128xbf16, #tpu.memory_space<vmem>>, %arg6: memref<128x128xf32, #tpu.memory_space<vmem>>) attributes {dimension_semantics = [#tpu.dimension_semantics<parallel>, #tpu.dimension_semantics<parallel>], iteration_bounds = array<i64: 2, 2>, scalar_prefetch = 0 : i64, scratch_operands = 1 : i64, tpu.core_type = #tpu.core_type<tc>, window_params = [{transform_indices = @transform_0, window_bounds = array<i64: 1, 18, 18, 64>}, {pipeline_mode = #tpu.pipeline_mode<synchronous>, transform_indices = @transform_1, window_bounds = array<i64: 3, 192, 128>}, {pipeline_mode = #tpu.pipeline_mode<synchronous>, transform_indices = @transform_2, window_bounds = array<i64: 1, 128>}, {transform_indices = @transform_3, window_bounds = array<i64: 1, 8, 16, 128>}]} {
    %c8_i32 = arith.constant 8 : i32
    %0 = arith.muli %arg1, %c8_i32 : i32
    %cst = arith.constant 0.000000e+00 : f32
    %1 = vector.broadcast %cst : f32 to vector<128x128xf32>
    %c0 = arith.constant 0 : index
    %c0_0 = arith.constant 0 : index
    %2 = vector.load %arg6[%c0, %c0_0] : memref<128x128xf32, #tpu.memory_space<vmem>>, vector<128x128xf32>
    tpu.vector_store %arg6[%c0, %c0_0], %1 {strides = array<i32>} : memref<128x128xf32, #tpu.memory_space<vmem>>, vector<128x128xf32>,
    %c0_i32 = arith.constant 0 : i32
    %3 = arith.addi %0, %c0_i32 : i32
    %c0_1 = arith.constant 0 : index
    %4 = arith.index_cast %3 : i32 to index
    %c0_2 = arith.constant 0 : index
    %c0_3 = arith.constant 0 : index
    %5 = vector.load %arg2[%c0_1, %4, %c0_2, %c0_3] : memref<1x18x18x64xbf16, #tpu.memory_space<vmem>>, vector<1x8x16x64xbf16>
    %6 = vector.shape_cast %5 : vector<1x8x16x64xbf16> to vector<8x16x64xbf16>
    %c0_i32_4 = arith.constant 0 : i32
    %7 = arith.addi %0, %c0_i32_4 : i32
    %c0_5 = arith.constant 0 : index
    %8 = arith.index_cast %7 : i32 to index
    %c1 = arith.constant 1 : index
    %c0_6 = arith.constant 0 : index
    %9 = vector.load %arg2[%c0_5, %8, %c1, %c0_6] : memref<1x18x18x64xbf16, #tpu.memory_space<vmem>>, vector<1x8x16x64xbf16>
    %10 = vector.shape_cast %9 : vector<1x8x16x64xbf16> to vector<8x16x64xbf16>
    %c0_i32_7 = arith.constant 0 : i32
    %11 = arith.addi %0, %c0_i32_7 : i32
    %c0_8 = arith.constant 0 : index
    %12 = arith.index_cast %11 : i32 to index
    %c2 = arith.constant 2 : index
    %c0_9 = arith.constant 0 : index
    %13 = vector.load %arg2[%c0_8, %12, %c2, %c0_9] : memref<1x18x18x64xbf16, #tpu.memory_space<vmem>>, vector<1x8x16x64xbf16>
    %14 = vector.shape_cast %13 : vector<1x8x16x64xbf16> to vector<8x16x64xbf16>
    %15 = tpu.concatenate %6, %10, %14 in 2 : vector<8x16x64xbf16>, vector<8x16x64xbf16>, vector<8x16x64xbf16> -> vector<8x16x192xbf16>
    %16 = vector.shape_cast %15 : vector<8x16x192xbf16> to vector<128x192xbf16>
    %c0_10 = arith.constant 0 : index
    %c0_11 = arith.constant 0 : index
    %17 = vector.load %arg6[%c0_10, %c0_11] : memref<128x128xf32, #tpu.memory_space<vmem>>, vector<128x128xf32>
    %c0_12 = arith.constant 0 : index
    %c0_13 = arith.constant 0 : index
    %c0_14 = arith.constant 0 : index
    %18 = vector.load %arg3[%c0_12, %c0_13, %c0_14] : memref<3x192x128xbf16, #tpu.memory_space<vmem>>, vector<1x192x128xbf16>
    %19 = vector.shape_cast %18 : vector<1x192x128xbf16> to vector<192x128xbf16>
    %cst_15 = arith.constant dense<0.000000e+00> : vector<128x128xf32>
    %20 = tpu.matmul %16, %19, %cst_15 {dimension_numbers = #tpu.dot_dimension_numbers<[1], [0], [0], [1], [0, 0, 1, 1], [], []>} : vector<128x192xbf16>, vector<192x128xbf16>, vector<128x128xf32> -> vector<128x128xf32>
    %21 = arith.addf %17, %20 : vector<128x128xf32>
    %c0_16 = arith.constant 0 : index
    %c0_17 = arith.constant 0 : index
    %22 = vector.load %arg6[%c0_16, %c0_17] : memref<128x128xf32, #tpu.memory_space<vmem>>, vector<128x128xf32>
    tpu.vector_store %arg6[%c0_16, %c0_17], %21 {strides = array<i32>} : memref<128x128xf32, #tpu.memory_space<vmem>>, vector<128x128xf32>,
    %c1_i32 = arith.constant 1 : i32
    %23 = arith.addi %0, %c1_i32 : i32
    %c0_18 = arith.constant 0 : index
    %24 = arith.index_cast %23 : i32 to index
    %c0_19 = arith.constant 0 : index
    %c0_20 = arith.constant 0 : index
    %25 = vector.load %arg2[%c0_18, %24, %c0_19, %c0_20] : memref<1x18x18x64xbf16, #tpu.memory_space<vmem>>, vector<1x8x16x64xbf16>
    %26 = vector.shape_cast %25 : vector<1x8x16x64xbf16> to vector<8x16x64xbf16>
    %c1_i32_21 = arith.constant 1 : i32
    %27 = arith.addi %0, %c1_i32_21 : i32
    %c0_22 = arith.constant 0 : index
    %28 = arith.index_cast %27 : i32 to index
    %c1_23 = arith.constant 1 : index
    %c0_24 = arith.constant 0 : index
    %29 = vector.load %arg2[%c0_22, %28, %c1_23, %c0_24] : memref<1x18x18x64xbf16, #tpu.memory_space<vmem>>, vector<1x8x16x64xbf16>
    %30 = vector.shape_cast %29 : vector<1x8x16x64xbf16> to vector<8x16x64xbf16>
    %c1_i32_25 = arith.constant 1 : i32
    %31 = arith.addi %0, %c1_i32_25 : i32
    %c0_26 = arith.constant 0 : index
    %32 = arith.index_cast %31 : i32 to index
    %c2_27 = arith.constant 2 : index
    %c0_28 = arith.constant 0 : index
    %33 = vector.load %arg2[%c0_26, %32, %c2_27, %c0_28] : memref<1x18x18x64xbf16, #tpu.memory_space<vmem>>, vector<1x8x16x64xbf16>
    %34 = vector.shape_cast %33 : vector<1x8x16x64xbf16> to vector<8x16x64xbf16>
    %35 = tpu.concatenate %26, %30, %34 in 2 : vector<8x16x64xbf16>, vector<8x16x64xbf16>, vector<8x16x64xbf16> -> vector<8x16x192xbf16>
    %36 = vector.shape_cast %35 : vector<8x16x192xbf16> to vector<128x192xbf16>
    %c0_29 = arith.constant 0 : index
    %c0_30 = arith.constant 0 : index
    %37 = vector.load %arg6[%c0_29, %c0_30] : memref<128x128xf32, #tpu.memory_space<vmem>>, vector<128x128xf32>
    %c1_31 = arith.constant 1 : index
    %c0_32 = arith.constant 0 : index
    %c0_33 = arith.constant 0 : index
    %38 = vector.load %arg3[%c1_31, %c0_32, %c0_33] : memref<3x192x128xbf16, #tpu.memory_space<vmem>>, vector<1x192x128xbf16>
    %39 = vector.shape_cast %38 : vector<1x192x128xbf16> to vector<192x128xbf16>
    %cst_34 = arith.constant dense<0.000000e+00> : vector<128x128xf32>
    %40 = tpu.matmul %36, %39, %cst_34 {dimension_numbers = #tpu.dot_dimension_numbers<[1], [0], [0], [1], [0, 0, 1, 1], [], []>} : vector<128x192xbf16>, vector<192x128xbf16>, vector<128x128xf32> -> vector<128x128xf32>
    %41 = arith.addf %37, %40 : vector<128x128xf32>
    %c0_35 = arith.constant 0 : index
    %c0_36 = arith.constant 0 : index
    %42 = vector.load %arg6[%c0_35, %c0_36] : memref<128x128xf32, #tpu.memory_space<vmem>>, vector<128x128xf32>
    tpu.vector_store %arg6[%c0_35, %c0_36], %41 {strides = array<i32>} : memref<128x128xf32, #tpu.memory_space<vmem>>, vector<128x128xf32>,
    %c2_i32 = arith.constant 2 : i32
    %43 = arith.addi %0, %c2_i32 : i32
    %c0_37 = arith.constant 0 : index
    %44 = arith.index_cast %43 : i32 to index
    %c0_38 = arith.constant 0 : index
    %c0_39 = arith.constant 0 : index
    %45 = vector.load %arg2[%c0_37, %44, %c0_38, %c0_39] : memref<1x18x18x64xbf16, #tpu.memory_space<vmem>>, vector<1x8x16x64xbf16>
    %46 = vector.shape_cast %45 : vector<1x8x16x64xbf16> to vector<8x16x64xbf16>
    %c2_i32_40 = arith.constant 2 : i32
    %47 = arith.addi %0, %c2_i32_40 : i32
    %c0_41 = arith.constant 0 : index
    %48 = arith.index_cast %47 : i32 to index
    %c1_42 = arith.constant 1 : index
    %c0_43 = arith.constant 0 : index
    %49 = vector.load %arg2[%c0_41, %48, %c1_42, %c0_43] : memref<1x18x18x64xbf16, #tpu.memory_space<vmem>>, vector<1x8x16x64xbf16>
    %50 = vector.shape_cast %49 : vector<1x8x16x64xbf16> to vector<8x16x64xbf16>
    %c2_i32_44 = arith.constant 2 : i32
    %51 = arith.addi %0, %c2_i32_44 : i32
    %c0_45 = arith.constant 0 : index
    %52 = arith.index_cast %51 : i32 to index
    %c2_46 = arith.constant 2 : index
    %c0_47 = arith.constant 0 : index
    %53 = vector.load %arg2[%c0_45, %52, %c2_46, %c0_47] : memref<1x18x18x64xbf16, #tpu.memory_space<vmem>>, vector<1x8x16x64xbf16>
    %54 = vector.shape_cast %53 : vector<1x8x16x64xbf16> to vector<8x16x64xbf16>
    %55 = tpu.concatenate %46, %50, %54 in 2 : vector<8x16x64xbf16>, vector<8x16x64xbf16>, vector<8x16x64xbf16> -> vector<8x16x192xbf16>
    %56 = vector.shape_cast %55 : vector<8x16x192xbf16> to vector<128x192xbf16>
    %c0_48 = arith.constant 0 : index
    %c0_49 = arith.constant 0 : index
    %57 = vector.load %arg6[%c0_48, %c0_49] : memref<128x128xf32, #tpu.memory_space<vmem>>, vector<128x128xf32>
    %c2_50 = arith.constant 2 : index
    %c0_51 = arith.constant 0 : index
    %c0_52 = arith.constant 0 : index
    %58 = vector.load %arg3[%c2_50, %c0_51, %c0_52] : memref<3x192x128xbf16, #tpu.memory_space<vmem>>, vector<1x192x128xbf16>
    %59 = vector.shape_cast %58 : vector<1x192x128xbf16> to vector<192x128xbf16>
    %cst_53 = arith.constant dense<0.000000e+00> : vector<128x128xf32>
    %60 = tpu.matmul %56, %59, %cst_53 {dimension_numbers = #tpu.dot_dimension_numbers<[1], [0], [0], [1], [0, 0, 1, 1], [], []>} : vector<128x192xbf16>, vector<192x128xbf16>, vector<128x128xf32> -> vector<128x128xf32>
    %61 = arith.addf %57, %60 : vector<128x128xf32>
    %c0_54 = arith.constant 0 : index
    %c0_55 = arith.constant 0 : index
    %62 = vector.load %arg6[%c0_54, %c0_55] : memref<128x128xf32, #tpu.memory_space<vmem>>, vector<128x128xf32>
    tpu.vector_store %arg6[%c0_54, %c0_55], %61 {strides = array<i32>} : memref<128x128xf32, #tpu.memory_space<vmem>>, vector<128x128xf32>,
    %c0_56 = arith.constant 0 : index
    %c0_57 = arith.constant 0 : index
    %63 = vector.load %arg6[%c0_56, %c0_57] : memref<128x128xf32, #tpu.memory_space<vmem>>, vector<128x128xf32>
    %c0_58 = arith.constant 0 : index
    %c0_59 = arith.constant 0 : index
    %64 = vector.load %arg4[%c0_58, %c0_59] : memref<1x128xf32, #tpu.memory_space<vmem>>, vector<1x128xf32>
    %65 = vector.broadcast %64 : vector<1x128xf32> to vector<128x128xf32>
    %66 = arith.addf %63, %65 : vector<128x128xf32>
    %cst_60 = arith.constant 0.000000e+00 : f32
    %67 = vector.broadcast %cst_60 : f32 to vector<128x128xf32>
    %68 = arith.maximumf %66, %67 : vector<128x128xf32>
    %69 = vector.shape_cast %68 : vector<128x128xf32> to vector<8x16x128xf32>
    %70 = arith.truncf %69 : vector<8x16x128xf32> to vector<8x16x128xbf16>
    %c0_61 = arith.constant 0 : index
    %c0_62 = arith.constant 0 : index
    %c0_63 = arith.constant 0 : index
    %c0_64 = arith.constant 0 : index
    %71 = vector.load %arg5[%c0_61, %c0_62, %c0_63, %c0_64] : memref<1x8x16x128xbf16, #tpu.memory_space<vmem>>, vector<1x8x16x128xbf16>
    %72 = vector.shape_cast %71 : vector<1x8x16x128xbf16> to vector<8x16x128xbf16>
    %73 = vector.shape_cast %70 : vector<8x16x128xbf16> to vector<1x8x16x128xbf16>
    tpu.vector_store %arg5[%c0_61, %c0_62, %c0_63, %c0_64], %73 {strides = array<i32>} : memref<1x8x16x128xbf16, #tpu.memory_space<vmem>>, vector<1x8x16x128xbf16>,
    return
  }
  func.func @transform_0(%arg0: i32, %arg1: i32) -> (i32, i32, i32, i32) {
    %c0_i32 = arith.constant 0 : i32
    %c0_i32_0 = arith.constant 0 : i32
    %c0_i32_1 = arith.constant 0 : i32
    %c0_i32_2 = arith.constant 0 : i32
    return %arg0, %c0_i32, %c0_i32_0, %c0_i32_1 : i32, i32, i32, i32
  }
  func.func @transform_1(%arg0: i32, %arg1: i32) -> (i32, i32, i32) {
    %c0_i32 = arith.constant 0 : i32
    %c0_i32_0 = arith.constant 0 : i32
    %c0_i32_1 = arith.constant 0 : i32
    %c0_i32_2 = arith.constant 0 : i32
    return %c0_i32, %c0_i32_0, %c0_i32_1 : i32, i32, i32
  }
  func.func @transform_2(%arg0: i32, %arg1: i32) -> (i32, i32) {
    %c0_i32 = arith.constant 0 : i32
    %c0_i32_0 = arith.constant 0 : i32
    %c0_i32_1 = arith.constant 0 : i32
    return %c0_i32, %c0_i32_0 : i32, i32
  }
  func.func @transform_3(%arg0: i32, %arg1: i32) -> (i32, i32, i32, i32) {
    %c0_i32 = arith.constant 0 : i32
    %c0_i32_0 = arith.constant 0 : i32
    %c0_i32_1 = arith.constant 0 : i32
    return %arg0, %arg1, %c0_i32, %c0_i32_0 : i32, i32, i32, i32
  }
}

module attributes {stable_mosaic.version = 11 : i64} {
  func.func @conv_kernel(%arg0: i32, %arg1: i32, %arg2: memref<1x18x18x96xbf16, #tpu.memory_space<vmem>>, %arg3: memref<3x288x128xbf16, #tpu.memory_space<vmem>>, %arg4: memref<1x128xf32, #tpu.memory_space<vmem>>, %arg5: memref<1x8x16x128xbf16, #tpu.memory_space<vmem>>, %arg6: memref<128x128xf32, #tpu.memory_space<vmem>>) attributes {dimension_semantics = [#tpu.dimension_semantics<parallel>, #tpu.dimension_semantics<parallel>], iteration_bounds = array<i64: 2, 2>, scalar_prefetch = 0 : i64, scratch_operands = 1 : i64, tpu.core_type = #tpu.core_type<tc>, window_params = [{transform_indices = @transform_0, window_bounds = array<i64: 1, 18, 18, 96>}, {pipeline_mode = #tpu.pipeline_mode<synchronous>, transform_indices = @transform_1, window_bounds = array<i64: 3, 288, 128>}, {pipeline_mode = #tpu.pipeline_mode<synchronous>, transform_indices = @transform_2, window_bounds = array<i64: 1, 128>}, {transform_indices = @transform_3, window_bounds = array<i64: 1, 8, 16, 128>}]} {
    %c8_i32 = arith.constant 8 : i32
    %0 = arith.muli %arg1, %c8_i32 : i32
    %cst = arith.constant 0.000000e+00 : f32
    %1 = vector.broadcast %cst : f32 to vector<128x128xf32>
    %c0 = arith.constant 0 : index
    %c0_0 = arith.constant 0 : index
    %2 = vector.load %arg6[%c0, %c0_0] : memref<128x128xf32, #tpu.memory_space<vmem>>, vector<128x128xf32>
    tpu.vector_store %arg6[%c0, %c0_0], %1 {strides = array<i32>} : memref<128x128xf32, #tpu.memory_space<vmem>>, vector<128x128xf32>,
    %c0_i32 = arith.constant 0 : i32
    %3 = arith.addi %0, %c0_i32 : i32
    %c0_1 = arith.constant 0 : index
    %4 = arith.index_cast %3 : i32 to index
    %c0_2 = arith.constant 0 : index
    %c0_3 = arith.constant 0 : index
    %5 = vector.load %arg2[%c0_1, %4, %c0_2, %c0_3] : memref<1x18x18x96xbf16, #tpu.memory_space<vmem>>, vector<1x8x16x96xbf16>
    %6 = vector.shape_cast %5 : vector<1x8x16x96xbf16> to vector<8x16x96xbf16>
    %c0_i32_4 = arith.constant 0 : i32
    %7 = arith.addi %0, %c0_i32_4 : i32
    %c0_5 = arith.constant 0 : index
    %8 = arith.index_cast %7 : i32 to index
    %c1 = arith.constant 1 : index
    %c0_6 = arith.constant 0 : index
    %9 = vector.load %arg2[%c0_5, %8, %c1, %c0_6] : memref<1x18x18x96xbf16, #tpu.memory_space<vmem>>, vector<1x8x16x96xbf16>
    %10 = vector.shape_cast %9 : vector<1x8x16x96xbf16> to vector<8x16x96xbf16>
    %c0_i32_7 = arith.constant 0 : i32
    %11 = arith.addi %0, %c0_i32_7 : i32
    %c0_8 = arith.constant 0 : index
    %12 = arith.index_cast %11 : i32 to index
    %c2 = arith.constant 2 : index
    %c0_9 = arith.constant 0 : index
    %13 = vector.load %arg2[%c0_8, %12, %c2, %c0_9] : memref<1x18x18x96xbf16, #tpu.memory_space<vmem>>, vector<1x8x16x96xbf16>
    %14 = vector.shape_cast %13 : vector<1x8x16x96xbf16> to vector<8x16x96xbf16>
    %15 = tpu.concatenate %6, %10, %14 in 2 : vector<8x16x96xbf16>, vector<8x16x96xbf16>, vector<8x16x96xbf16> -> vector<8x16x288xbf16>
    %16 = vector.shape_cast %15 : vector<8x16x288xbf16> to vector<128x288xbf16>
    %c0_10 = arith.constant 0 : index
    %c0_11 = arith.constant 0 : index
    %17 = vector.load %arg6[%c0_10, %c0_11] : memref<128x128xf32, #tpu.memory_space<vmem>>, vector<128x128xf32>
    %c0_12 = arith.constant 0 : index
    %c0_13 = arith.constant 0 : index
    %c0_14 = arith.constant 0 : index
    %18 = vector.load %arg3[%c0_12, %c0_13, %c0_14] : memref<3x288x128xbf16, #tpu.memory_space<vmem>>, vector<1x288x128xbf16>
    %19 = vector.shape_cast %18 : vector<1x288x128xbf16> to vector<288x128xbf16>
    %cst_15 = arith.constant dense<0.000000e+00> : vector<128x128xf32>
    %20 = tpu.matmul %16, %19, %cst_15 {dimension_numbers = #tpu.dot_dimension_numbers<[1], [0], [0], [1], [0, 0, 1, 1], [], []>} : vector<128x288xbf16>, vector<288x128xbf16>, vector<128x128xf32> -> vector<128x128xf32>
    %21 = arith.addf %17, %20 : vector<128x128xf32>
    %c0_16 = arith.constant 0 : index
    %c0_17 = arith.constant 0 : index
    %22 = vector.load %arg6[%c0_16, %c0_17] : memref<128x128xf32, #tpu.memory_space<vmem>>, vector<128x128xf32>
    tpu.vector_store %arg6[%c0_16, %c0_17], %21 {strides = array<i32>} : memref<128x128xf32, #tpu.memory_space<vmem>>, vector<128x128xf32>,
    %c1_i32 = arith.constant 1 : i32
    %23 = arith.addi %0, %c1_i32 : i32
    %c0_18 = arith.constant 0 : index
    %24 = arith.index_cast %23 : i32 to index
    %c0_19 = arith.constant 0 : index
    %c0_20 = arith.constant 0 : index
    %25 = vector.load %arg2[%c0_18, %24, %c0_19, %c0_20] : memref<1x18x18x96xbf16, #tpu.memory_space<vmem>>, vector<1x8x16x96xbf16>
    %26 = vector.shape_cast %25 : vector<1x8x16x96xbf16> to vector<8x16x96xbf16>
    %c1_i32_21 = arith.constant 1 : i32
    %27 = arith.addi %0, %c1_i32_21 : i32
    %c0_22 = arith.constant 0 : index
    %28 = arith.index_cast %27 : i32 to index
    %c1_23 = arith.constant 1 : index
    %c0_24 = arith.constant 0 : index
    %29 = vector.load %arg2[%c0_22, %28, %c1_23, %c0_24] : memref<1x18x18x96xbf16, #tpu.memory_space<vmem>>, vector<1x8x16x96xbf16>
    %30 = vector.shape_cast %29 : vector<1x8x16x96xbf16> to vector<8x16x96xbf16>
    %c1_i32_25 = arith.constant 1 : i32
    %31 = arith.addi %0, %c1_i32_25 : i32
    %c0_26 = arith.constant 0 : index
    %32 = arith.index_cast %31 : i32 to index
    %c2_27 = arith.constant 2 : index
    %c0_28 = arith.constant 0 : index
    %33 = vector.load %arg2[%c0_26, %32, %c2_27, %c0_28] : memref<1x18x18x96xbf16, #tpu.memory_space<vmem>>, vector<1x8x16x96xbf16>
    %34 = vector.shape_cast %33 : vector<1x8x16x96xbf16> to vector<8x16x96xbf16>
    %35 = tpu.concatenate %26, %30, %34 in 2 : vector<8x16x96xbf16>, vector<8x16x96xbf16>, vector<8x16x96xbf16> -> vector<8x16x288xbf16>
    %36 = vector.shape_cast %35 : vector<8x16x288xbf16> to vector<128x288xbf16>
    %c0_29 = arith.constant 0 : index
    %c0_30 = arith.constant 0 : index
    %37 = vector.load %arg6[%c0_29, %c0_30] : memref<128x128xf32, #tpu.memory_space<vmem>>, vector<128x128xf32>
    %c1_31 = arith.constant 1 : index
    %c0_32 = arith.constant 0 : index
    %c0_33 = arith.constant 0 : index
    %38 = vector.load %arg3[%c1_31, %c0_32, %c0_33] : memref<3x288x128xbf16, #tpu.memory_space<vmem>>, vector<1x288x128xbf16>
    %39 = vector.shape_cast %38 : vector<1x288x128xbf16> to vector<288x128xbf16>
    %cst_34 = arith.constant dense<0.000000e+00> : vector<128x128xf32>
    %40 = tpu.matmul %36, %39, %cst_34 {dimension_numbers = #tpu.dot_dimension_numbers<[1], [0], [0], [1], [0, 0, 1, 1], [], []>} : vector<128x288xbf16>, vector<288x128xbf16>, vector<128x128xf32> -> vector<128x128xf32>
    %41 = arith.addf %37, %40 : vector<128x128xf32>
    %c0_35 = arith.constant 0 : index
    %c0_36 = arith.constant 0 : index
    %42 = vector.load %arg6[%c0_35, %c0_36] : memref<128x128xf32, #tpu.memory_space<vmem>>, vector<128x128xf32>
    tpu.vector_store %arg6[%c0_35, %c0_36], %41 {strides = array<i32>} : memref<128x128xf32, #tpu.memory_space<vmem>>, vector<128x128xf32>,
    %c2_i32 = arith.constant 2 : i32
    %43 = arith.addi %0, %c2_i32 : i32
    %c0_37 = arith.constant 0 : index
    %44 = arith.index_cast %43 : i32 to index
    %c0_38 = arith.constant 0 : index
    %c0_39 = arith.constant 0 : index
    %45 = vector.load %arg2[%c0_37, %44, %c0_38, %c0_39] : memref<1x18x18x96xbf16, #tpu.memory_space<vmem>>, vector<1x8x16x96xbf16>
    %46 = vector.shape_cast %45 : vector<1x8x16x96xbf16> to vector<8x16x96xbf16>
    %c2_i32_40 = arith.constant 2 : i32
    %47 = arith.addi %0, %c2_i32_40 : i32
    %c0_41 = arith.constant 0 : index
    %48 = arith.index_cast %47 : i32 to index
    %c1_42 = arith.constant 1 : index
    %c0_43 = arith.constant 0 : index
    %49 = vector.load %arg2[%c0_41, %48, %c1_42, %c0_43] : memref<1x18x18x96xbf16, #tpu.memory_space<vmem>>, vector<1x8x16x96xbf16>
    %50 = vector.shape_cast %49 : vector<1x8x16x96xbf16> to vector<8x16x96xbf16>
    %c2_i32_44 = arith.constant 2 : i32
    %51 = arith.addi %0, %c2_i32_44 : i32
    %c0_45 = arith.constant 0 : index
    %52 = arith.index_cast %51 : i32 to index
    %c2_46 = arith.constant 2 : index
    %c0_47 = arith.constant 0 : index
    %53 = vector.load %arg2[%c0_45, %52, %c2_46, %c0_47] : memref<1x18x18x96xbf16, #tpu.memory_space<vmem>>, vector<1x8x16x96xbf16>
    %54 = vector.shape_cast %53 : vector<1x8x16x96xbf16> to vector<8x16x96xbf16>
    %55 = tpu.concatenate %46, %50, %54 in 2 : vector<8x16x96xbf16>, vector<8x16x96xbf16>, vector<8x16x96xbf16> -> vector<8x16x288xbf16>
    %56 = vector.shape_cast %55 : vector<8x16x288xbf16> to vector<128x288xbf16>
    %c0_48 = arith.constant 0 : index
    %c0_49 = arith.constant 0 : index
    %57 = vector.load %arg6[%c0_48, %c0_49] : memref<128x128xf32, #tpu.memory_space<vmem>>, vector<128x128xf32>
    %c2_50 = arith.constant 2 : index
    %c0_51 = arith.constant 0 : index
    %c0_52 = arith.constant 0 : index
    %58 = vector.load %arg3[%c2_50, %c0_51, %c0_52] : memref<3x288x128xbf16, #tpu.memory_space<vmem>>, vector<1x288x128xbf16>
    %59 = vector.shape_cast %58 : vector<1x288x128xbf16> to vector<288x128xbf16>
    %cst_53 = arith.constant dense<0.000000e+00> : vector<128x128xf32>
    %60 = tpu.matmul %56, %59, %cst_53 {dimension_numbers = #tpu.dot_dimension_numbers<[1], [0], [0], [1], [0, 0, 1, 1], [], []>} : vector<128x288xbf16>, vector<288x128xbf16>, vector<128x128xf32> -> vector<128x128xf32>
    %61 = arith.addf %57, %60 : vector<128x128xf32>
    %c0_54 = arith.constant 0 : index
    %c0_55 = arith.constant 0 : index
    %62 = vector.load %arg6[%c0_54, %c0_55] : memref<128x128xf32, #tpu.memory_space<vmem>>, vector<128x128xf32>
    tpu.vector_store %arg6[%c0_54, %c0_55], %61 {strides = array<i32>} : memref<128x128xf32, #tpu.memory_space<vmem>>, vector<128x128xf32>,
    %c0_56 = arith.constant 0 : index
    %c0_57 = arith.constant 0 : index
    %63 = vector.load %arg6[%c0_56, %c0_57] : memref<128x128xf32, #tpu.memory_space<vmem>>, vector<128x128xf32>
    %c0_58 = arith.constant 0 : index
    %c0_59 = arith.constant 0 : index
    %64 = vector.load %arg4[%c0_58, %c0_59] : memref<1x128xf32, #tpu.memory_space<vmem>>, vector<1x128xf32>
    %65 = vector.broadcast %64 : vector<1x128xf32> to vector<128x128xf32>
    %66 = arith.addf %63, %65 : vector<128x128xf32>
    %cst_60 = arith.constant 0.000000e+00 : f32
    %67 = vector.broadcast %cst_60 : f32 to vector<128x128xf32>
    %68 = arith.maximumf %66, %67 : vector<128x128xf32>
    %69 = vector.shape_cast %68 : vector<128x128xf32> to vector<8x16x128xf32>
    %70 = arith.truncf %69 : vector<8x16x128xf32> to vector<8x16x128xbf16>
    %c0_61 = arith.constant 0 : index
    %c0_62 = arith.constant 0 : index
    %c0_63 = arith.constant 0 : index
    %c0_64 = arith.constant 0 : index
    %71 = vector.load %arg5[%c0_61, %c0_62, %c0_63, %c0_64] : memref<1x8x16x128xbf16, #tpu.memory_space<vmem>>, vector<1x8x16x128xbf16>
    %72 = vector.shape_cast %71 : vector<1x8x16x128xbf16> to vector<8x16x128xbf16>
    %73 = vector.shape_cast %70 : vector<8x16x128xbf16> to vector<1x8x16x128xbf16>
    tpu.vector_store %arg5[%c0_61, %c0_62, %c0_63, %c0_64], %73 {strides = array<i32>} : memref<1x8x16x128xbf16, #tpu.memory_space<vmem>>, vector<1x8x16x128xbf16>,
    return
  }
  func.func @transform_0(%arg0: i32, %arg1: i32) -> (i32, i32, i32, i32) {
    %c0_i32 = arith.constant 0 : i32
    %c0_i32_0 = arith.constant 0 : i32
    %c0_i32_1 = arith.constant 0 : i32
    %c0_i32_2 = arith.constant 0 : i32
    return %arg0, %c0_i32, %c0_i32_0, %c0_i32_1 : i32, i32, i32, i32
  }
  func.func @transform_1(%arg0: i32, %arg1: i32) -> (i32, i32, i32) {
    %c0_i32 = arith.constant 0 : i32
    %c0_i32_0 = arith.constant 0 : i32
    %c0_i32_1 = arith.constant 0 : i32
    %c0_i32_2 = arith.constant 0 : i32
    return %c0_i32, %c0_i32_0, %c0_i32_1 : i32, i32, i32
  }
  func.func @transform_2(%arg0: i32, %arg1: i32) -> (i32, i32) {
    %c0_i32 = arith.constant 0 : i32
    %c0_i32_0 = arith.constant 0 : i32
    %c0_i32_1 = arith.constant 0 : i32
    return %c0_i32, %c0_i32_0 : i32, i32
  }
  func.func @transform_3(%arg0: i32, %arg1: i32) -> (i32, i32, i32, i32) {
    %c0_i32 = arith.constant 0 : i32
    %c0_i32_0 = arith.constant 0 : i32
    %c0_i32_1 = arith.constant 0 : i32
    return %arg0, %arg1, %c0_i32, %c0_i32_0 : i32, i32, i32, i32
  }
}

module attributes {stable_mosaic.version = 11 : i64} {
  func.func @conv_kernel(%arg0: i32, %arg1: i32, %arg2: memref<1x20x20x48xbf16, #tpu.memory_space<vmem>>, %arg3: memref<5x240x128xbf16, #tpu.memory_space<vmem>>, %arg4: memref<1x128xf32, #tpu.memory_space<vmem>>, %arg5: memref<1x8x16x128xbf16, #tpu.memory_space<vmem>>, %arg6: memref<128x128xf32, #tpu.memory_space<vmem>>) attributes {dimension_semantics = [#tpu.dimension_semantics<parallel>, #tpu.dimension_semantics<parallel>], iteration_bounds = array<i64: 2, 2>, scalar_prefetch = 0 : i64, scratch_operands = 1 : i64, tpu.core_type = #tpu.core_type<tc>, window_params = [{transform_indices = @transform_0, window_bounds = array<i64: 1, 20, 20, 48>}, {pipeline_mode = #tpu.pipeline_mode<synchronous>, transform_indices = @transform_1, window_bounds = array<i64: 5, 240, 128>}, {pipeline_mode = #tpu.pipeline_mode<synchronous>, transform_indices = @transform_2, window_bounds = array<i64: 1, 128>}, {transform_indices = @transform_3, window_bounds = array<i64: 1, 8, 16, 128>}]} {
    %c8_i32 = arith.constant 8 : i32
    %0 = arith.muli %arg1, %c8_i32 : i32
    %cst = arith.constant 0.000000e+00 : f32
    %1 = vector.broadcast %cst : f32 to vector<128x128xf32>
    %c0 = arith.constant 0 : index
    %c0_0 = arith.constant 0 : index
    %2 = vector.load %arg6[%c0, %c0_0] : memref<128x128xf32, #tpu.memory_space<vmem>>, vector<128x128xf32>
    tpu.vector_store %arg6[%c0, %c0_0], %1 {strides = array<i32>} : memref<128x128xf32, #tpu.memory_space<vmem>>, vector<128x128xf32>,
    %c0_i32 = arith.constant 0 : i32
    %3 = arith.addi %0, %c0_i32 : i32
    %c0_1 = arith.constant 0 : index
    %4 = arith.index_cast %3 : i32 to index
    %c0_2 = arith.constant 0 : index
    %c0_3 = arith.constant 0 : index
    %5 = vector.load %arg2[%c0_1, %4, %c0_2, %c0_3] : memref<1x20x20x48xbf16, #tpu.memory_space<vmem>>, vector<1x8x16x48xbf16>
    %6 = vector.shape_cast %5 : vector<1x8x16x48xbf16> to vector<8x16x48xbf16>
    %c0_i32_4 = arith.constant 0 : i32
    %7 = arith.addi %0, %c0_i32_4 : i32
    %c0_5 = arith.constant 0 : index
    %8 = arith.index_cast %7 : i32 to index
    %c1 = arith.constant 1 : index
    %c0_6 = arith.constant 0 : index
    %9 = vector.load %arg2[%c0_5, %8, %c1, %c0_6] : memref<1x20x20x48xbf16, #tpu.memory_space<vmem>>, vector<1x8x16x48xbf16>
    %10 = vector.shape_cast %9 : vector<1x8x16x48xbf16> to vector<8x16x48xbf16>
    %c0_i32_7 = arith.constant 0 : i32
    %11 = arith.addi %0, %c0_i32_7 : i32
    %c0_8 = arith.constant 0 : index
    %12 = arith.index_cast %11 : i32 to index
    %c2 = arith.constant 2 : index
    %c0_9 = arith.constant 0 : index
    %13 = vector.load %arg2[%c0_8, %12, %c2, %c0_9] : memref<1x20x20x48xbf16, #tpu.memory_space<vmem>>, vector<1x8x16x48xbf16>
    %14 = vector.shape_cast %13 : vector<1x8x16x48xbf16> to vector<8x16x48xbf16>
    %c0_i32_10 = arith.constant 0 : i32
    %15 = arith.addi %0, %c0_i32_10 : i32
    %c0_11 = arith.constant 0 : index
    %16 = arith.index_cast %15 : i32 to index
    %c3 = arith.constant 3 : index
    %c0_12 = arith.constant 0 : index
    %17 = vector.load %arg2[%c0_11, %16, %c3, %c0_12] : memref<1x20x20x48xbf16, #tpu.memory_space<vmem>>, vector<1x8x16x48xbf16>
    %18 = vector.shape_cast %17 : vector<1x8x16x48xbf16> to vector<8x16x48xbf16>
    %c0_i32_13 = arith.constant 0 : i32
    %19 = arith.addi %0, %c0_i32_13 : i32
    %c0_14 = arith.constant 0 : index
    %20 = arith.index_cast %19 : i32 to index
    %c4 = arith.constant 4 : index
    %c0_15 = arith.constant 0 : index
    %21 = vector.load %arg2[%c0_14, %20, %c4, %c0_15] : memref<1x20x20x48xbf16, #tpu.memory_space<vmem>>, vector<1x8x16x48xbf16>
    %22 = vector.shape_cast %21 : vector<1x8x16x48xbf16> to vector<8x16x48xbf16>
    %23 = tpu.concatenate %6, %10, %14, %18, %22 in 2 : vector<8x16x48xbf16>, vector<8x16x48xbf16>, vector<8x16x48xbf16>, vector<8x16x48xbf16>, vector<8x16x48xbf16> -> vector<8x16x240xbf16>
    %24 = vector.shape_cast %23 : vector<8x16x240xbf16> to vector<128x240xbf16>
    %c0_16 = arith.constant 0 : index
    %c0_17 = arith.constant 0 : index
    %25 = vector.load %arg6[%c0_16, %c0_17] : memref<128x128xf32, #tpu.memory_space<vmem>>, vector<128x128xf32>
    %c0_18 = arith.constant 0 : index
    %c0_19 = arith.constant 0 : index
    %c0_20 = arith.constant 0 : index
    %26 = vector.load %arg3[%c0_18, %c0_19, %c0_20] : memref<5x240x128xbf16, #tpu.memory_space<vmem>>, vector<1x240x128xbf16>
    %27 = vector.shape_cast %26 : vector<1x240x128xbf16> to vector<240x128xbf16>
    %cst_21 = arith.constant dense<0.000000e+00> : vector<128x128xf32>
    %28 = tpu.matmul %24, %27, %cst_21 {dimension_numbers = #tpu.dot_dimension_numbers<[1], [0], [0], [1], [0, 0, 1, 1], [], []>} : vector<128x240xbf16>, vector<240x128xbf16>, vector<128x128xf32> -> vector<128x128xf32>
    %29 = arith.addf %25, %28 : vector<128x128xf32>
    %c0_22 = arith.constant 0 : index
    %c0_23 = arith.constant 0 : index
    %30 = vector.load %arg6[%c0_22, %c0_23] : memref<128x128xf32, #tpu.memory_space<vmem>>, vector<128x128xf32>
    tpu.vector_store %arg6[%c0_22, %c0_23], %29 {strides = array<i32>} : memref<128x128xf32, #tpu.memory_space<vmem>>, vector<128x128xf32>,
    %c1_i32 = arith.constant 1 : i32
    %31 = arith.addi %0, %c1_i32 : i32
    %c0_24 = arith.constant 0 : index
    %32 = arith.index_cast %31 : i32 to index
    %c0_25 = arith.constant 0 : index
    %c0_26 = arith.constant 0 : index
    %33 = vector.load %arg2[%c0_24, %32, %c0_25, %c0_26] : memref<1x20x20x48xbf16, #tpu.memory_space<vmem>>, vector<1x8x16x48xbf16>
    %34 = vector.shape_cast %33 : vector<1x8x16x48xbf16> to vector<8x16x48xbf16>
    %c1_i32_27 = arith.constant 1 : i32
    %35 = arith.addi %0, %c1_i32_27 : i32
    %c0_28 = arith.constant 0 : index
    %36 = arith.index_cast %35 : i32 to index
    %c1_29 = arith.constant 1 : index
    %c0_30 = arith.constant 0 : index
    %37 = vector.load %arg2[%c0_28, %36, %c1_29, %c0_30] : memref<1x20x20x48xbf16, #tpu.memory_space<vmem>>, vector<1x8x16x48xbf16>
    %38 = vector.shape_cast %37 : vector<1x8x16x48xbf16> to vector<8x16x48xbf16>
    %c1_i32_31 = arith.constant 1 : i32
    %39 = arith.addi %0, %c1_i32_31 : i32
    %c0_32 = arith.constant 0 : index
    %40 = arith.index_cast %39 : i32 to index
    %c2_33 = arith.constant 2 : index
    %c0_34 = arith.constant 0 : index
    %41 = vector.load %arg2[%c0_32, %40, %c2_33, %c0_34] : memref<1x20x20x48xbf16, #tpu.memory_space<vmem>>, vector<1x8x16x48xbf16>
    %42 = vector.shape_cast %41 : vector<1x8x16x48xbf16> to vector<8x16x48xbf16>
    %c1_i32_35 = arith.constant 1 : i32
    %43 = arith.addi %0, %c1_i32_35 : i32
    %c0_36 = arith.constant 0 : index
    %44 = arith.index_cast %43 : i32 to index
    %c3_37 = arith.constant 3 : index
    %c0_38 = arith.constant 0 : index
    %45 = vector.load %arg2[%c0_36, %44, %c3_37, %c0_38] : memref<1x20x20x48xbf16, #tpu.memory_space<vmem>>, vector<1x8x16x48xbf16>
    %46 = vector.shape_cast %45 : vector<1x8x16x48xbf16> to vector<8x16x48xbf16>
    %c1_i32_39 = arith.constant 1 : i32
    %47 = arith.addi %0, %c1_i32_39 : i32
    %c0_40 = arith.constant 0 : index
    %48 = arith.index_cast %47 : i32 to index
    %c4_41 = arith.constant 4 : index
    %c0_42 = arith.constant 0 : index
    %49 = vector.load %arg2[%c0_40, %48, %c4_41, %c0_42] : memref<1x20x20x48xbf16, #tpu.memory_space<vmem>>, vector<1x8x16x48xbf16>
    %50 = vector.shape_cast %49 : vector<1x8x16x48xbf16> to vector<8x16x48xbf16>
    %51 = tpu.concatenate %34, %38, %42, %46, %50 in 2 : vector<8x16x48xbf16>, vector<8x16x48xbf16>, vector<8x16x48xbf16>, vector<8x16x48xbf16>, vector<8x16x48xbf16> -> vector<8x16x240xbf16>
    %52 = vector.shape_cast %51 : vector<8x16x240xbf16> to vector<128x240xbf16>
    %c0_43 = arith.constant 0 : index
    %c0_44 = arith.constant 0 : index
    %53 = vector.load %arg6[%c0_43, %c0_44] : memref<128x128xf32, #tpu.memory_space<vmem>>, vector<128x128xf32>
    %c1_45 = arith.constant 1 : index
    %c0_46 = arith.constant 0 : index
    %c0_47 = arith.constant 0 : index
    %54 = vector.load %arg3[%c1_45, %c0_46, %c0_47] : memref<5x240x128xbf16, #tpu.memory_space<vmem>>, vector<1x240x128xbf16>
    %55 = vector.shape_cast %54 : vector<1x240x128xbf16> to vector<240x128xbf16>
    %cst_48 = arith.constant dense<0.000000e+00> : vector<128x128xf32>
    %56 = tpu.matmul %52, %55, %cst_48 {dimension_numbers = #tpu.dot_dimension_numbers<[1], [0], [0], [1], [0, 0, 1, 1], [], []>} : vector<128x240xbf16>, vector<240x128xbf16>, vector<128x128xf32> -> vector<128x128xf32>
    %57 = arith.addf %53, %56 : vector<128x128xf32>
    %c0_49 = arith.constant 0 : index
    %c0_50 = arith.constant 0 : index
    %58 = vector.load %arg6[%c0_49, %c0_50] : memref<128x128xf32, #tpu.memory_space<vmem>>, vector<128x128xf32>
    tpu.vector_store %arg6[%c0_49, %c0_50], %57 {strides = array<i32>} : memref<128x128xf32, #tpu.memory_space<vmem>>, vector<128x128xf32>,
    %c2_i32 = arith.constant 2 : i32
    %59 = arith.addi %0, %c2_i32 : i32
    %c0_51 = arith.constant 0 : index
    %60 = arith.index_cast %59 : i32 to index
    %c0_52 = arith.constant 0 : index
    %c0_53 = arith.constant 0 : index
    %61 = vector.load %arg2[%c0_51, %60, %c0_52, %c0_53] : memref<1x20x20x48xbf16, #tpu.memory_space<vmem>>, vector<1x8x16x48xbf16>
    %62 = vector.shape_cast %61 : vector<1x8x16x48xbf16> to vector<8x16x48xbf16>
    %c2_i32_54 = arith.constant 2 : i32
    %63 = arith.addi %0, %c2_i32_54 : i32
    %c0_55 = arith.constant 0 : index
    %64 = arith.index_cast %63 : i32 to index
    %c1_56 = arith.constant 1 : index
    %c0_57 = arith.constant 0 : index
    %65 = vector.load %arg2[%c0_55, %64, %c1_56, %c0_57] : memref<1x20x20x48xbf16, #tpu.memory_space<vmem>>, vector<1x8x16x48xbf16>
    %66 = vector.shape_cast %65 : vector<1x8x16x48xbf16> to vector<8x16x48xbf16>
    %c2_i32_58 = arith.constant 2 : i32
    %67 = arith.addi %0, %c2_i32_58 : i32
    %c0_59 = arith.constant 0 : index
    %68 = arith.index_cast %67 : i32 to index
    %c2_60 = arith.constant 2 : index
    %c0_61 = arith.constant 0 : index
    %69 = vector.load %arg2[%c0_59, %68, %c2_60, %c0_61] : memref<1x20x20x48xbf16, #tpu.memory_space<vmem>>, vector<1x8x16x48xbf16>
    %70 = vector.shape_cast %69 : vector<1x8x16x48xbf16> to vector<8x16x48xbf16>
    %c2_i32_62 = arith.constant 2 : i32
    %71 = arith.addi %0, %c2_i32_62 : i32
    %c0_63 = arith.constant 0 : index
    %72 = arith.index_cast %71 : i32 to index
    %c3_64 = arith.constant 3 : index
    %c0_65 = arith.constant 0 : index
    %73 = vector.load %arg2[%c0_63, %72, %c3_64, %c0_65] : memref<1x20x20x48xbf16, #tpu.memory_space<vmem>>, vector<1x8x16x48xbf16>
    %74 = vector.shape_cast %73 : vector<1x8x16x48xbf16> to vector<8x16x48xbf16>
    %c2_i32_66 = arith.constant 2 : i32
    %75 = arith.addi %0, %c2_i32_66 : i32
    %c0_67 = arith.constant 0 : index
    %76 = arith.index_cast %75 : i32 to index
    %c4_68 = arith.constant 4 : index
    %c0_69 = arith.constant 0 : index
    %77 = vector.load %arg2[%c0_67, %76, %c4_68, %c0_69] : memref<1x20x20x48xbf16, #tpu.memory_space<vmem>>, vector<1x8x16x48xbf16>
    %78 = vector.shape_cast %77 : vector<1x8x16x48xbf16> to vector<8x16x48xbf16>
    %79 = tpu.concatenate %62, %66, %70, %74, %78 in 2 : vector<8x16x48xbf16>, vector<8x16x48xbf16>, vector<8x16x48xbf16>, vector<8x16x48xbf16>, vector<8x16x48xbf16> -> vector<8x16x240xbf16>
    %80 = vector.shape_cast %79 : vector<8x16x240xbf16> to vector<128x240xbf16>
    %c0_70 = arith.constant 0 : index
    %c0_71 = arith.constant 0 : index
    %81 = vector.load %arg6[%c0_70, %c0_71] : memref<128x128xf32, #tpu.memory_space<vmem>>, vector<128x128xf32>
    %c2_72 = arith.constant 2 : index
    %c0_73 = arith.constant 0 : index
    %c0_74 = arith.constant 0 : index
    %82 = vector.load %arg3[%c2_72, %c0_73, %c0_74] : memref<5x240x128xbf16, #tpu.memory_space<vmem>>, vector<1x240x128xbf16>
    %83 = vector.shape_cast %82 : vector<1x240x128xbf16> to vector<240x128xbf16>
    %cst_75 = arith.constant dense<0.000000e+00> : vector<128x128xf32>
    %84 = tpu.matmul %80, %83, %cst_75 {dimension_numbers = #tpu.dot_dimension_numbers<[1], [0], [0], [1], [0, 0, 1, 1], [], []>} : vector<128x240xbf16>, vector<240x128xbf16>, vector<128x128xf32> -> vector<128x128xf32>
    %85 = arith.addf %81, %84 : vector<128x128xf32>
    %c0_76 = arith.constant 0 : index
    %c0_77 = arith.constant 0 : index
    %86 = vector.load %arg6[%c0_76, %c0_77] : memref<128x128xf32, #tpu.memory_space<vmem>>, vector<128x128xf32>
    tpu.vector_store %arg6[%c0_76, %c0_77], %85 {strides = array<i32>} : memref<128x128xf32, #tpu.memory_space<vmem>>, vector<128x128xf32>,
    %c3_i32 = arith.constant 3 : i32
    %87 = arith.addi %0, %c3_i32 : i32
    %c0_78 = arith.constant 0 : index
    %88 = arith.index_cast %87 : i32 to index
    %c0_79 = arith.constant 0 : index
    %c0_80 = arith.constant 0 : index
    %89 = vector.load %arg2[%c0_78, %88, %c0_79, %c0_80] : memref<1x20x20x48xbf16, #tpu.memory_space<vmem>>, vector<1x8x16x48xbf16>
    %90 = vector.shape_cast %89 : vector<1x8x16x48xbf16> to vector<8x16x48xbf16>
    %c3_i32_81 = arith.constant 3 : i32
    %91 = arith.addi %0, %c3_i32_81 : i32
    %c0_82 = arith.constant 0 : index
    %92 = arith.index_cast %91 : i32 to index
    %c1_83 = arith.constant 1 : index
    %c0_84 = arith.constant 0 : index
    %93 = vector.load %arg2[%c0_82, %92, %c1_83, %c0_84] : memref<1x20x20x48xbf16, #tpu.memory_space<vmem>>, vector<1x8x16x48xbf16>
    %94 = vector.shape_cast %93 : vector<1x8x16x48xbf16> to vector<8x16x48xbf16>
    %c3_i32_85 = arith.constant 3 : i32
    %95 = arith.addi %0, %c3_i32_85 : i32
    %c0_86 = arith.constant 0 : index
    %96 = arith.index_cast %95 : i32 to index
    %c2_87 = arith.constant 2 : index
    %c0_88 = arith.constant 0 : index
    %97 = vector.load %arg2[%c0_86, %96, %c2_87, %c0_88] : memref<1x20x20x48xbf16, #tpu.memory_space<vmem>>, vector<1x8x16x48xbf16>
    %98 = vector.shape_cast %97 : vector<1x8x16x48xbf16> to vector<8x16x48xbf16>
    %c3_i32_89 = arith.constant 3 : i32
    %99 = arith.addi %0, %c3_i32_89 : i32
    %c0_90 = arith.constant 0 : index
    %100 = arith.index_cast %99 : i32 to index
    %c3_91 = arith.constant 3 : index
    %c0_92 = arith.constant 0 : index
    %101 = vector.load %arg2[%c0_90, %100, %c3_91, %c0_92] : memref<1x20x20x48xbf16, #tpu.memory_space<vmem>>, vector<1x8x16x48xbf16>
    %102 = vector.shape_cast %101 : vector<1x8x16x48xbf16> to vector<8x16x48xbf16>
    %c3_i32_93 = arith.constant 3 : i32
    %103 = arith.addi %0, %c3_i32_93 : i32
    %c0_94 = arith.constant 0 : index
    %104 = arith.index_cast %103 : i32 to index
    %c4_95 = arith.constant 4 : index
    %c0_96 = arith.constant 0 : index
    %105 = vector.load %arg2[%c0_94, %104, %c4_95, %c0_96] : memref<1x20x20x48xbf16, #tpu.memory_space<vmem>>, vector<1x8x16x48xbf16>
    %106 = vector.shape_cast %105 : vector<1x8x16x48xbf16> to vector<8x16x48xbf16>
    %107 = tpu.concatenate %90, %94, %98, %102, %106 in 2 : vector<8x16x48xbf16>, vector<8x16x48xbf16>, vector<8x16x48xbf16>, vector<8x16x48xbf16>, vector<8x16x48xbf16> -> vector<8x16x240xbf16>
    %108 = vector.shape_cast %107 : vector<8x16x240xbf16> to vector<128x240xbf16>
    %c0_97 = arith.constant 0 : index
    %c0_98 = arith.constant 0 : index
    %109 = vector.load %arg6[%c0_97, %c0_98] : memref<128x128xf32, #tpu.memory_space<vmem>>, vector<128x128xf32>
    %c3_99 = arith.constant 3 : index
    %c0_100 = arith.constant 0 : index
    %c0_101 = arith.constant 0 : index
    %110 = vector.load %arg3[%c3_99, %c0_100, %c0_101] : memref<5x240x128xbf16, #tpu.memory_space<vmem>>, vector<1x240x128xbf16>
    %111 = vector.shape_cast %110 : vector<1x240x128xbf16> to vector<240x128xbf16>
    %cst_102 = arith.constant dense<0.000000e+00> : vector<128x128xf32>
    %112 = tpu.matmul %108, %111, %cst_102 {dimension_numbers = #tpu.dot_dimension_numbers<[1], [0], [0], [1], [0, 0, 1, 1], [], []>} : vector<128x240xbf16>, vector<240x128xbf16>, vector<128x128xf32> -> vector<128x128xf32>
    %113 = arith.addf %109, %112 : vector<128x128xf32>
    %c0_103 = arith.constant 0 : index
    %c0_104 = arith.constant 0 : index
    %114 = vector.load %arg6[%c0_103, %c0_104] : memref<128x128xf32, #tpu.memory_space<vmem>>, vector<128x128xf32>
    tpu.vector_store %arg6[%c0_103, %c0_104], %113 {strides = array<i32>} : memref<128x128xf32, #tpu.memory_space<vmem>>, vector<128x128xf32>,
    %c4_i32 = arith.constant 4 : i32
    %115 = arith.addi %0, %c4_i32 : i32
    %c0_105 = arith.constant 0 : index
    %116 = arith.index_cast %115 : i32 to index
    %c0_106 = arith.constant 0 : index
    %c0_107 = arith.constant 0 : index
    %117 = vector.load %arg2[%c0_105, %116, %c0_106, %c0_107] : memref<1x20x20x48xbf16, #tpu.memory_space<vmem>>, vector<1x8x16x48xbf16>
    %118 = vector.shape_cast %117 : vector<1x8x16x48xbf16> to vector<8x16x48xbf16>
    %c4_i32_108 = arith.constant 4 : i32
    %119 = arith.addi %0, %c4_i32_108 : i32
    %c0_109 = arith.constant 0 : index
    %120 = arith.index_cast %119 : i32 to index
    %c1_110 = arith.constant 1 : index
    %c0_111 = arith.constant 0 : index
    %121 = vector.load %arg2[%c0_109, %120, %c1_110, %c0_111] : memref<1x20x20x48xbf16, #tpu.memory_space<vmem>>, vector<1x8x16x48xbf16>
    %122 = vector.shape_cast %121 : vector<1x8x16x48xbf16> to vector<8x16x48xbf16>
    %c4_i32_112 = arith.constant 4 : i32
    %123 = arith.addi %0, %c4_i32_112 : i32
    %c0_113 = arith.constant 0 : index
    %124 = arith.index_cast %123 : i32 to index
    %c2_114 = arith.constant 2 : index
    %c0_115 = arith.constant 0 : index
    %125 = vector.load %arg2[%c0_113, %124, %c2_114, %c0_115] : memref<1x20x20x48xbf16, #tpu.memory_space<vmem>>, vector<1x8x16x48xbf16>
    %126 = vector.shape_cast %125 : vector<1x8x16x48xbf16> to vector<8x16x48xbf16>
    %c4_i32_116 = arith.constant 4 : i32
    %127 = arith.addi %0, %c4_i32_116 : i32
    %c0_117 = arith.constant 0 : index
    %128 = arith.index_cast %127 : i32 to index
    %c3_118 = arith.constant 3 : index
    %c0_119 = arith.constant 0 : index
    %129 = vector.load %arg2[%c0_117, %128, %c3_118, %c0_119] : memref<1x20x20x48xbf16, #tpu.memory_space<vmem>>, vector<1x8x16x48xbf16>
    %130 = vector.shape_cast %129 : vector<1x8x16x48xbf16> to vector<8x16x48xbf16>
    %c4_i32_120 = arith.constant 4 : i32
    %131 = arith.addi %0, %c4_i32_120 : i32
    %c0_121 = arith.constant 0 : index
    %132 = arith.index_cast %131 : i32 to index
    %c4_122 = arith.constant 4 : index
    %c0_123 = arith.constant 0 : index
    %133 = vector.load %arg2[%c0_121, %132, %c4_122, %c0_123] : memref<1x20x20x48xbf16, #tpu.memory_space<vmem>>, vector<1x8x16x48xbf16>
    %134 = vector.shape_cast %133 : vector<1x8x16x48xbf16> to vector<8x16x48xbf16>
    %135 = tpu.concatenate %118, %122, %126, %130, %134 in 2 : vector<8x16x48xbf16>, vector<8x16x48xbf16>, vector<8x16x48xbf16>, vector<8x16x48xbf16>, vector<8x16x48xbf16> -> vector<8x16x240xbf16>
    %136 = vector.shape_cast %135 : vector<8x16x240xbf16> to vector<128x240xbf16>
    %c0_124 = arith.constant 0 : index
    %c0_125 = arith.constant 0 : index
    %137 = vector.load %arg6[%c0_124, %c0_125] : memref<128x128xf32, #tpu.memory_space<vmem>>, vector<128x128xf32>
    %c4_126 = arith.constant 4 : index
    %c0_127 = arith.constant 0 : index
    %c0_128 = arith.constant 0 : index
    %138 = vector.load %arg3[%c4_126, %c0_127, %c0_128] : memref<5x240x128xbf16, #tpu.memory_space<vmem>>, vector<1x240x128xbf16>
    %139 = vector.shape_cast %138 : vector<1x240x128xbf16> to vector<240x128xbf16>
    %cst_129 = arith.constant dense<0.000000e+00> : vector<128x128xf32>
    %140 = tpu.matmul %136, %139, %cst_129 {dimension_numbers = #tpu.dot_dimension_numbers<[1], [0], [0], [1], [0, 0, 1, 1], [], []>} : vector<128x240xbf16>, vector<240x128xbf16>, vector<128x128xf32> -> vector<128x128xf32>
    %141 = arith.addf %137, %140 : vector<128x128xf32>
    %c0_130 = arith.constant 0 : index
    %c0_131 = arith.constant 0 : index
    %142 = vector.load %arg6[%c0_130, %c0_131] : memref<128x128xf32, #tpu.memory_space<vmem>>, vector<128x128xf32>
    tpu.vector_store %arg6[%c0_130, %c0_131], %141 {strides = array<i32>} : memref<128x128xf32, #tpu.memory_space<vmem>>, vector<128x128xf32>,
    %c0_132 = arith.constant 0 : index
    %c0_133 = arith.constant 0 : index
    %143 = vector.load %arg6[%c0_132, %c0_133] : memref<128x128xf32, #tpu.memory_space<vmem>>, vector<128x128xf32>
    %c0_134 = arith.constant 0 : index
    %c0_135 = arith.constant 0 : index
    %144 = vector.load %arg4[%c0_134, %c0_135] : memref<1x128xf32, #tpu.memory_space<vmem>>, vector<1x128xf32>
    %145 = vector.broadcast %144 : vector<1x128xf32> to vector<128x128xf32>
    %146 = arith.addf %143, %145 : vector<128x128xf32>
    %cst_136 = arith.constant 0.000000e+00 : f32
    %147 = vector.broadcast %cst_136 : f32 to vector<128x128xf32>
    %148 = arith.maximumf %146, %147 : vector<128x128xf32>
    %149 = vector.shape_cast %148 : vector<128x128xf32> to vector<8x16x128xf32>
    %150 = arith.truncf %149 : vector<8x16x128xf32> to vector<8x16x128xbf16>
    %c0_137 = arith.constant 0 : index
    %c0_138 = arith.constant 0 : index
    %c0_139 = arith.constant 0 : index
    %c0_140 = arith.constant 0 : index
    %151 = vector.load %arg5[%c0_137, %c0_138, %c0_139, %c0_140] : memref<1x8x16x128xbf16, #tpu.memory_space<vmem>>, vector<1x8x16x128xbf16>
    %152 = vector.shape_cast %151 : vector<1x8x16x128xbf16> to vector<8x16x128xbf16>
    %153 = vector.shape_cast %150 : vector<8x16x128xbf16> to vector<1x8x16x128xbf16>
    tpu.vector_store %arg5[%c0_137, %c0_138, %c0_139, %c0_140], %153 {strides = array<i32>} : memref<1x8x16x128xbf16, #tpu.memory_space<vmem>>, vector<1x8x16x128xbf16>,
    return
  }
  func.func @transform_0(%arg0: i32, %arg1: i32) -> (i32, i32, i32, i32) {
    %c0_i32 = arith.constant 0 : i32
    %c0_i32_0 = arith.constant 0 : i32
    %c0_i32_1 = arith.constant 0 : i32
    %c0_i32_2 = arith.constant 0 : i32
    return %arg0, %c0_i32, %c0_i32_0, %c0_i32_1 : i32, i32, i32, i32
  }
  func.func @transform_1(%arg0: i32, %arg1: i32) -> (i32, i32, i32) {
    %c0_i32 = arith.constant 0 : i32
    %c0_i32_0 = arith.constant 0 : i32
    %c0_i32_1 = arith.constant 0 : i32
    %c0_i32_2 = arith.constant 0 : i32
    return %c0_i32, %c0_i32_0, %c0_i32_1 : i32, i32, i32
  }
  func.func @transform_2(%arg0: i32, %arg1: i32) -> (i32, i32) {
    %c0_i32 = arith.constant 0 : i32
    %c0_i32_0 = arith.constant 0 : i32
    %c0_i32_1 = arith.constant 0 : i32
    return %c0_i32, %c0_i32_0 : i32, i32
  }
  func.func @transform_3(%arg0: i32, %arg1: i32) -> (i32, i32, i32, i32) {
    %c0_i32 = arith.constant 0 : i32
    %c0_i32_0 = arith.constant 0 : i32
    %c0_i32_1 = arith.constant 0 : i32
    return %arg0, %arg1, %c0_i32, %c0_i32_0 : i32, i32, i32, i32
  }
}

</mosaic_0001>

<llo_original>
// kernel: inception_a_forward.4
$region0: #{inception_a_forward.4}
  #allocation0 [shape = 'u32[]', space=smem, size = 0x4, offset = 0x4, fixed_abs, tag = 'smem constant byte address 0x4 - core index']
  #allocation1 [shape = 'u32[144,128]{1,0:T(1,128)}', space=vmem, size = 0x12000, scoped, tag = 'internal scratch']
  #allocation2 [shape = 'f32[128,256]{1,0:T(8,128)}', space=vmem, size = 0x20000, scoped, tag = 'scratch operand']
  %s0 = inlined_call_operand.vmem [shape: bf16[2,18,18,16], index: 0, kind: input, shape index: {}]
  %s1 = inlined_call_operand.vmem [shape: bf16[16,256], index: 1, kind: input, shape index: {}]
  %s2 = inlined_call_operand.vmem [shape: bf16[16,256], index: 2, kind: input, shape index: {}]
  %s3 = inlined_call_operand.vmem [shape: f32[1,256], index: 3, kind: input, shape index: {}]
  %s4 = inlined_call_operand.vmem [shape: bf16[2,16,16,256], index: 4, kind: output, shape index: {}]
  %s5 = sld [smem:[#allocation0]]
  $region49: #{inception_a_forward.4} parent=0
    _
  %s7 = ssub.s32 1, %s5
  %s8 = scalar_select 0, %s7, %s5
  loop: start=0, step=1, limit=6
  $region2: #{inception_a_forward.4} parent=0 // loop_pre_header
    _
  $region3: #{inception_a_forward.4} parent=0 // loop_header
    %s10 = sphi 0, %s14
    %p11 = scmp.ge.s32.totalorder %s10, 6
    %s17 = sphi 0, %s29
    %s18 = sphi 0, %s25
    %s19 = sphi 0, %s17
    %s20 = sphi 0, %s18
    %s21 = sphi 0, %s19
    %s22 = sphi 0, %s20
    %s32 = sphi 0, %s34
    %s35 = sphi 0, %s32
    %s36 = sphi 0, %s35
    %s52 = sphi 0, %s36
    %s56 = sphi 0, %s56
    %s58 = sphi 0, %s56
    %s59 = sphi 0, %s58
    %s73 = sphi 0, %s59
    %s77 = sphi 0, %s77
    %s79 = sphi 0, %s77
    %s80 = sphi 0, %s79
    %s94 = sphi 0, %s80
    %s98 = sphi 0, %s98
    %s100 = sphi 0, %s98
    %s101 = sphi 0, %s100
    %s115 = sphi 0, %s101
    %s123 = sphi 0, %s125
    %s126 = sphi 0, %s123
    %s127 = sphi 0, %s126
    %s143 = sphi 0, %s127
  $region4: #{inception_a_forward.4} parent=0 // loop_header_branch
    %13 = sbr.rel (%p11) target = $region8
  $region5: #{inception_a_forward.4} parent=0 // loop_body
    %s15 = ssub.s32 %s10, 1
    %s16 = ssub.s32 %s10, 2
    %s23 = sadd.s32 1, %s18
    %p24 = scmp.ge.s32.totalorder %s23, 2
    %s25 = scalar_select %p24, 0, %s23
    %s26 = sadd.s32 1, %s17
    %s27 = scalar_select %p24, %s26, %s17
    %p28 = scmp.ge.s32.totalorder %s27, 2
    %s29 = scalar_select %p28, 0, %s27
    %s30 = ssub.s32 %s17, %s29
    %p31 = scmp.eq.s32.totalorder %s30, 0
    %s33 = sadd.s32 %s32, 1
    %s34 = scalar_select %p31, %s32, %s33
    %p37 = pneg %p31
    %p38 = scmp.eq.s32.totalorder %s10, 3
    %p39 = por %p37, %p38
    %p40 = scmp.ne.s32.totalorder %s32, %s35
    %p41 = scmp.eq.s32.totalorder %s10, 0
    %p42 = por %p40, %p41
    %p43 = scmp.ne.s32.totalorder %s32, %s35
    %p44 = scmp.eq.s32.totalorder %s15, 3
    %p45 = por %p43, %p44
    %p46 = scmp.ne.s32.totalorder %s35, %s36
    %p47 = scmp.eq.s32.totalorder %s15, 0
    %p48 = por %p46, %p47
    %p49 = scmp.ne.s32.totalorder %s35, %s36
    %p50 = scmp.eq.s32.totalorder %s16, 3
    %p51 = por %p49, %p50
    %p53 = scmp.ne.s32.totalorder %s36, %s52
    %p54 = scmp.eq.s32.totalorder %s16, 0
    %p55 = por %p53, %p54
    %s57 = sadd.s32 %s56, 1
    %p60 = scmp.eq.s32.totalorder %s10, 3
    %p61 = scmp.ne.s32.totalorder %s56, %s58
    %p62 = scmp.eq.s32.totalorder %s10, 0
    %p63 = por %p61, %p62
    %p64 = scmp.ne.s32.totalorder %s56, %s58
    %p65 = scmp.eq.s32.totalorder %s15, 3
    %p66 = por %p64, %p65
    %p67 = scmp.ne.s32.totalorder %s58, %s59
    %p68 = scmp.eq.s32.totalorder %s15, 0
    %p69 = por %p67, %p68
    %p70 = scmp.ne.s32.totalorder %s58, %s59
    %p71 = scmp.eq.s32.totalorder %s16, 3
    %p72 = por %p70, %p71
    %p74 = scmp.ne.s32.totalorder %s59, %s73
    %p75 = scmp.eq.s32.totalorder %s16, 0
    %p76 = por %p74, %p75
    %s78 = sadd.s32 %s77, 1
    %p81 = scmp.eq.s32.totalorder %s10, 3
    %p82 = scmp.ne.s32.totalorder %s77, %s79
    %p83 = scmp.eq.s32.totalorder %s10, 0
    %p84 = por %p82, %p83
    %p85 = scmp.ne.s32.totalorder %s77, %s79
    %p86 = scmp.eq.s32.totalorder %s15, 3
    %p87 = por %p85, %p86
    %p88 = scmp.ne.s32.totalorder %s79, %s80
    %p89 = scmp.eq.s32.totalorder %s15, 0
    %p90 = por %p88, %p89
    %p91 = scmp.ne.s32.totalorder %s79, %s80
    %p92 = scmp.eq.s32.totalorder %s16, 3
    %p93 = por %p91, %p92
    %p95 = scmp.ne.s32.totalorder %s80, %s94
    %p96 = scmp.eq.s32.totalorder %s16, 0
    %p97 = por %p95, %p96
    %s99 = sadd.s32 %s98, 1
    %p102 = scmp.eq.s32.totalorder %s10, 3
    %p103 = scmp.ne.s32.totalorder %s98, %s100
    %p104 = scmp.eq.s32.totalorder %s10, 0
    %p105 = por %p103, %p104
    %p106 = scmp.ne.s32.totalorder %s98, %s100
    %p107 = scmp.eq.s32.totalorder %s15, 3
    %p108 = por %p106, %p107
    %p109 = scmp.ne.s32.totalorder %s100, %s101
    %p110 = scmp.eq.s32.totalorder %s15, 0
    %p111 = por %p109, %p110
    %p112 = scmp.ne.s32.totalorder %s100, %s101
    %p113 = scmp.eq.s32.totalorder %s16, 3
    %p114 = por %p112, %p113
    %p116 = scmp.ne.s32.totalorder %s101, %s115
    %p117 = scmp.eq.s32.totalorder %s16, 0
    %p118 = por %p116, %p117
    %s119 = ssub.s32 %s17, %s29
    %s120 = ssub.s32 %s18, %s25
    %s121 = sor.u32 %s119, %s120
    %p122 = scmp.eq.s32.totalorder %s121, 0
    %s124 = sadd.s32 %s123, 1
    %s125 = scalar_select %p122, %s123, %s124
    %p128 = pneg %p122
    %p129 = scmp.eq.s32.totalorder %s10, 3
    %p130 = por %p128, %p129
    %p131 = scmp.ne.s32.totalorder %s123, %s126
    %p132 = scmp.eq.s32.totalorder %s10, 0
    %p133 = por %p131, %p132
    %p134 = scmp.ne.s32.totalorder %s123, %s126
    %p135 = scmp.eq.s32.totalorder %s15, 3
    %p136 = por %p134, %p135
    %p137 = scmp.ne.s32.totalorder %s126, %s127
    %p138 = scmp.eq.s32.totalorder %s15, 0
    %p139 = por %p137, %p138
    %p140 = scmp.ne.s32.totalorder %s126, %s127
    %p141 = scmp.eq.s32.totalorder %s16, 3
    %p142 = por %p140, %p141
    %p144 = scmp.ne.s32.totalorder %s127, %s143
    %p145 = scmp.eq.s32.totalorder %s16, 0
    %p146 = por %p144, %p145
    %p147 = scmp.le.s32.totalorder 1, %s10
    %p148 = scmp.lt.s32.totalorder %s10, 5
    %p149 = pnand %p147, %p148
    %p150 = pneg %p149
    // Predicated region
    $region9: #{inception_a_forward.4} parent=5 // pred_check
      _
    $region10: #{inception_a_forward.4} parent=5 // pred_check_branch
      %152 = sbr.rel (%p149) target = $region12
    $region11: #{inception_a_forward.4} parent=5 // pred_region
      %s153 = ssub.s32 %s10, 1
      // Predicated region
      $region13: #{inception_a_forward.4} parent=11 // pred_check
        %p154 = pneg %p69
      $region14: #{inception_a_forward.4} parent=11 // pred_check_branch
        %156 = sbr.rel (%p154) target = $region16
      $region15: #{inception_a_forward.4} parent=11 // pred_region
        _
      $region16: #{inception_a_forward.4} parent=11 // pred_fallthru
        _
      // Predicated region
      $region17: #{inception_a_forward.4} parent=11 // pred_check
        %p157 = pneg %p90
      $region18: #{inception_a_forward.4} parent=11 // pred_check_branch
        %159 = sbr.rel (%p157) target = $region20
      $region19: #{inception_a_forward.4} parent=11 // pred_region
        _
      $region20: #{inception_a_forward.4} parent=11 // pred_fallthru
        _
      // Predicated region
      $region21: #{inception_a_forward.4} parent=11 // pred_check
        %p160 = pneg %p111
      $region22: #{inception_a_forward.4} parent=11 // pred_check_branch
        %162 = sbr.rel (%p160) target = $region24
      $region23: #{inception_a_forward.4} parent=11 // pred_region
        _
      $region24: #{inception_a_forward.4} parent=11 // pred_fallthru
        _
    $region12: #{inception_a_forward.4} parent=5 // pred_fallthru
      _
    %p163 = scmp.lt.s32.totalorder %s10, 4
    // Predicated region
    $region25: #{inception_a_forward.4} parent=5 // pred_check
      %p164 = pneg %p163
    $region26: #{inception_a_forward.4} parent=5 // pred_check_branch
      %166 = sbr.rel (%p164) target = $region28
    $region27: #{inception_a_forward.4} parent=5 // pred_region
      // Predicated region
      $region29: #{inception_a_forward.4} parent=27 // pred_check
        %p167 = pneg %p42
      $region30: #{inception_a_forward.4} parent=27 // pred_check_branch
        %169 = sbr.rel (%p167) target = $region32
      $region31: #{inception_a_forward.4} parent=27 // pred_region
        %p170 = scmp.lt.s32.totalorder %s17, 1
        %s171 = scalar_select %p170, %s17, 1
        %s172 = smul.addr %s171, 54
        %s173 = smul.addr %s172, 4
        %s174 = scalar_lea.vmem %s0, %s173
      $region32: #{inception_a_forward.4} parent=27 // pred_fallthru
        _
    $region28: #{inception_a_forward.4} parent=5 // pred_fallthru
      _
    %p175 = scmp.le.s32.totalorder 1, %s10
    %p176 = scmp.lt.s32.totalorder %s10, 5
    %p177 = pnand %p175, %p176
    %p178 = pneg %p177
    // Predicated region
    $region33: #{inception_a_forward.4} parent=5 // pred_check
      _
    $region34: #{inception_a_forward.4} parent=5 // pred_check_branch
      %180 = sbr.rel (%p177) target = $region36
    $region35: #{inception_a_forward.4} parent=5 // pred_region
      %s181 = ssub.s32 %s10, 1
      %p182 = scmp.lt.s32.totalorder %s19, 1
      %s183 = scalar_select %p182, %s19, 1
      %s184 = smul.addr %s183, 54
      %s185 = smul.addr %s184, 4
      %s186 = scalar_lea.vmem %s0, %s185
      %p187 = pneg %p48
      %p188 = pneg %p45
      %p189 = pneg %p69
      %p190 = pneg %p66
      %p191 = pneg %p90
      %p192 = pneg %p87
      %p193 = pneg %p111
      %p194 = pneg %p108
      %p195 = pneg %p139
      %p196 = pneg %p136
      %s197 = smul.u32 8, %s20
      %p198 = scmp.lt.s32.totalorder %s19, 1
      %s199 = scalar_select %p198, %s19, 1
      %p200 = scmp.lt.s32.totalorder %s197, 15
      %s201 = scalar_select %p200, %s197, 15
      %s202 = smul.addr %s201, 4
      %s203 = smul.addr %s199, 64
      %s204 = sadd.s32 %s202, %s203
      %s205 = smul.addr %s204, 4
      %s206 = scalar_lea.vmem %s4, %s205
      %p207 = scmp.lt.s32.totalorder %s19, 1
      %s208 = scalar_select %p207, %s19, 1
      %s209 = smul.addr %s208, 54
      %s210 = smul.addr %s209, 4
      %s211 = scalar_lea.vmem %s0, %s210
      %s212 = smul.u32 8, %s20
      %p213 = scmp.lt.s32.totalorder %s19, 1
      %s214 = scalar_select %p213, %s19, 1
      %p215 = scmp.lt.s32.totalorder %s212, 15
      %s216 = scalar_select %p215, %s212, 15
      %s217 = smul.addr %s216, 4
      %s218 = smul.addr %s214, 64
      %s219 = sadd.s32 %s217, %s218
      %s220 = smul.addr %s219, 4
      %s221 = scalar_lea.vmem %s4, %s220
      %s222 = smul.u32 8, %s20
      %s224 = smul.u32 %s20, 8
      %s225 = sadd.s32 %s224, 1
      %s226 = smul.u32 %s225, 3
      %s227 = smul.addr %s226, 4
      %s228 = scalar_lea.vmem %s211, %s227
      %v229 = vld [vmem:[%s228] sm:$0xf]
      %v230 = vld [vmem:[%s228 + $0x4] sm:$0xf]
      %v231 = vld [vmem:[%s228 + $0x8] sm:$0x1]
      %v232 = vld [vmem:[%s228 + $0xc] sm:$0xf]
      %v233 = vld [vmem:[%s228 + $0x10] sm:$0xf]
      %v234 = vld [vmem:[%s228 + $0x14] sm:$0x1]
      %v235 = vld [vmem:[%s228 + $0x18] sm:$0xf]
      %v236 = vld [vmem:[%s228 + $0x1c] sm:$0xf]
      %v237 = vld [vmem:[%s228 + $0x20] sm:$0x1]
      %v238 = vld [vmem:[%s228 + $0x24] sm:$0xf]
      %v239 = vld [vmem:[%s228 + $0x28] sm:$0xf]
      %v240 = vld [vmem:[%s228 + $0x2c] sm:$0x1]
      %v241 = vld [vmem:[%s228 + $0x30] sm:$0xf]
      %v242 = vld [vmem:[%s228 + $0x34] sm:$0xf]
      %v243 = vld [vmem:[%s228 + $0x38] sm:$0x1]
      %v244 = vld [vmem:[%s228 + $0x3c] sm:$0xf]
      %v245 = vld [vmem:[%s228 + $0x40] sm:$0xf]
      %v246 = vld [vmem:[%s228 + $0x44] sm:$0x1]
      %v247 = vld [vmem:[%s228 + $0x48] sm:$0xf]
      %v248 = vld [vmem:[%s228 + $0x4c] sm:$0xf]
      %v249 = vld [vmem:[%s228 + $0x50] sm:$0x1]
      %v250 = vld [vmem:[%s228 + $0x54] sm:$0xf]
      %v251 = vld [vmem:[%s228 + $0x58] sm:$0xf]
      %v252 = vld [vmem:[%s228 + $0x5c] sm:$0x1]
      %vm253 = vsmask.f32 3328
      %vm254 = vsmask.f32 7440
      %vm255 = vmor %vm253, %vm254
      %v257 = vshrl.u32 %v229, 16
      %v259 = vrot.slane %v257, 4
      %v260 = vshll.u32 %v229, 16
      %v262 = vrot.slane %v260, 5
      %v263 = vor.u32 %v259, %v262
      %v264 = vrot.slane %v263, 4
      %v266 = vshll.u32 %v230, 16
      %v268 = vrot.slane %v266, 5
      %v269 = vsel %vm255, %v264, %v268
      %v270 = vshrl.u32 %v230, 16
      %v272 = vrot.slane %v270, 4
      %v273 = vor.u32 %v272, %v268
      %v274 = vrot.slane %v273, 4
      %v276 = vshll.u32 %v231, 16
      %v278 = vrot.slane %v276, 5
      %v279 = vsel %vm255, %v274, %v278
      %v281 = vshrl.u32 %v232, 16
      %v283 = vrot.slane %v281, 4
      %v284 = vshll.u32 %v232, 16
      %v286 = vrot.slane %v284, 5
      %v287 = vor.u32 %v283, %v286
      %v288 = vrot.slane %v287, 4
      %v290 = vshll.u32 %v233, 16
      %v292 = vrot.slane %v290, 5
      %v293 = vsel %vm255, %v288, %v292
      %v294 = vshrl.u32 %v233, 16
      %v296 = vrot.slane %v294, 4
      %v297 = vor.u32 %v296, %v292
      %v298 = vrot.slane %v297, 4
      %v300 = vshll.u32 %v234, 16
      %v302 = vrot.slane %v300, 5
      %v303 = vsel %vm255, %v298, %v302
      %v305 = vshrl.u32 %v235, 16
      %v307 = vrot.slane %v305, 4
      %v308 = vshll.u32 %v235, 16
      %v310 = vrot.slane %v308, 5
      %v311 = vor.u32 %v307, %v310
      %v312 = vrot.slane %v311, 4
      %v314 = vshll.u32 %v236, 16
      %v316 = vrot.slane %v314, 5
      %v317 = vsel %vm255, %v312, %v316
      %v318 = vshrl.u32 %v236, 16
      %v320 = vrot.slane %v318, 4
      %v321 = vor.u32 %v320, %v316
      %v322 = vrot.slane %v321, 4
      %v324 = vshll.u32 %v237, 16
      %v326 = vrot.slane %v324, 5
      %v327 = vsel %vm255, %v322, %v326
      %v329 = vshrl.u32 %v238, 16
      %v331 = vrot.slane %v329, 4
      %v332 = vshll.u32 %v238, 16
      %v334 = vrot.slane %v332, 5
      %v335 = vor.u32 %v331, %v334
      %v336 = vrot.slane %v335, 4
      %v338 = vshll.u32 %v239, 16
      %v340 = vrot.slane %v338, 5
      %v341 = vsel %vm255, %v336, %v340
      %v342 = vshrl.u32 %v239, 16
      %v344 = vrot.slane %v342, 4
      %v345 = vor.u32 %v344, %v340
      %v346 = vrot.slane %v345, 4
      %v348 = vshll.u32 %v240, 16
      %v350 = vrot.slane %v348, 5
      %v351 = vsel %vm255, %v346, %v350
      %v353 = vshrl.u32 %v241, 16
      %v355 = vrot.slane %v353, 4
      %v356 = vshll.u32 %v241, 16
      %v358 = vrot.slane %v356, 5
      %v359 = vor.u32 %v355, %v358
      %v360 = vrot.slane %v359, 4
      %v362 = vshll.u32 %v242, 16
      %v364 = vrot.slane %v362, 5
      %v365 = vsel %vm255, %v360, %v364
      %v366 = vshrl.u32 %v242, 16
      %v368 = vrot.slane %v366, 4
      %v369 = vor.u32 %v368, %v364
      %v370 = vrot.slane %v369, 4
      %v372 = vshll.u32 %v243, 16
      %v374 = vrot.slane %v372, 5
      %v375 = vsel %vm255, %v370, %v374
      %v377 = vshrl.u32 %v244, 16
      %v379 = vrot.slane %v377, 4
      %v380 = vshll.u32 %v244, 16
      %v382 = vrot.slane %v380, 5
      %v383 = vor.u32 %v379, %v382
      %v384 = vrot.slane %v383, 4
      %v386 = vshll.u32 %v245, 16
      %v388 = vrot.slane %v386, 5
      %v389 = vsel %vm255, %v384, %v388
      %v390 = vshrl.u32 %v245, 16
      %v392 = vrot.slane %v390, 4
      %v393 = vor.u32 %v392, %v388
      %v394 = vrot.slane %v393, 4
      %v396 = vshll.u32 %v246, 16
      %v398 = vrot.slane %v396, 5
      %v399 = vsel %vm255, %v394, %v398
      %v401 = vshrl.u32 %v247, 16
      %v403 = vrot.slane %v401, 4
      %v404 = vshll.u32 %v247, 16
      %v406 = vrot.slane %v404, 5
      %v407 = vor.u32 %v403, %v406
      %v408 = vrot.slane %v407, 4
      %v410 = vshll.u32 %v248, 16
      %v412 = vrot.slane %v410, 5
      %v413 = vsel %vm255, %v408, %v412
      %v414 = vshrl.u32 %v248, 16
      %v416 = vrot.slane %v414, 4
      %v417 = vor.u32 %v416, %v412
      %v418 = vrot.slane %v417, 4
      %v420 = vshll.u32 %v249, 16
      %v422 = vrot.slane %v420, 5
      %v423 = vsel %vm255, %v418, %v422
      %v425 = vshrl.u32 %v250, 16
      %v427 = vrot.slane %v425, 4
      %v428 = vshll.u32 %v250, 16
      %v430 = vrot.slane %v428, 5
      %v431 = vor.u32 %v427, %v430
      %v432 = vrot.slane %v431, 4
      %v434 = vshll.u32 %v251, 16
      %v436 = vrot.slane %v434, 5
      %v437 = vsel %vm255, %v432, %v436
      %v438 = vshrl.u32 %v251, 16
      %v440 = vrot.slane %v438, 4
      %v441 = vor.u32 %v440, %v436
      %v442 = vrot.slane %v441, 4
      %v444 = vshll.u32 %v252, 16
      %v446 = vrot.slane %v444, 5
      %v447 = vsel %vm255, %v442, %v446
      %v448 = vld [vmem:[%s1] sm:$0xff]
      %v449 = vld [vmem:[%s1 + $0x8] sm:$0xff]
      %v450 = vunpack.c.l.b16 %v269
      %v451 = vunpack.c.l.b16 %v279
      %v452 = vunpack.c.l.b16 %v293
      %v453 = vunpack.c.l.b16 %v303
      %v454 = vunpack.c.l.b16 %v317
      %v455 = vunpack.c.l.b16 %v327
      %v456 = vunpack.c.l.b16 %v341
      %v457 = vunpack.c.l.b16 %v351
      %v458 = vunpack.c.l.b16 %v365
      %v459 = vunpack.c.l.b16 %v375
      %v460 = vunpack.c.l.b16 %v389
      %v461 = vunpack.c.l.b16 %v399
      %v462 = vunpack.c.l.b16 %v413
      %v463 = vunpack.c.l.b16 %v423
      %v464 = vunpack.c.l.b16 %v437
      %v465 = vunpack.c.l.b16 %v447
      %v466 = vpack.c.b16 %v451, %v450
      %v467 = vpack.c.b16 %v453, %v452
      %v468 = vpack.c.b16 %v455, %v454
      %v469 = vpack.c.b16 %v457, %v456
      %v470 = vpack.c.b16 %v459, %v458
      %v471 = vpack.c.b16 %v461, %v460
      %v472 = vpack.c.b16 %v463, %v462
      %v473 = vpack.c.b16 %v465, %v464
      %v476 = vunpack.c.l.b16 %v448
      %v477 = vunpack.c.h.b16 %v448
      %v478 = vunpack.c.l.b16 %v449
      %v479 = vunpack.c.h.b16 %v449
      %v480 = vpack.c.b16 %v478, %v476
      %v481 = vpack.c.b16 %v479, %v477
      %vm484 = vcmask 130048
      %v486 = vsel %vm484, %v466, 0
      %v489 = vsel %vm484, %v467, 0
      %v492 = vsel %vm484, %v468, 0
      %v495 = vsel %vm484, %v469, 0
      %v498 = vsel %vm484, %v470, 0
      %v501 = vsel %vm484, %v471, 0
      %v504 = vsel %vm484, %v472, 0
      %v507 = vsel %vm484, %v473, 0
      %509 = vmatprep.subr.bf16.mxu0 0
      %510 = vmatpush1.bf16.msra.mxu0 0
      %511 = vmatprep.subr.bf16.mxu0 0
      %512 = vmatpush1.bf16.msra.mxu0 0
      %513 = vmatprep.subr.bf16.mxu0 0
      %514 = vmatpush1.bf16.msra.mxu0 0
      %515 = vmatprep.subr.bf16.mxu0 0
      %516 = vmatpush1.bf16.msra.mxu0 0
      %517 = vmatprep.subr.bf16.mxu0 0
      %518 = vmatpush1.bf16.msra.mxu0 0
      %519 = vmatprep.subr.bf16.mxu0 0
      %520 = vmatpush1.bf16.msra.mxu0 0
      %521 = vmatprep.subr.bf16.mxu0 0
      %522 = vmatpush1.bf16.msra.mxu0 0
      %523 = vmatprep.subr.bf16.mxu0 %v481
      %524 = vmatpush1.bf16.msra.mxu0 %v480
      %525 = vmatprep.subr.bf16.mxu0 0
      %526 = vmatpush2.bf16.msra.mxu0 0
      %527 = vmatprep.subr.bf16.mxu0 0
      %528 = vmatpush2.bf16.msra.mxu0 0
      %529 = vmatprep.subr.bf16.mxu0 0
      %530 = vmatpush2.bf16.msra.mxu0 0
      %531 = vmatprep.subr.bf16.mxu0 0
      %532 = vmatpush2.bf16.msra.mxu0 0
      %533 = vmatprep.subr.bf16.mxu0 0
      %534 = vmatpush2.bf16.msra.mxu0 0
      %535 = vmatprep.subr.bf16.mxu0 0
      %536 = vmatpush2.bf16.msra.mxu0 0
      %537 = vmatprep.subr.bf16.mxu0 0
      %538 = vmatpush2.bf16.msra.mxu0 0
      %539 = vmatprep.subr.bf16.mxu0 0
      %540 = vmatpush2.bf16.msra.mxu0 0
      %541 = vmatprep.mubr.bf16.mxu0 0
      %542 = vmatmul.mubr.bf16.gmra.mxu0 %v486
      %v543 = vpop.f32.mrf.mxu0
      %v544 = vadd.f32 0.0, %v543
      %v545 = vpop.f32.mrf.mxu0
      %v546 = vadd.f32 0.0, %v545
      %v547 = vpop.f32.mrf.mxu0
      %v548 = vadd.f32 0.0, %v547
      %v549 = vpop.f32.mrf.mxu0
      %v550 = vadd.f32 0.0, %v549
      %551 = vmatprep.mubr.bf16.mxu0 0
      %552 = vmatmul.mubr.bf16.gmra.mxu0 %v489
      %v553 = vpop.f32.mrf.mxu0
      %v554 = vadd.f32 0.0, %v553
      %v555 = vpop.f32.mrf.mxu0
      %v556 = vadd.f32 0.0, %v555
      %v557 = vpop.f32.mrf.mxu0
      %v558 = vadd.f32 0.0, %v557
      %v559 = vpop.f32.mrf.mxu0
      %v560 = vadd.f32 0.0, %v559
      %561 = vmatprep.mubr.bf16.mxu0 0
      %562 = vmatmul.mubr.bf16.gmra.mxu0 %v492
      %v563 = vpop.f32.mrf.mxu0
      %v564 = vadd.f32 0.0, %v563
      %v565 = vpop.f32.mrf.mxu0
      %v566 = vadd.f32 0.0, %v565
      %v567 = vpop.f32.mrf.mxu0
      %v568 = vadd.f32 0.0, %v567
      %v569 = vpop.f32.mrf.mxu0
      %v570 = vadd.f32 0.0, %v569
      %571 = vmatprep.mubr.bf16.mxu0 0
      %572 = vmatmul.mubr.bf16.gmra.mxu0 %v495
      %v573 = vpop.f32.mrf.mxu0
      %v574 = vadd.f32 0.0, %v573
      %v575 = vpop.f32.mrf.mxu0
      %v576 = vadd.f32 0.0, %v575
      %v577 = vpop.f32.mrf.mxu0
      %v578 = vadd.f32 0.0, %v577
      %v579 = vpop.f32.mrf.mxu0
      %v580 = vadd.f32 0.0, %v579
      %581 = vmatprep.mubr.bf16.mxu0 0
      %582 = vmatmul.mubr.bf16.gmra.mxu0 %v498
      %v583 = vpop.f32.mrf.mxu0
      %v584 = vadd.f32 0.0, %v583
      %v585 = vpop.f32.mrf.mxu0
      %v586 = vadd.f32 0.0, %v585
      %v587 = vpop.f32.mrf.mxu0
      %v588 = vadd.f32 0.0, %v587
      %v589 = vpop.f32.mrf.mxu0
      %v590 = vadd.f32 0.0, %v589
      %591 = vmatprep.mubr.bf16.mxu0 0
      %592 = vmatmul.mubr.bf16.gmra.mxu0 %v501
      %v593 = vpop.f32.mrf.mxu0
      %v594 = vadd.f32 0.0, %v593
      %v595 = vpop.f32.mrf.mxu0
      %v596 = vadd.f32 0.0, %v595
      %v597 = vpop.f32.mrf.mxu0
      %v598 = vadd.f32 0.0, %v597
      %v599 = vpop.f32.mrf.mxu0
      %v600 = vadd.f32 0.0, %v599
      %601 = vmatprep.mubr.bf16.mxu0 0
      %602 = vmatmul.mubr.bf16.gmra.mxu0 %v504
      %v603 = vpop.f32.mrf.mxu0
      %v604 = vadd.f32 0.0, %v603
      %v605 = vpop.f32.mrf.mxu0
      %v606 = vadd.f32 0.0, %v605
      %v607 = vpop.f32.mrf.mxu0
      %v608 = vadd.f32 0.0, %v607
      %v609 = vpop.f32.mrf.mxu0
      %v610 = vadd.f32 0.0, %v609
      %611 = vmatprep.mubr.bf16.mxu0 0
      %612 = vmatmul.mubr.bf16.gmra.mxu0 %v507
      %v613 = vpop.f32.mrf.mxu0
      %v614 = vadd.f32 0.0, %v613
      %v615 = vpop.f32.mrf.mxu0
      %v616 = vadd.f32 0.0, %v615
      %v617 = vpop.f32.mrf.mxu0
      %v618 = vadd.f32 0.0, %v617
      %v619 = vpop.f32.mrf.mxu0
      %v620 = vadd.f32 0.0, %v619
      %621 = vdwg.mxu0
      %622 = vst [vmem:[#allocation2] sm:$0xff] %v544
      %623 = vst [vmem:[#allocation2 + $0x8] sm:$0xff] %v546
      %624 = vst [vmem:[#allocation2 + $0x10] sm:$0xff] %v548
      %625 = vst [vmem:[#allocation2 + $0x18] sm:$0xff] %v550
      %626 = vst [vmem:[#allocation2 + $0x20] sm:$0xff] %v554
      %627 = vst [vmem:[#allocation2 + $0x28] sm:$0xff] %v556
      %628 = vst [vmem:[#allocation2 + $0x30] sm:$0xff] %v558
      %629 = vst [vmem:[#allocation2 + $0x38] sm:$0xff] %v560
      %630 = vst [vmem:[#allocation2 + $0x40] sm:$0xff] %v564
      %631 = vst [vmem:[#allocation2 + $0x48] sm:$0xff] %v566
      %632 = vst [vmem:[#allocation2 + $0x50] sm:$0xff] %v568
      %633 = vst [vmem:[#allocation2 + $0x58] sm:$0xff] %v570
      %634 = vst [vmem:[#allocation2 + $0x60] sm:$0xff] %v574
      %635 = vst [vmem:[#allocation2 + $0x68] sm:$0xff] %v576
      %636 = vst [vmem:[#allocation2 + $0x70] sm:$0xff] %v578
      %637 = vst [vmem:[#allocation2 + $0x78] sm:$0xff] %v580
      %638 = vst [vmem:[#allocation2 + $0x80] sm:$0xff] %v584
      %639 = vst [vmem:[#allocation2 + $0x88] sm:$0xff] %v586
      %640 = vst [vmem:[#allocation2 + $0x90] sm:$0xff] %v588
      %641 = vst [vmem:[#allocation2 + $0x98] sm:$0xff] %v590
      %642 = vst [vmem:[#allocation2 + $0xa0] sm:$0xff] %v594
      %643 = vst [vmem:[#allocation2 + $0xa8] sm:$0xff] %v596
      %644 = vst [vmem:[#allocation2 + $0xb0] sm:$0xff] %v598
      %645 = vst [vmem:[#allocation2 + $0xb8] sm:$0xff] %v600
      %646 = vst [vmem:[#allocation2 + $0xc0] sm:$0xff] %v604
      %647 = vst [vmem:[#allocation2 + $0xc8] sm:$0xff] %v606
      %648 = vst [vmem:[#allocation2 + $0xd0] sm:$0xff] %v608
      %649 = vst [vmem:[#allocation2 + $0xd8] sm:$0xff] %v610
      %650 = vst [vmem:[#allocation2 + $0xe0] sm:$0xff] %v614
      %651 = vst [vmem:[#allocation2 + $0xe8] sm:$0xff] %v616
      %652 = vst [vmem:[#allocation2 + $0xf0] sm:$0xff] %v618
      %653 = vst [vmem:[#allocation2 + $0xf8] sm:$0xff] %v620
      %s654 = smul.u32 %s224, 3
      %s655 = smul.addr %s654, 4
      %s656 = scalar_lea.vmem %s211, %s655
      %v657 = vld [vmem:[%s656] sm:$0xf]
      %v658 = vld [vmem:[%s656 + $0x4] sm:$0xf]
      %v659 = vld [vmem:[%s656 + $0xc] sm:$0xf]
      %v660 = vld [vmem:[%s656 + $0x10] sm:$0xf]
      %v661 = vld [vmem:[%s656 + $0x18] sm:$0xf]
      %v662 = vld [vmem:[%s656 + $0x1c] sm:$0xf]
      %v663 = vld [vmem:[%s656 + $0x24] sm:$0xf]
      %v664 = vld [vmem:[%s656 + $0x28] sm:$0xf]
      %v665 = vld [vmem:[%s656 + $0x30] sm:$0xf]
      %v666 = vld [vmem:[%s656 + $0x34] sm:$0xf]
      %v667 = vld [vmem:[%s656 + $0x3c] sm:$0xf]
      %v668 = vld [vmem:[%s656 + $0x40] sm:$0xf]
      %v669 = vld [vmem:[%s656 + $0x48] sm:$0xf]
      %v670 = vld [vmem:[%s656 + $0x4c] sm:$0xf]
      %v671 = vld [vmem:[%s656 + $0x54] sm:$0xf]
      %v672 = vld [vmem:[%s656 + $0x58] sm:$0xf]
      %v673 = vunpack.c.l.bf16 %v657
      %v674 = vunpack.c.l.bf16 %v658
      %v675 = vunpack.c.l.bf16 %v659
      %v676 = vunpack.c.l.bf16 %v660
      %v677 = vunpack.c.l.bf16 %v661
      %v678 = vunpack.c.l.bf16 %v662
      %v679 = vunpack.c.l.bf16 %v663
      %v680 = vunpack.c.l.bf16 %v664
      %v681 = vunpack.c.l.bf16 %v665
      %v682 = vunpack.c.l.bf16 %v666
      %v683 = vunpack.c.l.bf16 %v667
      %v684 = vunpack.c.l.bf16 %v668
      %v685 = vunpack.c.l.bf16 %v669
      %v686 = vunpack.c.l.bf16 %v670
      %v687 = vunpack.c.l.bf16 %v671
      %v688 = vunpack.c.l.bf16 %v672
      %v689 = vadd.f32 %v673, 0.0
      %v690 = vadd.f32 %v674, 0.0
      %v691 = vadd.f32 %v675, 0.0
      %v692 = vadd.f32 %v676, 0.0
      %v693 = vadd.f32 %v677, 0.0
      %v694 = vadd.f32 %v678, 0.0
      %v695 = vadd.f32 %v679, 0.0
      %v696 = vadd.f32 %v680, 0.0
      %v697 = vadd.f32 %v681, 0.0
      %v698 = vadd.f32 %v682, 0.0
      %v699 = vadd.f32 %v683, 0.0
      %v700 = vadd.f32 %v684, 0.0
      %v701 = vadd.f32 %v685, 0.0
      %v702 = vadd.f32 %v686, 0.0
      %v703 = vadd.f32 %v687, 0.0
      %v704 = vadd.f32 %v688, 0.0
      %v705 = vld [vmem:[%s656 + $0x8] sm:$0x1]
      %v706 = vld [vmem:[%s656 + $0x14] sm:$0x1]
      %v707 = vld [vmem:[%s656 + $0x20] sm:$0x1]
      %v708 = vld [vmem:[%s656 + $0x2c] sm:$0x1]
      %v709 = vld [vmem:[%s656 + $0x38] sm:$0x1]
      %v710 = vld [vmem:[%s656 + $0x44] sm:$0x1]
      %v711 = vld [vmem:[%s656 + $0x50] sm:$0x1]
      %v712 = vld [vmem:[%s656 + $0x5c] sm:$0x1]
      %v713 = vunpack.c.l.bf16 %v705
      %v714 = vunpack.c.l.bf16 %v706
      %v715 = vunpack.c.l.bf16 %v707
      %v716 = vunpack.c.l.bf16 %v708
      %v717 = vunpack.c.l.bf16 %v709
      %v718 = vunpack.c.l.bf16 %v710
      %v719 = vunpack.c.l.bf16 %v711
      %v720 = vunpack.c.l.bf16 %v712
      %vm745 = vcmask 1046528
      %v746 = vrot.slane %v673, 1
      %v747 = vrot.slane %v674, 1
      %v748 = vsel %vm745, %v746, %v747
      %v749 = vrot.slane %v713, 1
      %v750 = vsel %vm745, %v747, %v749
      %v751 = vrot.slane %v675, 1
      %v752 = vrot.slane %v676, 1
      %v753 = vsel %vm745, %v751, %v752
      %v754 = vrot.slane %v714, 1
      %v755 = vsel %vm745, %v752, %v754
      %v756 = vrot.slane %v677, 1
      %v757 = vrot.slane %v678, 1
      %v758 = vsel %vm745, %v756, %v757
      %v759 = vrot.slane %v715, 1
      %v760 = vsel %vm745, %v757, %v759
      %v761 = vrot.slane %v679, 1
      %v762 = vrot.slane %v680, 1
      %v763 = vsel %vm745, %v761, %v762
      %v764 = vrot.slane %v716, 1
      %v765 = vsel %vm745, %v762, %v764
      %v766 = vrot.slane %v681, 1
      %v767 = vrot.slane %v682, 1
      %v768 = vsel %vm745, %v766, %v767
      %v769 = vrot.slane %v717, 1
      %v770 = vsel %vm745, %v767, %v769
      %v771 = vrot.slane %v683, 1
      %v772 = vrot.slane %v684, 1
      %v773 = vsel %vm745, %v771, %v772
      %v774 = vrot.slane %v718, 1
      %v775 = vsel %vm745, %v772, %v774
      %v776 = vrot.slane %v685, 1
      %v777 = vrot.slane %v686, 1
      %v778 = vsel %vm745, %v776, %v777
      %v779 = vrot.slane %v719, 1
      %v780 = vsel %vm745, %v777, %v779
      %v781 = vrot.slane %v687, 1
      %v782 = vrot.slane %v688, 1
      %v783 = vsel %vm745, %v781, %v782
      %v784 = vrot.slane %v720, 1
      %v785 = vsel %vm745, %v782, %v784
      %v802 = vadd.f32 %v689, %v748
      %v803 = vadd.f32 %v690, %v750
      %v804 = vadd.f32 %v691, %v753
      %v805 = vadd.f32 %v692, %v755
      %v806 = vadd.f32 %v693, %v758
      %v807 = vadd.f32 %v694, %v760
      %v808 = vadd.f32 %v695, %v763
      %v809 = vadd.f32 %v696, %v765
      %v810 = vadd.f32 %v697, %v768
      %v811 = vadd.f32 %v698, %v770
      %v812 = vadd.f32 %v699, %v773
      %v813 = vadd.f32 %v700, %v775
      %v814 = vadd.f32 %v701, %v778
      %v815 = vadd.f32 %v702, %v780
      %v816 = vadd.f32 %v703, %v783
      %v817 = vadd.f32 %v704, %v785
      %v818 = vld [vmem:[%s656] sm:$0xe]
      %v819 = vld [vmem:[%s656 + $0xc] sm:$0xe]
      %v820 = vld [vmem:[%s656 + $0x18] sm:$0xe]
      %v821 = vld [vmem:[%s656 + $0x24] sm:$0xe]
      %v822 = vld [vmem:[%s656 + $0x30] sm:$0xe]
      %v823 = vld [vmem:[%s656 + $0x3c] sm:$0xe]
      %v824 = vld [vmem:[%s656 + $0x48] sm:$0xe]
      %v825 = vld [vmem:[%s656 + $0x54] sm:$0xe]
      %v826 = vunpack.c.l.bf16 %v818
      %v827 = vunpack.c.l.bf16 %v819
      %v828 = vunpack.c.l.bf16 %v820
      %v829 = vunpack.c.l.bf16 %v821
      %v830 = vunpack.c.l.bf16 %v822
      %v831 = vunpack.c.l.bf16 %v823
      %v832 = vunpack.c.l.bf16 %v824
      %v833 = vunpack.c.l.bf16 %v825
      %vm842 = vcmask 1045504
      %v843 = vrot.slane %v826, 2
      %v844 = vrot.slane %v674, 2
      %v845 = vsel %vm842, %v843, %v844
      %v846 = vrot.slane %v713, 2
      %v847 = vsel %vm842, %v844, %v846
      %v848 = vrot.slane %v827, 2
      %v849 = vrot.slane %v676, 2
      %v850 = vsel %vm842, %v848, %v849
      %v851 = vrot.slane %v714, 2
      %v852 = vsel %vm842, %v849, %v851
      %v853 = vrot.slane %v828, 2
      %v854 = vrot.slane %v678, 2
      %v855 = vsel %vm842, %v853, %v854
      %v856 = vrot.slane %v715, 2
      %v857 = vsel %vm842, %v854, %v856
      %v858 = vrot.slane %v829, 2
      %v859 = vrot.slane %v680, 2
      %v860 = vsel %vm842, %v858, %v859
      %v861 = vrot.slane %v716, 2
      %v862 = vsel %vm842, %v859, %v861
      %v863 = vrot.slane %v830, 2
      %v864 = vrot.slane %v682, 2
      %v865 = vsel %vm842, %v863, %v864
      %v866 = vrot.slane %v717, 2
      %v867 = vsel %vm842, %v864, %v866
      %v868 = vrot.slane %v831, 2
      %v869 = vrot.slane %v684, 2
      %v870 = vsel %vm842, %v868, %v869
      %v871 = vrot.slane %v718, 2
      %v872 = vsel %vm842, %v869, %v871
      %v873 = vrot.slane %v832, 2
      %v874 = vrot.slane %v686, 2
      %v875 = vsel %vm842, %v873, %v874
      %v876 = vrot.slane %v719, 2
      %v877 = vsel %vm842, %v874, %v876
      %v878 = vrot.slane %v833, 2
      %v879 = vrot.slane %v688, 2
      %v880 = vsel %vm842, %v878, %v879
      %v881 = vrot.slane %v720, 2
      %v882 = vsel %vm842, %v879, %v881
      %v899 = vadd.f32 %v802, %v845
      %v900 = vadd.f32 %v803, %v847
      %v901 = vadd.f32 %v804, %v850
      %v902 = vadd.f32 %v805, %v852
      %v903 = vadd.f32 %v806, %v855
      %v904 = vadd.f32 %v807, %v857
      %v905 = vadd.f32 %v808, %v860
      %v906 = vadd.f32 %v809, %v862
      %v907 = vadd.f32 %v810, %v865
      %v908 = vadd.f32 %v811, %v867
      %v909 = vadd.f32 %v812, %v870
      %v910 = vadd.f32 %v813, %v872
      %v911 = vadd.f32 %v814, %v875
      %v912 = vadd.f32 %v815, %v877
      %v913 = vadd.f32 %v816, %v880
      %v914 = vadd.f32 %v817, %v882
      %v915 = vld [vmem:[%s228] sm:$0xf]
      %v916 = vld [vmem:[%s228 + $0x4] sm:$0xf]
      %v917 = vld [vmem:[%s228 + $0xc] sm:$0xf]
      %v918 = vld [vmem:[%s228 + $0x10] sm:$0xf]
      %v919 = vld [vmem:[%s228 + $0x18] sm:$0xf]
      %v920 = vld [vmem:[%s228 + $0x1c] sm:$0xf]
      %v921 = vld [vmem:[%s228 + $0x24] sm:$0xf]
      %v922 = vld [vmem:[%s228 + $0x28] sm:$0xf]
      %v923 = vld [vmem:[%s228 + $0x30] sm:$0xf]
      %v924 = vld [vmem:[%s228 + $0x34] sm:$0xf]
      %v925 = vld [vmem:[%s228 + $0x3c] sm:$0xf]
      %v926 = vld [vmem:[%s228 + $0x40] sm:$0xf]
      %v927 = vld [vmem:[%s228 + $0x48] sm:$0xf]
      %v928 = vld [vmem:[%s228 + $0x4c] sm:$0xf]
      %v929 = vld [vmem:[%s228 + $0x54] sm:$0xf]
      %v930 = vld [vmem:[%s228 + $0x58] sm:$0xf]
      %v931 = vunpack.c.l.bf16 %v915
      %v932 = vunpack.c.l.bf16 %v916
      %v933 = vunpack.c.l.bf16 %v917
      %v934 = vunpack.c.l.bf16 %v918
      %v935 = vunpack.c.l.bf16 %v919
      %v936 = vunpack.c.l.bf16 %v920
      %v937 = vunpack.c.l.bf16 %v921
      %v938 = vunpack.c.l.bf16 %v922
      %v939 = vunpack.c.l.bf16 %v923
      %v940 = vunpack.c.l.bf16 %v924
      %v941 = vunpack.c.l.bf16 %v925
      %v942 = vunpack.c.l.bf16 %v926
      %v943 = vunpack.c.l.bf16 %v927
      %v944 = vunpack.c.l.bf16 %v928
      %v945 = vunpack.c.l.bf16 %v929
      %v946 = vunpack.c.l.bf16 %v930
      %v947 = vadd.f32 %v899, %v931
      %v948 = vadd.f32 %v900, %v932
      %v949 = vadd.f32 %v901, %v933
      %v950 = vadd.f32 %v902, %v934
      %v951 = vadd.f32 %v903, %v935
      %v952 = vadd.f32 %v904, %v936
      %v953 = vadd.f32 %v905, %v937
      %v954 = vadd.f32 %v906, %v938
      %v955 = vadd.f32 %v907, %v939
      %v956 = vadd.f32 %v908, %v940
      %v957 = vadd.f32 %v909, %v941
      %v958 = vadd.f32 %v910, %v942
      %v959 = vadd.f32 %v911, %v943
      %v960 = vadd.f32 %v912, %v944
      %v961 = vadd.f32 %v913, %v945
      %v962 = vadd.f32 %v914, %v946
      %v963 = vld [vmem:[%s228 + $0x8] sm:$0x1]
      %v964 = vld [vmem:[%s228 + $0x14] sm:$0x1]
      %v965 = vld [vmem:[%s228 + $0x20] sm:$0x1]
      %v966 = vld [vmem:[%s228 + $0x2c] sm:$0x1]
      %v967 = vld [vmem:[%s228 + $0x38] sm:$0x1]
      %v968 = vld [vmem:[%s228 + $0x44] sm:$0x1]
      %v969 = vld [vmem:[%s228 + $0x50] sm:$0x1]
      %v970 = vld [vmem:[%s228 + $0x5c] sm:$0x1]
      %v971 = vunpack.c.l.bf16 %v963
      %v972 = vunpack.c.l.bf16 %v964
      %v973 = vunpack.c.l.bf16 %v965
      %v974 = vunpack.c.l.bf16 %v966
      %v975 = vunpack.c.l.bf16 %v967
      %v976 = vunpack.c.l.bf16 %v968
      %v977 = vunpack.c.l.bf16 %v969
      %v978 = vunpack.c.l.bf16 %v970
      %v1003 = vrot.slane %v931, 1
      %v1004 = vrot.slane %v932, 1
      %v1005 = vsel %vm745, %v1003, %v1004
      %v1006 = vrot.slane %v971, 1
      %v1007 = vsel %vm745, %v1004, %v1006
      %v1008 = vrot.slane %v933, 1
      %v1009 = vrot.slane %v934, 1
      %v1010 = vsel %vm745, %v1008, %v1009
      %v1011 = vrot.slane %v972, 1
      %v1012 = vsel %vm745, %v1009, %v1011
      %v1013 = vrot.slane %v935, 1
      %v1014 = vrot.slane %v936, 1
      %v1015 = vsel %vm745, %v1013, %v1014
      %v1016 = vrot.slane %v973, 1
      %v1017 = vsel %vm745, %v1014, %v1016
      %v1018 = vrot.slane %v937, 1
      %v1019 = vrot.slane %v938, 1
      %v1020 = vsel %vm745, %v1018, %v1019
      %v1021 = vrot.slane %v974, 1
      %v1022 = vsel %vm745, %v1019, %v1021
      %v1023 = vrot.slane %v939, 1
      %v1024 = vrot.slane %v940, 1
      %v1025 = vsel %vm745, %v1023, %v1024
      %v1026 = vrot.slane %v975, 1
      %v1027 = vsel %vm745, %v1024, %v1026
      %v1028 = vrot.slane %v941, 1
      %v1029 = vrot.slane %v942, 1
      %v1030 = vsel %vm745, %v1028, %v1029
      %v1031 = vrot.slane %v976, 1
      %v1032 = vsel %vm745, %v1029, %v1031
      %v1033 = vrot.slane %v943, 1
      %v1034 = vrot.slane %v944, 1
      %v1035 = vsel %vm745, %v1033, %v1034
      %v1036 = vrot.slane %v977, 1
      %v1037 = vsel %vm745, %v1034, %v1036
      %v1038 = vrot.slane %v945, 1
      %v1039 = vrot.slane %v946, 1
      %v1040 = vsel %vm745, %v1038, %v1039
      %v1041 = vrot.slane %v978, 1
      %v1042 = vsel %vm745, %v1039, %v1041
      %v1059 = vadd.f32 %v947, %v1005
      %v1060 = vadd.f32 %v948, %v1007
      %v1061 = vadd.f32 %v949, %v1010
      %v1062 = vadd.f32 %v950, %v1012
      %v1063 = vadd.f32 %v951, %v1015
      %v1064 = vadd.f32 %v952, %v1017
      %v1065 = vadd.f32 %v953, %v1020
      %v1066 = vadd.f32 %v954, %v1022
      %v1067 = vadd.f32 %v955, %v1025
      %v1068 = vadd.f32 %v956, %v1027
      %v1069 = vadd.f32 %v957, %v1030
      %v1070 = vadd.f32 %v958, %v1032
      %v1071 = vadd.f32 %v959, %v1035
      %v1072 = vadd.f32 %v960, %v1037
      %v1073 = vadd.f32 %v961, %v1040
      %v1074 = vadd.f32 %v962, %v1042
      %v1075 = vld [vmem:[%s228] sm:$0xe]
      %v1076 = vld [vmem:[%s228 + $0xc] sm:$0xe]
      %v1077 = vld [vmem:[%s228 + $0x18] sm:$0xe]
      %v1078 = vld [vmem:[%s228 + $0x24] sm:$0xe]
      %v1079 = vld [vmem:[%s228 + $0x30] sm:$0xe]
      %v1080 = vld [vmem:[%s228 + $0x3c] sm:$0xe]
      %v1081 = vld [vmem:[%s228 + $0x48] sm:$0xe]
      %v1082 = vld [vmem:[%s228 + $0x54] sm:$0xe]
      %v1083 = vunpack.c.l.bf16 %v1075
      %v1084 = vunpack.c.l.bf16 %v1076
      %v1085 = vunpack.c.l.bf16 %v1077
      %v1086 = vunpack.c.l.bf16 %v1078
      %v1087 = vunpack.c.l.bf16 %v1079
      %v1088 = vunpack.c.l.bf16 %v1080
      %v1089 = vunpack.c.l.bf16 %v1081
      %v1090 = vunpack.c.l.bf16 %v1082
      %v1099 = vrot.slane %v1083, 2
      %v1100 = vrot.slane %v932, 2
      %v1101 = vsel %vm842, %v1099, %v1100
      %v1102 = vrot.slane %v971, 2
      %v1103 = vsel %vm842, %v1100, %v1102
      %v1104 = vrot.slane %v1084, 2
      %v1105 = vrot.slane %v934, 2
      %v1106 = vsel %vm842, %v1104, %v1105
      %v1107 = vrot.slane %v972, 2
      %v1108 = vsel %vm842, %v1105, %v1107
      %v1109 = vrot.slane %v1085, 2
      %v1110 = vrot.slane %v936, 2
      %v1111 = vsel %vm842, %v1109, %v1110
      %v1112 = vrot.slane %v973, 2
      %v1113 = vsel %vm842, %v1110, %v1112
      %v1114 = vrot.slane %v1086, 2
      %v1115 = vrot.slane %v938, 2
      %v1116 = vsel %vm842, %v1114, %v1115
      %v1117 = vrot.slane %v974, 2
      %v1118 = vsel %vm842, %v1115, %v1117
      %v1119 = vrot.slane %v1087, 2
      %v1120 = vrot.slane %v940, 2
      %v1121 = vsel %vm842, %v1119, %v1120
      %v1122 = vrot.slane %v975, 2
      %v1123 = vsel %vm842, %v1120, %v1122
      %v1124 = vrot.slane %v1088, 2
      %v1125 = vrot.slane %v942, 2
      %v1126 = vsel %vm842, %v1124, %v1125
      %v1127 = vrot.slane %v976, 2
      %v1128 = vsel %vm842, %v1125, %v1127
      %v1129 = vrot.slane %v1089, 2
      %v1130 = vrot.slane %v944, 2
      %v1131 = vsel %vm842, %v1129, %v1130
      %v1132 = vrot.slane %v977, 2
      %v1133 = vsel %vm842, %v1130, %v1132
      %v1134 = vrot.slane %v1090, 2
      %v1135 = vrot.slane %v946, 2
      %v1136 = vsel %vm842, %v1134, %v1135
      %v1137 = vrot.slane %v978, 2
      %v1138 = vsel %vm842, %v1135, %v1137
      %v1155 = vadd.f32 %v1059, %v1101
      %v1156 = vadd.f32 %v1060, %v1103
      %v1157 = vadd.f32 %v1061, %v1106
      %v1158 = vadd.f32 %v1062, %v1108
      %v1159 = vadd.f32 %v1063, %v1111
      %v1160 = vadd.f32 %v1064, %v1113
      %v1161 = vadd.f32 %v1065, %v1116
      %v1162 = vadd.f32 %v1066, %v1118
      %v1163 = vadd.f32 %v1067, %v1121
      %v1164 = vadd.f32 %v1068, %v1123
      %v1165 = vadd.f32 %v1069, %v1126
      %v1166 = vadd.f32 %v1070, %v1128
      %v1167 = vadd.f32 %v1071, %v1131
      %v1168 = vadd.f32 %v1072, %v1133
      %v1169 = vadd.f32 %v1073, %v1136
      %v1170 = vadd.f32 %v1074, %v1138
      %s1171 = sadd.s32 %s224, 2
      %s1172 = smul.u32 %s1171, 3
      %s1173 = smul.addr %s1172, 4
      %s1174 = scalar_lea.vmem %s211, %s1173
      %v1175 = vld [vmem:[%s1174] sm:$0xf]
      %v1176 = vld [vmem:[%s1174 + $0x4] sm:$0xf]
      %v1177 = vld [vmem:[%s1174 + $0xc] sm:$0xf]
      %v1178 = vld [vmem:[%s1174 + $0x10] sm:$0xf]
      %v1179 = vld [vmem:[%s1174 + $0x18] sm:$0xf]
      %v1180 = vld [vmem:[%s1174 + $0x1c] sm:$0xf]
      %v1181 = vld [vmem:[%s1174 + $0x24] sm:$0xf]
      %v1182 = vld [vmem:[%s1174 + $0x28] sm:$0xf]
      %v1183 = vld [vmem:[%s1174 + $0x30] sm:$0xf]
      %v1184 = vld [vmem:[%s1174 + $0x34] sm:$0xf]
      %v1185 = vld [vmem:[%s1174 + $0x3c] sm:$0xf]
      %v1186 = vld [vmem:[%s1174 + $0x40] sm:$0xf]
      %v1187 = vld [vmem:[%s1174 + $0x48] sm:$0xf]
      %v1188 = vld [vmem:[%s1174 + $0x4c] sm:$0xf]
      %v1189 = vld [vmem:[%s1174 + $0x54] sm:$0xf]
      %v1190 = vld [vmem:[%s1174 + $0x58] sm:$0xf]
      %v1191 = vunpack.c.l.bf16 %v1175
      %v1192 = vunpack.c.l.bf16 %v1176
      %v1193 = vunpack.c.l.bf16 %v1177
      %v1194 = vunpack.c.l.bf16 %v1178
      %v1195 = vunpack.c.l.bf16 %v1179
      %v1196 = vunpack.c.l.bf16 %v1180
      %v1197 = vunpack.c.l.bf16 %v1181
      %v1198 = vunpack.c.l.bf16 %v1182
      %v1199 = vunpack.c.l.bf16 %v1183
      %v1200 = vunpack.c.l.bf16 %v1184
      %v1201 = vunpack.c.l.bf16 %v1185
      %v1202 = vunpack.c.l.bf16 %v1186
      %v1203 = vunpack.c.l.bf16 %v1187
      %v1204 = vunpack.c.l.bf16 %v1188
      %v1205 = vunpack.c.l.bf16 %v1189
      %v1206 = vunpack.c.l.bf16 %v1190
      %v1207 = vadd.f32 %v1155, %v1191
      %v1208 = vadd.f32 %v1156, %v1192
      %v1209 = vadd.f32 %v1157, %v1193
      %v1210 = vadd.f32 %v1158, %v1194
      %v1211 = vadd.f32 %v1159, %v1195
      %v1212 = vadd.f32 %v1160, %v1196
      %v1213 = vadd.f32 %v1161, %v1197
      %v1214 = vadd.f32 %v1162, %v1198
      %v1215 = vadd.f32 %v1163, %v1199
      %v1216 = vadd.f32 %v1164, %v1200
      %v1217 = vadd.f32 %v1165, %v1201
      %v1218 = vadd.f32 %v1166, %v1202
      %v1219 = vadd.f32 %v1167, %v1203
      %v1220 = vadd.f32 %v1168, %v1204
      %v1221 = vadd.f32 %v1169, %v1205
      %v1222 = vadd.f32 %v1170, %v1206
      %v1223 = vld [vmem:[%s1174 + $0x8] sm:$0x1]
      %v1224 = vld [vmem:[%s1174 + $0x14] sm:$0x1]
      %v1225 = vld [vmem:[%s1174 + $0x20] sm:$0x1]
      %v1226 = vld [vmem:[%s1174 + $0x2c] sm:$0x1]
      %v1227 = vld [vmem:[%s1174 + $0x38] sm:$0x1]
      %v1228 = vld [vmem:[%s1174 + $0x44] sm:$0x1]
      %v1229 = vld [vmem:[%s1174 + $0x50] sm:$0x1]
      %v1230 = vld [vmem:[%s1174 + $0x5c] sm:$0x1]
      %v1231 = vunpack.c.l.bf16 %v1223
      %v1232 = vunpack.c.l.bf16 %v1224
      %v1233 = vunpack.c.l.bf16 %v1225
      %v1234 = vunpack.c.l.bf16 %v1226
      %v1235 = vunpack.c.l.bf16 %v1227
      %v1236 = vunpack.c.l.bf16 %v1228
      %v1237 = vunpack.c.l.bf16 %v1229
      %v1238 = vunpack.c.l.bf16 %v1230
      %v1263 = vrot.slane %v1191, 1
      %v1264 = vrot.slane %v1192, 1
      %v1265 = vsel %vm745, %v1263, %v1264
      %v1266 = vrot.slane %v1231, 1
      %v1267 = vsel %vm745, %v1264, %v1266
      %v1268 = vrot.slane %v1193, 1
      %v1269 = vrot.slane %v1194, 1
      %v1270 = vsel %vm745, %v1268, %v1269
      %v1271 = vrot.slane %v1232, 1
      %v1272 = vsel %vm745, %v1269, %v1271
      %v1273 = vrot.slane %v1195, 1
      %v1274 = vrot.slane %v1196, 1
      %v1275 = vsel %vm745, %v1273, %v1274
      %v1276 = vrot.slane %v1233, 1
      %v1277 = vsel %vm745, %v1274, %v1276
      %v1278 = vrot.slane %v1197, 1
      %v1279 = vrot.slane %v1198, 1
      %v1280 = vsel %vm745, %v1278, %v1279
      %v1281 = vrot.slane %v1234, 1
      %v1282 = vsel %vm745, %v1279, %v1281
      %v1283 = vrot.slane %v1199, 1
      %v1284 = vrot.slane %v1200, 1
      %v1285 = vsel %vm745, %v1283, %v1284
      %v1286 = vrot.slane %v1235, 1
      %v1287 = vsel %vm745, %v1284, %v1286
      %v1288 = vrot.slane %v1201, 1
      %v1289 = vrot.slane %v1202, 1
      %v1290 = vsel %vm745, %v1288, %v1289
      %v1291 = vrot.slane %v1236, 1
      %v1292 = vsel %vm745, %v1289, %v1291
      %v1293 = vrot.slane %v1203, 1
      %v1294 = vrot.slane %v1204, 1
      %v1295 = vsel %vm745, %v1293, %v1294
      %v1296 = vrot.slane %v1237, 1
      %v1297 = vsel %vm745, %v1294, %v1296
      %v1298 = vrot.slane %v1205, 1
      %v1299 = vrot.slane %v1206, 1
      %v1300 = vsel %vm745, %v1298, %v1299
      %v1301 = vrot.slane %v1238, 1
      %v1302 = vsel %vm745, %v1299, %v1301
      %v1319 = vadd.f32 %v1207, %v1265
      %v1320 = vadd.f32 %v1208, %v1267
      %v1321 = vadd.f32 %v1209, %v1270
      %v1322 = vadd.f32 %v1210, %v1272
      %v1323 = vadd.f32 %v1211, %v1275
      %v1324 = vadd.f32 %v1212, %v1277
      %v1325 = vadd.f32 %v1213, %v1280
      %v1326 = vadd.f32 %v1214, %v1282
      %v1327 = vadd.f32 %v1215, %v1285
      %v1328 = vadd.f32 %v1216, %v1287
      %v1329 = vadd.f32 %v1217, %v1290
      %v1330 = vadd.f32 %v1218, %v1292
      %v1331 = vadd.f32 %v1219, %v1295
      %v1332 = vadd.f32 %v1220, %v1297
      %v1333 = vadd.f32 %v1221, %v1300
      %v1334 = vadd.f32 %v1222, %v1302
      %v1335 = vld [vmem:[%s1174] sm:$0xe]
      %v1336 = vld [vmem:[%s1174 + $0xc] sm:$0xe]
      %v1337 = vld [vmem:[%s1174 + $0x18] sm:$0xe]
      %v1338 = vld [vmem:[%s1174 + $0x24] sm:$0xe]
      %v1339 = vld [vmem:[%s1174 + $0x30] sm:$0xe]
      %v1340 = vld [vmem:[%s1174 + $0x3c] sm:$0xe]
      %v1341 = vld [vmem:[%s1174 + $0x48] sm:$0xe]
      %v1342 = vld [vmem:[%s1174 + $0x54] sm:$0xe]
      %v1343 = vunpack.c.l.bf16 %v1335
      %v1344 = vunpack.c.l.bf16 %v1336
      %v1345 = vunpack.c.l.bf16 %v1337
      %v1346 = vunpack.c.l.bf16 %v1338
      %v1347 = vunpack.c.l.bf16 %v1339
      %v1348 = vunpack.c.l.bf16 %v1340
      %v1349 = vunpack.c.l.bf16 %v1341
      %v1350 = vunpack.c.l.bf16 %v1342
      %v1359 = vrot.slane %v1343, 2
      %v1360 = vrot.slane %v1192, 2
      %v1361 = vsel %vm842, %v1359, %v1360
      %v1362 = vrot.slane %v1231, 2
      %v1363 = vsel %vm842, %v1360, %v1362
      %v1364 = vrot.slane %v1344, 2
      %v1365 = vrot.slane %v1194, 2
      %v1366 = vsel %vm842, %v1364, %v1365
      %v1367 = vrot.slane %v1232, 2
      %v1368 = vsel %vm842, %v1365, %v1367
      %v1369 = vrot.slane %v1345, 2
      %v1370 = vrot.slane %v1196, 2
      %v1371 = vsel %vm842, %v1369, %v1370
      %v1372 = vrot.slane %v1233, 2
      %v1373 = vsel %vm842, %v1370, %v1372
      %v1374 = vrot.slane %v1346, 2
      %v1375 = vrot.slane %v1198, 2
      %v1376 = vsel %vm842, %v1374, %v1375
      %v1377 = vrot.slane %v1234, 2
      %v1378 = vsel %vm842, %v1375, %v1377
      %v1379 = vrot.slane %v1347, 2
      %v1380 = vrot.slane %v1200, 2
      %v1381 = vsel %vm842, %v1379, %v1380
      %v1382 = vrot.slane %v1235, 2
      %v1383 = vsel %vm842, %v1380, %v1382
      %v1384 = vrot.slane %v1348, 2
      %v1385 = vrot.slane %v1202, 2
      %v1386 = vsel %vm842, %v1384, %v1385
      %v1387 = vrot.slane %v1236, 2
      %v1388 = vsel %vm842, %v1385, %v1387
      %v1389 = vrot.slane %v1349, 2
      %v1390 = vrot.slane %v1204, 2
      %v1391 = vsel %vm842, %v1389, %v1390
      %v1392 = vrot.slane %v1237, 2
      %v1393 = vsel %vm842, %v1390, %v1392
      %v1394 = vrot.slane %v1350, 2
      %v1395 = vrot.slane %v1206, 2
      %v1396 = vsel %vm842, %v1394, %v1395
      %v1397 = vrot.slane %v1238, 2
      %v1398 = vsel %vm842, %v1395, %v1397
      %v1415 = vadd.f32 %v1319, %v1361
      %v1416 = vadd.f32 %v1320, %v1363
      %v1417 = vadd.f32 %v1321, %v1366
      %v1418 = vadd.f32 %v1322, %v1368
      %v1419 = vadd.f32 %v1323, %v1371
      %v1420 = vadd.f32 %v1324, %v1373
      %v1421 = vadd.f32 %v1325, %v1376
      %v1422 = vadd.f32 %v1326, %v1378
      %v1423 = vadd.f32 %v1327, %v1381
      %v1424 = vadd.f32 %v1328, %v1383
      %v1425 = vadd.f32 %v1329, %v1386
      %v1426 = vadd.f32 %v1330, %v1388
      %v1427 = vadd.f32 %v1331, %v1391
      %v1428 = vadd.f32 %v1332, %v1393
      %v1429 = vadd.f32 %v1333, %v1396
      %v1430 = vadd.f32 %v1334, %v1398
      %v1431 = vld [vmem:[#allocation2] sm:$0xff]
      %v1432 = vld [vmem:[#allocation2 + $0x8] sm:$0xff]
      %v1433 = vld [vmem:[#allocation2 + $0x10] sm:$0xff]
      %v1434 = vld [vmem:[#allocation2 + $0x18] sm:$0xff]
      %v1435 = vld [vmem:[#allocation2 + $0x20] sm:$0xff]
      %v1436 = vld [vmem:[#allocation2 + $0x28] sm:$0xff]
      %v1437 = vld [vmem:[#allocation2 + $0x30] sm:$0xff]
      %v1438 = vld [vmem:[#allocation2 + $0x38] sm:$0xff]
      %v1439 = vld [vmem:[#allocation2 + $0x40] sm:$0xff]
      %v1440 = vld [vmem:[#allocation2 + $0x48] sm:$0xff]
      %v1441 = vld [vmem:[#allocation2 + $0x50] sm:$0xff]
      %v1442 = vld [vmem:[#allocation2 + $0x58] sm:$0xff]
      %v1443 = vld [vmem:[#allocation2 + $0x60] sm:$0xff]
      %v1444 = vld [vmem:[#allocation2 + $0x68] sm:$0xff]
      %v1445 = vld [vmem:[#allocation2 + $0x70] sm:$0xff]
      %v1446 = vld [vmem:[#allocation2 + $0x78] sm:$0xff]
      %v1447 = vld [vmem:[#allocation2 + $0x80] sm:$0xff]
      %v1448 = vld [vmem:[#allocation2 + $0x88] sm:$0xff]
      %v1449 = vld [vmem:[#allocation2 + $0x90] sm:$0xff]
      %v1450 = vld [vmem:[#allocation2 + $0x98] sm:$0xff]
      %v1451 = vld [vmem:[#allocation2 + $0xa0] sm:$0xff]
      %v1452 = vld [vmem:[#allocation2 + $0xa8] sm:$0xff]
      %v1453 = vld [vmem:[#allocation2 + $0xb0] sm:$0xff]
      %v1454 = vld [vmem:[#allocation2 + $0xb8] sm:$0xff]
      %v1455 = vld [vmem:[#allocation2 + $0xc0] sm:$0xff]
      %v1456 = vld [vmem:[#allocation2 + $0xc8] sm:$0xff]
      %v1457 = vld [vmem:[#allocation2 + $0xd0] sm:$0xff]
      %v1458 = vld [vmem:[#allocation2 + $0xd8] sm:$0xff]
      %v1459 = vld [vmem:[#allocation2 + $0xe0] sm:$0xff]
      %v1460 = vld [vmem:[#allocation2 + $0xe8] sm:$0xff]
      %v1461 = vld [vmem:[#allocation2 + $0xf0] sm:$0xff]
      %v1462 = vld [vmem:[#allocation2 + $0xf8] sm:$0xff]
      %v1463 = vpack.c.bf16 %v1416, %v1415
      %v1464 = vpack.c.bf16 %v1418, %v1417
      %v1465 = vpack.c.bf16 %v1420, %v1419
      %v1466 = vpack.c.bf16 %v1422, %v1421
      %v1467 = vpack.c.bf16 %v1424, %v1423
      %v1468 = vpack.c.bf16 %v1426, %v1425
      %v1469 = vpack.c.bf16 %v1428, %v1427
      %v1470 = vpack.c.bf16 %v1430, %v1429
      %v1471 = vld [vmem:[%s2] sm:$0xff]
      %v1472 = vld [vmem:[%s2 + $0x8] sm:$0xff]
      %v1475 = vunpack.c.l.b16 %v1471
      %v1476 = vunpack.c.h.b16 %v1471
      %v1477 = vunpack.c.l.b16 %v1472
      %v1478 = vunpack.c.h.b16 %v1472
      %v1479 = vpack.c.b16 %v1477, %v1475
      %v1480 = vpack.c.b16 %v1478, %v1476
      %v1484 = vsel %vm484, %v1463, 0
      %v1487 = vsel %vm484, %v1464, 0
      %v1490 = vsel %vm484, %v1465, 0
      %v1493 = vsel %vm484, %v1466, 0
      %v1496 = vsel %vm484, %v1467, 0
      %v1499 = vsel %vm484, %v1468, 0
      %v1502 = vsel %vm484, %v1469, 0
      %v1505 = vsel %vm484, %v1470, 0
      %1507 = vmatprep.subr.bf16.mxu0 0
      %1508 = vmatpush1.bf16.msra.mxu0 0
      %1509 = vmatprep.subr.bf16.mxu0 0
      %1510 = vmatpush1.bf16.msra.mxu0 0
      %1511 = vmatprep.subr.bf16.mxu0 0
      %1512 = vmatpush1.bf16.msra.mxu0 0
      %1513 = vmatprep.subr.bf16.mxu0 0
      %1514 = vmatpush1.bf16.msra.mxu0 0
      %1515 = vmatprep.subr.bf16.mxu0 0
      %1516 = vmatpush1.bf16.msra.mxu0 0
      %1517 = vmatprep.subr.bf16.mxu0 0
      %1518 = vmatpush1.bf16.msra.mxu0 0
      %1519 = vmatprep.subr.bf16.mxu0 0
      %1520 = vmatpush1.bf16.msra.mxu0 0
      %1521 = vmatprep.subr.bf16.mxu0 %v1480
      %1522 = vmatpush1.bf16.msra.mxu0 %v1479
      %1523 = vmatprep.subr.bf16.mxu0 0
      %1524 = vmatpush2.bf16.msra.mxu0 0
      %1525 = vmatprep.subr.bf16.mxu0 0
      %1526 = vmatpush2.bf16.msra.mxu0 0
      %1527 = vmatprep.subr.bf16.mxu0 0
      %1528 = vmatpush2.bf16.msra.mxu0 0
      %1529 = vmatprep.subr.bf16.mxu0 0
      %1530 = vmatpush2.bf16.msra.mxu0 0
      %1531 = vmatprep.subr.bf16.mxu0 0
      %1532 = vmatpush2.bf16.msra.mxu0 0
      %1533 = vmatprep.subr.bf16.mxu0 0
      %1534 = vmatpush2.bf16.msra.mxu0 0
      %1535 = vmatprep.subr.bf16.mxu0 0
      %1536 = vmatpush2.bf16.msra.mxu0 0
      %1537 = vmatprep.subr.bf16.mxu0 0
      %1538 = vmatpush2.bf16.msra.mxu0 0
      %1539 = vmatprep.mubr.bf16.mxu0 0
      %1540 = vmatmul.mubr.bf16.gmra.mxu0 %v1484
      %v1541 = vpop.f32.mrf.mxu0
      %v1542 = vadd.f32 0.0, %v1541
      %v1543 = vpop.f32.mrf.mxu0
      %v1544 = vadd.f32 0.0, %v1543
      %v1545 = vpop.f32.mrf.mxu0
      %v1546 = vadd.f32 0.0, %v1545
      %v1547 = vpop.f32.mrf.mxu0
      %v1548 = vadd.f32 0.0, %v1547
      %1549 = vmatprep.mubr.bf16.mxu0 0
      %1550 = vmatmul.mubr.bf16.gmra.mxu0 %v1487
      %v1551 = vpop.f32.mrf.mxu0
      %v1552 = vadd.f32 0.0, %v1551
      %v1553 = vpop.f32.mrf.mxu0
      %v1554 = vadd.f32 0.0, %v1553
      %v1555 = vpop.f32.mrf.mxu0
      %v1556 = vadd.f32 0.0, %v1555
      %v1557 = vpop.f32.mrf.mxu0
      %v1558 = vadd.f32 0.0, %v1557
      %1559 = vmatprep.mubr.bf16.mxu0 0
      %1560 = vmatmul.mubr.bf16.gmra.mxu0 %v1490
      %v1561 = vpop.f32.mrf.mxu0
      %v1562 = vadd.f32 0.0, %v1561
      %v1563 = vpop.f32.mrf.mxu0
      %v1564 = vadd.f32 0.0, %v1563
      %v1565 = vpop.f32.mrf.mxu0
      %v1566 = vadd.f32 0.0, %v1565
      %v1567 = vpop.f32.mrf.mxu0
      %v1568 = vadd.f32 0.0, %v1567
      %1569 = vmatprep.mubr.bf16.mxu0 0
      %1570 = vmatmul.mubr.bf16.gmra.mxu0 %v1493
      %v1571 = vpop.f32.mrf.mxu0
      %v1572 = vadd.f32 0.0, %v1571
      %v1573 = vpop.f32.mrf.mxu0
      %v1574 = vadd.f32 0.0, %v1573
      %v1575 = vpop.f32.mrf.mxu0
      %v1576 = vadd.f32 0.0, %v1575
      %v1577 = vpop.f32.mrf.mxu0
      %v1578 = vadd.f32 0.0, %v1577
      %1579 = vmatprep.mubr.bf16.mxu0 0
      %1580 = vmatmul.mubr.bf16.gmra.mxu0 %v1496
      %v1581 = vpop.f32.mrf.mxu0
      %v1582 = vadd.f32 0.0, %v1581
      %v1583 = vpop.f32.mrf.mxu0
      %v1584 = vadd.f32 0.0, %v1583
      %v1585 = vpop.f32.mrf.mxu0
      %v1586 = vadd.f32 0.0, %v1585
      %v1587 = vpop.f32.mrf.mxu0
      %v1588 = vadd.f32 0.0, %v1587
      %1589 = vmatprep.mubr.bf16.mxu0 0
      %1590 = vmatmul.mubr.bf16.gmra.mxu0 %v1499
      %v1591 = vpop.f32.mrf.mxu0
      %v1592 = vadd.f32 0.0, %v1591
      %v1593 = vpop.f32.mrf.mxu0
      %v1594 = vadd.f32 0.0, %v1593
      %v1595 = vpop.f32.mrf.mxu0
      %v1596 = vadd.f32 0.0, %v1595
      %v1597 = vpop.f32.mrf.mxu0
      %v1598 = vadd.f32 0.0, %v1597
      %1599 = vmatprep.mubr.bf16.mxu0 0
      %1600 = vmatmul.mubr.bf16.gmra.mxu0 %v1502
      %v1601 = vpop.f32.mrf.mxu0
      %v1602 = vadd.f32 0.0, %v1601
      %v1603 = vpop.f32.mrf.mxu0
      %v1604 = vadd.f32 0.0, %v1603
      %v1605 = vpop.f32.mrf.mxu0
      %v1606 = vadd.f32 0.0, %v1605
      %v1607 = vpop.f32.mrf.mxu0
      %v1608 = vadd.f32 0.0, %v1607
      %1609 = vmatprep.mubr.bf16.mxu0 0
      %1610 = vmatmul.mubr.bf16.gmra.mxu0 %v1505
      %v1611 = vpop.f32.mrf.mxu0
      %v1612 = vadd.f32 0.0, %v1611
      %v1613 = vpop.f32.mrf.mxu0
      %v1614 = vadd.f32 0.0, %v1613
      %v1615 = vpop.f32.mrf.mxu0
      %v1616 = vadd.f32 0.0, %v1615
      %v1617 = vpop.f32.mrf.mxu0
      %v1618 = vadd.f32 0.0, %v1617
      %1619 = vdwg.mxu0
      %v1620 = vadd.f32 %v1431, %v1542
      %v1621 = vadd.f32 %v1432, %v1544
      %v1622 = vadd.f32 %v1433, %v1546
      %v1623 = vadd.f32 %v1434, %v1548
      %v1624 = vadd.f32 %v1435, %v1552
      %v1625 = vadd.f32 %v1436, %v1554
      %v1626 = vadd.f32 %v1437, %v1556
      %v1627 = vadd.f32 %v1438, %v1558
      %v1628 = vadd.f32 %v1439, %v1562
      %v1629 = vadd.f32 %v1440, %v1564
      %v1630 = vadd.f32 %v1441, %v1566
      %v1631 = vadd.f32 %v1442, %v1568
      %v1632 = vadd.f32 %v1443, %v1572
      %v1633 = vadd.f32 %v1444, %v1574
      %v1634 = vadd.f32 %v1445, %v1576
      %v1635 = vadd.f32 %v1446, %v1578
      %v1636 = vadd.f32 %v1447, %v1582
      %v1637 = vadd.f32 %v1448, %v1584
      %v1638 = vadd.f32 %v1449, %v1586
      %v1639 = vadd.f32 %v1450, %v1588
      %v1640 = vadd.f32 %v1451, %v1592
      %v1641 = vadd.f32 %v1452, %v1594
      %v1642 = vadd.f32 %v1453, %v1596
      %v1643 = vadd.f32 %v1454, %v1598
      %v1644 = vadd.f32 %v1455, %v1602
      %v1645 = vadd.f32 %v1456, %v1604
      %v1646 = vadd.f32 %v1457, %v1606
      %v1647 = vadd.f32 %v1458, %v1608
      %v1648 = vadd.f32 %v1459, %v1612
      %v1649 = vadd.f32 %v1460, %v1614
      %v1650 = vadd.f32 %v1461, %v1616
      %v1651 = vadd.f32 %v1462, %v1618
      %1652 = vst [vmem:[#allocation2] sm:$0xff] %v1620
      %1653 = vst [vmem:[#allocation2 + $0x8] sm:$0xff] %v1621
      %1654 = vst [vmem:[#allocation2 + $0x10] sm:$0xff] %v1622
      %1655 = vst [vmem:[#allocation2 + $0x18] sm:$0xff] %v1623
      %1656 = vst [vmem:[#allocation2 + $0x20] sm:$0xff] %v1624
      %1657 = vst [vmem:[#allocation2 + $0x28] sm:$0xff] %v1625
      %1658 = vst [vmem:[#allocation2 + $0x30] sm:$0xff] %v1626
      %1659 = vst [vmem:[#allocation2 + $0x38] sm:$0xff] %v1627
      %1660 = vst [vmem:[#allocation2 + $0x40] sm:$0xff] %v1628
      %1661 = vst [vmem:[#allocation2 + $0x48] sm:$0xff] %v1629
      %1662 = vst [vmem:[#allocation2 + $0x50] sm:$0xff] %v1630
      %1663 = vst [vmem:[#allocation2 + $0x58] sm:$0xff] %v1631
      %1664 = vst [vmem:[#allocation2 + $0x60] sm:$0xff] %v1632
      %1665 = vst [vmem:[#allocation2 + $0x68] sm:$0xff] %v1633
      %1666 = vst [vmem:[#allocation2 + $0x70] sm:$0xff] %v1634
      %1667 = vst [vmem:[#allocation2 + $0x78] sm:$0xff] %v1635
      %1668 = vst [vmem:[#allocation2 + $0x80] sm:$0xff] %v1636
      %1669 = vst [vmem:[#allocation2 + $0x88] sm:$0xff] %v1637
      %1670 = vst [vmem:[#allocation2 + $0x90] sm:$0xff] %v1638
      %1671 = vst [vmem:[#allocation2 + $0x98] sm:$0xff] %v1639
      %1672 = vst [vmem:[#allocation2 + $0xa0] sm:$0xff] %v1640
      %1673 = vst [vmem:[#allocation2 + $0xa8] sm:$0xff] %v1641
      %1674 = vst [vmem:[#allocation2 + $0xb0] sm:$0xff] %v1642
      %1675 = vst [vmem:[#allocation2 + $0xb8] sm:$0xff] %v1643
      %1676 = vst [vmem:[#allocation2 + $0xc0] sm:$0xff] %v1644
      %1677 = vst [vmem:[#allocation2 + $0xc8] sm:$0xff] %v1645
      %1678 = vst [vmem:[#allocation2 + $0xd0] sm:$0xff] %v1646
      %1679 = vst [vmem:[#allocation2 + $0xd8] sm:$0xff] %v1647
      %1680 = vst [vmem:[#allocation2 + $0xe0] sm:$0xff] %v1648
      %1681 = vst [vmem:[#allocation2 + $0xe8] sm:$0xff] %v1649
      %1682 = vst [vmem:[#allocation2 + $0xf0] sm:$0xff] %v1650
      %1683 = vst [vmem:[#allocation2 + $0xf8] sm:$0xff] %v1651
      %v1684 = vld [vmem:[#allocation2] sm:$0xff]
      %v1685 = vld [vmem:[#allocation2 + $0x8] sm:$0xff]
      %v1686 = vld [vmem:[#allocation2 + $0x10] sm:$0xff]
      %v1687 = vld [vmem:[#allocation2 + $0x18] sm:$0xff]
      %v1688 = vld [vmem:[#allocation2 + $0x20] sm:$0xff]
      %v1689 = vld [vmem:[#allocation2 + $0x28] sm:$0xff]
      %v1690 = vld [vmem:[#allocation2 + $0x30] sm:$0xff]
      %v1691 = vld [vmem:[#allocation2 + $0x38] sm:$0xff]
      %v1692 = vld [vmem:[#allocation2 + $0x40] sm:$0xff]
      %v1693 = vld [vmem:[#allocation2 + $0x48] sm:$0xff]
      %v1694 = vld [vmem:[#allocation2 + $0x50] sm:$0xff]
      %v1695 = vld [vmem:[#allocation2 + $0x58] sm:$0xff]
      %v1696 = vld [vmem:[#allocation2 + $0x60] sm:$0xff]
      %v1697 = vld [vmem:[#allocation2 + $0x68] sm:$0xff]
      %v1698 = vld [vmem:[#allocation2 + $0x70] sm:$0xff]
      %v1699 = vld [vmem:[#allocation2 + $0x78] sm:$0xff]
      %v1700 = vld [vmem:[#allocation2 + $0x80] sm:$0xff]
      %v1701 = vld [vmem:[#allocation2 + $0x88] sm:$0xff]
      %v1702 = vld [vmem:[#allocation2 + $0x90] sm:$0xff]
      %v1703 = vld [vmem:[#allocation2 + $0x98] sm:$0xff]
      %v1704 = vld [vmem:[#allocation2 + $0xa0] sm:$0xff]
      %v1705 = vld [vmem:[#allocation2 + $0xa8] sm:$0xff]
      %v1706 = vld [vmem:[#allocation2 + $0xb0] sm:$0xff]
      %v1707 = vld [vmem:[#allocation2 + $0xb8] sm:$0xff]
      %v1708 = vld [vmem:[#allocation2 + $0xc0] sm:$0xff]
      %v1709 = vld [vmem:[#allocation2 + $0xc8] sm:$0xff]
      %v1710 = vld [vmem:[#allocation2 + $0xd0] sm:$0xff]
      %v1711 = vld [vmem:[#allocation2 + $0xd8] sm:$0xff]
      %v1712 = vld [vmem:[#allocation2 + $0xe0] sm:$0xff]
      %v1713 = vld [vmem:[#allocation2 + $0xe8] sm:$0xff]
      %v1714 = vld [vmem:[#allocation2 + $0xf0] sm:$0xff]
      %v1715 = vld [vmem:[#allocation2 + $0xf8] sm:$0xff]
      %v1716 = vld [vmem:[%s3] sm:$0x3]
      %v1718 = vlaneseq
      %v1719 = vshrl.u32 %v1718, 7
      %v1720 = vsub.s32 0, %v1719
      %v1721 = vrot.slane %v1716, %v1720
      %v1722 = vlaneseq
      %v1723 = vshrl.u32 %v1722, 7
      %v1724 = vsub.s32 1, %v1723
      %v1725 = vrot.slane %v1716, %v1724
      %v1728 = vadd.f32 %v1684, %v1721
      %v1729 = vadd.f32 %v1685, %v1725
      %v1730 = vadd.f32 %v1686, %v1721
      %v1731 = vadd.f32 %v1687, %v1725
      %v1732 = vadd.f32 %v1688, %v1721
      %v1733 = vadd.f32 %v1689, %v1725
      %v1734 = vadd.f32 %v1690, %v1721
      %v1735 = vadd.f32 %v1691, %v1725
      %v1736 = vadd.f32 %v1692, %v1721
      %v1737 = vadd.f32 %v1693, %v1725
      %v1738 = vadd.f32 %v1694, %v1721
      %v1739 = vadd.f32 %v1695, %v1725
      %v1740 = vadd.f32 %v1696, %v1721
      %v1741 = vadd.f32 %v1697, %v1725
      %v1742 = vadd.f32 %v1698, %v1721
      %v1743 = vadd.f32 %v1699, %v1725
      %v1744 = vadd.f32 %v1700, %v1721
      %v1745 = vadd.f32 %v1701, %v1725
      %v1746 = vadd.f32 %v1702, %v1721
      %v1747 = vadd.f32 %v1703, %v1725
      %v1748 = vadd.f32 %v1704, %v1721
      %v1749 = vadd.f32 %v1705, %v1725
      %v1750 = vadd.f32 %v1706, %v1721
      %v1751 = vadd.f32 %v1707, %v1725
      %v1752 = vadd.f32 %v1708, %v1721
      %v1753 = vadd.f32 %v1709, %v1725
      %v1754 = vadd.f32 %v1710, %v1721
      %v1755 = vadd.f32 %v1711, %v1725
      %v1756 = vadd.f32 %v1712, %v1721
      %v1757 = vadd.f32 %v1713, %v1725
      %v1758 = vadd.f32 %v1714, %v1721
      %v1759 = vadd.f32 %v1715, %v1725
      %v1760 = vmax.f32 %v1728, 0.0
      %v1761 = vmax.f32 %v1729, 0.0
      %v1762 = vmax.f32 %v1730, 0.0
      %v1763 = vmax.f32 %v1731, 0.0
      %v1764 = vmax.f32 %v1732, 0.0
      %v1765 = vmax.f32 %v1733, 0.0
      %v1766 = vmax.f32 %v1734, 0.0
      %v1767 = vmax.f32 %v1735, 0.0
      %v1768 = vmax.f32 %v1736, 0.0
      %v1769 = vmax.f32 %v1737, 0.0
      %v1770 = vmax.f32 %v1738, 0.0
      %v1771 = vmax.f32 %v1739, 0.0
      %v1772 = vmax.f32 %v1740, 0.0
      %v1773 = vmax.f32 %v1741, 0.0
      %v1774 = vmax.f32 %v1742, 0.0
      %v1775 = vmax.f32 %v1743, 0.0
      %v1776 = vmax.f32 %v1744, 0.0
      %v1777 = vmax.f32 %v1745, 0.0
      %v1778 = vmax.f32 %v1746, 0.0
      %v1779 = vmax.f32 %v1747, 0.0
      %v1780 = vmax.f32 %v1748, 0.0
      %v1781 = vmax.f32 %v1749, 0.0
      %v1782 = vmax.f32 %v1750, 0.0
      %v1783 = vmax.f32 %v1751, 0.0
      %v1784 = vmax.f32 %v1752, 0.0
      %v1785 = vmax.f32 %v1753, 0.0
      %v1786 = vmax.f32 %v1754, 0.0
      %v1787 = vmax.f32 %v1755, 0.0
      %v1788 = vmax.f32 %v1756, 0.0
      %v1789 = vmax.f32 %v1757, 0.0
      %v1790 = vmax.f32 %v1758, 0.0
      %v1791 = vmax.f32 %v1759, 0.0
      %v1792 = vpack.c.bf16 %v1762, %v1760
      %v1793 = vpack.c.bf16 %v1763, %v1761
      %v1794 = vpack.c.bf16 %v1766, %v1764
      %v1795 = vpack.c.bf16 %v1767, %v1765
      %v1796 = vpack.c.bf16 %v1770, %v1768
      %v1797 = vpack.c.bf16 %v1771, %v1769
      %v1798 = vpack.c.bf16 %v1774, %v1772
      %v1799 = vpack.c.bf16 %v1775, %v1773
      %v1800 = vpack.c.bf16 %v1778, %v1776
      %v1801 = vpack.c.bf16 %v1779, %v1777
      %v1802 = vpack.c.bf16 %v1782, %v1780
      %v1803 = vpack.c.bf16 %v1783, %v1781
      %v1804 = vpack.c.bf16 %v1786, %v1784
      %v1805 = vpack.c.bf16 %v1787, %v1785
      %v1806 = vpack.c.bf16 %v1790, %v1788
      %v1807 = vpack.c.bf16 %v1791, %v1789
      %v1824 = vunpack.c.l.b16 %v1792
      %v1825 = vunpack.c.l.b16 %v1793
      %v1826 = vunpack.c.h.b16 %v1792
      %v1827 = vunpack.c.h.b16 %v1793
      %v1828 = vunpack.c.l.b16 %v1794
      %v1829 = vunpack.c.l.b16 %v1795
      %v1830 = vunpack.c.h.b16 %v1794
      %v1831 = vunpack.c.h.b16 %v1795
      %v1832 = vunpack.c.l.b16 %v1796
      %v1833 = vunpack.c.l.b16 %v1797
      %v1834 = vunpack.c.h.b16 %v1796
      %v1835 = vunpack.c.h.b16 %v1797
      %v1836 = vunpack.c.l.b16 %v1798
      %v1837 = vunpack.c.l.b16 %v1799
      %v1838 = vunpack.c.h.b16 %v1798
      %v1839 = vunpack.c.h.b16 %v1799
      %v1840 = vunpack.c.l.b16 %v1800
      %v1841 = vunpack.c.l.b16 %v1801
      %v1842 = vunpack.c.h.b16 %v1800
      %v1843 = vunpack.c.h.b16 %v1801
      %v1844 = vunpack.c.l.b16 %v1802
      %v1845 = vunpack.c.l.b16 %v1803
      %v1846 = vunpack.c.h.b16 %v1802
      %v1847 = vunpack.c.h.b16 %v1803
      %v1848 = vunpack.c.l.b16 %v1804
      %v1849 = vunpack.c.l.b16 %v1805
      %v1850 = vunpack.c.h.b16 %v1804
      %v1851 = vunpack.c.h.b16 %v1805
      %v1852 = vunpack.c.l.b16 %v1806
      %v1853 = vunpack.c.l.b16 %v1807
      %v1854 = vunpack.c.h.b16 %v1806
      %v1855 = vunpack.c.h.b16 %v1807
      %v1856 = vpack.c.b16 %v1825, %v1824
      %v1857 = vpack.c.b16 %v1827, %v1826
      %v1858 = vpack.c.b16 %v1829, %v1828
      %v1859 = vpack.c.b16 %v1831, %v1830
      %v1860 = vpack.c.b16 %v1833, %v1832
      %v1861 = vpack.c.b16 %v1835, %v1834
      %v1862 = vpack.c.b16 %v1837, %v1836
      %v1863 = vpack.c.b16 %v1839, %v1838
      %v1864 = vpack.c.b16 %v1841, %v1840
      %v1865 = vpack.c.b16 %v1843, %v1842
      %v1866 = vpack.c.b16 %v1845, %v1844
      %v1867 = vpack.c.b16 %v1847, %v1846
      %v1868 = vpack.c.b16 %v1849, %v1848
      %v1869 = vpack.c.b16 %v1851, %v1850
      %v1870 = vpack.c.b16 %v1853, %v1852
      %v1871 = vpack.c.b16 %v1855, %v1854
      %1888 = vst [vmem:[%s221] sm:$0xff] %v1856
      %1889 = vst [vmem:[%s221 + $0x8] sm:$0xff] %v1857
      %1890 = vst [vmem:[%s221 + $0x10] sm:$0xff] %v1858
      %1891 = vst [vmem:[%s221 + $0x18] sm:$0xff] %v1859
      %1892 = vst [vmem:[%s221 + $0x20] sm:$0xff] %v1860
      %1893 = vst [vmem:[%s221 + $0x28] sm:$0xff] %v1861
      %1894 = vst [vmem:[%s221 + $0x30] sm:$0xff] %v1862
      %1895 = vst [vmem:[%s221 + $0x38] sm:$0xff] %v1863
      %1896 = vst [vmem:[%s221 + $0x40] sm:$0xff] %v1864
      %1897 = vst [vmem:[%s221 + $0x48] sm:$0xff] %v1865
      %1898 = vst [vmem:[%s221 + $0x50] sm:$0xff] %v1866
      %1899 = vst [vmem:[%s221 + $0x58] sm:$0xff] %v1867
      %1900 = vst [vmem:[%s221 + $0x60] sm:$0xff] %v1868
      %1901 = vst [vmem:[%s221 + $0x68] sm:$0xff] %v1869
      %1902 = vst [vmem:[%s221 + $0x70] sm:$0xff] %v1870
      %1903 = vst [vmem:[%s221 + $0x78] sm:$0xff] %v1871
      %s1904 = smul.u32 8, %s20
      %p1905 = scmp.lt.s32.totalorder %s19, 1
      %s1906 = scalar_select %p1905, %s19, 1
      %p1907 = scmp.lt.s32.totalorder %s1904, 15
      %s1908 = scalar_select %p1907, %s1904, 15
      %s1909 = smul.addr %s1908, 4
      %s1910 = smul.addr %s1906, 64
      %s1911 = sadd.s32 %s1909, %s1910
      %s1912 = smul.addr %s1911, 4
      %s1913 = scalar_lea.vmem %s4, %s1912
      // Predicated region
      $region37: #{inception_a_forward.4} parent=35 // pred_check
        %p1914 = pneg %p136
      $region38: #{inception_a_forward.4} parent=35 // pred_check_branch
        %1916 = sbr.rel (%p1914) target = $region40
      $region39: #{inception_a_forward.4} parent=35 // pred_region
        %s1917 = smul.u32 8, %s20
      $region40: #{inception_a_forward.4} parent=35 // pred_fallthru
        _
    $region36: #{inception_a_forward.4} parent=5 // pred_fallthru
      _
    %p1918 = scmp.le.s32.totalorder 2, %s10
    // Predicated region
    $region41: #{inception_a_forward.4} parent=5 // pred_check
      %p1919 = pneg %p1918
    $region42: #{inception_a_forward.4} parent=5 // pred_check_branch
      %1921 = sbr.rel (%p1919) target = $region44
    $region43: #{inception_a_forward.4} parent=5 // pred_region
      %s1922 = ssub.s32 %s10, 2
      // Predicated region
      $region45: #{inception_a_forward.4} parent=43 // pred_check
        %p1923 = pneg %p142
      $region46: #{inception_a_forward.4} parent=43 // pred_check_branch
        %1925 = sbr.rel (%p1923) target = $region48
      $region47: #{inception_a_forward.4} parent=43 // pred_region
        %s1926 = smul.u32 8, %s22
        %p1927 = scmp.lt.s32.totalorder %s21, 1
        %s1928 = scalar_select %p1927, %s21, 1
        %p1929 = scmp.lt.s32.totalorder %s1926, 15
        %s1930 = scalar_select %p1929, %s1926, 15
        %s1931 = smul.addr %s1930, 4
        %s1932 = smul.addr %s1928, 64
        %s1933 = sadd.s32 %s1931, %s1932
        %s1934 = smul.addr %s1933, 4
        %s1935 = scalar_lea.vmem %s4, %s1934
      $region48: #{inception_a_forward.4} parent=43 // pred_fallthru
        _
    $region44: #{inception_a_forward.4} parent=5 // pred_fallthru
      _
  $region6: #{inception_a_forward.4} parent=0 // loop_footer
    %s14 = sadd.s32 1, %s10
  $region7: #{inception_a_forward.4} parent=0 // loop_footer_branch
    %9 = sbr.rel target = $region3
  $region8: #{inception_a_forward.4} parent=0 // loop_exit
    _

// kernel: inception_a_forward.6
$region0: #{inception_a_forward.6}
  #allocation0 [shape = 'u32[]', space=smem, size = 0x4, offset = 0x4, fixed_abs, tag = 'smem constant byte address 0x4 - core index']
  #allocation1 [shape = 'u32[144,128]{1,0:T(1,128)}', space=vmem, size = 0x12000, scoped, tag = 'internal scratch']
  #allocation2 [shape = 'f32[128,128]{1,0:T(8,128)}', space=vmem, size = 0x10000, scoped, tag = 'scratch operand']
  %s0 = inlined_call_operand.vmem [shape: bf16[2,18,18,64], index: 0, kind: input, shape index: {}]
  %s1 = inlined_call_operand.vmem [shape: bf16[3,192,128], index: 1, kind: input, shape index: {}]
  %s2 = inlined_call_operand.vmem [shape: f32[1,128], index: 2, kind: input, shape index: {}]
  %s3 = inlined_call_operand.vmem [shape: bf16[2,16,16,128], index: 3, kind: output, shape index: {}]
  %s4 = sld [smem:[#allocation0]]
  $region45: #{inception_a_forward.6} parent=0
    _
  %s6 = ssub.s32 1, %s4
  %s7 = scalar_select 0, %s6, %s4
  loop: start=0, step=1, limit=6
  $region2: #{inception_a_forward.6} parent=0 // loop_pre_header
    _
  $region3: #{inception_a_forward.6} parent=0 // loop_header
    %s9 = sphi 0, %s13
    %p10 = scmp.ge.s32.totalorder %s9, 6
    %s16 = sphi 0, %s28
    %s17 = sphi 0, %s24
    %s18 = sphi 0, %s16
    %s19 = sphi 0, %s17
    %s20 = sphi 0, %s18
    %s21 = sphi 0, %s19
    %s31 = sphi 0, %s33
    %s34 = sphi 0, %s31
    %s35 = sphi 0, %s34
    %s51 = sphi 0, %s35
    %s55 = sphi 0, %s55
    %s57 = sphi 0, %s55
    %s58 = sphi 0, %s57
    %s72 = sphi 0, %s58
    %s76 = sphi 0, %s76
    %s78 = sphi 0, %s76
    %s79 = sphi 0, %s78
    %s93 = sphi 0, %s79
    %s101 = sphi 0, %s103
    %s104 = sphi 0, %s101
    %s105 = sphi 0, %s104
    %s121 = sphi 0, %s105
  $region4: #{inception_a_forward.6} parent=0 // loop_header_branch
    %12 = sbr.rel (%p10) target = $region8
  $region5: #{inception_a_forward.6} parent=0 // loop_body
    %s14 = ssub.s32 %s9, 1
    %s15 = ssub.s32 %s9, 2
    %s22 = sadd.s32 1, %s17
    %p23 = scmp.ge.s32.totalorder %s22, 2
    %s24 = scalar_select %p23, 0, %s22
    %s25 = sadd.s32 1, %s16
    %s26 = scalar_select %p23, %s25, %s16
    %p27 = scmp.ge.s32.totalorder %s26, 2
    %s28 = scalar_select %p27, 0, %s26
    %s29 = ssub.s32 %s16, %s28
    %p30 = scmp.eq.s32.totalorder %s29, 0
    %s32 = sadd.s32 %s31, 1
    %s33 = scalar_select %p30, %s31, %s32
    %p36 = pneg %p30
    %p37 = scmp.eq.s32.totalorder %s9, 3
    %p38 = por %p36, %p37
    %p39 = scmp.ne.s32.totalorder %s31, %s34
    %p40 = scmp.eq.s32.totalorder %s9, 0
    %p41 = por %p39, %p40
    %p42 = scmp.ne.s32.totalorder %s31, %s34
    %p43 = scmp.eq.s32.totalorder %s14, 3
    %p44 = por %p42, %p43
    %p45 = scmp.ne.s32.totalorder %s34, %s35
    %p46 = scmp.eq.s32.totalorder %s14, 0
    %p47 = por %p45, %p46
    %p48 = scmp.ne.s32.totalorder %s34, %s35
    %p49 = scmp.eq.s32.totalorder %s15, 3
    %p50 = por %p48, %p49
    %p52 = scmp.ne.s32.totalorder %s35, %s51
    %p53 = scmp.eq.s32.totalorder %s15, 0
    %p54 = por %p52, %p53
    %s56 = sadd.s32 %s55, 1
    %p59 = scmp.eq.s32.totalorder %s9, 3
    %p60 = scmp.ne.s32.totalorder %s55, %s57
    %p61 = scmp.eq.s32.totalorder %s9, 0
    %p62 = por %p60, %p61
    %p63 = scmp.ne.s32.totalorder %s55, %s57
    %p64 = scmp.eq.s32.totalorder %s14, 3
    %p65 = por %p63, %p64
    %p66 = scmp.ne.s32.totalorder %s57, %s58
    %p67 = scmp.eq.s32.totalorder %s14, 0
    %p68 = por %p66, %p67
    %p69 = scmp.ne.s32.totalorder %s57, %s58
    %p70 = scmp.eq.s32.totalorder %s15, 3
    %p71 = por %p69, %p70
    %p73 = scmp.ne.s32.totalorder %s58, %s72
    %p74 = scmp.eq.s32.totalorder %s15, 0
    %p75 = por %p73, %p74
    %s77 = sadd.s32 %s76, 1
    %p80 = scmp.eq.s32.totalorder %s9, 3
    %p81 = scmp.ne.s32.totalorder %s76, %s78
    %p82 = scmp.eq.s32.totalorder %s9, 0
    %p83 = por %p81, %p82
    %p84 = scmp.ne.s32.totalorder %s76, %s78
    %p85 = scmp.eq.s32.totalorder %s14, 3
    %p86 = por %p84, %p85
    %p87 = scmp.ne.s32.totalorder %s78, %s79
    %p88 = scmp.eq.s32.totalorder %s14, 0
    %p89 = por %p87, %p88
    %p90 = scmp.ne.s32.totalorder %s78, %s79
    %p91 = scmp.eq.s32.totalorder %s15, 3
    %p92 = por %p90, %p91
    %p94 = scmp.ne.s32.totalorder %s79, %s93
    %p95 = scmp.eq.s32.totalorder %s15, 0
    %p96 = por %p94, %p95
    %s97 = ssub.s32 %s16, %s28
    %s98 = ssub.s32 %s17, %s24
    %s99 = sor.u32 %s97, %s98
    %p100 = scmp.eq.s32.totalorder %s99, 0
    %s102 = sadd.s32 %s101, 1
    %s103 = scalar_select %p100, %s101, %s102
    %p106 = pneg %p100
    %p107 = scmp.eq.s32.totalorder %s9, 3
    %p108 = por %p106, %p107
    %p109 = scmp.ne.s32.totalorder %s101, %s104
    %p110 = scmp.eq.s32.totalorder %s9, 0
    %p111 = por %p109, %p110
    %p112 = scmp.ne.s32.totalorder %s101, %s104
    %p113 = scmp.eq.s32.totalorder %s14, 3
    %p114 = por %p112, %p113
    %p115 = scmp.ne.s32.totalorder %s104, %s105
    %p116 = scmp.eq.s32.totalorder %s14, 0
    %p117 = por %p115, %p116
    %p118 = scmp.ne.s32.totalorder %s104, %s105
    %p119 = scmp.eq.s32.totalorder %s15, 3
    %p120 = por %p118, %p119
    %p122 = scmp.ne.s32.totalorder %s105, %s121
    %p123 = scmp.eq.s32.totalorder %s15, 0
    %p124 = por %p122, %p123
    %p125 = scmp.le.s32.totalorder 1, %s9
    %p126 = scmp.lt.s32.totalorder %s9, 5
    %p127 = pnand %p125, %p126
    %p128 = pneg %p127
    // Predicated region
    $region9: #{inception_a_forward.6} parent=5 // pred_check
      _
    $region10: #{inception_a_forward.6} parent=5 // pred_check_branch
      %130 = sbr.rel (%p127) target = $region12
    $region11: #{inception_a_forward.6} parent=5 // pred_region
      %s131 = ssub.s32 %s9, 1
      // Predicated region
      $region13: #{inception_a_forward.6} parent=11 // pred_check
        %p132 = pneg %p68
      $region14: #{inception_a_forward.6} parent=11 // pred_check_branch
        %134 = sbr.rel (%p132) target = $region16
      $region15: #{inception_a_forward.6} parent=11 // pred_region
        _
      $region16: #{inception_a_forward.6} parent=11 // pred_fallthru
        _
      // Predicated region
      $region17: #{inception_a_forward.6} parent=11 // pred_check
        %p135 = pneg %p89
      $region18: #{inception_a_forward.6} parent=11 // pred_check_branch
        %137 = sbr.rel (%p135) target = $region20
      $region19: #{inception_a_forward.6} parent=11 // pred_region
        _
      $region20: #{inception_a_forward.6} parent=11 // pred_fallthru
        _
    $region12: #{inception_a_forward.6} parent=5 // pred_fallthru
      _
    %p138 = scmp.lt.s32.totalorder %s9, 4
    // Predicated region
    $region21: #{inception_a_forward.6} parent=5 // pred_check
      %p139 = pneg %p138
    $region22: #{inception_a_forward.6} parent=5 // pred_check_branch
      %141 = sbr.rel (%p139) target = $region24
    $region23: #{inception_a_forward.6} parent=5 // pred_region
      // Predicated region
      $region25: #{inception_a_forward.6} parent=23 // pred_check
        %p142 = pneg %p41
      $region26: #{inception_a_forward.6} parent=23 // pred_check_branch
        %144 = sbr.rel (%p142) target = $region28
      $region27: #{inception_a_forward.6} parent=23 // pred_region
        %p145 = scmp.lt.s32.totalorder %s16, 1
        %s146 = scalar_select %p145, %s16, 1
        %s147 = smul.addr %s146, 54
        %s148 = smul.addr %s147, 4
        %s149 = scalar_lea.vmem %s0, %s148
      $region28: #{inception_a_forward.6} parent=23 // pred_fallthru
        _
    $region24: #{inception_a_forward.6} parent=5 // pred_fallthru
      _
    %p150 = scmp.le.s32.totalorder 1, %s9
    %p151 = scmp.lt.s32.totalorder %s9, 5
    %p152 = pnand %p150, %p151
    %p153 = pneg %p152
    // Predicated region
    $region29: #{inception_a_forward.6} parent=5 // pred_check
      _
    $region30: #{inception_a_forward.6} parent=5 // pred_check_branch
      %155 = sbr.rel (%p152) target = $region32
    $region31: #{inception_a_forward.6} parent=5 // pred_region
      %s156 = ssub.s32 %s9, 1
      %p157 = scmp.lt.s32.totalorder %s18, 1
      %s158 = scalar_select %p157, %s18, 1
      %s159 = smul.addr %s158, 54
      %s160 = smul.addr %s159, 4
      %s161 = scalar_lea.vmem %s0, %s160
      %p162 = pneg %p47
      %p163 = pneg %p44
      %p164 = pneg %p68
      %p165 = pneg %p65
      %p166 = pneg %p89
      %p167 = pneg %p86
      %p168 = pneg %p117
      %p169 = pneg %p114
      %s170 = smul.u32 8, %s19
      %p171 = scmp.lt.s32.totalorder %s18, 1
      %s172 = scalar_select %p171, %s18, 1
      %p173 = scmp.lt.s32.totalorder %s170, 15
      %s174 = scalar_select %p173, %s170, 15
      %s175 = smul.addr %s174, 2
      %s176 = smul.addr %s172, 32
      %s177 = sadd.s32 %s175, %s176
      %s178 = smul.addr %s177, 4
      %s179 = scalar_lea.vmem %s3, %s178
      %p180 = scmp.lt.s32.totalorder %s18, 1
      %s181 = scalar_select %p180, %s18, 1
      %s182 = smul.addr %s181, 54
      %s183 = smul.addr %s182, 4
      %s184 = scalar_lea.vmem %s0, %s183
      %s185 = smul.u32 8, %s19
      %p186 = scmp.lt.s32.totalorder %s18, 1
      %s187 = scalar_select %p186, %s18, 1
      %p188 = scmp.lt.s32.totalorder %s185, 15
      %s189 = scalar_select %p188, %s185, 15
      %s190 = smul.addr %s189, 2
      %s191 = smul.addr %s187, 32
      %s192 = sadd.s32 %s190, %s191
      %s193 = smul.addr %s192, 4
      %s194 = scalar_lea.vmem %s3, %s193
      %s195 = smul.u32 8, %s19
      %s197 = smul.u32 %s19, 8
      %198 = vst [vmem:[#allocation2] sm:$0xff] 0.0
      %199 = vst [vmem:[#allocation2 + $0x8] sm:$0xff] 0.0
      %200 = vst [vmem:[#allocation2 + $0x10] sm:$0xff] 0.0
      %201 = vst [vmem:[#allocation2 + $0x18] sm:$0xff] 0.0
      %202 = vst [vmem:[#allocation2 + $0x20] sm:$0xff] 0.0
      %203 = vst [vmem:[#allocation2 + $0x28] sm:$0xff] 0.0
      %204 = vst [vmem:[#allocation2 + $0x30] sm:$0xff] 0.0
      %205 = vst [vmem:[#allocation2 + $0x38] sm:$0xff] 0.0
      %206 = vst [vmem:[#allocation2 + $0x40] sm:$0xff] 0.0
      %207 = vst [vmem:[#allocation2 + $0x48] sm:$0xff] 0.0
      %208 = vst [vmem:[#allocation2 + $0x50] sm:$0xff] 0.0
      %209 = vst [vmem:[#allocation2 + $0x58] sm:$0xff] 0.0
      %210 = vst [vmem:[#allocation2 + $0x60] sm:$0xff] 0.0
      %211 = vst [vmem:[#allocation2 + $0x68] sm:$0xff] 0.0
      %212 = vst [vmem:[#allocation2 + $0x70] sm:$0xff] 0.0
      %213 = vst [vmem:[#allocation2 + $0x78] sm:$0xff] 0.0
      %s214 = smul.u32 %s197, 3
      %s215 = smul.addr %s214, 4
      %s216 = scalar_lea.vmem %s184, %s215
      %v217 = vld [vmem:[%s216] sm:$0xf]
      %v218 = vld [vmem:[%s216 + $0x4] sm:$0xf]
      %v219 = vld [vmem:[%s216 + $0xc] sm:$0xf]
      %v220 = vld [vmem:[%s216 + $0x10] sm:$0xf]
      %v221 = vld [vmem:[%s216 + $0x18] sm:$0xf]
      %v222 = vld [vmem:[%s216 + $0x1c] sm:$0xf]
      %v223 = vld [vmem:[%s216 + $0x24] sm:$0xf]
      %v224 = vld [vmem:[%s216 + $0x28] sm:$0xf]
      %v225 = vld [vmem:[%s216 + $0x30] sm:$0xf]
      %v226 = vld [vmem:[%s216 + $0x34] sm:$0xf]
      %v227 = vld [vmem:[%s216 + $0x3c] sm:$0xf]
      %v228 = vld [vmem:[%s216 + $0x40] sm:$0xf]
      %v229 = vld [vmem:[%s216 + $0x48] sm:$0xf]
      %v230 = vld [vmem:[%s216 + $0x4c] sm:$0xf]
      %v231 = vld [vmem:[%s216 + $0x54] sm:$0xf]
      %v232 = vld [vmem:[%s216 + $0x58] sm:$0xf]
      %v233 = vld [vmem:[%s216 + $0x8] sm:$0x1]
      %v234 = vld [vmem:[%s216 + $0x14] sm:$0x1]
      %v235 = vld [vmem:[%s216 + $0x20] sm:$0x1]
      %v236 = vld [vmem:[%s216 + $0x2c] sm:$0x1]
      %v237 = vld [vmem:[%s216 + $0x38] sm:$0x1]
      %v238 = vld [vmem:[%s216 + $0x44] sm:$0x1]
      %v239 = vld [vmem:[%s216 + $0x50] sm:$0x1]
      %v240 = vld [vmem:[%s216 + $0x5c] sm:$0x1]
      %v241 = vld [vmem:[%s216] sm:$0xe]
      %v242 = vld [vmem:[%s216 + $0xc] sm:$0xe]
      %v243 = vld [vmem:[%s216 + $0x18] sm:$0xe]
      %v244 = vld [vmem:[%s216 + $0x24] sm:$0xe]
      %v245 = vld [vmem:[%s216 + $0x30] sm:$0xe]
      %v246 = vld [vmem:[%s216 + $0x3c] sm:$0xe]
      %v247 = vld [vmem:[%s216 + $0x48] sm:$0xe]
      %v248 = vld [vmem:[%s216 + $0x54] sm:$0xe]
      %v265 = vunpack.c.l.b16 %v217
      %v266 = vunpack.c.l.b16 %v218
      %v267 = vunpack.c.l.b16 %v219
      %v268 = vunpack.c.l.b16 %v220
      %v269 = vunpack.c.l.b16 %v221
      %v270 = vunpack.c.l.b16 %v222
      %v271 = vunpack.c.l.b16 %v223
      %v272 = vunpack.c.l.b16 %v224
      %v273 = vunpack.c.l.b16 %v225
      %v274 = vunpack.c.l.b16 %v226
      %v275 = vunpack.c.l.b16 %v227
      %v276 = vunpack.c.l.b16 %v228
      %v277 = vunpack.c.l.b16 %v229
      %v278 = vunpack.c.l.b16 %v230
      %v279 = vunpack.c.l.b16 %v231
      %v280 = vunpack.c.l.b16 %v232
      %v281 = vpack.c.b16 %v266, %v265
      %v282 = vpack.c.b16 %v268, %v267
      %v283 = vpack.c.b16 %v270, %v269
      %v284 = vpack.c.b16 %v272, %v271
      %v285 = vpack.c.b16 %v274, %v273
      %v286 = vpack.c.b16 %v276, %v275
      %v287 = vpack.c.b16 %v278, %v277
      %v288 = vpack.c.b16 %v280, %v279
      %v297 = vunpack.c.l.b16 %v233
      %v298 = vunpack.c.l.b16 %v234
      %v299 = vunpack.c.l.b16 %v235
      %v300 = vunpack.c.l.b16 %v236
      %v301 = vunpack.c.l.b16 %v237
      %v302 = vunpack.c.l.b16 %v238
      %v303 = vunpack.c.l.b16 %v239
      %v304 = vunpack.c.l.b16 %v240
      %v305 = vpack.c.b16 %v297, %v297
      %v306 = vpack.c.b16 %v298, %v298
      %v307 = vpack.c.b16 %v299, %v299
      %v308 = vpack.c.b16 %v300, %v300
      %v309 = vpack.c.b16 %v301, %v301
      %v310 = vpack.c.b16 %v302, %v302
      %v311 = vpack.c.b16 %v303, %v303
      %v312 = vpack.c.b16 %v304, %v304
      %vm313 = vsmask.f32 7424
      %v315 = vshrl.u32 %v281, 16
      %v317 = vshll.u32 %v281, 16
      %v319 = vrot.slane %v317, 1
      %v320 = vor.u32 %v315, %v319
      %v322 = vshll.u32 %v305, 16
      %v324 = vrot.slane %v322, 1
      %v325 = vsel %vm313, %v320, %v324
      %v327 = vshrl.u32 %v282, 16
      %v329 = vshll.u32 %v282, 16
      %v331 = vrot.slane %v329, 1
      %v332 = vor.u32 %v327, %v331
      %v334 = vshll.u32 %v306, 16
      %v336 = vrot.slane %v334, 1
      %v337 = vsel %vm313, %v332, %v336
      %v339 = vshrl.u32 %v283, 16
      %v341 = vshll.u32 %v283, 16
      %v343 = vrot.slane %v341, 1
      %v344 = vor.u32 %v339, %v343
      %v346 = vshll.u32 %v307, 16
      %v348 = vrot.slane %v346, 1
      %v349 = vsel %vm313, %v344, %v348
      %v351 = vshrl.u32 %v284, 16
      %v353 = vshll.u32 %v284, 16
      %v355 = vrot.slane %v353, 1
      %v356 = vor.u32 %v351, %v355
      %v358 = vshll.u32 %v308, 16
      %v360 = vrot.slane %v358, 1
      %v361 = vsel %vm313, %v356, %v360
      %v363 = vshrl.u32 %v285, 16
      %v365 = vshll.u32 %v285, 16
      %v367 = vrot.slane %v365, 1
      %v368 = vor.u32 %v363, %v367
      %v370 = vshll.u32 %v309, 16
      %v372 = vrot.slane %v370, 1
      %v373 = vsel %vm313, %v368, %v372
      %v375 = vshrl.u32 %v286, 16
      %v377 = vshll.u32 %v286, 16
      %v379 = vrot.slane %v377, 1
      %v380 = vor.u32 %v375, %v379
      %v382 = vshll.u32 %v310, 16
      %v384 = vrot.slane %v382, 1
      %v385 = vsel %vm313, %v380, %v384
      %v387 = vshrl.u32 %v287, 16
      %v389 = vshll.u32 %v287, 16
      %v391 = vrot.slane %v389, 1
      %v392 = vor.u32 %v387, %v391
      %v394 = vshll.u32 %v311, 16
      %v396 = vrot.slane %v394, 1
      %v397 = vsel %vm313, %v392, %v396
      %v399 = vshrl.u32 %v288, 16
      %v401 = vshll.u32 %v288, 16
      %v403 = vrot.slane %v401, 1
      %v404 = vor.u32 %v399, %v403
      %v406 = vshll.u32 %v312, 16
      %v408 = vrot.slane %v406, 1
      %v409 = vsel %vm313, %v404, %v408
      %410 = vrot.lane.b32.xlu0 %v325, 64
      %v411 = vpop.permute.xlu0 %410
      %412 = vrot.lane.b32.xlu0 %v337, 64
      %v413 = vpop.permute.xlu0 %412
      %414 = vrot.lane.b32.xlu0 %v349, 64
      %v415 = vpop.permute.xlu0 %414
      %416 = vrot.lane.b32.xlu0 %v361, 64
      %v417 = vpop.permute.xlu0 %416
      %418 = vrot.lane.b32.xlu0 %v373, 64
      %v419 = vpop.permute.xlu0 %418
      %420 = vrot.lane.b32.xlu0 %v385, 64
      %v421 = vpop.permute.xlu0 %420
      %422 = vrot.lane.b32.xlu0 %v397, 64
      %v423 = vpop.permute.xlu0 %422
      %424 = vrot.lane.b32.xlu0 %v409, 64
      %v425 = vpop.permute.xlu0 %424
      %v434 = vunpack.c.l.b16 %v241
      %v435 = vunpack.c.l.b16 %v242
      %v436 = vunpack.c.l.b16 %v243
      %v437 = vunpack.c.l.b16 %v244
      %v438 = vunpack.c.l.b16 %v245
      %v439 = vunpack.c.l.b16 %v246
      %v440 = vunpack.c.l.b16 %v247
      %v441 = vunpack.c.l.b16 %v248
      %v442 = vpack.c.b16 %v266, %v434
      %v443 = vpack.c.b16 %v268, %v435
      %v444 = vpack.c.b16 %v270, %v436
      %v445 = vpack.c.b16 %v272, %v437
      %v446 = vpack.c.b16 %v274, %v438
      %v447 = vpack.c.b16 %v276, %v439
      %v448 = vpack.c.b16 %v278, %v440
      %v449 = vpack.c.b16 %v280, %v441
      %vm450 = vcmask 1046528
      %v451 = vrot.slane %v442, 1
      %v452 = vrot.slane %v305, 1
      %v453 = vsel %vm450, %v451, %v452
      %v454 = vrot.slane %v443, 1
      %v455 = vrot.slane %v306, 1
      %v456 = vsel %vm450, %v454, %v455
      %v457 = vrot.slane %v444, 1
      %v458 = vrot.slane %v307, 1
      %v459 = vsel %vm450, %v457, %v458
      %v460 = vrot.slane %v445, 1
      %v461 = vrot.slane %v308, 1
      %v462 = vsel %vm450, %v460, %v461
      %v463 = vrot.slane %v446, 1
      %v464 = vrot.slane %v309, 1
      %v465 = vsel %vm450, %v463, %v464
      %v466 = vrot.slane %v447, 1
      %v467 = vrot.slane %v310, 1
      %v468 = vsel %vm450, %v466, %v467
      %v469 = vrot.slane %v448, 1
      %v470 = vrot.slane %v311, 1
      %v471 = vsel %vm450, %v469, %v470
      %v472 = vrot.slane %v449, 1
      %v473 = vrot.slane %v312, 1
      %v474 = vsel %vm450, %v472, %v473
      %vm475 = vcmask 523264
      %v477 = vsel %vm475, %v281, %v411
      %v480 = vsel %vm475, %v282, %v413
      %v483 = vsel %vm475, %v283, %v415
      %v486 = vsel %vm475, %v284, %v417
      %v489 = vsel %vm475, %v285, %v419
      %v492 = vsel %vm475, %v286, %v421
      %v495 = vsel %vm475, %v287, %v423
      %v498 = vsel %vm475, %v288, %v425
      %v500 = vld [vmem:[#allocation2] sm:$0xff]
      %v501 = vld [vmem:[#allocation2 + $0x8] sm:$0xff]
      %v502 = vld [vmem:[#allocation2 + $0x10] sm:$0xff]
      %v503 = vld [vmem:[#allocation2 + $0x18] sm:$0xff]
      %v504 = vld [vmem:[#allocation2 + $0x20] sm:$0xff]
      %v505 = vld [vmem:[#allocation2 + $0x28] sm:$0xff]
      %v506 = vld [vmem:[#allocation2 + $0x30] sm:$0xff]
      %v507 = vld [vmem:[#allocation2 + $0x38] sm:$0xff]
      %v508 = vld [vmem:[#allocation2 + $0x40] sm:$0xff]
      %v509 = vld [vmem:[#allocation2 + $0x48] sm:$0xff]
      %v510 = vld [vmem:[#allocation2 + $0x50] sm:$0xff]
      %v511 = vld [vmem:[#allocation2 + $0x58] sm:$0xff]
      %v512 = vld [vmem:[#allocation2 + $0x60] sm:$0xff]
      %v513 = vld [vmem:[#allocation2 + $0x68] sm:$0xff]
      %v514 = vld [vmem:[#allocation2 + $0x70] sm:$0xff]
      %v515 = vld [vmem:[#allocation2 + $0x78] sm:$0xff]
      %v516 = vld [vmem:[%s1] sm:$0xf]
      %v517 = vld [vmem:[%s1 + $0x4] sm:$0xf]
      %v518 = vld [vmem:[%s1 + $0x8] sm:$0xf]
      %v519 = vld [vmem:[%s1 + $0xc] sm:$0xf]
      %v520 = vld [vmem:[%s1 + $0x10] sm:$0xf]
      %v521 = vld [vmem:[%s1 + $0x14] sm:$0xf]
      %v522 = vld [vmem:[%s1 + $0x18] sm:$0xf]
      %v523 = vld [vmem:[%s1 + $0x1c] sm:$0xf]
      %v524 = vld [vmem:[%s1 + $0x20] sm:$0xf]
      %v525 = vld [vmem:[%s1 + $0x24] sm:$0xf]
      %v526 = vld [vmem:[%s1 + $0x28] sm:$0xf]
      %v527 = vld [vmem:[%s1 + $0x2c] sm:$0xf]
      %v528 = vld [vmem:[%s1 + $0x30] sm:$0xf]
      %v529 = vld [vmem:[%s1 + $0x34] sm:$0xf]
      %v530 = vld [vmem:[%s1 + $0x38] sm:$0xf]
      %v531 = vld [vmem:[%s1 + $0x3c] sm:$0xf]
      %v532 = vld [vmem:[%s1 + $0x40] sm:$0xf]
      %v533 = vld [vmem:[%s1 + $0x44] sm:$0xf]
      %v534 = vld [vmem:[%s1 + $0x48] sm:$0xf]
      %v535 = vld [vmem:[%s1 + $0x4c] sm:$0xf]
      %v536 = vld [vmem:[%s1 + $0x50] sm:$0xf]
      %v537 = vld [vmem:[%s1 + $0x54] sm:$0xf]
      %v538 = vld [vmem:[%s1 + $0x58] sm:$0xf]
      %v539 = vld [vmem:[%s1 + $0x5c] sm:$0xf]
      %v564 = vunpack.c.l.b16 %v516
      %v565 = vunpack.c.l.b16 %v517
      %v566 = vunpack.c.l.b16 %v518
      %v567 = vunpack.c.l.b16 %v519
      %v568 = vunpack.c.l.b16 %v520
      %v569 = vunpack.c.l.b16 %v521
      %v570 = vunpack.c.l.b16 %v522
      %v571 = vunpack.c.l.b16 %v523
      %v572 = vunpack.c.l.b16 %v524
      %v573 = vunpack.c.l.b16 %v525
      %v574 = vunpack.c.l.b16 %v526
      %v575 = vunpack.c.l.b16 %v527
      %v576 = vunpack.c.l.b16 %v528
      %v577 = vunpack.c.l.b16 %v529
      %v578 = vunpack.c.l.b16 %v530
      %v579 = vunpack.c.l.b16 %v531
      %v580 = vunpack.c.l.b16 %v532
      %v581 = vunpack.c.l.b16 %v533
      %v582 = vunpack.c.l.b16 %v534
      %v583 = vunpack.c.l.b16 %v535
      %v584 = vunpack.c.l.b16 %v536
      %v585 = vunpack.c.l.b16 %v537
      %v586 = vunpack.c.l.b16 %v538
      %v587 = vunpack.c.l.b16 %v539
      %v588 = vpack.c.b16 %v565, %v564
      %v589 = vpack.c.b16 %v567, %v566
      %v590 = vpack.c.b16 %v569, %v568
      %v591 = vpack.c.b16 %v571, %v570
      %v592 = vpack.c.b16 %v573, %v572
      %v593 = vpack.c.b16 %v575, %v574
      %v594 = vpack.c.b16 %v577, %v576
      %v595 = vpack.c.b16 %v579, %v578
      %v596 = vpack.c.b16 %v581, %v580
      %v597 = vpack.c.b16 %v583, %v582
      %v598 = vpack.c.b16 %v585, %v584
      %v599 = vpack.c.b16 %v587, %v586
      %v613 = vsel %vm475, %v453, 0
      %v616 = vsel %vm475, %v456, 0
      %v619 = vsel %vm475, %v459, 0
      %v622 = vsel %vm475, %v462, 0
      %v625 = vsel %vm475, %v465, 0
      %v628 = vsel %vm475, %v468, 0
      %v631 = vsel %vm475, %v471, 0
      %v634 = vsel %vm475, %v474, 0
      %636 = vmatprep.subr.bf16.mxu0 0
      %637 = vmatpush1.bf16.msra.mxu0 %v595
      %638 = vmatprep.subr.bf16.mxu0 0
      %639 = vmatpush1.bf16.msra.mxu0 %v594
      %640 = vmatprep.subr.bf16.mxu0 0
      %641 = vmatpush1.bf16.msra.mxu0 %v593
      %642 = vmatprep.subr.bf16.mxu0 0
      %643 = vmatpush1.bf16.msra.mxu0 %v592
      %644 = vmatprep.subr.bf16.mxu0 0
      %645 = vmatpush1.bf16.msra.mxu0 %v591
      %646 = vmatprep.subr.bf16.mxu0 0
      %647 = vmatpush1.bf16.msra.mxu0 %v590
      %648 = vmatprep.subr.bf16.mxu0 0
      %649 = vmatpush1.bf16.msra.mxu0 %v589
      %650 = vmatprep.subr.bf16.mxu0 0
      %651 = vmatpush1.bf16.msra.mxu0 %v588
      %652 = vmatprep.subr.bf16.mxu0 0
      %653 = vmatpush2.bf16.msra.mxu0 0
      %654 = vmatprep.subr.bf16.mxu0 0
      %655 = vmatpush2.bf16.msra.mxu0 0
      %656 = vmatprep.subr.bf16.mxu0 0
      %657 = vmatpush2.bf16.msra.mxu0 0
      %658 = vmatprep.subr.bf16.mxu0 0
      %659 = vmatpush2.bf16.msra.mxu0 0
      %660 = vmatprep.subr.bf16.mxu0 0
      %661 = vmatpush2.bf16.msra.mxu0 %v599
      %662 = vmatprep.subr.bf16.mxu0 0
      %663 = vmatpush2.bf16.msra.mxu0 %v598
      %664 = vmatprep.subr.bf16.mxu0 0
      %665 = vmatpush2.bf16.msra.mxu0 %v597
      %666 = vmatprep.subr.bf16.mxu0 0
      %667 = vmatpush2.bf16.msra.mxu0 %v596
      %668 = vmatprep.mubr.bf16.mxu0 %v613
      %669 = vmatmul.mubr.bf16.gmra.mxu0 %v477
      %v670 = vpop.f32.mrf.mxu0
      %v671 = vadd.f32 0.0, %v670
      %v672 = vpop.f32.mrf.mxu0
      %v673 = vpop.f32.mrf.mxu0
      %v674 = vadd.f32 0.0, %v673
      %v675 = vpop.f32.mrf.mxu0
      %676 = vmatprep.mubr.bf16.mxu0 %v616
      %677 = vmatmul.mubr.bf16.gmra.mxu0 %v480
      %v678 = vpop.f32.mrf.mxu0
      %v679 = vadd.f32 0.0, %v678
      %v680 = vpop.f32.mrf.mxu0
      %v681 = vpop.f32.mrf.mxu0
      %v682 = vadd.f32 0.0, %v681
      %v683 = vpop.f32.mrf.mxu0
      %684 = vmatprep.mubr.bf16.mxu0 %v619
      %685 = vmatmul.mubr.bf16.gmra.mxu0 %v483
      %v686 = vpop.f32.mrf.mxu0
      %v687 = vadd.f32 0.0, %v686
      %v688 = vpop.f32.mrf.mxu0
      %v689 = vpop.f32.mrf.mxu0
      %v690 = vadd.f32 0.0, %v689
      %v691 = vpop.f32.mrf.mxu0
      %692 = vmatprep.mubr.bf16.mxu0 %v622
      %693 = vmatmul.mubr.bf16.gmra.mxu0 %v486
      %v694 = vpop.f32.mrf.mxu0
      %v695 = vadd.f32 0.0, %v694
      %v696 = vpop.f32.mrf.mxu0
      %v697 = vpop.f32.mrf.mxu0
      %v698 = vadd.f32 0.0, %v697
      %v699 = vpop.f32.mrf.mxu0
      %700 = vmatprep.mubr.bf16.mxu0 %v625
      %701 = vmatmul.mubr.bf16.gmra.mxu0 %v489
      %v702 = vpop.f32.mrf.mxu0
      %v703 = vadd.f32 0.0, %v702
      %v704 = vpop.f32.mrf.mxu0
      %v705 = vpop.f32.mrf.mxu0
      %v706 = vadd.f32 0.0, %v705
      %v707 = vpop.f32.mrf.mxu0
      %708 = vmatprep.mubr.bf16.mxu0 %v628
      %709 = vmatmul.mubr.bf16.gmra.mxu0 %v492
      %v710 = vpop.f32.mrf.mxu0
      %v711 = vadd.f32 0.0, %v710
      %v712 = vpop.f32.mrf.mxu0
      %v713 = vpop.f32.mrf.mxu0
      %v714 = vadd.f32 0.0, %v713
      %v715 = vpop.f32.mrf.mxu0
      %716 = vmatprep.mubr.bf16.mxu0 %v631
      %717 = vmatmul.mubr.bf16.gmra.mxu0 %v495
      %v718 = vpop.f32.mrf.mxu0
      %v719 = vadd.f32 0.0, %v718
      %v720 = vpop.f32.mrf.mxu0
      %v721 = vpop.f32.mrf.mxu0
      %v722 = vadd.f32 0.0, %v721
      %v723 = vpop.f32.mrf.mxu0
      %724 = vmatprep.mubr.bf16.mxu0 %v634
      %725 = vmatmul.mubr.bf16.gmra.mxu0 %v498
      %v726 = vpop.f32.mrf.mxu0
      %v727 = vadd.f32 0.0, %v726
      %v728 = vpop.f32.mrf.mxu0
      %v729 = vpop.f32.mrf.mxu0
      %v730 = vadd.f32 0.0, %v729
      %v731 = vpop.f32.mrf.mxu0
      %732 = vdwg.mxu0
      %v733 = vadd.f32 %v500, %v671
      %v734 = vadd.f32 %v501, %v674
      %v735 = vadd.f32 %v502, %v679
      %v736 = vadd.f32 %v503, %v682
      %v737 = vadd.f32 %v504, %v687
      %v738 = vadd.f32 %v505, %v690
      %v739 = vadd.f32 %v506, %v695
      %v740 = vadd.f32 %v507, %v698
      %v741 = vadd.f32 %v508, %v703
      %v742 = vadd.f32 %v509, %v706
      %v743 = vadd.f32 %v510, %v711
      %v744 = vadd.f32 %v511, %v714
      %v745 = vadd.f32 %v512, %v719
      %v746 = vadd.f32 %v513, %v722
      %v747 = vadd.f32 %v514, %v727
      %v748 = vadd.f32 %v515, %v730
      %749 = vst [vmem:[#allocation2] sm:$0xff] %v733
      %750 = vst [vmem:[#allocation2 + $0x8] sm:$0xff] %v734
      %751 = vst [vmem:[#allocation2 + $0x10] sm:$0xff] %v735
      %752 = vst [vmem:[#allocation2 + $0x18] sm:$0xff] %v736
      %753 = vst [vmem:[#allocation2 + $0x20] sm:$0xff] %v737
      %754 = vst [vmem:[#allocation2 + $0x28] sm:$0xff] %v738
      %755 = vst [vmem:[#allocation2 + $0x30] sm:$0xff] %v739
      %756 = vst [vmem:[#allocation2 + $0x38] sm:$0xff] %v740
      %757 = vst [vmem:[#allocation2 + $0x40] sm:$0xff] %v741
      %758 = vst [vmem:[#allocation2 + $0x48] sm:$0xff] %v742
      %759 = vst [vmem:[#allocation2 + $0x50] sm:$0xff] %v743
      %760 = vst [vmem:[#allocation2 + $0x58] sm:$0xff] %v744
      %761 = vst [vmem:[#allocation2 + $0x60] sm:$0xff] %v745
      %762 = vst [vmem:[#allocation2 + $0x68] sm:$0xff] %v746
      %763 = vst [vmem:[#allocation2 + $0x70] sm:$0xff] %v747
      %764 = vst [vmem:[#allocation2 + $0x78] sm:$0xff] %v748
      %s765 = sadd.s32 %s197, 1
      %s766 = smul.u32 %s765, 3
      %s767 = smul.addr %s766, 4
      %s768 = scalar_lea.vmem %s184, %s767
      %v769 = vld [vmem:[%s768] sm:$0xf]
      %v770 = vld [vmem:[%s768 + $0x4] sm:$0xf]
      %v771 = vld [vmem:[%s768 + $0xc] sm:$0xf]
      %v772 = vld [vmem:[%s768 + $0x10] sm:$0xf]
      %v773 = vld [vmem:[%s768 + $0x18] sm:$0xf]
      %v774 = vld [vmem:[%s768 + $0x1c] sm:$0xf]
      %v775 = vld [vmem:[%s768 + $0x24] sm:$0xf]
      %v776 = vld [vmem:[%s768 + $0x28] sm:$0xf]
      %v777 = vld [vmem:[%s768 + $0x30] sm:$0xf]
      %v778 = vld [vmem:[%s768 + $0x34] sm:$0xf]
      %v779 = vld [vmem:[%s768 + $0x3c] sm:$0xf]
      %v780 = vld [vmem:[%s768 + $0x40] sm:$0xf]
      %v781 = vld [vmem:[%s768 + $0x48] sm:$0xf]
      %v782 = vld [vmem:[%s768 + $0x4c] sm:$0xf]
      %v783 = vld [vmem:[%s768 + $0x54] sm:$0xf]
      %v784 = vld [vmem:[%s768 + $0x58] sm:$0xf]
      %v785 = vld [vmem:[%s768 + $0x8] sm:$0x1]
      %v786 = vld [vmem:[%s768 + $0x14] sm:$0x1]
      %v787 = vld [vmem:[%s768 + $0x20] sm:$0x1]
      %v788 = vld [vmem:[%s768 + $0x2c] sm:$0x1]
      %v789 = vld [vmem:[%s768 + $0x38] sm:$0x1]
      %v790 = vld [vmem:[%s768 + $0x44] sm:$0x1]
      %v791 = vld [vmem:[%s768 + $0x50] sm:$0x1]
      %v792 = vld [vmem:[%s768 + $0x5c] sm:$0x1]
      %v793 = vld [vmem:[%s768] sm:$0xe]
      %v794 = vld [vmem:[%s768 + $0xc] sm:$0xe]
      %v795 = vld [vmem:[%s768 + $0x18] sm:$0xe]
      %v796 = vld [vmem:[%s768 + $0x24] sm:$0xe]
      %v797 = vld [vmem:[%s768 + $0x30] sm:$0xe]
      %v798 = vld [vmem:[%s768 + $0x3c] sm:$0xe]
      %v799 = vld [vmem:[%s768 + $0x48] sm:$0xe]
      %v800 = vld [vmem:[%s768 + $0x54] sm:$0xe]
      %v817 = vunpack.c.l.b16 %v769
      %v818 = vunpack.c.l.b16 %v770
      %v819 = vunpack.c.l.b16 %v771
      %v820 = vunpack.c.l.b16 %v772
      %v821 = vunpack.c.l.b16 %v773
      %v822 = vunpack.c.l.b16 %v774
      %v823 = vunpack.c.l.b16 %v775
      %v824 = vunpack.c.l.b16 %v776
      %v825 = vunpack.c.l.b16 %v777
      %v826 = vunpack.c.l.b16 %v778
      %v827 = vunpack.c.l.b16 %v779
      %v828 = vunpack.c.l.b16 %v780
      %v829 = vunpack.c.l.b16 %v781
      %v830 = vunpack.c.l.b16 %v782
      %v831 = vunpack.c.l.b16 %v783
      %v832 = vunpack.c.l.b16 %v784
      %v833 = vpack.c.b16 %v818, %v817
      %v834 = vpack.c.b16 %v820, %v819
      %v835 = vpack.c.b16 %v822, %v821
      %v836 = vpack.c.b16 %v824, %v823
      %v837 = vpack.c.b16 %v826, %v825
      %v838 = vpack.c.b16 %v828, %v827
      %v839 = vpack.c.b16 %v830, %v829
      %v840 = vpack.c.b16 %v832, %v831
      %v849 = vunpack.c.l.b16 %v785
      %v850 = vunpack.c.l.b16 %v786
      %v851 = vunpack.c.l.b16 %v787
      %v852 = vunpack.c.l.b16 %v788
      %v853 = vunpack.c.l.b16 %v789
      %v854 = vunpack.c.l.b16 %v790
      %v855 = vunpack.c.l.b16 %v791
      %v856 = vunpack.c.l.b16 %v792
      %v857 = vpack.c.b16 %v849, %v849
      %v858 = vpack.c.b16 %v850, %v850
      %v859 = vpack.c.b16 %v851, %v851
      %v860 = vpack.c.b16 %v852, %v852
      %v861 = vpack.c.b16 %v853, %v853
      %v862 = vpack.c.b16 %v854, %v854
      %v863 = vpack.c.b16 %v855, %v855
      %v864 = vpack.c.b16 %v856, %v856
      %v866 = vshrl.u32 %v833, 16
      %v868 = vshll.u32 %v833, 16
      %v870 = vrot.slane %v868, 1
      %v871 = vor.u32 %v866, %v870
      %v873 = vshll.u32 %v857, 16
      %v875 = vrot.slane %v873, 1
      %v876 = vsel %vm313, %v871, %v875
      %v878 = vshrl.u32 %v834, 16
      %v880 = vshll.u32 %v834, 16
      %v882 = vrot.slane %v880, 1
      %v883 = vor.u32 %v878, %v882
      %v885 = vshll.u32 %v858, 16
      %v887 = vrot.slane %v885, 1
      %v888 = vsel %vm313, %v883, %v887
      %v890 = vshrl.u32 %v835, 16
      %v892 = vshll.u32 %v835, 16
      %v894 = vrot.slane %v892, 1
      %v895 = vor.u32 %v890, %v894
      %v897 = vshll.u32 %v859, 16
      %v899 = vrot.slane %v897, 1
      %v900 = vsel %vm313, %v895, %v899
      %v902 = vshrl.u32 %v836, 16
      %v904 = vshll.u32 %v836, 16
      %v906 = vrot.slane %v904, 1
      %v907 = vor.u32 %v902, %v906
      %v909 = vshll.u32 %v860, 16
      %v911 = vrot.slane %v909, 1
      %v912 = vsel %vm313, %v907, %v911
      %v914 = vshrl.u32 %v837, 16
      %v916 = vshll.u32 %v837, 16
      %v918 = vrot.slane %v916, 1
      %v919 = vor.u32 %v914, %v918
      %v921 = vshll.u32 %v861, 16
      %v923 = vrot.slane %v921, 1
      %v924 = vsel %vm313, %v919, %v923
      %v926 = vshrl.u32 %v838, 16
      %v928 = vshll.u32 %v838, 16
      %v930 = vrot.slane %v928, 1
      %v931 = vor.u32 %v926, %v930
      %v933 = vshll.u32 %v862, 16
      %v935 = vrot.slane %v933, 1
      %v936 = vsel %vm313, %v931, %v935
      %v938 = vshrl.u32 %v839, 16
      %v940 = vshll.u32 %v839, 16
      %v942 = vrot.slane %v940, 1
      %v943 = vor.u32 %v938, %v942
      %v945 = vshll.u32 %v863, 16
      %v947 = vrot.slane %v945, 1
      %v948 = vsel %vm313, %v943, %v947
      %v950 = vshrl.u32 %v840, 16
      %v952 = vshll.u32 %v840, 16
      %v954 = vrot.slane %v952, 1
      %v955 = vor.u32 %v950, %v954
      %v957 = vshll.u32 %v864, 16
      %v959 = vrot.slane %v957, 1
      %v960 = vsel %vm313, %v955, %v959
      %961 = vrot.lane.b32.xlu0 %v876, 64
      %v962 = vpop.permute.xlu0 %961
      %963 = vrot.lane.b32.xlu0 %v888, 64
      %v964 = vpop.permute.xlu0 %963
      %965 = vrot.lane.b32.xlu0 %v900, 64
      %v966 = vpop.permute.xlu0 %965
      %967 = vrot.lane.b32.xlu0 %v912, 64
      %v968 = vpop.permute.xlu0 %967
      %969 = vrot.lane.b32.xlu0 %v924, 64
      %v970 = vpop.permute.xlu0 %969
      %971 = vrot.lane.b32.xlu0 %v936, 64
      %v972 = vpop.permute.xlu0 %971
      %973 = vrot.lane.b32.xlu0 %v948, 64
      %v974 = vpop.permute.xlu0 %973
      %975 = vrot.lane.b32.xlu0 %v960, 64
      %v976 = vpop.permute.xlu0 %975
      %v985 = vunpack.c.l.b16 %v793
      %v986 = vunpack.c.l.b16 %v794
      %v987 = vunpack.c.l.b16 %v795
      %v988 = vunpack.c.l.b16 %v796
      %v989 = vunpack.c.l.b16 %v797
      %v990 = vunpack.c.l.b16 %v798
      %v991 = vunpack.c.l.b16 %v799
      %v992 = vunpack.c.l.b16 %v800
      %v993 = vpack.c.b16 %v818, %v985
      %v994 = vpack.c.b16 %v820, %v986
      %v995 = vpack.c.b16 %v822, %v987
      %v996 = vpack.c.b16 %v824, %v988
      %v997 = vpack.c.b16 %v826, %v989
      %v998 = vpack.c.b16 %v828, %v990
      %v999 = vpack.c.b16 %v830, %v991
      %v1000 = vpack.c.b16 %v832, %v992
      %v1001 = vrot.slane %v993, 1
      %v1002 = vrot.slane %v857, 1
      %v1003 = vsel %vm450, %v1001, %v1002
      %v1004 = vrot.slane %v994, 1
      %v1005 = vrot.slane %v858, 1
      %v1006 = vsel %vm450, %v1004, %v1005
      %v1007 = vrot.slane %v995, 1
      %v1008 = vrot.slane %v859, 1
      %v1009 = vsel %vm450, %v1007, %v1008
      %v1010 = vrot.slane %v996, 1
      %v1011 = vrot.slane %v860, 1
      %v1012 = vsel %vm450, %v1010, %v1011
      %v1013 = vrot.slane %v997, 1
      %v1014 = vrot.slane %v861, 1
      %v1015 = vsel %vm450, %v1013, %v1014
      %v1016 = vrot.slane %v998, 1
      %v1017 = vrot.slane %v862, 1
      %v1018 = vsel %vm450, %v1016, %v1017
      %v1019 = vrot.slane %v999, 1
      %v1020 = vrot.slane %v863, 1
      %v1021 = vsel %vm450, %v1019, %v1020
      %v1022 = vrot.slane %v1000, 1
      %v1023 = vrot.slane %v864, 1
      %v1024 = vsel %vm450, %v1022, %v1023
      %v1026 = vsel %vm475, %v833, %v962
      %v1029 = vsel %vm475, %v834, %v964
      %v1032 = vsel %vm475, %v835, %v966
      %v1035 = vsel %vm475, %v836, %v968
      %v1038 = vsel %vm475, %v837, %v970
      %v1041 = vsel %vm475, %v838, %v972
      %v1044 = vsel %vm475, %v839, %v974
      %v1047 = vsel %vm475, %v840, %v976
      %v1049 = vld [vmem:[#allocation2] sm:$0xff]
      %v1050 = vld [vmem:[#allocation2 + $0x8] sm:$0xff]
      %v1051 = vld [vmem:[#allocation2 + $0x10] sm:$0xff]
      %v1052 = vld [vmem:[#allocation2 + $0x18] sm:$0xff]
      %v1053 = vld [vmem:[#allocation2 + $0x20] sm:$0xff]
      %v1054 = vld [vmem:[#allocation2 + $0x28] sm:$0xff]
      %v1055 = vld [vmem:[#allocation2 + $0x30] sm:$0xff]
      %v1056 = vld [vmem:[#allocation2 + $0x38] sm:$0xff]
      %v1057 = vld [vmem:[#allocation2 + $0x40] sm:$0xff]
      %v1058 = vld [vmem:[#allocation2 + $0x48] sm:$0xff]
      %v1059 = vld [vmem:[#allocation2 + $0x50] sm:$0xff]
      %v1060 = vld [vmem:[#allocation2 + $0x58] sm:$0xff]
      %v1061 = vld [vmem:[#allocation2 + $0x60] sm:$0xff]
      %v1062 = vld [vmem:[#allocation2 + $0x68] sm:$0xff]
      %v1063 = vld [vmem:[#allocation2 + $0x70] sm:$0xff]
      %v1064 = vld [vmem:[#allocation2 + $0x78] sm:$0xff]
      %s1065 = scalar_lea.vmem %s1, 96
      %v1066 = vld [vmem:[%s1065] sm:$0xf]
      %v1067 = vld [vmem:[%s1065 + $0x4] sm:$0xf]
      %v1068 = vld [vmem:[%s1065 + $0x8] sm:$0xf]
      %v1069 = vld [vmem:[%s1065 + $0xc] sm:$0xf]
      %v1070 = vld [vmem:[%s1065 + $0x10] sm:$0xf]
      %v1071 = vld [vmem:[%s1065 + $0x14] sm:$0xf]
      %v1072 = vld [vmem:[%s1065 + $0x18] sm:$0xf]
      %v1073 = vld [vmem:[%s1065 + $0x1c] sm:$0xf]
      %v1074 = vld [vmem:[%s1065 + $0x20] sm:$0xf]
      %v1075 = vld [vmem:[%s1065 + $0x24] sm:$0xf]
      %v1076 = vld [vmem:[%s1065 + $0x28] sm:$0xf]
      %v1077 = vld [vmem:[%s1065 + $0x2c] sm:$0xf]
      %v1078 = vld [vmem:[%s1065 + $0x30] sm:$0xf]
      %v1079 = vld [vmem:[%s1065 + $0x34] sm:$0xf]
      %v1080 = vld [vmem:[%s1065 + $0x38] sm:$0xf]
      %v1081 = vld [vmem:[%s1065 + $0x3c] sm:$0xf]
      %v1082 = vld [vmem:[%s1065 + $0x40] sm:$0xf]
      %v1083 = vld [vmem:[%s1065 + $0x44] sm:$0xf]
      %v1084 = vld [vmem:[%s1065 + $0x48] sm:$0xf]
      %v1085 = vld [vmem:[%s1065 + $0x4c] sm:$0xf]
      %v1086 = vld [vmem:[%s1065 + $0x50] sm:$0xf]
      %v1087 = vld [vmem:[%s1065 + $0x54] sm:$0xf]
      %v1088 = vld [vmem:[%s1065 + $0x58] sm:$0xf]
      %v1089 = vld [vmem:[%s1065 + $0x5c] sm:$0xf]
      %v1114 = vunpack.c.l.b16 %v1066
      %v1115 = vunpack.c.l.b16 %v1067
      %v1116 = vunpack.c.l.b16 %v1068
      %v1117 = vunpack.c.l.b16 %v1069
      %v1118 = vunpack.c.l.b16 %v1070
      %v1119 = vunpack.c.l.b16 %v1071
      %v1120 = vunpack.c.l.b16 %v1072
      %v1121 = vunpack.c.l.b16 %v1073
      %v1122 = vunpack.c.l.b16 %v1074
      %v1123 = vunpack.c.l.b16 %v1075
      %v1124 = vunpack.c.l.b16 %v1076
      %v1125 = vunpack.c.l.b16 %v1077
      %v1126 = vunpack.c.l.b16 %v1078
      %v1127 = vunpack.c.l.b16 %v1079
      %v1128 = vunpack.c.l.b16 %v1080
      %v1129 = vunpack.c.l.b16 %v1081
      %v1130 = vunpack.c.l.b16 %v1082
      %v1131 = vunpack.c.l.b16 %v1083
      %v1132 = vunpack.c.l.b16 %v1084
      %v1133 = vunpack.c.l.b16 %v1085
      %v1134 = vunpack.c.l.b16 %v1086
      %v1135 = vunpack.c.l.b16 %v1087
      %v1136 = vunpack.c.l.b16 %v1088
      %v1137 = vunpack.c.l.b16 %v1089
      %v1138 = vpack.c.b16 %v1115, %v1114
      %v1139 = vpack.c.b16 %v1117, %v1116
      %v1140 = vpack.c.b16 %v1119, %v1118
      %v1141 = vpack.c.b16 %v1121, %v1120
      %v1142 = vpack.c.b16 %v1123, %v1122
      %v1143 = vpack.c.b16 %v1125, %v1124
      %v1144 = vpack.c.b16 %v1127, %v1126
      %v1145 = vpack.c.b16 %v1129, %v1128
      %v1146 = vpack.c.b16 %v1131, %v1130
      %v1147 = vpack.c.b16 %v1133, %v1132
      %v1148 = vpack.c.b16 %v1135, %v1134
      %v1149 = vpack.c.b16 %v1137, %v1136
      %v1163 = vsel %vm475, %v1003, 0
      %v1166 = vsel %vm475, %v1006, 0
      %v1169 = vsel %vm475, %v1009, 0
      %v1172 = vsel %vm475, %v1012, 0
      %v1175 = vsel %vm475, %v1015, 0
      %v1178 = vsel %vm475, %v1018, 0
      %v1181 = vsel %vm475, %v1021, 0
      %v1184 = vsel %vm475, %v1024, 0
      %1186 = vmatprep.subr.bf16.mxu0 0
      %1187 = vmatpush1.bf16.msra.mxu0 %v1145
      %1188 = vmatprep.subr.bf16.mxu0 0
      %1189 = vmatpush1.bf16.msra.mxu0 %v1144
      %1190 = vmatprep.subr.bf16.mxu0 0
      %1191 = vmatpush1.bf16.msra.mxu0 %v1143
      %1192 = vmatprep.subr.bf16.mxu0 0
      %1193 = vmatpush1.bf16.msra.mxu0 %v1142
      %1194 = vmatprep.subr.bf16.mxu0 0
      %1195 = vmatpush1.bf16.msra.mxu0 %v1141
      %1196 = vmatprep.subr.bf16.mxu0 0
      %1197 = vmatpush1.bf16.msra.mxu0 %v1140
      %1198 = vmatprep.subr.bf16.mxu0 0
      %1199 = vmatpush1.bf16.msra.mxu0 %v1139
      %1200 = vmatprep.subr.bf16.mxu0 0
      %1201 = vmatpush1.bf16.msra.mxu0 %v1138
      %1202 = vmatprep.subr.bf16.mxu0 0
      %1203 = vmatpush2.bf16.msra.mxu0 0
      %1204 = vmatprep.subr.bf16.mxu0 0
      %1205 = vmatpush2.bf16.msra.mxu0 0
      %1206 = vmatprep.subr.bf16.mxu0 0
      %1207 = vmatpush2.bf16.msra.mxu0 0
      %1208 = vmatprep.subr.bf16.mxu0 0
      %1209 = vmatpush2.bf16.msra.mxu0 0
      %1210 = vmatprep.subr.bf16.mxu0 0
      %1211 = vmatpush2.bf16.msra.mxu0 %v1149
      %1212 = vmatprep.subr.bf16.mxu0 0
      %1213 = vmatpush2.bf16.msra.mxu0 %v1148
      %1214 = vmatprep.subr.bf16.mxu0 0
      %1215 = vmatpush2.bf16.msra.mxu0 %v1147
      %1216 = vmatprep.subr.bf16.mxu0 0
      %1217 = vmatpush2.bf16.msra.mxu0 %v1146
      %1218 = vmatprep.mubr.bf16.mxu0 %v1163
      %1219 = vmatmul.mubr.bf16.gmra.mxu0 %v1026
      %v1220 = vpop.f32.mrf.mxu0
      %v1221 = vadd.f32 0.0, %v1220
      %v1222 = vpop.f32.mrf.mxu0
      %v1223 = vpop.f32.mrf.mxu0
      %v1224 = vadd.f32 0.0, %v1223
      %v1225 = vpop.f32.mrf.mxu0
      %1226 = vmatprep.mubr.bf16.mxu0 %v1166
      %1227 = vmatmul.mubr.bf16.gmra.mxu0 %v1029
      %v1228 = vpop.f32.mrf.mxu0
      %v1229 = vadd.f32 0.0, %v1228
      %v1230 = vpop.f32.mrf.mxu0
      %v1231 = vpop.f32.mrf.mxu0
      %v1232 = vadd.f32 0.0, %v1231
      %v1233 = vpop.f32.mrf.mxu0
      %1234 = vmatprep.mubr.bf16.mxu0 %v1169
      %1235 = vmatmul.mubr.bf16.gmra.mxu0 %v1032
      %v1236 = vpop.f32.mrf.mxu0
      %v1237 = vadd.f32 0.0, %v1236
      %v1238 = vpop.f32.mrf.mxu0
      %v1239 = vpop.f32.mrf.mxu0
      %v1240 = vadd.f32 0.0, %v1239
      %v1241 = vpop.f32.mrf.mxu0
      %1242 = vmatprep.mubr.bf16.mxu0 %v1172
      %1243 = vmatmul.mubr.bf16.gmra.mxu0 %v1035
      %v1244 = vpop.f32.mrf.mxu0
      %v1245 = vadd.f32 0.0, %v1244
      %v1246 = vpop.f32.mrf.mxu0
      %v1247 = vpop.f32.mrf.mxu0
      %v1248 = vadd.f32 0.0, %v1247
      %v1249 = vpop.f32.mrf.mxu0
      %1250 = vmatprep.mubr.bf16.mxu0 %v1175
      %1251 = vmatmul.mubr.bf16.gmra.mxu0 %v1038
      %v1252 = vpop.f32.mrf.mxu0
      %v1253 = vadd.f32 0.0, %v1252
      %v1254 = vpop.f32.mrf.mxu0
      %v1255 = vpop.f32.mrf.mxu0
      %v1256 = vadd.f32 0.0, %v1255
      %v1257 = vpop.f32.mrf.mxu0
      %1258 = vmatprep.mubr.bf16.mxu0 %v1178
      %1259 = vmatmul.mubr.bf16.gmra.mxu0 %v1041
      %v1260 = vpop.f32.mrf.mxu0
      %v1261 = vadd.f32 0.0, %v1260
      %v1262 = vpop.f32.mrf.mxu0
      %v1263 = vpop.f32.mrf.mxu0
      %v1264 = vadd.f32 0.0, %v1263
      %v1265 = vpop.f32.mrf.mxu0
      %1266 = vmatprep.mubr.bf16.mxu0 %v1181
      %1267 = vmatmul.mubr.bf16.gmra.mxu0 %v1044
      %v1268 = vpop.f32.mrf.mxu0
      %v1269 = vadd.f32 0.0, %v1268
      %v1270 = vpop.f32.mrf.mxu0
      %v1271 = vpop.f32.mrf.mxu0
      %v1272 = vadd.f32 0.0, %v1271
      %v1273 = vpop.f32.mrf.mxu0
      %1274 = vmatprep.mubr.bf16.mxu0 %v1184
      %1275 = vmatmul.mubr.bf16.gmra.mxu0 %v1047
      %v1276 = vpop.f32.mrf.mxu0
      %v1277 = vadd.f32 0.0, %v1276
      %v1278 = vpop.f32.mrf.mxu0
      %v1279 = vpop.f32.mrf.mxu0
      %v1280 = vadd.f32 0.0, %v1279
      %v1281 = vpop.f32.mrf.mxu0
      %1282 = vdwg.mxu0
      %v1283 = vadd.f32 %v1049, %v1221
      %v1284 = vadd.f32 %v1050, %v1224
      %v1285 = vadd.f32 %v1051, %v1229
      %v1286 = vadd.f32 %v1052, %v1232
      %v1287 = vadd.f32 %v1053, %v1237
      %v1288 = vadd.f32 %v1054, %v1240
      %v1289 = vadd.f32 %v1055, %v1245
      %v1290 = vadd.f32 %v1056, %v1248
      %v1291 = vadd.f32 %v1057, %v1253
      %v1292 = vadd.f32 %v1058, %v1256
      %v1293 = vadd.f32 %v1059, %v1261
      %v1294 = vadd.f32 %v1060, %v1264
      %v1295 = vadd.f32 %v1061, %v1269
      %v1296 = vadd.f32 %v1062, %v1272
      %v1297 = vadd.f32 %v1063, %v1277
      %v1298 = vadd.f32 %v1064, %v1280
      %1299 = vst [vmem:[#allocation2] sm:$0xff] %v1283
      %1300 = vst [vmem:[#allocation2 + $0x8] sm:$0xff] %v1284
      %1301 = vst [vmem:[#allocation2 + $0x10] sm:$0xff] %v1285
      %1302 = vst [vmem:[#allocation2 + $0x18] sm:$0xff] %v1286
      %1303 = vst [vmem:[#allocation2 + $0x20] sm:$0xff] %v1287
      %1304 = vst [vmem:[#allocation2 + $0x28] sm:$0xff] %v1288
      %1305 = vst [vmem:[#allocation2 + $0x30] sm:$0xff] %v1289
      %1306 = vst [vmem:[#allocation2 + $0x38] sm:$0xff] %v1290
      %1307 = vst [vmem:[#allocation2 + $0x40] sm:$0xff] %v1291
      %1308 = vst [vmem:[#allocation2 + $0x48] sm:$0xff] %v1292
      %1309 = vst [vmem:[#allocation2 + $0x50] sm:$0xff] %v1293
      %1310 = vst [vmem:[#allocation2 + $0x58] sm:$0xff] %v1294
      %1311 = vst [vmem:[#allocation2 + $0x60] sm:$0xff] %v1295
      %1312 = vst [vmem:[#allocation2 + $0x68] sm:$0xff] %v1296
      %1313 = vst [vmem:[#allocation2 + $0x70] sm:$0xff] %v1297
      %1314 = vst [vmem:[#allocation2 + $0x78] sm:$0xff] %v1298
      %s1315 = sadd.s32 %s197, 2
      %s1316 = smul.u32 %s1315, 3
      %s1317 = smul.addr %s1316, 4
      %s1318 = scalar_lea.vmem %s184, %s1317
      %v1319 = vld [vmem:[%s1318] sm:$0xf]
      %v1320 = vld [vmem:[%s1318 + $0x4] sm:$0xf]
      %v1321 = vld [vmem:[%s1318 + $0xc] sm:$0xf]
      %v1322 = vld [vmem:[%s1318 + $0x10] sm:$0xf]
      %v1323 = vld [vmem:[%s1318 + $0x18] sm:$0xf]
      %v1324 = vld [vmem:[%s1318 + $0x1c] sm:$0xf]
      %v1325 = vld [vmem:[%s1318 + $0x24] sm:$0xf]
      %v1326 = vld [vmem:[%s1318 + $0x28] sm:$0xf]
      %v1327 = vld [vmem:[%s1318 + $0x30] sm:$0xf]
      %v1328 = vld [vmem:[%s1318 + $0x34] sm:$0xf]
      %v1329 = vld [vmem:[%s1318 + $0x3c] sm:$0xf]
      %v1330 = vld [vmem:[%s1318 + $0x40] sm:$0xf]
      %v1331 = vld [vmem:[%s1318 + $0x48] sm:$0xf]
      %v1332 = vld [vmem:[%s1318 + $0x4c] sm:$0xf]
      %v1333 = vld [vmem:[%s1318 + $0x54] sm:$0xf]
      %v1334 = vld [vmem:[%s1318 + $0x58] sm:$0xf]
      %v1335 = vld [vmem:[%s1318 + $0x8] sm:$0x1]
      %v1336 = vld [vmem:[%s1318 + $0x14] sm:$0x1]
      %v1337 = vld [vmem:[%s1318 + $0x20] sm:$0x1]
      %v1338 = vld [vmem:[%s1318 + $0x2c] sm:$0x1]
      %v1339 = vld [vmem:[%s1318 + $0x38] sm:$0x1]
      %v1340 = vld [vmem:[%s1318 + $0x44] sm:$0x1]
      %v1341 = vld [vmem:[%s1318 + $0x50] sm:$0x1]
      %v1342 = vld [vmem:[%s1318 + $0x5c] sm:$0x1]
      %v1343 = vld [vmem:[%s1318] sm:$0xe]
      %v1344 = vld [vmem:[%s1318 + $0xc] sm:$0xe]
      %v1345 = vld [vmem:[%s1318 + $0x18] sm:$0xe]
      %v1346 = vld [vmem:[%s1318 + $0x24] sm:$0xe]
      %v1347 = vld [vmem:[%s1318 + $0x30] sm:$0xe]
      %v1348 = vld [vmem:[%s1318 + $0x3c] sm:$0xe]
      %v1349 = vld [vmem:[%s1318 + $0x48] sm:$0xe]
      %v1350 = vld [vmem:[%s1318 + $0x54] sm:$0xe]
      %v1367 = vunpack.c.l.b16 %v1319
      %v1368 = vunpack.c.l.b16 %v1320
      %v1369 = vunpack.c.l.b16 %v1321
      %v1370 = vunpack.c.l.b16 %v1322
      %v1371 = vunpack.c.l.b16 %v1323
      %v1372 = vunpack.c.l.b16 %v1324
      %v1373 = vunpack.c.l.b16 %v1325
      %v1374 = vunpack.c.l.b16 %v1326
      %v1375 = vunpack.c.l.b16 %v1327
      %v1376 = vunpack.c.l.b16 %v1328
      %v1377 = vunpack.c.l.b16 %v1329
      %v1378 = vunpack.c.l.b16 %v1330
      %v1379 = vunpack.c.l.b16 %v1331
      %v1380 = vunpack.c.l.b16 %v1332
      %v1381 = vunpack.c.l.b16 %v1333
      %v1382 = vunpack.c.l.b16 %v1334
      %v1383 = vpack.c.b16 %v1368, %v1367
      %v1384 = vpack.c.b16 %v1370, %v1369
      %v1385 = vpack.c.b16 %v1372, %v1371
      %v1386 = vpack.c.b16 %v1374, %v1373
      %v1387 = vpack.c.b16 %v1376, %v1375
      %v1388 = vpack.c.b16 %v1378, %v1377
      %v1389 = vpack.c.b16 %v1380, %v1379
      %v1390 = vpack.c.b16 %v1382, %v1381
      %v1399 = vunpack.c.l.b16 %v1335
      %v1400 = vunpack.c.l.b16 %v1336
      %v1401 = vunpack.c.l.b16 %v1337
      %v1402 = vunpack.c.l.b16 %v1338
      %v1403 = vunpack.c.l.b16 %v1339
      %v1404 = vunpack.c.l.b16 %v1340
      %v1405 = vunpack.c.l.b16 %v1341
      %v1406 = vunpack.c.l.b16 %v1342
      %v1407 = vpack.c.b16 %v1399, %v1399
      %v1408 = vpack.c.b16 %v1400, %v1400
      %v1409 = vpack.c.b16 %v1401, %v1401
      %v1410 = vpack.c.b16 %v1402, %v1402
      %v1411 = vpack.c.b16 %v1403, %v1403
      %v1412 = vpack.c.b16 %v1404, %v1404
      %v1413 = vpack.c.b16 %v1405, %v1405
      %v1414 = vpack.c.b16 %v1406, %v1406
      %v1416 = vshrl.u32 %v1383, 16
      %v1418 = vshll.u32 %v1383, 16
      %v1420 = vrot.slane %v1418, 1
      %v1421 = vor.u32 %v1416, %v1420
      %v1423 = vshll.u32 %v1407, 16
      %v1425 = vrot.slane %v1423, 1
      %v1426 = vsel %vm313, %v1421, %v1425
      %v1428 = vshrl.u32 %v1384, 16
      %v1430 = vshll.u32 %v1384, 16
      %v1432 = vrot.slane %v1430, 1
      %v1433 = vor.u32 %v1428, %v1432
      %v1435 = vshll.u32 %v1408, 16
      %v1437 = vrot.slane %v1435, 1
      %v1438 = vsel %vm313, %v1433, %v1437
      %v1440 = vshrl.u32 %v1385, 16
      %v1442 = vshll.u32 %v1385, 16
      %v1444 = vrot.slane %v1442, 1
      %v1445 = vor.u32 %v1440, %v1444
      %v1447 = vshll.u32 %v1409, 16
      %v1449 = vrot.slane %v1447, 1
      %v1450 = vsel %vm313, %v1445, %v1449
      %v1452 = vshrl.u32 %v1386, 16
      %v1454 = vshll.u32 %v1386, 16
      %v1456 = vrot.slane %v1454, 1
      %v1457 = vor.u32 %v1452, %v1456
      %v1459 = vshll.u32 %v1410, 16
      %v1461 = vrot.slane %v1459, 1
      %v1462 = vsel %vm313, %v1457, %v1461
      %v1464 = vshrl.u32 %v1387, 16
      %v1466 = vshll.u32 %v1387, 16
      %v1468 = vrot.slane %v1466, 1
      %v1469 = vor.u32 %v1464, %v1468
      %v1471 = vshll.u32 %v1411, 16
      %v1473 = vrot.slane %v1471, 1
      %v1474 = vsel %vm313, %v1469, %v1473
      %v1476 = vshrl.u32 %v1388, 16
      %v1478 = vshll.u32 %v1388, 16
      %v1480 = vrot.slane %v1478, 1
      %v1481 = vor.u32 %v1476, %v1480
      %v1483 = vshll.u32 %v1412, 16
      %v1485 = vrot.slane %v1483, 1
      %v1486 = vsel %vm313, %v1481, %v1485
      %v1488 = vshrl.u32 %v1389, 16
      %v1490 = vshll.u32 %v1389, 16
      %v1492 = vrot.slane %v1490, 1
      %v1493 = vor.u32 %v1488, %v1492
      %v1495 = vshll.u32 %v1413, 16
      %v1497 = vrot.slane %v1495, 1
      %v1498 = vsel %vm313, %v1493, %v1497
      %v1500 = vshrl.u32 %v1390, 16
      %v1502 = vshll.u32 %v1390, 16
      %v1504 = vrot.slane %v1502, 1
      %v1505 = vor.u32 %v1500, %v1504
      %v1507 = vshll.u32 %v1414, 16
      %v1509 = vrot.slane %v1507, 1
      %v1510 = vsel %vm313, %v1505, %v1509
      %1511 = vrot.lane.b32.xlu0 %v1426, 64
      %v1512 = vpop.permute.xlu0 %1511
      %1513 = vrot.lane.b32.xlu0 %v1438, 64
      %v1514 = vpop.permute.xlu0 %1513
      %1515 = vrot.lane.b32.xlu0 %v1450, 64
      %v1516 = vpop.permute.xlu0 %1515
      %1517 = vrot.lane.b32.xlu0 %v1462, 64
      %v1518 = vpop.permute.xlu0 %1517
      %1519 = vrot.lane.b32.xlu0 %v1474, 64
      %v1520 = vpop.permute.xlu0 %1519
      %1521 = vrot.lane.b32.xlu0 %v1486, 64
      %v1522 = vpop.permute.xlu0 %1521
      %1523 = vrot.lane.b32.xlu0 %v1498, 64
      %v1524 = vpop.permute.xlu0 %1523
      %1525 = vrot.lane.b32.xlu0 %v1510, 64
      %v1526 = vpop.permute.xlu0 %1525
      %v1535 = vunpack.c.l.b16 %v1343
      %v1536 = vunpack.c.l.b16 %v1344
      %v1537 = vunpack.c.l.b16 %v1345
      %v1538 = vunpack.c.l.b16 %v1346
      %v1539 = vunpack.c.l.b16 %v1347
      %v1540 = vunpack.c.l.b16 %v1348
      %v1541 = vunpack.c.l.b16 %v1349
      %v1542 = vunpack.c.l.b16 %v1350
      %v1543 = vpack.c.b16 %v1368, %v1535
      %v1544 = vpack.c.b16 %v1370, %v1536
      %v1545 = vpack.c.b16 %v1372, %v1537
      %v1546 = vpack.c.b16 %v1374, %v1538
      %v1547 = vpack.c.b16 %v1376, %v1539
      %v1548 = vpack.c.b16 %v1378, %v1540
      %v1549 = vpack.c.b16 %v1380, %v1541
      %v1550 = vpack.c.b16 %v1382, %v1542
      %v1551 = vrot.slane %v1543, 1
      %v1552 = vrot.slane %v1407, 1
      %v1553 = vsel %vm450, %v1551, %v1552
      %v1554 = vrot.slane %v1544, 1
      %v1555 = vrot.slane %v1408, 1
      %v1556 = vsel %vm450, %v1554, %v1555
      %v1557 = vrot.slane %v1545, 1
      %v1558 = vrot.slane %v1409, 1
      %v1559 = vsel %vm450, %v1557, %v1558
      %v1560 = vrot.slane %v1546, 1
      %v1561 = vrot.slane %v1410, 1
      %v1562 = vsel %vm450, %v1560, %v1561
      %v1563 = vrot.slane %v1547, 1
      %v1564 = vrot.slane %v1411, 1
      %v1565 = vsel %vm450, %v1563, %v1564
      %v1566 = vrot.slane %v1548, 1
      %v1567 = vrot.slane %v1412, 1
      %v1568 = vsel %vm450, %v1566, %v1567
      %v1569 = vrot.slane %v1549, 1
      %v1570 = vrot.slane %v1413, 1
      %v1571 = vsel %vm450, %v1569, %v1570
      %v1572 = vrot.slane %v1550, 1
      %v1573 = vrot.slane %v1414, 1
      %v1574 = vsel %vm450, %v1572, %v1573
      %v1576 = vsel %vm475, %v1383, %v1512
      %v1579 = vsel %vm475, %v1384, %v1514
      %v1582 = vsel %vm475, %v1385, %v1516
      %v1585 = vsel %vm475, %v1386, %v1518
      %v1588 = vsel %vm475, %v1387, %v1520
      %v1591 = vsel %vm475, %v1388, %v1522
      %v1594 = vsel %vm475, %v1389, %v1524
      %v1597 = vsel %vm475, %v1390, %v1526
      %v1599 = vld [vmem:[#allocation2] sm:$0xff]
      %v1600 = vld [vmem:[#allocation2 + $0x8] sm:$0xff]
      %v1601 = vld [vmem:[#allocation2 + $0x10] sm:$0xff]
      %v1602 = vld [vmem:[#allocation2 + $0x18] sm:$0xff]
      %v1603 = vld [vmem:[#allocation2 + $0x20] sm:$0xff]
      %v1604 = vld [vmem:[#allocation2 + $0x28] sm:$0xff]
      %v1605 = vld [vmem:[#allocation2 + $0x30] sm:$0xff]
      %v1606 = vld [vmem:[#allocation2 + $0x38] sm:$0xff]
      %v1607 = vld [vmem:[#allocation2 + $0x40] sm:$0xff]
      %v1608 = vld [vmem:[#allocation2 + $0x48] sm:$0xff]
      %v1609 = vld [vmem:[#allocation2 + $0x50] sm:$0xff]
      %v1610 = vld [vmem:[#allocation2 + $0x58] sm:$0xff]
      %v1611 = vld [vmem:[#allocation2 + $0x60] sm:$0xff]
      %v1612 = vld [vmem:[#allocation2 + $0x68] sm:$0xff]
      %v1613 = vld [vmem:[#allocation2 + $0x70] sm:$0xff]
      %v1614 = vld [vmem:[#allocation2 + $0x78] sm:$0xff]
      %s1615 = scalar_lea.vmem %s1, 192
      %v1616 = vld [vmem:[%s1615] sm:$0xf]
      %v1617 = vld [vmem:[%s1615 + $0x4] sm:$0xf]
      %v1618 = vld [vmem:[%s1615 + $0x8] sm:$0xf]
      %v1619 = vld [vmem:[%s1615 + $0xc] sm:$0xf]
      %v1620 = vld [vmem:[%s1615 + $0x10] sm:$0xf]
      %v1621 = vld [vmem:[%s1615 + $0x14] sm:$0xf]
      %v1622 = vld [vmem:[%s1615 + $0x18] sm:$0xf]
      %v1623 = vld [vmem:[%s1615 + $0x1c] sm:$0xf]
      %v1624 = vld [vmem:[%s1615 + $0x20] sm:$0xf]
      %v1625 = vld [vmem:[%s1615 + $0x24] sm:$0xf]
      %v1626 = vld [vmem:[%s1615 + $0x28] sm:$0xf]
      %v1627 = vld [vmem:[%s1615 + $0x2c] sm:$0xf]
      %v1628 = vld [vmem:[%s1615 + $0x30] sm:$0xf]
      %v1629 = vld [vmem:[%s1615 + $0x34] sm:$0xf]
      %v1630 = vld [vmem:[%s1615 + $0x38] sm:$0xf]
      %v1631 = vld [vmem:[%s1615 + $0x3c] sm:$0xf]
      %v1632 = vld [vmem:[%s1615 + $0x40] sm:$0xf]
      %v1633 = vld [vmem:[%s1615 + $0x44] sm:$0xf]
      %v1634 = vld [vmem:[%s1615 + $0x48] sm:$0xf]
      %v1635 = vld [vmem:[%s1615 + $0x4c] sm:$0xf]
      %v1636 = vld [vmem:[%s1615 + $0x50] sm:$0xf]
      %v1637 = vld [vmem:[%s1615 + $0x54] sm:$0xf]
      %v1638 = vld [vmem:[%s1615 + $0x58] sm:$0xf]
      %v1639 = vld [vmem:[%s1615 + $0x5c] sm:$0xf]
      %v1664 = vunpack.c.l.b16 %v1616
      %v1665 = vunpack.c.l.b16 %v1617
      %v1666 = vunpack.c.l.b16 %v1618
      %v1667 = vunpack.c.l.b16 %v1619
      %v1668 = vunpack.c.l.b16 %v1620
      %v1669 = vunpack.c.l.b16 %v1621
      %v1670 = vunpack.c.l.b16 %v1622
      %v1671 = vunpack.c.l.b16 %v1623
      %v1672 = vunpack.c.l.b16 %v1624
      %v1673 = vunpack.c.l.b16 %v1625
      %v1674 = vunpack.c.l.b16 %v1626
      %v1675 = vunpack.c.l.b16 %v1627
      %v1676 = vunpack.c.l.b16 %v1628
      %v1677 = vunpack.c.l.b16 %v1629
      %v1678 = vunpack.c.l.b16 %v1630
      %v1679 = vunpack.c.l.b16 %v1631
      %v1680 = vunpack.c.l.b16 %v1632
      %v1681 = vunpack.c.l.b16 %v1633
      %v1682 = vunpack.c.l.b16 %v1634
      %v1683 = vunpack.c.l.b16 %v1635
      %v1684 = vunpack.c.l.b16 %v1636
      %v1685 = vunpack.c.l.b16 %v1637
      %v1686 = vunpack.c.l.b16 %v1638
      %v1687 = vunpack.c.l.b16 %v1639
      %v1688 = vpack.c.b16 %v1665, %v1664
      %v1689 = vpack.c.b16 %v1667, %v1666
      %v1690 = vpack.c.b16 %v1669, %v1668
      %v1691 = vpack.c.b16 %v1671, %v1670
      %v1692 = vpack.c.b16 %v1673, %v1672
      %v1693 = vpack.c.b16 %v1675, %v1674
      %v1694 = vpack.c.b16 %v1677, %v1676
      %v1695 = vpack.c.b16 %v1679, %v1678
      %v1696 = vpack.c.b16 %v1681, %v1680
      %v1697 = vpack.c.b16 %v1683, %v1682
      %v1698 = vpack.c.b16 %v1685, %v1684
      %v1699 = vpack.c.b16 %v1687, %v1686
      %v1713 = vsel %vm475, %v1553, 0
      %v1716 = vsel %vm475, %v1556, 0
      %v1719 = vsel %vm475, %v1559, 0
      %v1722 = vsel %vm475, %v1562, 0
      %v1725 = vsel %vm475, %v1565, 0
      %v1728 = vsel %vm475, %v1568, 0
      %v1731 = vsel %vm475, %v1571, 0
      %v1734 = vsel %vm475, %v1574, 0
      %1736 = vmatprep.subr.bf16.mxu0 0
      %1737 = vmatpush1.bf16.msra.mxu0 %v1695
      %1738 = vmatprep.subr.bf16.mxu0 0
      %1739 = vmatpush1.bf16.msra.mxu0 %v1694
      %1740 = vmatprep.subr.bf16.mxu0 0
      %1741 = vmatpush1.bf16.msra.mxu0 %v1693
      %1742 = vmatprep.subr.bf16.mxu0 0
      %1743 = vmatpush1.bf16.msra.mxu0 %v1692
      %1744 = vmatprep.subr.bf16.mxu0 0
      %1745 = vmatpush1.bf16.msra.mxu0 %v1691
      %1746 = vmatprep.subr.bf16.mxu0 0
      %1747 = vmatpush1.bf16.msra.mxu0 %v1690
      %1748 = vmatprep.subr.bf16.mxu0 0
      %1749 = vmatpush1.bf16.msra.mxu0 %v1689
      %1750 = vmatprep.subr.bf16.mxu0 0
      %1751 = vmatpush1.bf16.msra.mxu0 %v1688
      %1752 = vmatprep.subr.bf16.mxu0 0
      %1753 = vmatpush2.bf16.msra.mxu0 0
      %1754 = vmatprep.subr.bf16.mxu0 0
      %1755 = vmatpush2.bf16.msra.mxu0 0
      %1756 = vmatprep.subr.bf16.mxu0 0
      %1757 = vmatpush2.bf16.msra.mxu0 0
      %1758 = vmatprep.subr.bf16.mxu0 0
      %1759 = vmatpush2.bf16.msra.mxu0 0
      %1760 = vmatprep.subr.bf16.mxu0 0
      %1761 = vmatpush2.bf16.msra.mxu0 %v1699
      %1762 = vmatprep.subr.bf16.mxu0 0
      %1763 = vmatpush2.bf16.msra.mxu0 %v1698
      %1764 = vmatprep.subr.bf16.mxu0 0
      %1765 = vmatpush2.bf16.msra.mxu0 %v1697
      %1766 = vmatprep.subr.bf16.mxu0 0
      %1767 = vmatpush2.bf16.msra.mxu0 %v1696
      %1768 = vmatprep.mubr.bf16.mxu0 %v1713
      %1769 = vmatmul.mubr.bf16.gmra.mxu0 %v1576
      %v1770 = vpop.f32.mrf.mxu0
      %v1771 = vadd.f32 0.0, %v1770
      %v1772 = vpop.f32.mrf.mxu0
      %v1773 = vpop.f32.mrf.mxu0
      %v1774 = vadd.f32 0.0, %v1773
      %v1775 = vpop.f32.mrf.mxu0
      %1776 = vmatprep.mubr.bf16.mxu0 %v1716
      %1777 = vmatmul.mubr.bf16.gmra.mxu0 %v1579
      %v1778 = vpop.f32.mrf.mxu0
      %v1779 = vadd.f32 0.0, %v1778
      %v1780 = vpop.f32.mrf.mxu0
      %v1781 = vpop.f32.mrf.mxu0
      %v1782 = vadd.f32 0.0, %v1781
      %v1783 = vpop.f32.mrf.mxu0
      %1784 = vmatprep.mubr.bf16.mxu0 %v1719
      %1785 = vmatmul.mubr.bf16.gmra.mxu0 %v1582
      %v1786 = vpop.f32.mrf.mxu0
      %v1787 = vadd.f32 0.0, %v1786
      %v1788 = vpop.f32.mrf.mxu0
      %v1789 = vpop.f32.mrf.mxu0
      %v1790 = vadd.f32 0.0, %v1789
      %v1791 = vpop.f32.mrf.mxu0
      %1792 = vmatprep.mubr.bf16.mxu0 %v1722
      %1793 = vmatmul.mubr.bf16.gmra.mxu0 %v1585
      %v1794 = vpop.f32.mrf.mxu0
      %v1795 = vadd.f32 0.0, %v1794
      %v1796 = vpop.f32.mrf.mxu0
      %v1797 = vpop.f32.mrf.mxu0
      %v1798 = vadd.f32 0.0, %v1797
      %v1799 = vpop.f32.mrf.mxu0
      %1800 = vmatprep.mubr.bf16.mxu0 %v1725
      %1801 = vmatmul.mubr.bf16.gmra.mxu0 %v1588
      %v1802 = vpop.f32.mrf.mxu0
      %v1803 = vadd.f32 0.0, %v1802
      %v1804 = vpop.f32.mrf.mxu0
      %v1805 = vpop.f32.mrf.mxu0
      %v1806 = vadd.f32 0.0, %v1805
      %v1807 = vpop.f32.mrf.mxu0
      %1808 = vmatprep.mubr.bf16.mxu0 %v1728
      %1809 = vmatmul.mubr.bf16.gmra.mxu0 %v1591
      %v1810 = vpop.f32.mrf.mxu0
      %v1811 = vadd.f32 0.0, %v1810
      %v1812 = vpop.f32.mrf.mxu0
      %v1813 = vpop.f32.mrf.mxu0
      %v1814 = vadd.f32 0.0, %v1813
      %v1815 = vpop.f32.mrf.mxu0
      %1816 = vmatprep.mubr.bf16.mxu0 %v1731
      %1817 = vmatmul.mubr.bf16.gmra.mxu0 %v1594
      %v1818 = vpop.f32.mrf.mxu0
      %v1819 = vadd.f32 0.0, %v1818
      %v1820 = vpop.f32.mrf.mxu0
      %v1821 = vpop.f32.mrf.mxu0
      %v1822 = vadd.f32 0.0, %v1821
      %v1823 = vpop.f32.mrf.mxu0
      %1824 = vmatprep.mubr.bf16.mxu0 %v1734
      %1825 = vmatmul.mubr.bf16.gmra.mxu0 %v1597
      %v1826 = vpop.f32.mrf.mxu0
      %v1827 = vadd.f32 0.0, %v1826
      %v1828 = vpop.f32.mrf.mxu0
      %v1829 = vpop.f32.mrf.mxu0
      %v1830 = vadd.f32 0.0, %v1829
      %v1831 = vpop.f32.mrf.mxu0
      %1832 = vdwg.mxu0
      %v1833 = vadd.f32 %v1599, %v1771
      %v1834 = vadd.f32 %v1600, %v1774
      %v1835 = vadd.f32 %v1601, %v1779
      %v1836 = vadd.f32 %v1602, %v1782
      %v1837 = vadd.f32 %v1603, %v1787
      %v1838 = vadd.f32 %v1604, %v1790
      %v1839 = vadd.f32 %v1605, %v1795
      %v1840 = vadd.f32 %v1606, %v1798
      %v1841 = vadd.f32 %v1607, %v1803
      %v1842 = vadd.f32 %v1608, %v1806
      %v1843 = vadd.f32 %v1609, %v1811
      %v1844 = vadd.f32 %v1610, %v1814
      %v1845 = vadd.f32 %v1611, %v1819
      %v1846 = vadd.f32 %v1612, %v1822
      %v1847 = vadd.f32 %v1613, %v1827
      %v1848 = vadd.f32 %v1614, %v1830
      %1849 = vst [vmem:[#allocation2] sm:$0xff] %v1833
      %1850 = vst [vmem:[#allocation2 + $0x8] sm:$0xff] %v1834
      %1851 = vst [vmem:[#allocation2 + $0x10] sm:$0xff] %v1835
      %1852 = vst [vmem:[#allocation2 + $0x18] sm:$0xff] %v1836
      %1853 = vst [vmem:[#allocation2 + $0x20] sm:$0xff] %v1837
      %1854 = vst [vmem:[#allocation2 + $0x28] sm:$0xff] %v1838
      %1855 = vst [vmem:[#allocation2 + $0x30] sm:$0xff] %v1839
      %1856 = vst [vmem:[#allocation2 + $0x38] sm:$0xff] %v1840
      %1857 = vst [vmem:[#allocation2 + $0x40] sm:$0xff] %v1841
      %1858 = vst [vmem:[#allocation2 + $0x48] sm:$0xff] %v1842
      %1859 = vst [vmem:[#allocation2 + $0x50] sm:$0xff] %v1843
      %1860 = vst [vmem:[#allocation2 + $0x58] sm:$0xff] %v1844
      %1861 = vst [vmem:[#allocation2 + $0x60] sm:$0xff] %v1845
      %1862 = vst [vmem:[#allocation2 + $0x68] sm:$0xff] %v1846
      %1863 = vst [vmem:[#allocation2 + $0x70] sm:$0xff] %v1847
      %1864 = vst [vmem:[#allocation2 + $0x78] sm:$0xff] %v1848
      %v1865 = vld [vmem:[#allocation2] sm:$0xff]
      %v1866 = vld [vmem:[#allocation2 + $0x8] sm:$0xff]
      %v1867 = vld [vmem:[#allocation2 + $0x10] sm:$0xff]
      %v1868 = vld [vmem:[#allocation2 + $0x18] sm:$0xff]
      %v1869 = vld [vmem:[#allocation2 + $0x20] sm:$0xff]
      %v1870 = vld [vmem:[#allocation2 + $0x28] sm:$0xff]
      %v1871 = vld [vmem:[#allocation2 + $0x30] sm:$0xff]
      %v1872 = vld [vmem:[#allocation2 + $0x38] sm:$0xff]
      %v1873 = vld [vmem:[#allocation2 + $0x40] sm:$0xff]
      %v1874 = vld [vmem:[#allocation2 + $0x48] sm:$0xff]
      %v1875 = vld [vmem:[#allocation2 + $0x50] sm:$0xff]
      %v1876 = vld [vmem:[#allocation2 + $0x58] sm:$0xff]
      %v1877 = vld [vmem:[#allocation2 + $0x60] sm:$0xff]
      %v1878 = vld [vmem:[#allocation2 + $0x68] sm:$0xff]
      %v1879 = vld [vmem:[#allocation2 + $0x70] sm:$0xff]
      %v1880 = vld [vmem:[#allocation2 + $0x78] sm:$0xff]
      %v1881 = vld [vmem:[%s2] sm:$0x1]
      %v1883 = vlaneseq
      %v1884 = vshrl.u32 %v1883, 7
      %v1885 = vsub.s32 0, %v1884
      %v1886 = vrot.slane %v1881, %v1885
      %v1888 = vadd.f32 %v1865, %v1886
      %v1889 = vadd.f32 %v1866, %v1886
      %v1890 = vadd.f32 %v1867, %v1886
      %v1891 = vadd.f32 %v1868, %v1886
      %v1892 = vadd.f32 %v1869, %v1886
      %v1893 = vadd.f32 %v1870, %v1886
      %v1894 = vadd.f32 %v1871, %v1886
      %v1895 = vadd.f32 %v1872, %v1886
      %v1896 = vadd.f32 %v1873, %v1886
      %v1897 = vadd.f32 %v1874, %v1886
      %v1898 = vadd.f32 %v1875, %v1886
      %v1899 = vadd.f32 %v1876, %v1886
      %v1900 = vadd.f32 %v1877, %v1886
      %v1901 = vadd.f32 %v1878, %v1886
      %v1902 = vadd.f32 %v1879, %v1886
      %v1903 = vadd.f32 %v1880, %v1886
      %v1904 = vmax.f32 %v1888, 0.0
      %v1905 = vmax.f32 %v1889, 0.0
      %v1906 = vmax.f32 %v1890, 0.0
      %v1907 = vmax.f32 %v1891, 0.0
      %v1908 = vmax.f32 %v1892, 0.0
      %v1909 = vmax.f32 %v1893, 0.0
      %v1910 = vmax.f32 %v1894, 0.0
      %v1911 = vmax.f32 %v1895, 0.0
      %v1912 = vmax.f32 %v1896, 0.0
      %v1913 = vmax.f32 %v1897, 0.0
      %v1914 = vmax.f32 %v1898, 0.0
      %v1915 = vmax.f32 %v1899, 0.0
      %v1916 = vmax.f32 %v1900, 0.0
      %v1917 = vmax.f32 %v1901, 0.0
      %v1918 = vmax.f32 %v1902, 0.0
      %v1919 = vmax.f32 %v1903, 0.0
      %v1920 = vpack.c.bf16 %v1905, %v1904
      %v1921 = vpack.c.bf16 %v1907, %v1906
      %v1922 = vpack.c.bf16 %v1909, %v1908
      %v1923 = vpack.c.bf16 %v1911, %v1910
      %v1924 = vpack.c.bf16 %v1913, %v1912
      %v1925 = vpack.c.bf16 %v1915, %v1914
      %v1926 = vpack.c.bf16 %v1917, %v1916
      %v1927 = vpack.c.bf16 %v1919, %v1918
      %v1936 = vunpack.c.l.b16 %v1920
      %v1937 = vunpack.c.h.b16 %v1920
      %v1938 = vunpack.c.l.b16 %v1921
      %v1939 = vunpack.c.h.b16 %v1921
      %v1940 = vunpack.c.l.b16 %v1922
      %v1941 = vunpack.c.h.b16 %v1922
      %v1942 = vunpack.c.l.b16 %v1923
      %v1943 = vunpack.c.h.b16 %v1923
      %v1944 = vunpack.c.l.b16 %v1924
      %v1945 = vunpack.c.h.b16 %v1924
      %v1946 = vunpack.c.l.b16 %v1925
      %v1947 = vunpack.c.h.b16 %v1925
      %v1948 = vunpack.c.l.b16 %v1926
      %v1949 = vunpack.c.h.b16 %v1926
      %v1950 = vunpack.c.l.b16 %v1927
      %v1951 = vunpack.c.h.b16 %v1927
      %v1952 = vpack.c.b16 %v1936, %v1936
      %v1953 = vpack.c.b16 %v1937, %v1937
      %v1954 = vpack.c.b16 %v1938, %v1938
      %v1955 = vpack.c.b16 %v1939, %v1939
      %v1956 = vpack.c.b16 %v1940, %v1940
      %v1957 = vpack.c.b16 %v1941, %v1941
      %v1958 = vpack.c.b16 %v1942, %v1942
      %v1959 = vpack.c.b16 %v1943, %v1943
      %v1960 = vpack.c.b16 %v1944, %v1944
      %v1961 = vpack.c.b16 %v1945, %v1945
      %v1962 = vpack.c.b16 %v1946, %v1946
      %v1963 = vpack.c.b16 %v1947, %v1947
      %v1964 = vpack.c.b16 %v1948, %v1948
      %v1965 = vpack.c.b16 %v1949, %v1949
      %v1966 = vpack.c.b16 %v1950, %v1950
      %v1967 = vpack.c.b16 %v1951, %v1951
      %1984 = vst [vmem:[%s194] sm:$0xf] %v1952
      %1985 = vst [vmem:[%s194 + $0x4] sm:$0xf] %v1953
      %1986 = vst [vmem:[%s194 + $0x8] sm:$0xf] %v1954
      %1987 = vst [vmem:[%s194 + $0xc] sm:$0xf] %v1955
      %1988 = vst [vmem:[%s194 + $0x10] sm:$0xf] %v1956
      %1989 = vst [vmem:[%s194 + $0x14] sm:$0xf] %v1957
      %1990 = vst [vmem:[%s194 + $0x18] sm:$0xf] %v1958
      %1991 = vst [vmem:[%s194 + $0x1c] sm:$0xf] %v1959
      %1992 = vst [vmem:[%s194 + $0x20] sm:$0xf] %v1960
      %1993 = vst [vmem:[%s194 + $0x24] sm:$0xf] %v1961
      %1994 = vst [vmem:[%s194 + $0x28] sm:$0xf] %v1962
      %1995 = vst [vmem:[%s194 + $0x2c] sm:$0xf] %v1963
      %1996 = vst [vmem:[%s194 + $0x30] sm:$0xf] %v1964
      %1997 = vst [vmem:[%s194 + $0x34] sm:$0xf] %v1965
      %1998 = vst [vmem:[%s194 + $0x38] sm:$0xf] %v1966
      %1999 = vst [vmem:[%s194 + $0x3c] sm:$0xf] %v1967
      %s2000 = smul.u32 8, %s19
      %p2001 = scmp.lt.s32.totalorder %s18, 1
      %s2002 = scalar_select %p2001, %s18, 1
      %p2003 = scmp.lt.s32.totalorder %s2000, 15
      %s2004 = scalar_select %p2003, %s2000, 15
      %s2005 = smul.addr %s2004, 2
      %s2006 = smul.addr %s2002, 32
      %s2007 = sadd.s32 %s2005, %s2006
      %s2008 = smul.addr %s2007, 4
      %s2009 = scalar_lea.vmem %s3, %s2008
      // Predicated region
      $region33: #{inception_a_forward.6} parent=31 // pred_check
        %p2010 = pneg %p114
      $region34: #{inception_a_forward.6} parent=31 // pred_check_branch
        %2012 = sbr.rel (%p2010) target = $region36
      $region35: #{inception_a_forward.6} parent=31 // pred_region
        %s2013 = smul.u32 8, %s19
      $region36: #{inception_a_forward.6} parent=31 // pred_fallthru
        _
    $region32: #{inception_a_forward.6} parent=5 // pred_fallthru
      _
    %p2014 = scmp.le.s32.totalorder 2, %s9
    // Predicated region
    $region37: #{inception_a_forward.6} parent=5 // pred_check
      %p2015 = pneg %p2014
    $region38: #{inception_a_forward.6} parent=5 // pred_check_branch
      %2017 = sbr.rel (%p2015) target = $region40
    $region39: #{inception_a_forward.6} parent=5 // pred_region
      %s2018 = ssub.s32 %s9, 2
      // Predicated region
      $region41: #{inception_a_forward.6} parent=39 // pred_check
        %p2019 = pneg %p120
      $region42: #{inception_a_forward.6} parent=39 // pred_check_branch
        %2021 = sbr.rel (%p2019) target = $region44
      $region43: #{inception_a_forward.6} parent=39 // pred_region
        %s2022 = smul.u32 8, %s21
        %p2023 = scmp.lt.s32.totalorder %s20, 1
        %s2024 = scalar_select %p2023, %s20, 1
        %p2025 = scmp.lt.s32.totalorder %s2022, 15
        %s2026 = scalar_select %p2025, %s2022, 15
        %s2027 = smul.addr %s2026, 2
        %s2028 = smul.addr %s2024, 32
        %s2029 = sadd.s32 %s2027, %s2028
        %s2030 = smul.addr %s2029, 4
        %s2031 = scalar_lea.vmem %s3, %s2030
      $region44: #{inception_a_forward.6} parent=39 // pred_fallthru
        _
    $region40: #{inception_a_forward.6} parent=5 // pred_fallthru
      _
  $region6: #{inception_a_forward.6} parent=0 // loop_footer
    %s13 = sadd.s32 1, %s9
  $region7: #{inception_a_forward.6} parent=0 // loop_footer_branch
    %8 = sbr.rel target = $region3
  $region8: #{inception_a_forward.6} parent=0 // loop_exit
    _

// kernel: inception_a_forward.7
$region0: #{inception_a_forward.7}
  #allocation0 [shape = 'u32[]', space=smem, size = 0x4, offset = 0x4, fixed_abs, tag = 'smem constant byte address 0x4 - core index']
  #allocation1 [shape = 'u32[144,128]{1,0:T(1,128)}', space=vmem, size = 0x12000, scoped, tag = 'internal scratch']
  #allocation2 [shape = 'f32[128,128]{1,0:T(8,128)}', space=vmem, size = 0x10000, scoped, tag = 'scratch operand']
  %s0 = inlined_call_operand.vmem [shape: bf16[2,18,18,96], index: 0, kind: input, shape index: {}]
  %s1 = inlined_call_operand.vmem [shape: bf16[3,288,128], index: 1, kind: input, shape index: {}]
  %s2 = inlined_call_operand.vmem [shape: f32[1,128], index: 2, kind: input, shape index: {}]
  %s3 = inlined_call_operand.vmem [shape: bf16[2,16,16,128], index: 3, kind: output, shape index: {}]
  %s4 = sld [smem:[#allocation0]]
  $region45: #{inception_a_forward.7} parent=0
    _
  %s6 = ssub.s32 1, %s4
  %s7 = scalar_select 0, %s6, %s4
  loop: start=0, step=1, limit=6
  $region2: #{inception_a_forward.7} parent=0 // loop_pre_header
    _
  $region3: #{inception_a_forward.7} parent=0 // loop_header
    %s9 = sphi 0, %s13
    %p10 = scmp.ge.s32.totalorder %s9, 6
    %s16 = sphi 0, %s28
    %s17 = sphi 0, %s24
    %s18 = sphi 0, %s16
    %s19 = sphi 0, %s17
    %s20 = sphi 0, %s18
    %s21 = sphi 0, %s19
    %s31 = sphi 0, %s33
    %s34 = sphi 0, %s31
    %s35 = sphi 0, %s34
    %s51 = sphi 0, %s35
    %s55 = sphi 0, %s55
    %s57 = sphi 0, %s55
    %s58 = sphi 0, %s57
    %s72 = sphi 0, %s58
    %s76 = sphi 0, %s76
    %s78 = sphi 0, %s76
    %s79 = sphi 0, %s78
    %s93 = sphi 0, %s79
    %s101 = sphi 0, %s103
    %s104 = sphi 0, %s101
    %s105 = sphi 0, %s104
    %s121 = sphi 0, %s105
  $region4: #{inception_a_forward.7} parent=0 // loop_header_branch
    %12 = sbr.rel (%p10) target = $region8
  $region5: #{inception_a_forward.7} parent=0 // loop_body
    %s14 = ssub.s32 %s9, 1
    %s15 = ssub.s32 %s9, 2
    %s22 = sadd.s32 1, %s17
    %p23 = scmp.ge.s32.totalorder %s22, 2
    %s24 = scalar_select %p23, 0, %s22
    %s25 = sadd.s32 1, %s16
    %s26 = scalar_select %p23, %s25, %s16
    %p27 = scmp.ge.s32.totalorder %s26, 2
    %s28 = scalar_select %p27, 0, %s26
    %s29 = ssub.s32 %s16, %s28
    %p30 = scmp.eq.s32.totalorder %s29, 0
    %s32 = sadd.s32 %s31, 1
    %s33 = scalar_select %p30, %s31, %s32
    %p36 = pneg %p30
    %p37 = scmp.eq.s32.totalorder %s9, 3
    %p38 = por %p36, %p37
    %p39 = scmp.ne.s32.totalorder %s31, %s34
    %p40 = scmp.eq.s32.totalorder %s9, 0
    %p41 = por %p39, %p40
    %p42 = scmp.ne.s32.totalorder %s31, %s34
    %p43 = scmp.eq.s32.totalorder %s14, 3
    %p44 = por %p42, %p43
    %p45 = scmp.ne.s32.totalorder %s34, %s35
    %p46 = scmp.eq.s32.totalorder %s14, 0
    %p47 = por %p45, %p46
    %p48 = scmp.ne.s32.totalorder %s34, %s35
    %p49 = scmp.eq.s32.totalorder %s15, 3
    %p50 = por %p48, %p49
    %p52 = scmp.ne.s32.totalorder %s35, %s51
    %p53 = scmp.eq.s32.totalorder %s15, 0
    %p54 = por %p52, %p53
    %s56 = sadd.s32 %s55, 1
    %p59 = scmp.eq.s32.totalorder %s9, 3
    %p60 = scmp.ne.s32.totalorder %s55, %s57
    %p61 = scmp.eq.s32.totalorder %s9, 0
    %p62 = por %p60, %p61
    %p63 = scmp.ne.s32.totalorder %s55, %s57
    %p64 = scmp.eq.s32.totalorder %s14, 3
    %p65 = por %p63, %p64
    %p66 = scmp.ne.s32.totalorder %s57, %s58
    %p67 = scmp.eq.s32.totalorder %s14, 0
    %p68 = por %p66, %p67
    %p69 = scmp.ne.s32.totalorder %s57, %s58
    %p70 = scmp.eq.s32.totalorder %s15, 3
    %p71 = por %p69, %p70
    %p73 = scmp.ne.s32.totalorder %s58, %s72
    %p74 = scmp.eq.s32.totalorder %s15, 0
    %p75 = por %p73, %p74
    %s77 = sadd.s32 %s76, 1
    %p80 = scmp.eq.s32.totalorder %s9, 3
    %p81 = scmp.ne.s32.totalorder %s76, %s78
    %p82 = scmp.eq.s32.totalorder %s9, 0
    %p83 = por %p81, %p82
    %p84 = scmp.ne.s32.totalorder %s76, %s78
    %p85 = scmp.eq.s32.totalorder %s14, 3
    %p86 = por %p84, %p85
    %p87 = scmp.ne.s32.totalorder %s78, %s79
    %p88 = scmp.eq.s32.totalorder %s14, 0
    %p89 = por %p87, %p88
    %p90 = scmp.ne.s32.totalorder %s78, %s79
    %p91 = scmp.eq.s32.totalorder %s15, 3
    %p92 = por %p90, %p91
    %p94 = scmp.ne.s32.totalorder %s79, %s93
    %p95 = scmp.eq.s32.totalorder %s15, 0
    %p96 = por %p94, %p95
    %s97 = ssub.s32 %s16, %s28
    %s98 = ssub.s32 %s17, %s24
    %s99 = sor.u32 %s97, %s98
    %p100 = scmp.eq.s32.totalorder %s99, 0
    %s102 = sadd.s32 %s101, 1
    %s103 = scalar_select %p100, %s101, %s102
    %p106 = pneg %p100
    %p107 = scmp.eq.s32.totalorder %s9, 3
    %p108 = por %p106, %p107
    %p109 = scmp.ne.s32.totalorder %s101, %s104
    %p110 = scmp.eq.s32.totalorder %s9, 0
    %p111 = por %p109, %p110
    %p112 = scmp.ne.s32.totalorder %s101, %s104
    %p113 = scmp.eq.s32.totalorder %s14, 3
    %p114 = por %p112, %p113
    %p115 = scmp.ne.s32.totalorder %s104, %s105
    %p116 = scmp.eq.s32.totalorder %s14, 0
    %p117 = por %p115, %p116
    %p118 = scmp.ne.s32.totalorder %s104, %s105
    %p119 = scmp.eq.s32.totalorder %s15, 3
    %p120 = por %p118, %p119
    %p122 = scmp.ne.s32.totalorder %s105, %s121
    %p123 = scmp.eq.s32.totalorder %s15, 0
    %p124 = por %p122, %p123
    %p125 = scmp.le.s32.totalorder 1, %s9
    %p126 = scmp.lt.s32.totalorder %s9, 5
    %p127 = pnand %p125, %p126
    %p128 = pneg %p127
    // Predicated region
    $region9: #{inception_a_forward.7} parent=5 // pred_check
      _
    $region10: #{inception_a_forward.7} parent=5 // pred_check_branch
      %130 = sbr.rel (%p127) target = $region12
    $region11: #{inception_a_forward.7} parent=5 // pred_region
      %s131 = ssub.s32 %s9, 1
      // Predicated region
      $region13: #{inception_a_forward.7} parent=11 // pred_check
        %p132 = pneg %p68
      $region14: #{inception_a_forward.7} parent=11 // pred_check_branch
        %134 = sbr.rel (%p132) target = $region16
      $region15: #{inception_a_forward.7} parent=11 // pred_region
        _
      $region16: #{inception_a_forward.7} parent=11 // pred_fallthru
        _
      // Predicated region
      $region17: #{inception_a_forward.7} parent=11 // pred_check
        %p135 = pneg %p89
      $region18: #{inception_a_forward.7} parent=11 // pred_check_branch
        %137 = sbr.rel (%p135) target = $region20
      $region19: #{inception_a_forward.7} parent=11 // pred_region
        _
      $region20: #{inception_a_forward.7} parent=11 // pred_fallthru
        _
    $region12: #{inception_a_forward.7} parent=5 // pred_fallthru
      _
    %p138 = scmp.lt.s32.totalorder %s9, 4
    // Predicated region
    $region21: #{inception_a_forward.7} parent=5 // pred_check
      %p139 = pneg %p138
    $region22: #{inception_a_forward.7} parent=5 // pred_check_branch
      %141 = sbr.rel (%p139) target = $region24
    $region23: #{inception_a_forward.7} parent=5 // pred_region
      // Predicated region
      $region25: #{inception_a_forward.7} parent=23 // pred_check
        %p142 = pneg %p41
      $region26: #{inception_a_forward.7} parent=23 // pred_check_branch
        %144 = sbr.rel (%p142) target = $region28
      $region27: #{inception_a_forward.7} parent=23 // pred_region
        %p145 = scmp.lt.s32.totalorder %s16, 1
        %s146 = scalar_select %p145, %s16, 1
        %s147 = smul.addr %s146, 54
        %s148 = smul.addr %s147, 4
        %s149 = scalar_lea.vmem %s0, %s148
      $region28: #{inception_a_forward.7} parent=23 // pred_fallthru
        _
    $region24: #{inception_a_forward.7} parent=5 // pred_fallthru
      _
    %p150 = scmp.le.s32.totalorder 1, %s9
    %p151 = scmp.lt.s32.totalorder %s9, 5
    %p152 = pnand %p150, %p151
    %p153 = pneg %p152
    // Predicated region
    $region29: #{inception_a_forward.7} parent=5 // pred_check
      _
    $region30: #{inception_a_forward.7} parent=5 // pred_check_branch
      %155 = sbr.rel (%p152) target = $region32
    $region31: #{inception_a_forward.7} parent=5 // pred_region
      %s156 = ssub.s32 %s9, 1
      %p157 = scmp.lt.s32.totalorder %s18, 1
      %s158 = scalar_select %p157, %s18, 1
      %s159 = smul.addr %s158, 54
      %s160 = smul.addr %s159, 4
      %s161 = scalar_lea.vmem %s0, %s160
      %p162 = pneg %p47
      %p163 = pneg %p44
      %p164 = pneg %p68
      %p165 = pneg %p65
      %p166 = pneg %p89
      %p167 = pneg %p86
      %p168 = pneg %p117
      %p169 = pneg %p114
      %s170 = smul.u32 8, %s19
      %p171 = scmp.lt.s32.totalorder %s18, 1
      %s172 = scalar_select %p171, %s18, 1
      %p173 = scmp.lt.s32.totalorder %s170, 15
      %s174 = scalar_select %p173, %s170, 15
      %s175 = smul.addr %s174, 2
      %s176 = smul.addr %s172, 32
      %s177 = sadd.s32 %s175, %s176
      %s178 = smul.addr %s177, 4
      %s179 = scalar_lea.vmem %s3, %s178
      %p180 = scmp.lt.s32.totalorder %s18, 1
      %s181 = scalar_select %p180, %s18, 1
      %s182 = smul.addr %s181, 54
      %s183 = smul.addr %s182, 4
      %s184 = scalar_lea.vmem %s0, %s183
      %s185 = smul.u32 8, %s19
      %p186 = scmp.lt.s32.totalorder %s18, 1
      %s187 = scalar_select %p186, %s18, 1
      %p188 = scmp.lt.s32.totalorder %s185, 15
      %s189 = scalar_select %p188, %s185, 15
      %s190 = smul.addr %s189, 2
      %s191 = smul.addr %s187, 32
      %s192 = sadd.s32 %s190, %s191
      %s193 = smul.addr %s192, 4
      %s194 = scalar_lea.vmem %s3, %s193
      %s195 = smul.u32 8, %s19
      %s197 = smul.u32 %s19, 8
      %198 = vst [vmem:[#allocation2] sm:$0xff] 0.0
      %199 = vst [vmem:[#allocation2 + $0x8] sm:$0xff] 0.0
      %200 = vst [vmem:[#allocation2 + $0x10] sm:$0xff] 0.0
      %201 = vst [vmem:[#allocation2 + $0x18] sm:$0xff] 0.0
      %202 = vst [vmem:[#allocation2 + $0x20] sm:$0xff] 0.0
      %203 = vst [vmem:[#allocation2 + $0x28] sm:$0xff] 0.0
      %204 = vst [vmem:[#allocation2 + $0x30] sm:$0xff] 0.0
      %205 = vst [vmem:[#allocation2 + $0x38] sm:$0xff] 0.0
      %206 = vst [vmem:[#allocation2 + $0x40] sm:$0xff] 0.0
      %207 = vst [vmem:[#allocation2 + $0x48] sm:$0xff] 0.0
      %208 = vst [vmem:[#allocation2 + $0x50] sm:$0xff] 0.0
      %209 = vst [vmem:[#allocation2 + $0x58] sm:$0xff] 0.0
      %210 = vst [vmem:[#allocation2 + $0x60] sm:$0xff] 0.0
      %211 = vst [vmem:[#allocation2 + $0x68] sm:$0xff] 0.0
      %212 = vst [vmem:[#allocation2 + $0x70] sm:$0xff] 0.0
      %213 = vst [vmem:[#allocation2 + $0x78] sm:$0xff] 0.0
      %s214 = smul.u32 %s197, 3
      %s215 = smul.addr %s214, 4
      %s216 = scalar_lea.vmem %s184, %s215
      %v217 = vld [vmem:[%s216] sm:$0xf]
      %v218 = vld [vmem:[%s216 + $0x4] sm:$0xf]
      %v219 = vld [vmem:[%s216 + $0xc] sm:$0xf]
      %v220 = vld [vmem:[%s216 + $0x10] sm:$0xf]
      %v221 = vld [vmem:[%s216 + $0x18] sm:$0xf]
      %v222 = vld [vmem:[%s216 + $0x1c] sm:$0xf]
      %v223 = vld [vmem:[%s216 + $0x24] sm:$0xf]
      %v224 = vld [vmem:[%s216 + $0x28] sm:$0xf]
      %v225 = vld [vmem:[%s216 + $0x30] sm:$0xf]
      %v226 = vld [vmem:[%s216 + $0x34] sm:$0xf]
      %v227 = vld [vmem:[%s216 + $0x3c] sm:$0xf]
      %v228 = vld [vmem:[%s216 + $0x40] sm:$0xf]
      %v229 = vld [vmem:[%s216 + $0x48] sm:$0xf]
      %v230 = vld [vmem:[%s216 + $0x4c] sm:$0xf]
      %v231 = vld [vmem:[%s216 + $0x54] sm:$0xf]
      %v232 = vld [vmem:[%s216 + $0x58] sm:$0xf]
      %v233 = vld [vmem:[%s216 + $0x8] sm:$0x1]
      %v234 = vld [vmem:[%s216 + $0x14] sm:$0x1]
      %v235 = vld [vmem:[%s216 + $0x20] sm:$0x1]
      %v236 = vld [vmem:[%s216 + $0x2c] sm:$0x1]
      %v237 = vld [vmem:[%s216 + $0x38] sm:$0x1]
      %v238 = vld [vmem:[%s216 + $0x44] sm:$0x1]
      %v239 = vld [vmem:[%s216 + $0x50] sm:$0x1]
      %v240 = vld [vmem:[%s216 + $0x5c] sm:$0x1]
      %v241 = vld [vmem:[%s216] sm:$0xe]
      %v242 = vld [vmem:[%s216 + $0xc] sm:$0xe]
      %v243 = vld [vmem:[%s216 + $0x18] sm:$0xe]
      %v244 = vld [vmem:[%s216 + $0x24] sm:$0xe]
      %v245 = vld [vmem:[%s216 + $0x30] sm:$0xe]
      %v246 = vld [vmem:[%s216 + $0x3c] sm:$0xe]
      %v247 = vld [vmem:[%s216 + $0x48] sm:$0xe]
      %v248 = vld [vmem:[%s216 + $0x54] sm:$0xe]
      %v265 = vunpack.c.l.b16 %v217
      %v266 = vunpack.c.l.b16 %v218
      %v267 = vunpack.c.l.b16 %v219
      %v268 = vunpack.c.l.b16 %v220
      %v269 = vunpack.c.l.b16 %v221
      %v270 = vunpack.c.l.b16 %v222
      %v271 = vunpack.c.l.b16 %v223
      %v272 = vunpack.c.l.b16 %v224
      %v273 = vunpack.c.l.b16 %v225
      %v274 = vunpack.c.l.b16 %v226
      %v275 = vunpack.c.l.b16 %v227
      %v276 = vunpack.c.l.b16 %v228
      %v277 = vunpack.c.l.b16 %v229
      %v278 = vunpack.c.l.b16 %v230
      %v279 = vunpack.c.l.b16 %v231
      %v280 = vunpack.c.l.b16 %v232
      %v281 = vpack.c.b16 %v266, %v265
      %v282 = vpack.c.b16 %v268, %v267
      %v283 = vpack.c.b16 %v270, %v269
      %v284 = vpack.c.b16 %v272, %v271
      %v285 = vpack.c.b16 %v274, %v273
      %v286 = vpack.c.b16 %v276, %v275
      %v287 = vpack.c.b16 %v278, %v277
      %v288 = vpack.c.b16 %v280, %v279
      %v297 = vunpack.c.l.b16 %v233
      %v298 = vunpack.c.l.b16 %v234
      %v299 = vunpack.c.l.b16 %v235
      %v300 = vunpack.c.l.b16 %v236
      %v301 = vunpack.c.l.b16 %v237
      %v302 = vunpack.c.l.b16 %v238
      %v303 = vunpack.c.l.b16 %v239
      %v304 = vunpack.c.l.b16 %v240
      %v305 = vpack.c.b16 %v297, %v297
      %v306 = vpack.c.b16 %v298, %v298
      %v307 = vpack.c.b16 %v299, %v299
      %v308 = vpack.c.b16 %v300, %v300
      %v309 = vpack.c.b16 %v301, %v301
      %v310 = vpack.c.b16 %v302, %v302
      %v311 = vpack.c.b16 %v303, %v303
      %v312 = vpack.c.b16 %v304, %v304
      %vm313 = vsmask.f32 7424
      %v315 = vshrl.u32 %v281, 16
      %v317 = vshll.u32 %v281, 16
      %v319 = vrot.slane %v317, 1
      %v320 = vor.u32 %v315, %v319
      %v322 = vshll.u32 %v305, 16
      %v324 = vrot.slane %v322, 1
      %v325 = vsel %vm313, %v320, %v324
      %v327 = vshrl.u32 %v282, 16
      %v329 = vshll.u32 %v282, 16
      %v331 = vrot.slane %v329, 1
      %v332 = vor.u32 %v327, %v331
      %v334 = vshll.u32 %v306, 16
      %v336 = vrot.slane %v334, 1
      %v337 = vsel %vm313, %v332, %v336
      %v339 = vshrl.u32 %v283, 16
      %v341 = vshll.u32 %v283, 16
      %v343 = vrot.slane %v341, 1
      %v344 = vor.u32 %v339, %v343
      %v346 = vshll.u32 %v307, 16
      %v348 = vrot.slane %v346, 1
      %v349 = vsel %vm313, %v344, %v348
      %v351 = vshrl.u32 %v284, 16
      %v353 = vshll.u32 %v284, 16
      %v355 = vrot.slane %v353, 1
      %v356 = vor.u32 %v351, %v355
      %v358 = vshll.u32 %v308, 16
      %v360 = vrot.slane %v358, 1
      %v361 = vsel %vm313, %v356, %v360
      %v363 = vshrl.u32 %v285, 16
      %v365 = vshll.u32 %v285, 16
      %v367 = vrot.slane %v365, 1
      %v368 = vor.u32 %v363, %v367
      %v370 = vshll.u32 %v309, 16
      %v372 = vrot.slane %v370, 1
      %v373 = vsel %vm313, %v368, %v372
      %v375 = vshrl.u32 %v286, 16
      %v377 = vshll.u32 %v286, 16
      %v379 = vrot.slane %v377, 1
      %v380 = vor.u32 %v375, %v379
      %v382 = vshll.u32 %v310, 16
      %v384 = vrot.slane %v382, 1
      %v385 = vsel %vm313, %v380, %v384
      %v387 = vshrl.u32 %v287, 16
      %v389 = vshll.u32 %v287, 16
      %v391 = vrot.slane %v389, 1
      %v392 = vor.u32 %v387, %v391
      %v394 = vshll.u32 %v311, 16
      %v396 = vrot.slane %v394, 1
      %v397 = vsel %vm313, %v392, %v396
      %v399 = vshrl.u32 %v288, 16
      %v401 = vshll.u32 %v288, 16
      %v403 = vrot.slane %v401, 1
      %v404 = vor.u32 %v399, %v403
      %v406 = vshll.u32 %v312, 16
      %v408 = vrot.slane %v406, 1
      %v409 = vsel %vm313, %v404, %v408
      %410 = vrot.lane.b32.xlu0 %v325, 96
      %v411 = vpop.permute.xlu0 %410
      %412 = vrot.lane.b32.xlu0 %v337, 96
      %v413 = vpop.permute.xlu0 %412
      %414 = vrot.lane.b32.xlu0 %v349, 96
      %v415 = vpop.permute.xlu0 %414
      %416 = vrot.lane.b32.xlu0 %v361, 96
      %v417 = vpop.permute.xlu0 %416
      %418 = vrot.lane.b32.xlu0 %v373, 96
      %v419 = vpop.permute.xlu0 %418
      %420 = vrot.lane.b32.xlu0 %v385, 96
      %v421 = vpop.permute.xlu0 %420
      %422 = vrot.lane.b32.xlu0 %v397, 96
      %v423 = vpop.permute.xlu0 %422
      %424 = vrot.lane.b32.xlu0 %v409, 96
      %v425 = vpop.permute.xlu0 %424
      %v434 = vunpack.c.l.b16 %v241
      %v435 = vunpack.c.l.b16 %v242
      %v436 = vunpack.c.l.b16 %v243
      %v437 = vunpack.c.l.b16 %v244
      %v438 = vunpack.c.l.b16 %v245
      %v439 = vunpack.c.l.b16 %v246
      %v440 = vunpack.c.l.b16 %v247
      %v441 = vunpack.c.l.b16 %v248
      %v442 = vpack.c.b16 %v266, %v434
      %v443 = vpack.c.b16 %v268, %v435
      %v444 = vpack.c.b16 %v270, %v436
      %v445 = vpack.c.b16 %v272, %v437
      %v446 = vpack.c.b16 %v274, %v438
      %v447 = vpack.c.b16 %v276, %v439
      %v448 = vpack.c.b16 %v278, %v440
      %v449 = vpack.c.b16 %v280, %v441
      %vm450 = vcmask 1046528
      %v451 = vrot.slane %v442, 1
      %v452 = vrot.slane %v305, 1
      %v453 = vsel %vm450, %v451, %v452
      %v454 = vrot.slane %v443, 1
      %v455 = vrot.slane %v306, 1
      %v456 = vsel %vm450, %v454, %v455
      %v457 = vrot.slane %v444, 1
      %v458 = vrot.slane %v307, 1
      %v459 = vsel %vm450, %v457, %v458
      %v460 = vrot.slane %v445, 1
      %v461 = vrot.slane %v308, 1
      %v462 = vsel %vm450, %v460, %v461
      %v463 = vrot.slane %v446, 1
      %v464 = vrot.slane %v309, 1
      %v465 = vsel %vm450, %v463, %v464
      %v466 = vrot.slane %v447, 1
      %v467 = vrot.slane %v310, 1
      %v468 = vsel %vm450, %v466, %v467
      %v469 = vrot.slane %v448, 1
      %v470 = vrot.slane %v311, 1
      %v471 = vsel %vm450, %v469, %v470
      %v472 = vrot.slane %v449, 1
      %v473 = vrot.slane %v312, 1
      %v474 = vsel %vm450, %v472, %v473
      %475 = vrot.lane.b32.xlu0 %v453, 64
      %v476 = vpop.permute.xlu0 %475
      %477 = vrot.lane.b32.xlu0 %v456, 64
      %v478 = vpop.permute.xlu0 %477
      %479 = vrot.lane.b32.xlu0 %v459, 64
      %v480 = vpop.permute.xlu0 %479
      %481 = vrot.lane.b32.xlu0 %v462, 64
      %v482 = vpop.permute.xlu0 %481
      %483 = vrot.lane.b32.xlu0 %v465, 64
      %v484 = vpop.permute.xlu0 %483
      %485 = vrot.lane.b32.xlu0 %v468, 64
      %v486 = vpop.permute.xlu0 %485
      %487 = vrot.lane.b32.xlu0 %v471, 64
      %v488 = vpop.permute.xlu0 %487
      %489 = vrot.lane.b32.xlu0 %v474, 64
      %v490 = vpop.permute.xlu0 %489
      %vm491 = vcmask 785408
      %v493 = vsel %vm491, %v281, %v411
      %v496 = vsel %vm491, %v282, %v413
      %v499 = vsel %vm491, %v283, %v415
      %v502 = vsel %vm491, %v284, %v417
      %v505 = vsel %vm491, %v285, %v419
      %v508 = vsel %vm491, %v286, %v421
      %v511 = vsel %vm491, %v287, %v423
      %v514 = vsel %vm491, %v288, %v425
      %vm516 = vcmask 523264
      %v518 = vsel %vm516, %v411, %v476
      %v521 = vsel %vm516, %v413, %v478
      %v524 = vsel %vm516, %v415, %v480
      %v527 = vsel %vm516, %v417, %v482
      %v530 = vsel %vm516, %v419, %v484
      %v533 = vsel %vm516, %v421, %v486
      %v536 = vsel %vm516, %v423, %v488
      %v539 = vsel %vm516, %v425, %v490
      %v541 = vld [vmem:[#allocation2] sm:$0xff]
      %v542 = vld [vmem:[#allocation2 + $0x8] sm:$0xff]
      %v543 = vld [vmem:[#allocation2 + $0x10] sm:$0xff]
      %v544 = vld [vmem:[#allocation2 + $0x18] sm:$0xff]
      %v545 = vld [vmem:[#allocation2 + $0x20] sm:$0xff]
      %v546 = vld [vmem:[#allocation2 + $0x28] sm:$0xff]
      %v547 = vld [vmem:[#allocation2 + $0x30] sm:$0xff]
      %v548 = vld [vmem:[#allocation2 + $0x38] sm:$0xff]
      %v549 = vld [vmem:[#allocation2 + $0x40] sm:$0xff]
      %v550 = vld [vmem:[#allocation2 + $0x48] sm:$0xff]
      %v551 = vld [vmem:[#allocation2 + $0x50] sm:$0xff]
      %v552 = vld [vmem:[#allocation2 + $0x58] sm:$0xff]
      %v553 = vld [vmem:[#allocation2 + $0x60] sm:$0xff]
      %v554 = vld [vmem:[#allocation2 + $0x68] sm:$0xff]
      %v555 = vld [vmem:[#allocation2 + $0x70] sm:$0xff]
      %v556 = vld [vmem:[#allocation2 + $0x78] sm:$0xff]
      %v557 = vld [vmem:[%s1] sm:$0xf]
      %v558 = vld [vmem:[%s1 + $0x4] sm:$0xf]
      %v559 = vld [vmem:[%s1 + $0x8] sm:$0xf]
      %v560 = vld [vmem:[%s1 + $0xc] sm:$0xf]
      %v561 = vld [vmem:[%s1 + $0x10] sm:$0xf]
      %v562 = vld [vmem:[%s1 + $0x14] sm:$0xf]
      %v563 = vld [vmem:[%s1 + $0x18] sm:$0xf]
      %v564 = vld [vmem:[%s1 + $0x1c] sm:$0xf]
      %v565 = vld [vmem:[%s1 + $0x20] sm:$0xf]
      %v566 = vld [vmem:[%s1 + $0x24] sm:$0xf]
      %v567 = vld [vmem:[%s1 + $0x28] sm:$0xf]
      %v568 = vld [vmem:[%s1 + $0x2c] sm:$0xf]
      %v569 = vld [vmem:[%s1 + $0x30] sm:$0xf]
      %v570 = vld [vmem:[%s1 + $0x34] sm:$0xf]
      %v571 = vld [vmem:[%s1 + $0x38] sm:$0xf]
      %v572 = vld [vmem:[%s1 + $0x3c] sm:$0xf]
      %v573 = vld [vmem:[%s1 + $0x40] sm:$0xf]
      %v574 = vld [vmem:[%s1 + $0x44] sm:$0xf]
      %v575 = vld [vmem:[%s1 + $0x48] sm:$0xf]
      %v576 = vld [vmem:[%s1 + $0x4c] sm:$0xf]
      %v577 = vld [vmem:[%s1 + $0x50] sm:$0xf]
      %v578 = vld [vmem:[%s1 + $0x54] sm:$0xf]
      %v579 = vld [vmem:[%s1 + $0x58] sm:$0xf]
      %v580 = vld [vmem:[%s1 + $0x5c] sm:$0xf]
      %v581 = vld [vmem:[%s1 + $0x60] sm:$0xf]
      %v582 = vld [vmem:[%s1 + $0x64] sm:$0xf]
      %v583 = vld [vmem:[%s1 + $0x68] sm:$0xf]
      %v584 = vld [vmem:[%s1 + $0x6c] sm:$0xf]
      %v585 = vld [vmem:[%s1 + $0x70] sm:$0xf]
      %v586 = vld [vmem:[%s1 + $0x74] sm:$0xf]
      %v587 = vld [vmem:[%s1 + $0x78] sm:$0xf]
      %v588 = vld [vmem:[%s1 + $0x7c] sm:$0xf]
      %v589 = vld [vmem:[%s1 + $0x80] sm:$0xf]
      %v590 = vld [vmem:[%s1 + $0x84] sm:$0xf]
      %v591 = vld [vmem:[%s1 + $0x88] sm:$0xf]
      %v592 = vld [vmem:[%s1 + $0x8c] sm:$0xf]
      %v629 = vunpack.c.l.b16 %v557
      %v630 = vunpack.c.l.b16 %v558
      %v631 = vunpack.c.l.b16 %v559
      %v632 = vunpack.c.l.b16 %v560
      %v633 = vunpack.c.l.b16 %v561
      %v634 = vunpack.c.l.b16 %v562
      %v635 = vunpack.c.l.b16 %v563
      %v636 = vunpack.c.l.b16 %v564
      %v637 = vunpack.c.l.b16 %v565
      %v638 = vunpack.c.l.b16 %v566
      %v639 = vunpack.c.l.b16 %v567
      %v640 = vunpack.c.l.b16 %v568
      %v641 = vunpack.c.l.b16 %v569
      %v642 = vunpack.c.l.b16 %v570
      %v643 = vunpack.c.l.b16 %v571
      %v644 = vunpack.c.l.b16 %v572
      %v645 = vunpack.c.l.b16 %v573
      %v646 = vunpack.c.l.b16 %v574
      %v647 = vunpack.c.l.b16 %v575
      %v648 = vunpack.c.l.b16 %v576
      %v649 = vunpack.c.l.b16 %v577
      %v650 = vunpack.c.l.b16 %v578
      %v651 = vunpack.c.l.b16 %v579
      %v652 = vunpack.c.l.b16 %v580
      %v653 = vunpack.c.l.b16 %v581
      %v654 = vunpack.c.l.b16 %v582
      %v655 = vunpack.c.l.b16 %v583
      %v656 = vunpack.c.l.b16 %v584
      %v657 = vunpack.c.l.b16 %v585
      %v658 = vunpack.c.l.b16 %v586
      %v659 = vunpack.c.l.b16 %v587
      %v660 = vunpack.c.l.b16 %v588
      %v661 = vunpack.c.l.b16 %v589
      %v662 = vunpack.c.l.b16 %v590
      %v663 = vunpack.c.l.b16 %v591
      %v664 = vunpack.c.l.b16 %v592
      %v665 = vpack.c.b16 %v630, %v629
      %v666 = vpack.c.b16 %v632, %v631
      %v667 = vpack.c.b16 %v634, %v633
      %v668 = vpack.c.b16 %v636, %v635
      %v669 = vpack.c.b16 %v638, %v637
      %v670 = vpack.c.b16 %v640, %v639
      %v671 = vpack.c.b16 %v642, %v641
      %v672 = vpack.c.b16 %v644, %v643
      %v673 = vpack.c.b16 %v646, %v645
      %v674 = vpack.c.b16 %v648, %v647
      %v675 = vpack.c.b16 %v650, %v649
      %v676 = vpack.c.b16 %v652, %v651
      %v677 = vpack.c.b16 %v654, %v653
      %v678 = vpack.c.b16 %v656, %v655
      %v679 = vpack.c.b16 %v658, %v657
      %v680 = vpack.c.b16 %v660, %v659
      %v681 = vpack.c.b16 %v662, %v661
      %v682 = vpack.c.b16 %v664, %v663
      %vm701 = vcmask 261120
      %v702 = vsel %vm701, %v476, 0
      %v704 = vsel %vm701, %v478, 0
      %v706 = vsel %vm701, %v480, 0
      %v708 = vsel %vm701, %v482, 0
      %v710 = vsel %vm701, %v484, 0
      %v712 = vsel %vm701, %v486, 0
      %v714 = vsel %vm701, %v488, 0
      %v716 = vsel %vm701, %v490, 0
      %718 = vmatprep.subr.bf16.mxu0 0
      %719 = vmatpush1.bf16.msra.mxu0 %v672
      %720 = vmatprep.subr.bf16.mxu0 0
      %721 = vmatpush1.bf16.msra.mxu0 %v671
      %722 = vmatprep.subr.bf16.mxu0 0
      %723 = vmatpush1.bf16.msra.mxu0 %v670
      %724 = vmatprep.subr.bf16.mxu0 0
      %725 = vmatpush1.bf16.msra.mxu0 %v669
      %726 = vmatprep.subr.bf16.mxu0 0
      %727 = vmatpush1.bf16.msra.mxu0 %v668
      %728 = vmatprep.subr.bf16.mxu0 0
      %729 = vmatpush1.bf16.msra.mxu0 %v667
      %730 = vmatprep.subr.bf16.mxu0 0
      %731 = vmatpush1.bf16.msra.mxu0 %v666
      %732 = vmatprep.subr.bf16.mxu0 0
      %733 = vmatpush1.bf16.msra.mxu0 %v665
      %734 = vmatprep.subr.bf16.mxu0 0
      %735 = vmatpush2.bf16.msra.mxu0 %v680
      %736 = vmatprep.subr.bf16.mxu0 0
      %737 = vmatpush2.bf16.msra.mxu0 %v679
      %738 = vmatprep.subr.bf16.mxu0 0
      %739 = vmatpush2.bf16.msra.mxu0 %v678
      %740 = vmatprep.subr.bf16.mxu0 0
      %741 = vmatpush2.bf16.msra.mxu0 %v677
      %742 = vmatprep.subr.bf16.mxu0 0
      %743 = vmatpush2.bf16.msra.mxu0 %v676
      %744 = vmatprep.subr.bf16.mxu0 0
      %745 = vmatpush2.bf16.msra.mxu0 %v675
      %746 = vmatprep.subr.bf16.mxu0 0
      %747 = vmatpush2.bf16.msra.mxu0 %v674
      %748 = vmatprep.subr.bf16.mxu0 0
      %749 = vmatpush2.bf16.msra.mxu0 %v673
      %750 = vmatprep.mubr.bf16.mxu0 %v518
      %751 = vmatmul.mubr.bf16.gmra.mxu0 %v493
      %v752 = vpop.f32.mrf.mxu0
      %v753 = vadd.f32 0.0, %v752
      %v754 = vpop.f32.mrf.mxu0
      %v755 = vpop.f32.mrf.mxu0
      %v756 = vadd.f32 0.0, %v755
      %v757 = vpop.f32.mrf.mxu0
      %758 = vmatprep.mubr.bf16.mxu0 %v521
      %759 = vmatmul.mubr.bf16.gmra.mxu0 %v496
      %v760 = vpop.f32.mrf.mxu0
      %v761 = vadd.f32 0.0, %v760
      %v762 = vpop.f32.mrf.mxu0
      %v763 = vpop.f32.mrf.mxu0
      %v764 = vadd.f32 0.0, %v763
      %v765 = vpop.f32.mrf.mxu0
      %766 = vmatprep.mubr.bf16.mxu0 %v524
      %767 = vmatmul.mubr.bf16.gmra.mxu0 %v499
      %v768 = vpop.f32.mrf.mxu0
      %v769 = vadd.f32 0.0, %v768
      %v770 = vpop.f32.mrf.mxu0
      %v771 = vpop.f32.mrf.mxu0
      %v772 = vadd.f32 0.0, %v771
      %v773 = vpop.f32.mrf.mxu0
      %774 = vmatprep.mubr.bf16.mxu0 %v527
      %775 = vmatmul.mubr.bf16.gmra.mxu0 %v502
      %v776 = vpop.f32.mrf.mxu0
      %v777 = vadd.f32 0.0, %v776
      %v778 = vpop.f32.mrf.mxu0
      %v779 = vpop.f32.mrf.mxu0
      %v780 = vadd.f32 0.0, %v779
      %v781 = vpop.f32.mrf.mxu0
      %782 = vmatprep.mubr.bf16.mxu0 %v530
      %783 = vmatmul.mubr.bf16.gmra.mxu0 %v505
      %v784 = vpop.f32.mrf.mxu0
      %v785 = vadd.f32 0.0, %v784
      %v786 = vpop.f32.mrf.mxu0
      %v787 = vpop.f32.mrf.mxu0
      %v788 = vadd.f32 0.0, %v787
      %v789 = vpop.f32.mrf.mxu0
      %790 = vmatprep.mubr.bf16.mxu0 %v533
      %791 = vmatmul.mubr.bf16.gmra.mxu0 %v508
      %v792 = vpop.f32.mrf.mxu0
      %v793 = vadd.f32 0.0, %v792
      %v794 = vpop.f32.mrf.mxu0
      %v795 = vpop.f32.mrf.mxu0
      %v796 = vadd.f32 0.0, %v795
      %v797 = vpop.f32.mrf.mxu0
      %798 = vmatprep.mubr.bf16.mxu0 %v536
      %799 = vmatmul.mubr.bf16.gmra.mxu0 %v511
      %v800 = vpop.f32.mrf.mxu0
      %v801 = vadd.f32 0.0, %v800
      %v802 = vpop.f32.mrf.mxu0
      %v803 = vpop.f32.mrf.mxu0
      %v804 = vadd.f32 0.0, %v803
      %v805 = vpop.f32.mrf.mxu0
      %806 = vmatprep.mubr.bf16.mxu0 %v539
      %807 = vmatmul.mubr.bf16.gmra.mxu0 %v514
      %v808 = vpop.f32.mrf.mxu0
      %v809 = vadd.f32 0.0, %v808
      %v810 = vpop.f32.mrf.mxu0
      %v811 = vpop.f32.mrf.mxu0
      %v812 = vadd.f32 0.0, %v811
      %v813 = vpop.f32.mrf.mxu0
      %814 = vdwg.mxu0
      %815 = vmatprep.subr.bf16.mxu0 0
      %816 = vmatpush1.bf16.msra.mxu0 0
      %817 = vmatprep.subr.bf16.mxu0 0
      %818 = vmatpush1.bf16.msra.mxu0 0
      %819 = vmatprep.subr.bf16.mxu0 0
      %820 = vmatpush1.bf16.msra.mxu0 0
      %821 = vmatprep.subr.bf16.mxu0 0
      %822 = vmatpush1.bf16.msra.mxu0 0
      %823 = vmatprep.subr.bf16.mxu0 0
      %824 = vmatpush1.bf16.msra.mxu0 0
      %825 = vmatprep.subr.bf16.mxu0 0
      %826 = vmatpush1.bf16.msra.mxu0 0
      %827 = vmatprep.subr.bf16.mxu0 0
      %828 = vmatpush1.bf16.msra.mxu0 %v682
      %829 = vmatprep.subr.bf16.mxu0 0
      %830 = vmatpush1.bf16.msra.mxu0 %v681
      %831 = vmatprep.subr.bf16.mxu0 0
      %832 = vmatpush2.bf16.msra.mxu0 0
      %833 = vmatprep.subr.bf16.mxu0 0
      %834 = vmatpush2.bf16.msra.mxu0 0
      %835 = vmatprep.subr.bf16.mxu0 0
      %836 = vmatpush2.bf16.msra.mxu0 0
      %837 = vmatprep.subr.bf16.mxu0 0
      %838 = vmatpush2.bf16.msra.mxu0 0
      %839 = vmatprep.subr.bf16.mxu0 0
      %840 = vmatpush2.bf16.msra.mxu0 0
      %841 = vmatprep.subr.bf16.mxu0 0
      %842 = vmatpush2.bf16.msra.mxu0 0
      %843 = vmatprep.subr.bf16.mxu0 0
      %844 = vmatpush2.bf16.msra.mxu0 0
      %845 = vmatprep.subr.bf16.mxu0 0
      %846 = vmatpush2.bf16.msra.mxu0 0
      %847 = vmatprep.mubr.bf16.mxu0 0
      %848 = vmatmul.mubr.bf16.gmra.mxu0 %v702
      %v849 = vpop.f32.mrf.mxu0
      %v850 = vadd.f32 %v753, %v849
      %v851 = vpop.f32.mrf.mxu0
      %v852 = vpop.f32.mrf.mxu0
      %v853 = vadd.f32 %v756, %v852
      %v854 = vpop.f32.mrf.mxu0
      %855 = vmatprep.mubr.bf16.mxu0 0
      %856 = vmatmul.mubr.bf16.gmra.mxu0 %v704
      %v857 = vpop.f32.mrf.mxu0
      %v858 = vadd.f32 %v761, %v857
      %v859 = vpop.f32.mrf.mxu0
      %v860 = vpop.f32.mrf.mxu0
      %v861 = vadd.f32 %v764, %v860
      %v862 = vpop.f32.mrf.mxu0
      %863 = vmatprep.mubr.bf16.mxu0 0
      %864 = vmatmul.mubr.bf16.gmra.mxu0 %v706
      %v865 = vpop.f32.mrf.mxu0
      %v866 = vadd.f32 %v769, %v865
      %v867 = vpop.f32.mrf.mxu0
      %v868 = vpop.f32.mrf.mxu0
      %v869 = vadd.f32 %v772, %v868
      %v870 = vpop.f32.mrf.mxu0
      %871 = vmatprep.mubr.bf16.mxu0 0
      %872 = vmatmul.mubr.bf16.gmra.mxu0 %v708
      %v873 = vpop.f32.mrf.mxu0
      %v874 = vadd.f32 %v777, %v873
      %v875 = vpop.f32.mrf.mxu0
      %v876 = vpop.f32.mrf.mxu0
      %v877 = vadd.f32 %v780, %v876
      %v878 = vpop.f32.mrf.mxu0
      %879 = vmatprep.mubr.bf16.mxu0 0
      %880 = vmatmul.mubr.bf16.gmra.mxu0 %v710
      %v881 = vpop.f32.mrf.mxu0
      %v882 = vadd.f32 %v785, %v881
      %v883 = vpop.f32.mrf.mxu0
      %v884 = vpop.f32.mrf.mxu0
      %v885 = vadd.f32 %v788, %v884
      %v886 = vpop.f32.mrf.mxu0
      %887 = vmatprep.mubr.bf16.mxu0 0
      %888 = vmatmul.mubr.bf16.gmra.mxu0 %v712
      %v889 = vpop.f32.mrf.mxu0
      %v890 = vadd.f32 %v793, %v889
      %v891 = vpop.f32.mrf.mxu0
      %v892 = vpop.f32.mrf.mxu0
      %v893 = vadd.f32 %v796, %v892
      %v894 = vpop.f32.mrf.mxu0
      %895 = vmatprep.mubr.bf16.mxu0 0
      %896 = vmatmul.mubr.bf16.gmra.mxu0 %v714
      %v897 = vpop.f32.mrf.mxu0
      %v898 = vadd.f32 %v801, %v897
      %v899 = vpop.f32.mrf.mxu0
      %v900 = vpop.f32.mrf.mxu0
      %v901 = vadd.f32 %v804, %v900
      %v902 = vpop.f32.mrf.mxu0
      %903 = vmatprep.mubr.bf16.mxu0 0
      %904 = vmatmul.mubr.bf16.gmra.mxu0 %v716
      %v905 = vpop.f32.mrf.mxu0
      %v906 = vadd.f32 %v809, %v905
      %v907 = vpop.f32.mrf.mxu0
      %v908 = vpop.f32.mrf.mxu0
      %v909 = vadd.f32 %v812, %v908
      %v910 = vpop.f32.mrf.mxu0
      %911 = vdwg.mxu0
      %v912 = vadd.f32 %v541, %v850
      %v913 = vadd.f32 %v542, %v853
      %v914 = vadd.f32 %v543, %v858
      %v915 = vadd.f32 %v544, %v861
      %v916 = vadd.f32 %v545, %v866
      %v917 = vadd.f32 %v546, %v869
      %v918 = vadd.f32 %v547, %v874
      %v919 = vadd.f32 %v548, %v877
      %v920 = vadd.f32 %v549, %v882
      %v921 = vadd.f32 %v550, %v885
      %v922 = vadd.f32 %v551, %v890
      %v923 = vadd.f32 %v552, %v893
      %v924 = vadd.f32 %v553, %v898
      %v925 = vadd.f32 %v554, %v901
      %v926 = vadd.f32 %v555, %v906
      %v927 = vadd.f32 %v556, %v909
      %928 = vst [vmem:[#allocation2] sm:$0xff] %v912
      %929 = vst [vmem:[#allocation2 + $0x8] sm:$0xff] %v913
      %930 = vst [vmem:[#allocation2 + $0x10] sm:$0xff] %v914
      %931 = vst [vmem:[#allocation2 + $0x18] sm:$0xff] %v915
      %932 = vst [vmem:[#allocation2 + $0x20] sm:$0xff] %v916
      %933 = vst [vmem:[#allocation2 + $0x28] sm:$0xff] %v917
      %934 = vst [vmem:[#allocation2 + $0x30] sm:$0xff] %v918
      %935 = vst [vmem:[#allocation2 + $0x38] sm:$0xff] %v919
      %936 = vst [vmem:[#allocation2 + $0x40] sm:$0xff] %v920
      %937 = vst [vmem:[#allocation2 + $0x48] sm:$0xff] %v921
      %938 = vst [vmem:[#allocation2 + $0x50] sm:$0xff] %v922
      %939 = vst [vmem:[#allocation2 + $0x58] sm:$0xff] %v923
      %940 = vst [vmem:[#allocation2 + $0x60] sm:$0xff] %v924
      %941 = vst [vmem:[#allocation2 + $0x68] sm:$0xff] %v925
      %942 = vst [vmem:[#allocation2 + $0x70] sm:$0xff] %v926
      %943 = vst [vmem:[#allocation2 + $0x78] sm:$0xff] %v927
      %s944 = sadd.s32 %s197, 1
      %s945 = smul.u32 %s944, 3
      %s946 = smul.addr %s945, 4
      %s947 = scalar_lea.vmem %s184, %s946
      %v948 = vld [vmem:[%s947] sm:$0xf]
      %v949 = vld [vmem:[%s947 + $0x4] sm:$0xf]
      %v950 = vld [vmem:[%s947 + $0xc] sm:$0xf]
      %v951 = vld [vmem:[%s947 + $0x10] sm:$0xf]
      %v952 = vld [vmem:[%s947 + $0x18] sm:$0xf]
      %v953 = vld [vmem:[%s947 + $0x1c] sm:$0xf]
      %v954 = vld [vmem:[%s947 + $0x24] sm:$0xf]
      %v955 = vld [vmem:[%s947 + $0x28] sm:$0xf]
      %v956 = vld [vmem:[%s947 + $0x30] sm:$0xf]
      %v957 = vld [vmem:[%s947 + $0x34] sm:$0xf]
      %v958 = vld [vmem:[%s947 + $0x3c] sm:$0xf]
      %v959 = vld [vmem:[%s947 + $0x40] sm:$0xf]
      %v960 = vld [vmem:[%s947 + $0x48] sm:$0xf]
      %v961 = vld [vmem:[%s947 + $0x4c] sm:$0xf]
      %v962 = vld [vmem:[%s947 + $0x54] sm:$0xf]
      %v963 = vld [vmem:[%s947 + $0x58] sm:$0xf]
      %v964 = vld [vmem:[%s947 + $0x8] sm:$0x1]
      %v965 = vld [vmem:[%s947 + $0x14] sm:$0x1]
      %v966 = vld [vmem:[%s947 + $0x20] sm:$0x1]
      %v967 = vld [vmem:[%s947 + $0x2c] sm:$0x1]
      %v968 = vld [vmem:[%s947 + $0x38] sm:$0x1]
      %v969 = vld [vmem:[%s947 + $0x44] sm:$0x1]
      %v970 = vld [vmem:[%s947 + $0x50] sm:$0x1]
      %v971 = vld [vmem:[%s947 + $0x5c] sm:$0x1]
      %v972 = vld [vmem:[%s947] sm:$0xe]
      %v973 = vld [vmem:[%s947 + $0xc] sm:$0xe]
      %v974 = vld [vmem:[%s947 + $0x18] sm:$0xe]
      %v975 = vld [vmem:[%s947 + $0x24] sm:$0xe]
      %v976 = vld [vmem:[%s947 + $0x30] sm:$0xe]
      %v977 = vld [vmem:[%s947 + $0x3c] sm:$0xe]
      %v978 = vld [vmem:[%s947 + $0x48] sm:$0xe]
      %v979 = vld [vmem:[%s947 + $0x54] sm:$0xe]
      %v996 = vunpack.c.l.b16 %v948
      %v997 = vunpack.c.l.b16 %v949
      %v998 = vunpack.c.l.b16 %v950
      %v999 = vunpack.c.l.b16 %v951
      %v1000 = vunpack.c.l.b16 %v952
      %v1001 = vunpack.c.l.b16 %v953
      %v1002 = vunpack.c.l.b16 %v954
      %v1003 = vunpack.c.l.b16 %v955
      %v1004 = vunpack.c.l.b16 %v956
      %v1005 = vunpack.c.l.b16 %v957
      %v1006 = vunpack.c.l.b16 %v958
      %v1007 = vunpack.c.l.b16 %v959
      %v1008 = vunpack.c.l.b16 %v960
      %v1009 = vunpack.c.l.b16 %v961
      %v1010 = vunpack.c.l.b16 %v962
      %v1011 = vunpack.c.l.b16 %v963
      %v1012 = vpack.c.b16 %v997, %v996
      %v1013 = vpack.c.b16 %v999, %v998
      %v1014 = vpack.c.b16 %v1001, %v1000
      %v1015 = vpack.c.b16 %v1003, %v1002
      %v1016 = vpack.c.b16 %v1005, %v1004
      %v1017 = vpack.c.b16 %v1007, %v1006
      %v1018 = vpack.c.b16 %v1009, %v1008
      %v1019 = vpack.c.b16 %v1011, %v1010
      %v1028 = vunpack.c.l.b16 %v964
      %v1029 = vunpack.c.l.b16 %v965
      %v1030 = vunpack.c.l.b16 %v966
      %v1031 = vunpack.c.l.b16 %v967
      %v1032 = vunpack.c.l.b16 %v968
      %v1033 = vunpack.c.l.b16 %v969
      %v1034 = vunpack.c.l.b16 %v970
      %v1035 = vunpack.c.l.b16 %v971
      %v1036 = vpack.c.b16 %v1028, %v1028
      %v1037 = vpack.c.b16 %v1029, %v1029
      %v1038 = vpack.c.b16 %v1030, %v1030
      %v1039 = vpack.c.b16 %v1031, %v1031
      %v1040 = vpack.c.b16 %v1032, %v1032
      %v1041 = vpack.c.b16 %v1033, %v1033
      %v1042 = vpack.c.b16 %v1034, %v1034
      %v1043 = vpack.c.b16 %v1035, %v1035
      %v1045 = vshrl.u32 %v1012, 16
      %v1047 = vshll.u32 %v1012, 16
      %v1049 = vrot.slane %v1047, 1
      %v1050 = vor.u32 %v1045, %v1049
      %v1052 = vshll.u32 %v1036, 16
      %v1054 = vrot.slane %v1052, 1
      %v1055 = vsel %vm313, %v1050, %v1054
      %v1057 = vshrl.u32 %v1013, 16
      %v1059 = vshll.u32 %v1013, 16
      %v1061 = vrot.slane %v1059, 1
      %v1062 = vor.u32 %v1057, %v1061
      %v1064 = vshll.u32 %v1037, 16
      %v1066 = vrot.slane %v1064, 1
      %v1067 = vsel %vm313, %v1062, %v1066
      %v1069 = vshrl.u32 %v1014, 16
      %v1071 = vshll.u32 %v1014, 16
      %v1073 = vrot.slane %v1071, 1
      %v1074 = vor.u32 %v1069, %v1073
      %v1076 = vshll.u32 %v1038, 16
      %v1078 = vrot.slane %v1076, 1
      %v1079 = vsel %vm313, %v1074, %v1078
      %v1081 = vshrl.u32 %v1015, 16
      %v1083 = vshll.u32 %v1015, 16
      %v1085 = vrot.slane %v1083, 1
      %v1086 = vor.u32 %v1081, %v1085
      %v1088 = vshll.u32 %v1039, 16
      %v1090 = vrot.slane %v1088, 1
      %v1091 = vsel %vm313, %v1086, %v1090
      %v1093 = vshrl.u32 %v1016, 16
      %v1095 = vshll.u32 %v1016, 16
      %v1097 = vrot.slane %v1095, 1
      %v1098 = vor.u32 %v1093, %v1097
      %v1100 = vshll.u32 %v1040, 16
      %v1102 = vrot.slane %v1100, 1
      %v1103 = vsel %vm313, %v1098, %v1102
      %v1105 = vshrl.u32 %v1017, 16
      %v1107 = vshll.u32 %v1017, 16
      %v1109 = vrot.slane %v1107, 1
      %v1110 = vor.u32 %v1105, %v1109
      %v1112 = vshll.u32 %v1041, 16
      %v1114 = vrot.slane %v1112, 1
      %v1115 = vsel %vm313, %v1110, %v1114
      %v1117 = vshrl.u32 %v1018, 16
      %v1119 = vshll.u32 %v1018, 16
      %v1121 = vrot.slane %v1119, 1
      %v1122 = vor.u32 %v1117, %v1121
      %v1124 = vshll.u32 %v1042, 16
      %v1126 = vrot.slane %v1124, 1
      %v1127 = vsel %vm313, %v1122, %v1126
      %v1129 = vshrl.u32 %v1019, 16
      %v1131 = vshll.u32 %v1019, 16
      %v1133 = vrot.slane %v1131, 1
      %v1134 = vor.u32 %v1129, %v1133
      %v1136 = vshll.u32 %v1043, 16
      %v1138 = vrot.slane %v1136, 1
      %v1139 = vsel %vm313, %v1134, %v1138
      %1140 = vrot.lane.b32.xlu0 %v1055, 96
      %v1141 = vpop.permute.xlu0 %1140
      %1142 = vrot.lane.b32.xlu0 %v1067, 96
      %v1143 = vpop.permute.xlu0 %1142
      %1144 = vrot.lane.b32.xlu0 %v1079, 96
      %v1145 = vpop.permute.xlu0 %1144
      %1146 = vrot.lane.b32.xlu0 %v1091, 96
      %v1147 = vpop.permute.xlu0 %1146
      %1148 = vrot.lane.b32.xlu0 %v1103, 96
      %v1149 = vpop.permute.xlu0 %1148
      %1150 = vrot.lane.b32.xlu0 %v1115, 96
      %v1151 = vpop.permute.xlu0 %1150
      %1152 = vrot.lane.b32.xlu0 %v1127, 96
      %v1153 = vpop.permute.xlu0 %1152
      %1154 = vrot.lane.b32.xlu0 %v1139, 96
      %v1155 = vpop.permute.xlu0 %1154
      %v1164 = vunpack.c.l.b16 %v972
      %v1165 = vunpack.c.l.b16 %v973
      %v1166 = vunpack.c.l.b16 %v974
      %v1167 = vunpack.c.l.b16 %v975
      %v1168 = vunpack.c.l.b16 %v976
      %v1169 = vunpack.c.l.b16 %v977
      %v1170 = vunpack.c.l.b16 %v978
      %v1171 = vunpack.c.l.b16 %v979
      %v1172 = vpack.c.b16 %v997, %v1164
      %v1173 = vpack.c.b16 %v999, %v1165
      %v1174 = vpack.c.b16 %v1001, %v1166
      %v1175 = vpack.c.b16 %v1003, %v1167
      %v1176 = vpack.c.b16 %v1005, %v1168
      %v1177 = vpack.c.b16 %v1007, %v1169
      %v1178 = vpack.c.b16 %v1009, %v1170
      %v1179 = vpack.c.b16 %v1011, %v1171
      %v1180 = vrot.slane %v1172, 1
      %v1181 = vrot.slane %v1036, 1
      %v1182 = vsel %vm450, %v1180, %v1181
      %v1183 = vrot.slane %v1173, 1
      %v1184 = vrot.slane %v1037, 1
      %v1185 = vsel %vm450, %v1183, %v1184
      %v1186 = vrot.slane %v1174, 1
      %v1187 = vrot.slane %v1038, 1
      %v1188 = vsel %vm450, %v1186, %v1187
      %v1189 = vrot.slane %v1175, 1
      %v1190 = vrot.slane %v1039, 1
      %v1191 = vsel %vm450, %v1189, %v1190
      %v1192 = vrot.slane %v1176, 1
      %v1193 = vrot.slane %v1040, 1
      %v1194 = vsel %vm450, %v1192, %v1193
      %v1195 = vrot.slane %v1177, 1
      %v1196 = vrot.slane %v1041, 1
      %v1197 = vsel %vm450, %v1195, %v1196
      %v1198 = vrot.slane %v1178, 1
      %v1199 = vrot.slane %v1042, 1
      %v1200 = vsel %vm450, %v1198, %v1199
      %v1201 = vrot.slane %v1179, 1
      %v1202 = vrot.slane %v1043, 1
      %v1203 = vsel %vm450, %v1201, %v1202
      %1204 = vrot.lane.b32.xlu0 %v1182, 64
      %v1205 = vpop.permute.xlu0 %1204
      %1206 = vrot.lane.b32.xlu0 %v1185, 64
      %v1207 = vpop.permute.xlu0 %1206
      %1208 = vrot.lane.b32.xlu0 %v1188, 64
      %v1209 = vpop.permute.xlu0 %1208
      %1210 = vrot.lane.b32.xlu0 %v1191, 64
      %v1211 = vpop.permute.xlu0 %1210
      %1212 = vrot.lane.b32.xlu0 %v1194, 64
      %v1213 = vpop.permute.xlu0 %1212
      %1214 = vrot.lane.b32.xlu0 %v1197, 64
      %v1215 = vpop.permute.xlu0 %1214
      %1216 = vrot.lane.b32.xlu0 %v1200, 64
      %v1217 = vpop.permute.xlu0 %1216
      %1218 = vrot.lane.b32.xlu0 %v1203, 64
      %v1219 = vpop.permute.xlu0 %1218
      %v1221 = vsel %vm491, %v1012, %v1141
      %v1224 = vsel %vm491, %v1013, %v1143
      %v1227 = vsel %vm491, %v1014, %v1145
      %v1230 = vsel %vm491, %v1015, %v1147
      %v1233 = vsel %vm491, %v1016, %v1149
      %v1236 = vsel %vm491, %v1017, %v1151
      %v1239 = vsel %vm491, %v1018, %v1153
      %v1242 = vsel %vm491, %v1019, %v1155
      %v1245 = vsel %vm516, %v1141, %v1205
      %v1248 = vsel %vm516, %v1143, %v1207
      %v1251 = vsel %vm516, %v1145, %v1209
      %v1254 = vsel %vm516, %v1147, %v1211
      %v1257 = vsel %vm516, %v1149, %v1213
      %v1260 = vsel %vm516, %v1151, %v1215
      %v1263 = vsel %vm516, %v1153, %v1217
      %v1266 = vsel %vm516, %v1155, %v1219
      %v1268 = vld [vmem:[#allocation2] sm:$0xff]
      %v1269 = vld [vmem:[#allocation2 + $0x8] sm:$0xff]
      %v1270 = vld [vmem:[#allocation2 + $0x10] sm:$0xff]
      %v1271 = vld [vmem:[#allocation2 + $0x18] sm:$0xff]
      %v1272 = vld [vmem:[#allocation2 + $0x20] sm:$0xff]
      %v1273 = vld [vmem:[#allocation2 + $0x28] sm:$0xff]
      %v1274 = vld [vmem:[#allocation2 + $0x30] sm:$0xff]
      %v1275 = vld [vmem:[#allocation2 + $0x38] sm:$0xff]
      %v1276 = vld [vmem:[#allocation2 + $0x40] sm:$0xff]
      %v1277 = vld [vmem:[#allocation2 + $0x48] sm:$0xff]
      %v1278 = vld [vmem:[#allocation2 + $0x50] sm:$0xff]
      %v1279 = vld [vmem:[#allocation2 + $0x58] sm:$0xff]
      %v1280 = vld [vmem:[#allocation2 + $0x60] sm:$0xff]
      %v1281 = vld [vmem:[#allocation2 + $0x68] sm:$0xff]
      %v1282 = vld [vmem:[#allocation2 + $0x70] sm:$0xff]
      %v1283 = vld [vmem:[#allocation2 + $0x78] sm:$0xff]
      %s1284 = scalar_lea.vmem %s1, 144
      %v1285 = vld [vmem:[%s1284] sm:$0xf]
      %v1286 = vld [vmem:[%s1284 + $0x4] sm:$0xf]
      %v1287 = vld [vmem:[%s1284 + $0x8] sm:$0xf]
      %v1288 = vld [vmem:[%s1284 + $0xc] sm:$0xf]
      %v1289 = vld [vmem:[%s1284 + $0x10] sm:$0xf]
      %v1290 = vld [vmem:[%s1284 + $0x14] sm:$0xf]
      %v1291 = vld [vmem:[%s1284 + $0x18] sm:$0xf]
      %v1292 = vld [vmem:[%s1284 + $0x1c] sm:$0xf]
      %v1293 = vld [vmem:[%s1284 + $0x20] sm:$0xf]
      %v1294 = vld [vmem:[%s1284 + $0x24] sm:$0xf]
      %v1295 = vld [vmem:[%s1284 + $0x28] sm:$0xf]
      %v1296 = vld [vmem:[%s1284 + $0x2c] sm:$0xf]
      %v1297 = vld [vmem:[%s1284 + $0x30] sm:$0xf]
      %v1298 = vld [vmem:[%s1284 + $0x34] sm:$0xf]
      %v1299 = vld [vmem:[%s1284 + $0x38] sm:$0xf]
      %v1300 = vld [vmem:[%s1284 + $0x3c] sm:$0xf]
      %v1301 = vld [vmem:[%s1284 + $0x40] sm:$0xf]
      %v1302 = vld [vmem:[%s1284 + $0x44] sm:$0xf]
      %v1303 = vld [vmem:[%s1284 + $0x48] sm:$0xf]
      %v1304 = vld [vmem:[%s1284 + $0x4c] sm:$0xf]
      %v1305 = vld [vmem:[%s1284 + $0x50] sm:$0xf]
      %v1306 = vld [vmem:[%s1284 + $0x54] sm:$0xf]
      %v1307 = vld [vmem:[%s1284 + $0x58] sm:$0xf]
      %v1308 = vld [vmem:[%s1284 + $0x5c] sm:$0xf]
      %v1309 = vld [vmem:[%s1284 + $0x60] sm:$0xf]
      %v1310 = vld [vmem:[%s1284 + $0x64] sm:$0xf]
      %v1311 = vld [vmem:[%s1284 + $0x68] sm:$0xf]
      %v1312 = vld [vmem:[%s1284 + $0x6c] sm:$0xf]
      %v1313 = vld [vmem:[%s1284 + $0x70] sm:$0xf]
      %v1314 = vld [vmem:[%s1284 + $0x74] sm:$0xf]
      %v1315 = vld [vmem:[%s1284 + $0x78] sm:$0xf]
      %v1316 = vld [vmem:[%s1284 + $0x7c] sm:$0xf]
      %v1317 = vld [vmem:[%s1284 + $0x80] sm:$0xf]
      %v1318 = vld [vmem:[%s1284 + $0x84] sm:$0xf]
      %v1319 = vld [vmem:[%s1284 + $0x88] sm:$0xf]
      %v1320 = vld [vmem:[%s1284 + $0x8c] sm:$0xf]
      %v1357 = vunpack.c.l.b16 %v1285
      %v1358 = vunpack.c.l.b16 %v1286
      %v1359 = vunpack.c.l.b16 %v1287
      %v1360 = vunpack.c.l.b16 %v1288
      %v1361 = vunpack.c.l.b16 %v1289
      %v1362 = vunpack.c.l.b16 %v1290
      %v1363 = vunpack.c.l.b16 %v1291
      %v1364 = vunpack.c.l.b16 %v1292
      %v1365 = vunpack.c.l.b16 %v1293
      %v1366 = vunpack.c.l.b16 %v1294
      %v1367 = vunpack.c.l.b16 %v1295
      %v1368 = vunpack.c.l.b16 %v1296
      %v1369 = vunpack.c.l.b16 %v1297
      %v1370 = vunpack.c.l.b16 %v1298
      %v1371 = vunpack.c.l.b16 %v1299
      %v1372 = vunpack.c.l.b16 %v1300
      %v1373 = vunpack.c.l.b16 %v1301
      %v1374 = vunpack.c.l.b16 %v1302
      %v1375 = vunpack.c.l.b16 %v1303
      %v1376 = vunpack.c.l.b16 %v1304
      %v1377 = vunpack.c.l.b16 %v1305
      %v1378 = vunpack.c.l.b16 %v1306
      %v1379 = vunpack.c.l.b16 %v1307
      %v1380 = vunpack.c.l.b16 %v1308
      %v1381 = vunpack.c.l.b16 %v1309
      %v1382 = vunpack.c.l.b16 %v1310
      %v1383 = vunpack.c.l.b16 %v1311
      %v1384 = vunpack.c.l.b16 %v1312
      %v1385 = vunpack.c.l.b16 %v1313
      %v1386 = vunpack.c.l.b16 %v1314
      %v1387 = vunpack.c.l.b16 %v1315
      %v1388 = vunpack.c.l.b16 %v1316
      %v1389 = vunpack.c.l.b16 %v1317
      %v1390 = vunpack.c.l.b16 %v1318
      %v1391 = vunpack.c.l.b16 %v1319
      %v1392 = vunpack.c.l.b16 %v1320
      %v1393 = vpack.c.b16 %v1358, %v1357
      %v1394 = vpack.c.b16 %v1360, %v1359
      %v1395 = vpack.c.b16 %v1362, %v1361
      %v1396 = vpack.c.b16 %v1364, %v1363
      %v1397 = vpack.c.b16 %v1366, %v1365
      %v1398 = vpack.c.b16 %v1368, %v1367
      %v1399 = vpack.c.b16 %v1370, %v1369
      %v1400 = vpack.c.b16 %v1372, %v1371
      %v1401 = vpack.c.b16 %v1374, %v1373
      %v1402 = vpack.c.b16 %v1376, %v1375
      %v1403 = vpack.c.b16 %v1378, %v1377
      %v1404 = vpack.c.b16 %v1380, %v1379
      %v1405 = vpack.c.b16 %v1382, %v1381
      %v1406 = vpack.c.b16 %v1384, %v1383
      %v1407 = vpack.c.b16 %v1386, %v1385
      %v1408 = vpack.c.b16 %v1388, %v1387
      %v1409 = vpack.c.b16 %v1390, %v1389
      %v1410 = vpack.c.b16 %v1392, %v1391
      %v1429 = vsel %vm701, %v1205, 0
      %v1431 = vsel %vm701, %v1207, 0
      %v1433 = vsel %vm701, %v1209, 0
      %v1435 = vsel %vm701, %v1211, 0
      %v1437 = vsel %vm701, %v1213, 0
      %v1439 = vsel %vm701, %v1215, 0
      %v1441 = vsel %vm701, %v1217, 0
      %v1443 = vsel %vm701, %v1219, 0
      %1445 = vmatprep.subr.bf16.mxu0 0
      %1446 = vmatpush1.bf16.msra.mxu0 %v1400
      %1447 = vmatprep.subr.bf16.mxu0 0
      %1448 = vmatpush1.bf16.msra.mxu0 %v1399
      %1449 = vmatprep.subr.bf16.mxu0 0
      %1450 = vmatpush1.bf16.msra.mxu0 %v1398
      %1451 = vmatprep.subr.bf16.mxu0 0
      %1452 = vmatpush1.bf16.msra.mxu0 %v1397
      %1453 = vmatprep.subr.bf16.mxu0 0
      %1454 = vmatpush1.bf16.msra.mxu0 %v1396
      %1455 = vmatprep.subr.bf16.mxu0 0
      %1456 = vmatpush1.bf16.msra.mxu0 %v1395
      %1457 = vmatprep.subr.bf16.mxu0 0
      %1458 = vmatpush1.bf16.msra.mxu0 %v1394
      %1459 = vmatprep.subr.bf16.mxu0 0
      %1460 = vmatpush1.bf16.msra.mxu0 %v1393
      %1461 = vmatprep.subr.bf16.mxu0 0
      %1462 = vmatpush2.bf16.msra.mxu0 %v1408
      %1463 = vmatprep.subr.bf16.mxu0 0
      %1464 = vmatpush2.bf16.msra.mxu0 %v1407
      %1465 = vmatprep.subr.bf16.mxu0 0
      %1466 = vmatpush2.bf16.msra.mxu0 %v1406
      %1467 = vmatprep.subr.bf16.mxu0 0
      %1468 = vmatpush2.bf16.msra.mxu0 %v1405
      %1469 = vmatprep.subr.bf16.mxu0 0
      %1470 = vmatpush2.bf16.msra.mxu0 %v1404
      %1471 = vmatprep.subr.bf16.mxu0 0
      %1472 = vmatpush2.bf16.msra.mxu0 %v1403
      %1473 = vmatprep.subr.bf16.mxu0 0
      %1474 = vmatpush2.bf16.msra.mxu0 %v1402
      %1475 = vmatprep.subr.bf16.mxu0 0
      %1476 = vmatpush2.bf16.msra.mxu0 %v1401
      %1477 = vmatprep.mubr.bf16.mxu0 %v1245
      %1478 = vmatmul.mubr.bf16.gmra.mxu0 %v1221
      %v1479 = vpop.f32.mrf.mxu0
      %v1480 = vadd.f32 0.0, %v1479
      %v1481 = vpop.f32.mrf.mxu0
      %v1482 = vpop.f32.mrf.mxu0
      %v1483 = vadd.f32 0.0, %v1482
      %v1484 = vpop.f32.mrf.mxu0
      %1485 = vmatprep.mubr.bf16.mxu0 %v1248
      %1486 = vmatmul.mubr.bf16.gmra.mxu0 %v1224
      %v1487 = vpop.f32.mrf.mxu0
      %v1488 = vadd.f32 0.0, %v1487
      %v1489 = vpop.f32.mrf.mxu0
      %v1490 = vpop.f32.mrf.mxu0
      %v1491 = vadd.f32 0.0, %v1490
      %v1492 = vpop.f32.mrf.mxu0
      %1493 = vmatprep.mubr.bf16.mxu0 %v1251
      %1494 = vmatmul.mubr.bf16.gmra.mxu0 %v1227
      %v1495 = vpop.f32.mrf.mxu0
      %v1496 = vadd.f32 0.0, %v1495
      %v1497 = vpop.f32.mrf.mxu0
      %v1498 = vpop.f32.mrf.mxu0
      %v1499 = vadd.f32 0.0, %v1498
      %v1500 = vpop.f32.mrf.mxu0
      %1501 = vmatprep.mubr.bf16.mxu0 %v1254
      %1502 = vmatmul.mubr.bf16.gmra.mxu0 %v1230
      %v1503 = vpop.f32.mrf.mxu0
      %v1504 = vadd.f32 0.0, %v1503
      %v1505 = vpop.f32.mrf.mxu0
      %v1506 = vpop.f32.mrf.mxu0
      %v1507 = vadd.f32 0.0, %v1506
      %v1508 = vpop.f32.mrf.mxu0
      %1509 = vmatprep.mubr.bf16.mxu0 %v1257
      %1510 = vmatmul.mubr.bf16.gmra.mxu0 %v1233
      %v1511 = vpop.f32.mrf.mxu0
      %v1512 = vadd.f32 0.0, %v1511
      %v1513 = vpop.f32.mrf.mxu0
      %v1514 = vpop.f32.mrf.mxu0
      %v1515 = vadd.f32 0.0, %v1514
      %v1516 = vpop.f32.mrf.mxu0
      %1517 = vmatprep.mubr.bf16.mxu0 %v1260
      %1518 = vmatmul.mubr.bf16.gmra.mxu0 %v1236
      %v1519 = vpop.f32.mrf.mxu0
      %v1520 = vadd.f32 0.0, %v1519
      %v1521 = vpop.f32.mrf.mxu0
      %v1522 = vpop.f32.mrf.mxu0
      %v1523 = vadd.f32 0.0, %v1522
      %v1524 = vpop.f32.mrf.mxu0
      %1525 = vmatprep.mubr.bf16.mxu0 %v1263
      %1526 = vmatmul.mubr.bf16.gmra.mxu0 %v1239
      %v1527 = vpop.f32.mrf.mxu0
      %v1528 = vadd.f32 0.0, %v1527
      %v1529 = vpop.f32.mrf.mxu0
      %v1530 = vpop.f32.mrf.mxu0
      %v1531 = vadd.f32 0.0, %v1530
      %v1532 = vpop.f32.mrf.mxu0
      %1533 = vmatprep.mubr.bf16.mxu0 %v1266
      %1534 = vmatmul.mubr.bf16.gmra.mxu0 %v1242
      %v1535 = vpop.f32.mrf.mxu0
      %v1536 = vadd.f32 0.0, %v1535
      %v1537 = vpop.f32.mrf.mxu0
      %v1538 = vpop.f32.mrf.mxu0
      %v1539 = vadd.f32 0.0, %v1538
      %v1540 = vpop.f32.mrf.mxu0
      %1541 = vdwg.mxu0
      %1542 = vmatprep.subr.bf16.mxu0 0
      %1543 = vmatpush1.bf16.msra.mxu0 0
      %1544 = vmatprep.subr.bf16.mxu0 0
      %1545 = vmatpush1.bf16.msra.mxu0 0
      %1546 = vmatprep.subr.bf16.mxu0 0
      %1547 = vmatpush1.bf16.msra.mxu0 0
      %1548 = vmatprep.subr.bf16.mxu0 0
      %1549 = vmatpush1.bf16.msra.mxu0 0
      %1550 = vmatprep.subr.bf16.mxu0 0
      %1551 = vmatpush1.bf16.msra.mxu0 0
      %1552 = vmatprep.subr.bf16.mxu0 0
      %1553 = vmatpush1.bf16.msra.mxu0 0
      %1554 = vmatprep.subr.bf16.mxu0 0
      %1555 = vmatpush1.bf16.msra.mxu0 %v1410
      %1556 = vmatprep.subr.bf16.mxu0 0
      %1557 = vmatpush1.bf16.msra.mxu0 %v1409
      %1558 = vmatprep.subr.bf16.mxu0 0
      %1559 = vmatpush2.bf16.msra.mxu0 0
      %1560 = vmatprep.subr.bf16.mxu0 0
      %1561 = vmatpush2.bf16.msra.mxu0 0
      %1562 = vmatprep.subr.bf16.mxu0 0
      %1563 = vmatpush2.bf16.msra.mxu0 0
      %1564 = vmatprep.subr.bf16.mxu0 0
      %1565 = vmatpush2.bf16.msra.mxu0 0
      %1566 = vmatprep.subr.bf16.mxu0 0
      %1567 = vmatpush2.bf16.msra.mxu0 0
      %1568 = vmatprep.subr.bf16.mxu0 0
      %1569 = vmatpush2.bf16.msra.mxu0 0
      %1570 = vmatprep.subr.bf16.mxu0 0
      %1571 = vmatpush2.bf16.msra.mxu0 0
      %1572 = vmatprep.subr.bf16.mxu0 0
      %1573 = vmatpush2.bf16.msra.mxu0 0
      %1574 = vmatprep.mubr.bf16.mxu0 0
      %1575 = vmatmul.mubr.bf16.gmra.mxu0 %v1429
      %v1576 = vpop.f32.mrf.mxu0
      %v1577 = vadd.f32 %v1480, %v1576
      %v1578 = vpop.f32.mrf.mxu0
      %v1579 = vpop.f32.mrf.mxu0
      %v1580 = vadd.f32 %v1483, %v1579
      %v1581 = vpop.f32.mrf.mxu0
      %1582 = vmatprep.mubr.bf16.mxu0 0
      %1583 = vmatmul.mubr.bf16.gmra.mxu0 %v1431
      %v1584 = vpop.f32.mrf.mxu0
      %v1585 = vadd.f32 %v1488, %v1584
      %v1586 = vpop.f32.mrf.mxu0
      %v1587 = vpop.f32.mrf.mxu0
      %v1588 = vadd.f32 %v1491, %v1587
      %v1589 = vpop.f32.mrf.mxu0
      %1590 = vmatprep.mubr.bf16.mxu0 0
      %1591 = vmatmul.mubr.bf16.gmra.mxu0 %v1433
      %v1592 = vpop.f32.mrf.mxu0
      %v1593 = vadd.f32 %v1496, %v1592
      %v1594 = vpop.f32.mrf.mxu0
      %v1595 = vpop.f32.mrf.mxu0
      %v1596 = vadd.f32 %v1499, %v1595
      %v1597 = vpop.f32.mrf.mxu0
      %1598 = vmatprep.mubr.bf16.mxu0 0
      %1599 = vmatmul.mubr.bf16.gmra.mxu0 %v1435
      %v1600 = vpop.f32.mrf.mxu0
      %v1601 = vadd.f32 %v1504, %v1600
      %v1602 = vpop.f32.mrf.mxu0
      %v1603 = vpop.f32.mrf.mxu0
      %v1604 = vadd.f32 %v1507, %v1603
      %v1605 = vpop.f32.mrf.mxu0
      %1606 = vmatprep.mubr.bf16.mxu0 0
      %1607 = vmatmul.mubr.bf16.gmra.mxu0 %v1437
      %v1608 = vpop.f32.mrf.mxu0
      %v1609 = vadd.f32 %v1512, %v1608
      %v1610 = vpop.f32.mrf.mxu0
      %v1611 = vpop.f32.mrf.mxu0
      %v1612 = vadd.f32 %v1515, %v1611
      %v1613 = vpop.f32.mrf.mxu0
      %1614 = vmatprep.mubr.bf16.mxu0 0
      %1615 = vmatmul.mubr.bf16.gmra.mxu0 %v1439
      %v1616 = vpop.f32.mrf.mxu0
      %v1617 = vadd.f32 %v1520, %v1616
      %v1618 = vpop.f32.mrf.mxu0
      %v1619 = vpop.f32.mrf.mxu0
      %v1620 = vadd.f32 %v1523, %v1619
      %v1621 = vpop.f32.mrf.mxu0
      %1622 = vmatprep.mubr.bf16.mxu0 0
      %1623 = vmatmul.mubr.bf16.gmra.mxu0 %v1441
      %v1624 = vpop.f32.mrf.mxu0
      %v1625 = vadd.f32 %v1528, %v1624
      %v1626 = vpop.f32.mrf.mxu0
      %v1627 = vpop.f32.mrf.mxu0
      %v1628 = vadd.f32 %v1531, %v1627
      %v1629 = vpop.f32.mrf.mxu0
      %1630 = vmatprep.mubr.bf16.mxu0 0
      %1631 = vmatmul.mubr.bf16.gmra.mxu0 %v1443
      %v1632 = vpop.f32.mrf.mxu0
      %v1633 = vadd.f32 %v1536, %v1632
      %v1634 = vpop.f32.mrf.mxu0
      %v1635 = vpop.f32.mrf.mxu0
      %v1636 = vadd.f32 %v1539, %v1635
      %v1637 = vpop.f32.mrf.mxu0
      %1638 = vdwg.mxu0
      %v1639 = vadd.f32 %v1268, %v1577
      %v1640 = vadd.f32 %v1269, %v1580
      %v1641 = vadd.f32 %v1270, %v1585
      %v1642 = vadd.f32 %v1271, %v1588
      %v1643 = vadd.f32 %v1272, %v1593
      %v1644 = vadd.f32 %v1273, %v1596
      %v1645 = vadd.f32 %v1274, %v1601
      %v1646 = vadd.f32 %v1275, %v1604
      %v1647 = vadd.f32 %v1276, %v1609
      %v1648 = vadd.f32 %v1277, %v1612
      %v1649 = vadd.f32 %v1278, %v1617
      %v1650 = vadd.f32 %v1279, %v1620
      %v1651 = vadd.f32 %v1280, %v1625
      %v1652 = vadd.f32 %v1281, %v1628
      %v1653 = vadd.f32 %v1282, %v1633
      %v1654 = vadd.f32 %v1283, %v1636
      %1655 = vst [vmem:[#allocation2] sm:$0xff] %v1639
      %1656 = vst [vmem:[#allocation2 + $0x8] sm:$0xff] %v1640
      %1657 = vst [vmem:[#allocation2 + $0x10] sm:$0xff] %v1641
      %1658 = vst [vmem:[#allocation2 + $0x18] sm:$0xff] %v1642
      %1659 = vst [vmem:[#allocation2 + $0x20] sm:$0xff] %v1643
      %1660 = vst [vmem:[#allocation2 + $0x28] sm:$0xff] %v1644
      %1661 = vst [vmem:[#allocation2 + $0x30] sm:$0xff] %v1645
      %1662 = vst [vmem:[#allocation2 + $0x38] sm:$0xff] %v1646
      %1663 = vst [vmem:[#allocation2 + $0x40] sm:$0xff] %v1647
      %1664 = vst [vmem:[#allocation2 + $0x48] sm:$0xff] %v1648
      %1665 = vst [vmem:[#allocation2 + $0x50] sm:$0xff] %v1649
      %1666 = vst [vmem:[#allocation2 + $0x58] sm:$0xff] %v1650
      %1667 = vst [vmem:[#allocation2 + $0x60] sm:$0xff] %v1651
      %1668 = vst [vmem:[#allocation2 + $0x68] sm:$0xff] %v1652
      %1669 = vst [vmem:[#allocation2 + $0x70] sm:$0xff] %v1653
      %1670 = vst [vmem:[#allocation2 + $0x78] sm:$0xff] %v1654
      %s1671 = sadd.s32 %s197, 2
      %s1672 = smul.u32 %s1671, 3
      %s1673 = smul.addr %s1672, 4
      %s1674 = scalar_lea.vmem %s184, %s1673
      %v1675 = vld [vmem:[%s1674] sm:$0xf]
      %v1676 = vld [vmem:[%s1674 + $0x4] sm:$0xf]
      %v1677 = vld [vmem:[%s1674 + $0xc] sm:$0xf]
      %v1678 = vld [vmem:[%s1674 + $0x10] sm:$0xf]
      %v1679 = vld [vmem:[%s1674 + $0x18] sm:$0xf]
      %v1680 = vld [vmem:[%s1674 + $0x1c] sm:$0xf]
      %v1681 = vld [vmem:[%s1674 + $0x24] sm:$0xf]
      %v1682 = vld [vmem:[%s1674 + $0x28] sm:$0xf]
      %v1683 = vld [vmem:[%s1674 + $0x30] sm:$0xf]
      %v1684 = vld [vmem:[%s1674 + $0x34] sm:$0xf]
      %v1685 = vld [vmem:[%s1674 + $0x3c] sm:$0xf]
      %v1686 = vld [vmem:[%s1674 + $0x40] sm:$0xf]
      %v1687 = vld [vmem:[%s1674 + $0x48] sm:$0xf]
      %v1688 = vld [vmem:[%s1674 + $0x4c] sm:$0xf]
      %v1689 = vld [vmem:[%s1674 + $0x54] sm:$0xf]
      %v1690 = vld [vmem:[%s1674 + $0x58] sm:$0xf]
      %v1691 = vld [vmem:[%s1674 + $0x8] sm:$0x1]
      %v1692 = vld [vmem:[%s1674 + $0x14] sm:$0x1]
      %v1693 = vld [vmem:[%s1674 + $0x20] sm:$0x1]
      %v1694 = vld [vmem:[%s1674 + $0x2c] sm:$0x1]
      %v1695 = vld [vmem:[%s1674 + $0x38] sm:$0x1]
      %v1696 = vld [vmem:[%s1674 + $0x44] sm:$0x1]
      %v1697 = vld [vmem:[%s1674 + $0x50] sm:$0x1]
      %v1698 = vld [vmem:[%s1674 + $0x5c] sm:$0x1]
      %v1699 = vld [vmem:[%s1674] sm:$0xe]
      %v1700 = vld [vmem:[%s1674 + $0xc] sm:$0xe]
      %v1701 = vld [vmem:[%s1674 + $0x18] sm:$0xe]
      %v1702 = vld [vmem:[%s1674 + $0x24] sm:$0xe]
      %v1703 = vld [vmem:[%s1674 + $0x30] sm:$0xe]
      %v1704 = vld [vmem:[%s1674 + $0x3c] sm:$0xe]
      %v1705 = vld [vmem:[%s1674 + $0x48] sm:$0xe]
      %v1706 = vld [vmem:[%s1674 + $0x54] sm:$0xe]
      %v1723 = vunpack.c.l.b16 %v1675
      %v1724 = vunpack.c.l.b16 %v1676
      %v1725 = vunpack.c.l.b16 %v1677
      %v1726 = vunpack.c.l.b16 %v1678
      %v1727 = vunpack.c.l.b16 %v1679
      %v1728 = vunpack.c.l.b16 %v1680
      %v1729 = vunpack.c.l.b16 %v1681
      %v1730 = vunpack.c.l.b16 %v1682
      %v1731 = vunpack.c.l.b16 %v1683
      %v1732 = vunpack.c.l.b16 %v1684
      %v1733 = vunpack.c.l.b16 %v1685
      %v1734 = vunpack.c.l.b16 %v1686
      %v1735 = vunpack.c.l.b16 %v1687
      %v1736 = vunpack.c.l.b16 %v1688
      %v1737 = vunpack.c.l.b16 %v1689
      %v1738 = vunpack.c.l.b16 %v1690
      %v1739 = vpack.c.b16 %v1724, %v1723
      %v1740 = vpack.c.b16 %v1726, %v1725
      %v1741 = vpack.c.b16 %v1728, %v1727
      %v1742 = vpack.c.b16 %v1730, %v1729
      %v1743 = vpack.c.b16 %v1732, %v1731
      %v1744 = vpack.c.b16 %v1734, %v1733
      %v1745 = vpack.c.b16 %v1736, %v1735
      %v1746 = vpack.c.b16 %v1738, %v1737
      %v1755 = vunpack.c.l.b16 %v1691
      %v1756 = vunpack.c.l.b16 %v1692
      %v1757 = vunpack.c.l.b16 %v1693
      %v1758 = vunpack.c.l.b16 %v1694
      %v1759 = vunpack.c.l.b16 %v1695
      %v1760 = vunpack.c.l.b16 %v1696
      %v1761 = vunpack.c.l.b16 %v1697
      %v1762 = vunpack.c.l.b16 %v1698
      %v1763 = vpack.c.b16 %v1755, %v1755
      %v1764 = vpack.c.b16 %v1756, %v1756
      %v1765 = vpack.c.b16 %v1757, %v1757
      %v1766 = vpack.c.b16 %v1758, %v1758
      %v1767 = vpack.c.b16 %v1759, %v1759
      %v1768 = vpack.c.b16 %v1760, %v1760
      %v1769 = vpack.c.b16 %v1761, %v1761
      %v1770 = vpack.c.b16 %v1762, %v1762
      %v1772 = vshrl.u32 %v1739, 16
      %v1774 = vshll.u32 %v1739, 16
      %v1776 = vrot.slane %v1774, 1
      %v1777 = vor.u32 %v1772, %v1776
      %v1779 = vshll.u32 %v1763, 16
      %v1781 = vrot.slane %v1779, 1
      %v1782 = vsel %vm313, %v1777, %v1781
      %v1784 = vshrl.u32 %v1740, 16
      %v1786 = vshll.u32 %v1740, 16
      %v1788 = vrot.slane %v1786, 1
      %v1789 = vor.u32 %v1784, %v1788
      %v1791 = vshll.u32 %v1764, 16
      %v1793 = vrot.slane %v1791, 1
      %v1794 = vsel %vm313, %v1789, %v1793
      %v1796 = vshrl.u32 %v1741, 16
      %v1798 = vshll.u32 %v1741, 16
      %v1800 = vrot.slane %v1798, 1
      %v1801 = vor.u32 %v1796, %v1800
      %v1803 = vshll.u32 %v1765, 16
      %v1805 = vrot.slane %v1803, 1
      %v1806 = vsel %vm313, %v1801, %v1805
      %v1808 = vshrl.u32 %v1742, 16
      %v1810 = vshll.u32 %v1742, 16
      %v1812 = vrot.slane %v1810, 1
      %v1813 = vor.u32 %v1808, %v1812
      %v1815 = vshll.u32 %v1766, 16
      %v1817 = vrot.slane %v1815, 1
      %v1818 = vsel %vm313, %v1813, %v1817
      %v1820 = vshrl.u32 %v1743, 16
      %v1822 = vshll.u32 %v1743, 16
      %v1824 = vrot.slane %v1822, 1
      %v1825 = vor.u32 %v1820, %v1824
      %v1827 = vshll.u32 %v1767, 16
      %v1829 = vrot.slane %v1827, 1
      %v1830 = vsel %vm313, %v1825, %v1829
      %v1832 = vshrl.u32 %v1744, 16
      %v1834 = vshll.u32 %v1744, 16
      %v1836 = vrot.slane %v1834, 1
      %v1837 = vor.u32 %v1832, %v1836
      %v1839 = vshll.u32 %v1768, 16
      %v1841 = vrot.slane %v1839, 1
      %v1842 = vsel %vm313, %v1837, %v1841
      %v1844 = vshrl.u32 %v1745, 16
      %v1846 = vshll.u32 %v1745, 16
      %v1848 = vrot.slane %v1846, 1
      %v1849 = vor.u32 %v1844, %v1848
      %v1851 = vshll.u32 %v1769, 16
      %v1853 = vrot.slane %v1851, 1
      %v1854 = vsel %vm313, %v1849, %v1853
      %v1856 = vshrl.u32 %v1746, 16
      %v1858 = vshll.u32 %v1746, 16
      %v1860 = vrot.slane %v1858, 1
      %v1861 = vor.u32 %v1856, %v1860
      %v1863 = vshll.u32 %v1770, 16
      %v1865 = vrot.slane %v1863, 1
      %v1866 = vsel %vm313, %v1861, %v1865
      %1867 = vrot.lane.b32.xlu0 %v1782, 96
      %v1868 = vpop.permute.xlu0 %1867
      %1869 = vrot.lane.b32.xlu0 %v1794, 96
      %v1870 = vpop.permute.xlu0 %1869
      %1871 = vrot.lane.b32.xlu0 %v1806, 96
      %v1872 = vpop.permute.xlu0 %1871
      %1873 = vrot.lane.b32.xlu0 %v1818, 96
      %v1874 = vpop.permute.xlu0 %1873
      %1875 = vrot.lane.b32.xlu0 %v1830, 96
      %v1876 = vpop.permute.xlu0 %1875
      %1877 = vrot.lane.b32.xlu0 %v1842, 96
      %v1878 = vpop.permute.xlu0 %1877
      %1879 = vrot.lane.b32.xlu0 %v1854, 96
      %v1880 = vpop.permute.xlu0 %1879
      %1881 = vrot.lane.b32.xlu0 %v1866, 96
      %v1882 = vpop.permute.xlu0 %1881
      %v1891 = vunpack.c.l.b16 %v1699
      %v1892 = vunpack.c.l.b16 %v1700
      %v1893 = vunpack.c.l.b16 %v1701
      %v1894 = vunpack.c.l.b16 %v1702
      %v1895 = vunpack.c.l.b16 %v1703
      %v1896 = vunpack.c.l.b16 %v1704
      %v1897 = vunpack.c.l.b16 %v1705
      %v1898 = vunpack.c.l.b16 %v1706
      %v1899 = vpack.c.b16 %v1724, %v1891
      %v1900 = vpack.c.b16 %v1726, %v1892
      %v1901 = vpack.c.b16 %v1728, %v1893
      %v1902 = vpack.c.b16 %v1730, %v1894
      %v1903 = vpack.c.b16 %v1732, %v1895
      %v1904 = vpack.c.b16 %v1734, %v1896
      %v1905 = vpack.c.b16 %v1736, %v1897
      %v1906 = vpack.c.b16 %v1738, %v1898
      %v1907 = vrot.slane %v1899, 1
      %v1908 = vrot.slane %v1763, 1
      %v1909 = vsel %vm450, %v1907, %v1908
      %v1910 = vrot.slane %v1900, 1
      %v1911 = vrot.slane %v1764, 1
      %v1912 = vsel %vm450, %v1910, %v1911
      %v1913 = vrot.slane %v1901, 1
      %v1914 = vrot.slane %v1765, 1
      %v1915 = vsel %vm450, %v1913, %v1914
      %v1916 = vrot.slane %v1902, 1
      %v1917 = vrot.slane %v1766, 1
      %v1918 = vsel %vm450, %v1916, %v1917
      %v1919 = vrot.slane %v1903, 1
      %v1920 = vrot.slane %v1767, 1
      %v1921 = vsel %vm450, %v1919, %v1920
      %v1922 = vrot.slane %v1904, 1
      %v1923 = vrot.slane %v1768, 1
      %v1924 = vsel %vm450, %v1922, %v1923
      %v1925 = vrot.slane %v1905, 1
      %v1926 = vrot.slane %v1769, 1
      %v1927 = vsel %vm450, %v1925, %v1926
      %v1928 = vrot.slane %v1906, 1
      %v1929 = vrot.slane %v1770, 1
      %v1930 = vsel %vm450, %v1928, %v1929
      %1931 = vrot.lane.b32.xlu0 %v1909, 64
      %v1932 = vpop.permute.xlu0 %1931
      %1933 = vrot.lane.b32.xlu0 %v1912, 64
      %v1934 = vpop.permute.xlu0 %1933
      %1935 = vrot.lane.b32.xlu0 %v1915, 64
      %v1936 = vpop.permute.xlu0 %1935
      %1937 = vrot.lane.b32.xlu0 %v1918, 64
      %v1938 = vpop.permute.xlu0 %1937
      %1939 = vrot.lane.b32.xlu0 %v1921, 64
      %v1940 = vpop.permute.xlu0 %1939
      %1941 = vrot.lane.b32.xlu0 %v1924, 64
      %v1942 = vpop.permute.xlu0 %1941
      %1943 = vrot.lane.b32.xlu0 %v1927, 64
      %v1944 = vpop.permute.xlu0 %1943
      %1945 = vrot.lane.b32.xlu0 %v1930, 64
      %v1946 = vpop.permute.xlu0 %1945
      %v1948 = vsel %vm491, %v1739, %v1868
      %v1951 = vsel %vm491, %v1740, %v1870
      %v1954 = vsel %vm491, %v1741, %v1872
      %v1957 = vsel %vm491, %v1742, %v1874
      %v1960 = vsel %vm491, %v1743, %v1876
      %v1963 = vsel %vm491, %v1744, %v1878
      %v1966 = vsel %vm491, %v1745, %v1880
      %v1969 = vsel %vm491, %v1746, %v1882
      %v1972 = vsel %vm516, %v1868, %v1932
      %v1975 = vsel %vm516, %v1870, %v1934
      %v1978 = vsel %vm516, %v1872, %v1936
      %v1981 = vsel %vm516, %v1874, %v1938
      %v1984 = vsel %vm516, %v1876, %v1940
      %v1987 = vsel %vm516, %v1878, %v1942
      %v1990 = vsel %vm516, %v1880, %v1944
      %v1993 = vsel %vm516, %v1882, %v1946
      %v1995 = vld [vmem:[#allocation2] sm:$0xff]
      %v1996 = vld [vmem:[#allocation2 + $0x8] sm:$0xff]
      %v1997 = vld [vmem:[#allocation2 + $0x10] sm:$0xff]
      %v1998 = vld [vmem:[#allocation2 + $0x18] sm:$0xff]
      %v1999 = vld [vmem:[#allocation2 + $0x20] sm:$0xff]
      %v2000 = vld [vmem:[#allocation2 + $0x28] sm:$0xff]
      %v2001 = vld [vmem:[#allocation2 + $0x30] sm:$0xff]
      %v2002 = vld [vmem:[#allocation2 + $0x38] sm:$0xff]
      %v2003 = vld [vmem:[#allocation2 + $0x40] sm:$0xff]
      %v2004 = vld [vmem:[#allocation2 + $0x48] sm:$0xff]
      %v2005 = vld [vmem:[#allocation2 + $0x50] sm:$0xff]
      %v2006 = vld [vmem:[#allocation2 + $0x58] sm:$0xff]
      %v2007 = vld [vmem:[#allocation2 + $0x60] sm:$0xff]
      %v2008 = vld [vmem:[#allocation2 + $0x68] sm:$0xff]
      %v2009 = vld [vmem:[#allocation2 + $0x70] sm:$0xff]
      %v2010 = vld [vmem:[#allocation2 + $0x78] sm:$0xff]
      %s2011 = scalar_lea.vmem %s1, 288
      %v2012 = vld [vmem:[%s2011] sm:$0xf]
      %v2013 = vld [vmem:[%s2011 + $0x4] sm:$0xf]
      %v2014 = vld [vmem:[%s2011 + $0x8] sm:$0xf]
      %v2015 = vld [vmem:[%s2011 + $0xc] sm:$0xf]
      %v2016 = vld [vmem:[%s2011 + $0x10] sm:$0xf]
      %v2017 = vld [vmem:[%s2011 + $0x14] sm:$0xf]
      %v2018 = vld [vmem:[%s2011 + $0x18] sm:$0xf]
      %v2019 = vld [vmem:[%s2011 + $0x1c] sm:$0xf]
      %v2020 = vld [vmem:[%s2011 + $0x20] sm:$0xf]
      %v2021 = vld [vmem:[%s2011 + $0x24] sm:$0xf]
      %v2022 = vld [vmem:[%s2011 + $0x28] sm:$0xf]
      %v2023 = vld [vmem:[%s2011 + $0x2c] sm:$0xf]
      %v2024 = vld [vmem:[%s2011 + $0x30] sm:$0xf]
      %v2025 = vld [vmem:[%s2011 + $0x34] sm:$0xf]
      %v2026 = vld [vmem:[%s2011 + $0x38] sm:$0xf]
      %v2027 = vld [vmem:[%s2011 + $0x3c] sm:$0xf]
      %v2028 = vld [vmem:[%s2011 + $0x40] sm:$0xf]
      %v2029 = vld [vmem:[%s2011 + $0x44] sm:$0xf]
      %v2030 = vld [vmem:[%s2011 + $0x48] sm:$0xf]
      %v2031 = vld [vmem:[%s2011 + $0x4c] sm:$0xf]
      %v2032 = vld [vmem:[%s2011 + $0x50] sm:$0xf]
      %v2033 = vld [vmem:[%s2011 + $0x54] sm:$0xf]
      %v2034 = vld [vmem:[%s2011 + $0x58] sm:$0xf]
      %v2035 = vld [vmem:[%s2011 + $0x5c] sm:$0xf]
      %v2036 = vld [vmem:[%s2011 + $0x60] sm:$0xf]
      %v2037 = vld [vmem:[%s2011 + $0x64] sm:$0xf]
      %v2038 = vld [vmem:[%s2011 + $0x68] sm:$0xf]
      %v2039 = vld [vmem:[%s2011 + $0x6c] sm:$0xf]
      %v2040 = vld [vmem:[%s2011 + $0x70] sm:$0xf]
      %v2041 = vld [vmem:[%s2011 + $0x74] sm:$0xf]
      %v2042 = vld [vmem:[%s2011 + $0x78] sm:$0xf]
      %v2043 = vld [vmem:[%s2011 + $0x7c] sm:$0xf]
      %v2044 = vld [vmem:[%s2011 + $0x80] sm:$0xf]
      %v2045 = vld [vmem:[%s2011 + $0x84] sm:$0xf]
      %v2046 = vld [vmem:[%s2011 + $0x88] sm:$0xf]
      %v2047 = vld [vmem:[%s2011 + $0x8c] sm:$0xf]
      %v2084 = vunpack.c.l.b16 %v2012
      %v2085 = vunpack.c.l.b16 %v2013
      %v2086 = vunpack.c.l.b16 %v2014
      %v2087 = vunpack.c.l.b16 %v2015
      %v2088 = vunpack.c.l.b16 %v2016
      %v2089 = vunpack.c.l.b16 %v2017
      %v2090 = vunpack.c.l.b16 %v2018
      %v2091 = vunpack.c.l.b16 %v2019
      %v2092 = vunpack.c.l.b16 %v2020
      %v2093 = vunpack.c.l.b16 %v2021
      %v2094 = vunpack.c.l.b16 %v2022
      %v2095 = vunpack.c.l.b16 %v2023
      %v2096 = vunpack.c.l.b16 %v2024
      %v2097 = vunpack.c.l.b16 %v2025
      %v2098 = vunpack.c.l.b16 %v2026
      %v2099 = vunpack.c.l.b16 %v2027
      %v2100 = vunpack.c.l.b16 %v2028
      %v2101 = vunpack.c.l.b16 %v2029
      %v2102 = vunpack.c.l.b16 %v2030
      %v2103 = vunpack.c.l.b16 %v2031
      %v2104 = vunpack.c.l.b16 %v2032
      %v2105 = vunpack.c.l.b16 %v2033
      %v2106 = vunpack.c.l.b16 %v2034
      %v2107 = vunpack.c.l.b16 %v2035
      %v2108 = vunpack.c.l.b16 %v2036
      %v2109 = vunpack.c.l.b16 %v2037
      %v2110 = vunpack.c.l.b16 %v2038
      %v2111 = vunpack.c.l.b16 %v2039
      %v2112 = vunpack.c.l.b16 %v2040
      %v2113 = vunpack.c.l.b16 %v2041
      %v2114 = vunpack.c.l.b16 %v2042
      %v2115 = vunpack.c.l.b16 %v2043
      %v2116 = vunpack.c.l.b16 %v2044
      %v2117 = vunpack.c.l.b16 %v2045
      %v2118 = vunpack.c.l.b16 %v2046
      %v2119 = vunpack.c.l.b16 %v2047
      %v2120 = vpack.c.b16 %v2085, %v2084
      %v2121 = vpack.c.b16 %v2087, %v2086
      %v2122 = vpack.c.b16 %v2089, %v2088
      %v2123 = vpack.c.b16 %v2091, %v2090
      %v2124 = vpack.c.b16 %v2093, %v2092
      %v2125 = vpack.c.b16 %v2095, %v2094
      %v2126 = vpack.c.b16 %v2097, %v2096
      %v2127 = vpack.c.b16 %v2099, %v2098
      %v2128 = vpack.c.b16 %v2101, %v2100
      %v2129 = vpack.c.b16 %v2103, %v2102
      %v2130 = vpack.c.b16 %v2105, %v2104
      %v2131 = vpack.c.b16 %v2107, %v2106
      %v2132 = vpack.c.b16 %v2109, %v2108
      %v2133 = vpack.c.b16 %v2111, %v2110
      %v2134 = vpack.c.b16 %v2113, %v2112
      %v2135 = vpack.c.b16 %v2115, %v2114
      %v2136 = vpack.c.b16 %v2117, %v2116
      %v2137 = vpack.c.b16 %v2119, %v2118
      %v2156 = vsel %vm701, %v1932, 0
      %v2158 = vsel %vm701, %v1934, 0
      %v2160 = vsel %vm701, %v1936, 0
      %v2162 = vsel %vm701, %v1938, 0
      %v2164 = vsel %vm701, %v1940, 0
      %v2166 = vsel %vm701, %v1942, 0
      %v2168 = vsel %vm701, %v1944, 0
      %v2170 = vsel %vm701, %v1946, 0
      %2172 = vmatprep.subr.bf16.mxu0 0
      %2173 = vmatpush1.bf16.msra.mxu0 %v2127
      %2174 = vmatprep.subr.bf16.mxu0 0
      %2175 = vmatpush1.bf16.msra.mxu0 %v2126
      %2176 = vmatprep.subr.bf16.mxu0 0
      %2177 = vmatpush1.bf16.msra.mxu0 %v2125
      %2178 = vmatprep.subr.bf16.mxu0 0
      %2179 = vmatpush1.bf16.msra.mxu0 %v2124
      %2180 = vmatprep.subr.bf16.mxu0 0
      %2181 = vmatpush1.bf16.msra.mxu0 %v2123
      %2182 = vmatprep.subr.bf16.mxu0 0
      %2183 = vmatpush1.bf16.msra.mxu0 %v2122
      %2184 = vmatprep.subr.bf16.mxu0 0
      %2185 = vmatpush1.bf16.msra.mxu0 %v2121
      %2186 = vmatprep.subr.bf16.mxu0 0
      %2187 = vmatpush1.bf16.msra.mxu0 %v2120
      %2188 = vmatprep.subr.bf16.mxu0 0
      %2189 = vmatpush2.bf16.msra.mxu0 %v2135
      %2190 = vmatprep.subr.bf16.mxu0 0
      %2191 = vmatpush2.bf16.msra.mxu0 %v2134
      %2192 = vmatprep.subr.bf16.mxu0 0
      %2193 = vmatpush2.bf16.msra.mxu0 %v2133
      %2194 = vmatprep.subr.bf16.mxu0 0
      %2195 = vmatpush2.bf16.msra.mxu0 %v2132
      %2196 = vmatprep.subr.bf16.mxu0 0
      %2197 = vmatpush2.bf16.msra.mxu0 %v2131
      %2198 = vmatprep.subr.bf16.mxu0 0
      %2199 = vmatpush2.bf16.msra.mxu0 %v2130
      %2200 = vmatprep.subr.bf16.mxu0 0
      %2201 = vmatpush2.bf16.msra.mxu0 %v2129
      %2202 = vmatprep.subr.bf16.mxu0 0
      %2203 = vmatpush2.bf16.msra.mxu0 %v2128
      %2204 = vmatprep.mubr.bf16.mxu0 %v1972
      %2205 = vmatmul.mubr.bf16.gmra.mxu0 %v1948
      %v2206 = vpop.f32.mrf.mxu0
      %v2207 = vadd.f32 0.0, %v2206
      %v2208 = vpop.f32.mrf.mxu0
      %v2209 = vpop.f32.mrf.mxu0
      %v2210 = vadd.f32 0.0, %v2209
      %v2211 = vpop.f32.mrf.mxu0
      %2212 = vmatprep.mubr.bf16.mxu0 %v1975
      %2213 = vmatmul.mubr.bf16.gmra.mxu0 %v1951
      %v2214 = vpop.f32.mrf.mxu0
      %v2215 = vadd.f32 0.0, %v2214
      %v2216 = vpop.f32.mrf.mxu0
      %v2217 = vpop.f32.mrf.mxu0
      %v2218 = vadd.f32 0.0, %v2217
      %v2219 = vpop.f32.mrf.mxu0
      %2220 = vmatprep.mubr.bf16.mxu0 %v1978
      %2221 = vmatmul.mubr.bf16.gmra.mxu0 %v1954
      %v2222 = vpop.f32.mrf.mxu0
      %v2223 = vadd.f32 0.0, %v2222
      %v2224 = vpop.f32.mrf.mxu0
      %v2225 = vpop.f32.mrf.mxu0
      %v2226 = vadd.f32 0.0, %v2225
      %v2227 = vpop.f32.mrf.mxu0
      %2228 = vmatprep.mubr.bf16.mxu0 %v1981
      %2229 = vmatmul.mubr.bf16.gmra.mxu0 %v1957
      %v2230 = vpop.f32.mrf.mxu0
      %v2231 = vadd.f32 0.0, %v2230
      %v2232 = vpop.f32.mrf.mxu0
      %v2233 = vpop.f32.mrf.mxu0
      %v2234 = vadd.f32 0.0, %v2233
      %v2235 = vpop.f32.mrf.mxu0
      %2236 = vmatprep.mubr.bf16.mxu0 %v1984
      %2237 = vmatmul.mubr.bf16.gmra.mxu0 %v1960
      %v2238 = vpop.f32.mrf.mxu0
      %v2239 = vadd.f32 0.0, %v2238
      %v2240 = vpop.f32.mrf.mxu0
      %v2241 = vpop.f32.mrf.mxu0
      %v2242 = vadd.f32 0.0, %v2241
      %v2243 = vpop.f32.mrf.mxu0
      %2244 = vmatprep.mubr.bf16.mxu0 %v1987
      %2245 = vmatmul.mubr.bf16.gmra.mxu0 %v1963
      %v2246 = vpop.f32.mrf.mxu0
      %v2247 = vadd.f32 0.0, %v2246
      %v2248 = vpop.f32.mrf.mxu0
      %v2249 = vpop.f32.mrf.mxu0
      %v2250 = vadd.f32 0.0, %v2249
      %v2251 = vpop.f32.mrf.mxu0
      %2252 = vmatprep.mubr.bf16.mxu0 %v1990
      %2253 = vmatmul.mubr.bf16.gmra.mxu0 %v1966
      %v2254 = vpop.f32.mrf.mxu0
      %v2255 = vadd.f32 0.0, %v2254
      %v2256 = vpop.f32.mrf.mxu0
      %v2257 = vpop.f32.mrf.mxu0
      %v2258 = vadd.f32 0.0, %v2257
      %v2259 = vpop.f32.mrf.mxu0
      %2260 = vmatprep.mubr.bf16.mxu0 %v1993
      %2261 = vmatmul.mubr.bf16.gmra.mxu0 %v1969
      %v2262 = vpop.f32.mrf.mxu0
      %v2263 = vadd.f32 0.0, %v2262
      %v2264 = vpop.f32.mrf.mxu0
      %v2265 = vpop.f32.mrf.mxu0
      %v2266 = vadd.f32 0.0, %v2265
      %v2267 = vpop.f32.mrf.mxu0
      %2268 = vdwg.mxu0
      %2269 = vmatprep.subr.bf16.mxu0 0
      %2270 = vmatpush1.bf16.msra.mxu0 0
      %2271 = vmatprep.subr.bf16.mxu0 0
      %2272 = vmatpush1.bf16.msra.mxu0 0
      %2273 = vmatprep.subr.bf16.mxu0 0
      %2274 = vmatpush1.bf16.msra.mxu0 0
      %2275 = vmatprep.subr.bf16.mxu0 0
      %2276 = vmatpush1.bf16.msra.mxu0 0
      %2277 = vmatprep.subr.bf16.mxu0 0
      %2278 = vmatpush1.bf16.msra.mxu0 0
      %2279 = vmatprep.subr.bf16.mxu0 0
      %2280 = vmatpush1.bf16.msra.mxu0 0
      %2281 = vmatprep.subr.bf16.mxu0 0
      %2282 = vmatpush1.bf16.msra.mxu0 %v2137
      %2283 = vmatprep.subr.bf16.mxu0 0
      %2284 = vmatpush1.bf16.msra.mxu0 %v2136
      %2285 = vmatprep.subr.bf16.mxu0 0
      %2286 = vmatpush2.bf16.msra.mxu0 0
      %2287 = vmatprep.subr.bf16.mxu0 0
      %2288 = vmatpush2.bf16.msra.mxu0 0
      %2289 = vmatprep.subr.bf16.mxu0 0
      %2290 = vmatpush2.bf16.msra.mxu0 0
      %2291 = vmatprep.subr.bf16.mxu0 0
      %2292 = vmatpush2.bf16.msra.mxu0 0
      %2293 = vmatprep.subr.bf16.mxu0 0
      %2294 = vmatpush2.bf16.msra.mxu0 0
      %2295 = vmatprep.subr.bf16.mxu0 0
      %2296 = vmatpush2.bf16.msra.mxu0 0
      %2297 = vmatprep.subr.bf16.mxu0 0
      %2298 = vmatpush2.bf16.msra.mxu0 0
      %2299 = vmatprep.subr.bf16.mxu0 0
      %2300 = vmatpush2.bf16.msra.mxu0 0
      %2301 = vmatprep.mubr.bf16.mxu0 0
      %2302 = vmatmul.mubr.bf16.gmra.mxu0 %v2156
      %v2303 = vpop.f32.mrf.mxu0
      %v2304 = vadd.f32 %v2207, %v2303
      %v2305 = vpop.f32.mrf.mxu0
      %v2306 = vpop.f32.mrf.mxu0
      %v2307 = vadd.f32 %v2210, %v2306
      %v2308 = vpop.f32.mrf.mxu0
      %2309 = vmatprep.mubr.bf16.mxu0 0
      %2310 = vmatmul.mubr.bf16.gmra.mxu0 %v2158
      %v2311 = vpop.f32.mrf.mxu0
      %v2312 = vadd.f32 %v2215, %v2311
      %v2313 = vpop.f32.mrf.mxu0
      %v2314 = vpop.f32.mrf.mxu0
      %v2315 = vadd.f32 %v2218, %v2314
      %v2316 = vpop.f32.mrf.mxu0
      %2317 = vmatprep.mubr.bf16.mxu0 0
      %2318 = vmatmul.mubr.bf16.gmra.mxu0 %v2160
      %v2319 = vpop.f32.mrf.mxu0
      %v2320 = vadd.f32 %v2223, %v2319
      %v2321 = vpop.f32.mrf.mxu0
      %v2322 = vpop.f32.mrf.mxu0
      %v2323 = vadd.f32 %v2226, %v2322
      %v2324 = vpop.f32.mrf.mxu0
      %2325 = vmatprep.mubr.bf16.mxu0 0
      %2326 = vmatmul.mubr.bf16.gmra.mxu0 %v2162
      %v2327 = vpop.f32.mrf.mxu0
      %v2328 = vadd.f32 %v2231, %v2327
      %v2329 = vpop.f32.mrf.mxu0
      %v2330 = vpop.f32.mrf.mxu0
      %v2331 = vadd.f32 %v2234, %v2330
      %v2332 = vpop.f32.mrf.mxu0
      %2333 = vmatprep.mubr.bf16.mxu0 0
      %2334 = vmatmul.mubr.bf16.gmra.mxu0 %v2164
      %v2335 = vpop.f32.mrf.mxu0
      %v2336 = vadd.f32 %v2239, %v2335
      %v2337 = vpop.f32.mrf.mxu0
      %v2338 = vpop.f32.mrf.mxu0
      %v2339 = vadd.f32 %v2242, %v2338
      %v2340 = vpop.f32.mrf.mxu0
      %2341 = vmatprep.mubr.bf16.mxu0 0
      %2342 = vmatmul.mubr.bf16.gmra.mxu0 %v2166
      %v2343 = vpop.f32.mrf.mxu0
      %v2344 = vadd.f32 %v2247, %v2343
      %v2345 = vpop.f32.mrf.mxu0
      %v2346 = vpop.f32.mrf.mxu0
      %v2347 = vadd.f32 %v2250, %v2346
      %v2348 = vpop.f32.mrf.mxu0
      %2349 = vmatprep.mubr.bf16.mxu0 0
      %2350 = vmatmul.mubr.bf16.gmra.mxu0 %v2168
      %v2351 = vpop.f32.mrf.mxu0
      %v2352 = vadd.f32 %v2255, %v2351
      %v2353 = vpop.f32.mrf.mxu0
      %v2354 = vpop.f32.mrf.mxu0
      %v2355 = vadd.f32 %v2258, %v2354
      %v2356 = vpop.f32.mrf.mxu0
      %2357 = vmatprep.mubr.bf16.mxu0 0
      %2358 = vmatmul.mubr.bf16.gmra.mxu0 %v2170
      %v2359 = vpop.f32.mrf.mxu0
      %v2360 = vadd.f32 %v2263, %v2359
      %v2361 = vpop.f32.mrf.mxu0
      %v2362 = vpop.f32.mrf.mxu0
      %v2363 = vadd.f32 %v2266, %v2362
      %v2364 = vpop.f32.mrf.mxu0
      %2365 = vdwg.mxu0
      %v2366 = vadd.f32 %v1995, %v2304
      %v2367 = vadd.f32 %v1996, %v2307
      %v2368 = vadd.f32 %v1997, %v2312
      %v2369 = vadd.f32 %v1998, %v2315
      %v2370 = vadd.f32 %v1999, %v2320
      %v2371 = vadd.f32 %v2000, %v2323
      %v2372 = vadd.f32 %v2001, %v2328
      %v2373 = vadd.f32 %v2002, %v2331
      %v2374 = vadd.f32 %v2003, %v2336
      %v2375 = vadd.f32 %v2004, %v2339
      %v2376 = vadd.f32 %v2005, %v2344
      %v2377 = vadd.f32 %v2006, %v2347
      %v2378 = vadd.f32 %v2007, %v2352
      %v2379 = vadd.f32 %v2008, %v2355
      %v2380 = vadd.f32 %v2009, %v2360
      %v2381 = vadd.f32 %v2010, %v2363
      %2382 = vst [vmem:[#allocation2] sm:$0xff] %v2366
      %2383 = vst [vmem:[#allocation2 + $0x8] sm:$0xff] %v2367
      %2384 = vst [vmem:[#allocation2 + $0x10] sm:$0xff] %v2368
      %2385 = vst [vmem:[#allocation2 + $0x18] sm:$0xff] %v2369
      %2386 = vst [vmem:[#allocation2 + $0x20] sm:$0xff] %v2370
      %2387 = vst [vmem:[#allocation2 + $0x28] sm:$0xff] %v2371
      %2388 = vst [vmem:[#allocation2 + $0x30] sm:$0xff] %v2372
      %2389 = vst [vmem:[#allocation2 + $0x38] sm:$0xff] %v2373
      %2390 = vst [vmem:[#allocation2 + $0x40] sm:$0xff] %v2374
      %2391 = vst [vmem:[#allocation2 + $0x48] sm:$0xff] %v2375
      %2392 = vst [vmem:[#allocation2 + $0x50] sm:$0xff] %v2376
      %2393 = vst [vmem:[#allocation2 + $0x58] sm:$0xff] %v2377
      %2394 = vst [vmem:[#allocation2 + $0x60] sm:$0xff] %v2378
      %2395 = vst [vmem:[#allocation2 + $0x68] sm:$0xff] %v2379
      %2396 = vst [vmem:[#allocation2 + $0x70] sm:$0xff] %v2380
      %2397 = vst [vmem:[#allocation2 + $0x78] sm:$0xff] %v2381
      %v2398 = vld [vmem:[#allocation2] sm:$0xff]
      %v2399 = vld [vmem:[#allocation2 + $0x8] sm:$0xff]
      %v2400 = vld [vmem:[#allocation2 + $0x10] sm:$0xff]
      %v2401 = vld [vmem:[#allocation2 + $0x18] sm:$0xff]
      %v2402 = vld [vmem:[#allocation2 + $0x20] sm:$0xff]
      %v2403 = vld [vmem:[#allocation2 + $0x28] sm:$0xff]
      %v2404 = vld [vmem:[#allocation2 + $0x30] sm:$0xff]
      %v2405 = vld [vmem:[#allocation2 + $0x38] sm:$0xff]
      %v2406 = vld [vmem:[#allocation2 + $0x40] sm:$0xff]
      %v2407 = vld [vmem:[#allocation2 + $0x48] sm:$0xff]
      %v2408 = vld [vmem:[#allocation2 + $0x50] sm:$0xff]
      %v2409 = vld [vmem:[#allocation2 + $0x58] sm:$0xff]
      %v2410 = vld [vmem:[#allocation2 + $0x60] sm:$0xff]
      %v2411 = vld [vmem:[#allocation2 + $0x68] sm:$0xff]
      %v2412 = vld [vmem:[#allocation2 + $0x70] sm:$0xff]
      %v2413 = vld [vmem:[#allocation2 + $0x78] sm:$0xff]
      %v2414 = vld [vmem:[%s2] sm:$0x1]
      %v2416 = vlaneseq
      %v2417 = vshrl.u32 %v2416, 7
      %v2418 = vsub.s32 0, %v2417
      %v2419 = vrot.slane %v2414, %v2418
      %v2421 = vadd.f32 %v2398, %v2419
      %v2422 = vadd.f32 %v2399, %v2419
      %v2423 = vadd.f32 %v2400, %v2419
      %v2424 = vadd.f32 %v2401, %v2419
      %v2425 = vadd.f32 %v2402, %v2419
      %v2426 = vadd.f32 %v2403, %v2419
      %v2427 = vadd.f32 %v2404, %v2419
      %v2428 = vadd.f32 %v2405, %v2419
      %v2429 = vadd.f32 %v2406, %v2419
      %v2430 = vadd.f32 %v2407, %v2419
      %v2431 = vadd.f32 %v2408, %v2419
      %v2432 = vadd.f32 %v2409, %v2419
      %v2433 = vadd.f32 %v2410, %v2419
      %v2434 = vadd.f32 %v2411, %v2419
      %v2435 = vadd.f32 %v2412, %v2419
      %v2436 = vadd.f32 %v2413, %v2419
      %v2437 = vmax.f32 %v2421, 0.0
      %v2438 = vmax.f32 %v2422, 0.0
      %v2439 = vmax.f32 %v2423, 0.0
      %v2440 = vmax.f32 %v2424, 0.0
      %v2441 = vmax.f32 %v2425, 0.0
      %v2442 = vmax.f32 %v2426, 0.0
      %v2443 = vmax.f32 %v2427, 0.0
      %v2444 = vmax.f32 %v2428, 0.0
      %v2445 = vmax.f32 %v2429, 0.0
      %v2446 = vmax.f32 %v2430, 0.0
      %v2447 = vmax.f32 %v2431, 0.0
      %v2448 = vmax.f32 %v2432, 0.0
      %v2449 = vmax.f32 %v2433, 0.0
      %v2450 = vmax.f32 %v2434, 0.0
      %v2451 = vmax.f32 %v2435, 0.0
      %v2452 = vmax.f32 %v2436, 0.0
      %v2453 = vpack.c.bf16 %v2438, %v2437
      %v2454 = vpack.c.bf16 %v2440, %v2439
      %v2455 = vpack.c.bf16 %v2442, %v2441
      %v2456 = vpack.c.bf16 %v2444, %v2443
      %v2457 = vpack.c.bf16 %v2446, %v2445
      %v2458 = vpack.c.bf16 %v2448, %v2447
      %v2459 = vpack.c.bf16 %v2450, %v2449
      %v2460 = vpack.c.bf16 %v2452, %v2451
      %v2469 = vunpack.c.l.b16 %v2453
      %v2470 = vunpack.c.h.b16 %v2453
      %v2471 = vunpack.c.l.b16 %v2454
      %v2472 = vunpack.c.h.b16 %v2454
      %v2473 = vunpack.c.l.b16 %v2455
      %v2474 = vunpack.c.h.b16 %v2455
      %v2475 = vunpack.c.l.b16 %v2456
      %v2476 = vunpack.c.h.b16 %v2456
      %v2477 = vunpack.c.l.b16 %v2457
      %v2478 = vunpack.c.h.b16 %v2457
      %v2479 = vunpack.c.l.b16 %v2458
      %v2480 = vunpack.c.h.b16 %v2458
      %v2481 = vunpack.c.l.b16 %v2459
      %v2482 = vunpack.c.h.b16 %v2459
      %v2483 = vunpack.c.l.b16 %v2460
      %v2484 = vunpack.c.h.b16 %v2460
      %v2485 = vpack.c.b16 %v2469, %v2469
      %v2486 = vpack.c.b16 %v2470, %v2470
      %v2487 = vpack.c.b16 %v2471, %v2471
      %v2488 = vpack.c.b16 %v2472, %v2472
      %v2489 = vpack.c.b16 %v2473, %v2473
      %v2490 = vpack.c.b16 %v2474, %v2474
      %v2491 = vpack.c.b16 %v2475, %v2475
      %v2492 = vpack.c.b16 %v2476, %v2476
      %v2493 = vpack.c.b16 %v2477, %v2477
      %v2494 = vpack.c.b16 %v2478, %v2478
      %v2495 = vpack.c.b16 %v2479, %v2479
      %v2496 = vpack.c.b16 %v2480, %v2480
      %v2497 = vpack.c.b16 %v2481, %v2481
      %v2498 = vpack.c.b16 %v2482, %v2482
      %v2499 = vpack.c.b16 %v2483, %v2483
      %v2500 = vpack.c.b16 %v2484, %v2484
      %2517 = vst [vmem:[%s194] sm:$0xf] %v2485
      %2518 = vst [vmem:[%s194 + $0x4] sm:$0xf] %v2486
      %2519 = vst [vmem:[%s194 + $0x8] sm:$0xf] %v2487
      %2520 = vst [vmem:[%s194 + $0xc] sm:$0xf] %v2488
      %2521 = vst [vmem:[%s194 + $0x10] sm:$0xf] %v2489
      %2522 = vst [vmem:[%s194 + $0x14] sm:$0xf] %v2490
      %2523 = vst [vmem:[%s194 + $0x18] sm:$0xf] %v2491
      %2524 = vst [vmem:[%s194 + $0x1c] sm:$0xf] %v2492
      %2525 = vst [vmem:[%s194 + $0x20] sm:$0xf] %v2493
      %2526 = vst [vmem:[%s194 + $0x24] sm:$0xf] %v2494
      %2527 = vst [vmem:[%s194 + $0x28] sm:$0xf] %v2495
      %2528 = vst [vmem:[%s194 + $0x2c] sm:$0xf] %v2496
      %2529 = vst [vmem:[%s194 + $0x30] sm:$0xf] %v2497
      %2530 = vst [vmem:[%s194 + $0x34] sm:$0xf] %v2498
      %2531 = vst [vmem:[%s194 + $0x38] sm:$0xf] %v2499
      %2532 = vst [vmem:[%s194 + $0x3c] sm:$0xf] %v2500
      %s2533 = smul.u32 8, %s19
      %p2534 = scmp.lt.s32.totalorder %s18, 1
      %s2535 = scalar_select %p2534, %s18, 1
      %p2536 = scmp.lt.s32.totalorder %s2533, 15
      %s2537 = scalar_select %p2536, %s2533, 15
      %s2538 = smul.addr %s2537, 2
      %s2539 = smul.addr %s2535, 32
      %s2540 = sadd.s32 %s2538, %s2539
      %s2541 = smul.addr %s2540, 4
      %s2542 = scalar_lea.vmem %s3, %s2541
      // Predicated region
      $region33: #{inception_a_forward.7} parent=31 // pred_check
        %p2543 = pneg %p114
      $region34: #{inception_a_forward.7} parent=31 // pred_check_branch
        %2545 = sbr.rel (%p2543) target = $region36
      $region35: #{inception_a_forward.7} parent=31 // pred_region
        %s2546 = smul.u32 8, %s19
      $region36: #{inception_a_forward.7} parent=31 // pred_fallthru
        _
    $region32: #{inception_a_forward.7} parent=5 // pred_fallthru
      _
    %p2547 = scmp.le.s32.totalorder 2, %s9
    // Predicated region
    $region37: #{inception_a_forward.7} parent=5 // pred_check
      %p2548 = pneg %p2547
    $region38: #{inception_a_forward.7} parent=5 // pred_check_branch
      %2550 = sbr.rel (%p2548) target = $region40
    $region39: #{inception_a_forward.7} parent=5 // pred_region
      %s2551 = ssub.s32 %s9, 2
      // Predicated region
      $region41: #{inception_a_forward.7} parent=39 // pred_check
        %p2552 = pneg %p120
      $region42: #{inception_a_forward.7} parent=39 // pred_check_branch
        %2554 = sbr.rel (%p2552) target = $region44
      $region43: #{inception_a_forward.7} parent=39 // pred_region
        %s2555 = smul.u32 8, %s21
        %p2556 = scmp.lt.s32.totalorder %s20, 1
        %s2557 = scalar_select %p2556, %s20, 1
        %p2558 = scmp.lt.s32.totalorder %s2555, 15
        %s2559 = scalar_select %p2558, %s2555, 15
        %s2560 = smul.addr %s2559, 2
        %s2561 = smul.addr %s2557, 32
        %s2562 = sadd.s32 %s2560, %s2561
        %s2563 = smul.addr %s2562, 4
        %s2564 = scalar_lea.vmem %s3, %s2563
      $region44: #{inception_a_forward.7} parent=39 // pred_fallthru
        _
    $region40: #{inception_a_forward.7} parent=5 // pred_fallthru
      _
  $region6: #{inception_a_forward.7} parent=0 // loop_footer
    %s13 = sadd.s32 1, %s9
  $region7: #{inception_a_forward.7} parent=0 // loop_footer_branch
    %8 = sbr.rel target = $region3
  $region8: #{inception_a_forward.7} parent=0 // loop_exit
    _

// kernel: inception_a_forward.5
$region0: #{inception_a_forward.5}
  #allocation0 [shape = 'u32[]', space=smem, size = 0x4, offset = 0x4, fixed_abs, tag = 'smem constant byte address 0x4 - core index']
  #allocation1 [shape = 'u32[144,128]{1,0:T(1,128)}', space=vmem, size = 0x12000, scoped, tag = 'internal scratch']
  #allocation2 [shape = 'f32[128,128]{1,0:T(8,128)}', space=vmem, size = 0x10000, scoped, tag = 'scratch operand']
  %s0 = inlined_call_operand.vmem [shape: bf16[2,20,20,48], index: 0, kind: input, shape index: {}]
  %s1 = inlined_call_operand.vmem [shape: bf16[5,240,128], index: 1, kind: input, shape index: {}]
  %s2 = inlined_call_operand.vmem [shape: f32[1,128], index: 2, kind: input, shape index: {}]
  %s3 = inlined_call_operand.vmem [shape: bf16[2,16,16,128], index: 3, kind: output, shape index: {}]
  %s4 = sld [smem:[#allocation0]]
  $region45: #{inception_a_forward.5} parent=0
    _
  %s6 = ssub.s32 1, %s4
  %s7 = scalar_select 0, %s6, %s4
  loop: start=0, step=1, limit=6
  $region2: #{inception_a_forward.5} parent=0 // loop_pre_header
    _
  $region3: #{inception_a_forward.5} parent=0 // loop_header
    %s9 = sphi 0, %s13
    %p10 = scmp.ge.s32.totalorder %s9, 6
    %s16 = sphi 0, %s28
    %s17 = sphi 0, %s24
    %s18 = sphi 0, %s16
    %s19 = sphi 0, %s17
    %s20 = sphi 0, %s18
    %s21 = sphi 0, %s19
    %s31 = sphi 0, %s33
    %s34 = sphi 0, %s31
    %s35 = sphi 0, %s34
    %s51 = sphi 0, %s35
    %s55 = sphi 0, %s55
    %s57 = sphi 0, %s55
    %s58 = sphi 0, %s57
    %s72 = sphi 0, %s58
    %s76 = sphi 0, %s76
    %s78 = sphi 0, %s76
    %s79 = sphi 0, %s78
    %s93 = sphi 0, %s79
    %s101 = sphi 0, %s103
    %s104 = sphi 0, %s101
    %s105 = sphi 0, %s104
    %s121 = sphi 0, %s105
  $region4: #{inception_a_forward.5} parent=0 // loop_header_branch
    %12 = sbr.rel (%p10) target = $region8
  $region5: #{inception_a_forward.5} parent=0 // loop_body
    %s14 = ssub.s32 %s9, 1
    %s15 = ssub.s32 %s9, 2
    %s22 = sadd.s32 1, %s17
    %p23 = scmp.ge.s32.totalorder %s22, 2
    %s24 = scalar_select %p23, 0, %s22
    %s25 = sadd.s32 1, %s16
    %s26 = scalar_select %p23, %s25, %s16
    %p27 = scmp.ge.s32.totalorder %s26, 2
    %s28 = scalar_select %p27, 0, %s26
    %s29 = ssub.s32 %s16, %s28
    %p30 = scmp.eq.s32.totalorder %s29, 0
    %s32 = sadd.s32 %s31, 1
    %s33 = scalar_select %p30, %s31, %s32
    %p36 = pneg %p30
    %p37 = scmp.eq.s32.totalorder %s9, 3
    %p38 = por %p36, %p37
    %p39 = scmp.ne.s32.totalorder %s31, %s34
    %p40 = scmp.eq.s32.totalorder %s9, 0
    %p41 = por %p39, %p40
    %p42 = scmp.ne.s32.totalorder %s31, %s34
    %p43 = scmp.eq.s32.totalorder %s14, 3
    %p44 = por %p42, %p43
    %p45 = scmp.ne.s32.totalorder %s34, %s35
    %p46 = scmp.eq.s32.totalorder %s14, 0
    %p47 = por %p45, %p46
    %p48 = scmp.ne.s32.totalorder %s34, %s35
    %p49 = scmp.eq.s32.totalorder %s15, 3
    %p50 = por %p48, %p49
    %p52 = scmp.ne.s32.totalorder %s35, %s51
    %p53 = scmp.eq.s32.totalorder %s15, 0
    %p54 = por %p52, %p53
    %s56 = sadd.s32 %s55, 1
    %p59 = scmp.eq.s32.totalorder %s9, 3
    %p60 = scmp.ne.s32.totalorder %s55, %s57
    %p61 = scmp.eq.s32.totalorder %s9, 0
    %p62 = por %p60, %p61
    %p63 = scmp.ne.s32.totalorder %s55, %s57
    %p64 = scmp.eq.s32.totalorder %s14, 3
    %p65 = por %p63, %p64
    %p66 = scmp.ne.s32.totalorder %s57, %s58
    %p67 = scmp.eq.s32.totalorder %s14, 0
    %p68 = por %p66, %p67
    %p69 = scmp.ne.s32.totalorder %s57, %s58
    %p70 = scmp.eq.s32.totalorder %s15, 3
    %p71 = por %p69, %p70
    %p73 = scmp.ne.s32.totalorder %s58, %s72
    %p74 = scmp.eq.s32.totalorder %s15, 0
    %p75 = por %p73, %p74
    %s77 = sadd.s32 %s76, 1
    %p80 = scmp.eq.s32.totalorder %s9, 3
    %p81 = scmp.ne.s32.totalorder %s76, %s78
    %p82 = scmp.eq.s32.totalorder %s9, 0
    %p83 = por %p81, %p82
    %p84 = scmp.ne.s32.totalorder %s76, %s78
    %p85 = scmp.eq.s32.totalorder %s14, 3
    %p86 = por %p84, %p85
    %p87 = scmp.ne.s32.totalorder %s78, %s79
    %p88 = scmp.eq.s32.totalorder %s14, 0
    %p89 = por %p87, %p88
    %p90 = scmp.ne.s32.totalorder %s78, %s79
    %p91 = scmp.eq.s32.totalorder %s15, 3
    %p92 = por %p90, %p91
    %p94 = scmp.ne.s32.totalorder %s79, %s93
    %p95 = scmp.eq.s32.totalorder %s15, 0
    %p96 = por %p94, %p95
    %s97 = ssub.s32 %s16, %s28
    %s98 = ssub.s32 %s17, %s24
    %s99 = sor.u32 %s97, %s98
    %p100 = scmp.eq.s32.totalorder %s99, 0
    %s102 = sadd.s32 %s101, 1
    %s103 = scalar_select %p100, %s101, %s102
    %p106 = pneg %p100
    %p107 = scmp.eq.s32.totalorder %s9, 3
    %p108 = por %p106, %p107
    %p109 = scmp.ne.s32.totalorder %s101, %s104
    %p110 = scmp.eq.s32.totalorder %s9, 0
    %p111 = por %p109, %p110
    %p112 = scmp.ne.s32.totalorder %s101, %s104
    %p113 = scmp.eq.s32.totalorder %s14, 3
    %p114 = por %p112, %p113
    %p115 = scmp.ne.s32.totalorder %s104, %s105
    %p116 = scmp.eq.s32.totalorder %s14, 0
    %p117 = por %p115, %p116
    %p118 = scmp.ne.s32.totalorder %s104, %s105
    %p119 = scmp.eq.s32.totalorder %s15, 3
    %p120 = por %p118, %p119
    %p122 = scmp.ne.s32.totalorder %s105, %s121
    %p123 = scmp.eq.s32.totalorder %s15, 0
    %p124 = por %p122, %p123
    %p125 = scmp.le.s32.totalorder 1, %s9
    %p126 = scmp.lt.s32.totalorder %s9, 5
    %p127 = pnand %p125, %p126
    %p128 = pneg %p127
    // Predicated region
    $region9: #{inception_a_forward.5} parent=5 // pred_check
      _
    $region10: #{inception_a_forward.5} parent=5 // pred_check_branch
      %130 = sbr.rel (%p127) target = $region12
    $region11: #{inception_a_forward.5} parent=5 // pred_region
      %s131 = ssub.s32 %s9, 1
      // Predicated region
      $region13: #{inception_a_forward.5} parent=11 // pred_check
        %p132 = pneg %p68
      $region14: #{inception_a_forward.5} parent=11 // pred_check_branch
        %134 = sbr.rel (%p132) target = $region16
      $region15: #{inception_a_forward.5} parent=11 // pred_region
        _
      $region16: #{inception_a_forward.5} parent=11 // pred_fallthru
        _
      // Predicated region
      $region17: #{inception_a_forward.5} parent=11 // pred_check
        %p135 = pneg %p89
      $region18: #{inception_a_forward.5} parent=11 // pred_check_branch
        %137 = sbr.rel (%p135) target = $region20
      $region19: #{inception_a_forward.5} parent=11 // pred_region
        _
      $region20: #{inception_a_forward.5} parent=11 // pred_fallthru
        _
    $region12: #{inception_a_forward.5} parent=5 // pred_fallthru
      _
    %p138 = scmp.lt.s32.totalorder %s9, 4
    // Predicated region
    $region21: #{inception_a_forward.5} parent=5 // pred_check
      %p139 = pneg %p138
    $region22: #{inception_a_forward.5} parent=5 // pred_check_branch
      %141 = sbr.rel (%p139) target = $region24
    $region23: #{inception_a_forward.5} parent=5 // pred_region
      // Predicated region
      $region25: #{inception_a_forward.5} parent=23 // pred_check
        %p142 = pneg %p41
      $region26: #{inception_a_forward.5} parent=23 // pred_check_branch
        %144 = sbr.rel (%p142) target = $region28
      $region27: #{inception_a_forward.5} parent=23 // pred_region
        %p145 = scmp.lt.s32.totalorder %s16, 1
        %s146 = scalar_select %p145, %s16, 1
        %s147 = smul.addr %s146, 60
        %s148 = smul.addr %s147, 4
        %s149 = scalar_lea.vmem %s0, %s148
      $region28: #{inception_a_forward.5} parent=23 // pred_fallthru
        _
    $region24: #{inception_a_forward.5} parent=5 // pred_fallthru
      _
    %p150 = scmp.le.s32.totalorder 1, %s9
    %p151 = scmp.lt.s32.totalorder %s9, 5
    %p152 = pnand %p150, %p151
    %p153 = pneg %p152
    // Predicated region
    $region29: #{inception_a_forward.5} parent=5 // pred_check
      _
    $region30: #{inception_a_forward.5} parent=5 // pred_check_branch
      %155 = sbr.rel (%p152) target = $region32
    $region31: #{inception_a_forward.5} parent=5 // pred_region
      %s156 = ssub.s32 %s9, 1
      %p157 = scmp.lt.s32.totalorder %s18, 1
      %s158 = scalar_select %p157, %s18, 1
      %s159 = smul.addr %s158, 60
      %s160 = smul.addr %s159, 4
      %s161 = scalar_lea.vmem %s0, %s160
      %p162 = pneg %p47
      %p163 = pneg %p44
      %p164 = pneg %p68
      %p165 = pneg %p65
      %p166 = pneg %p89
      %p167 = pneg %p86
      %p168 = pneg %p117
      %p169 = pneg %p114
      %s170 = smul.u32 8, %s19
      %p171 = scmp.lt.s32.totalorder %s18, 1
      %s172 = scalar_select %p171, %s18, 1
      %p173 = scmp.lt.s32.totalorder %s170, 15
      %s174 = scalar_select %p173, %s170, 15
      %s175 = smul.addr %s174, 2
      %s176 = smul.addr %s172, 32
      %s177 = sadd.s32 %s175, %s176
      %s178 = smul.addr %s177, 4
      %s179 = scalar_lea.vmem %s3, %s178
      %p180 = scmp.lt.s32.totalorder %s18, 1
      %s181 = scalar_select %p180, %s18, 1
      %s182 = smul.addr %s181, 60
      %s183 = smul.addr %s182, 4
      %s184 = scalar_lea.vmem %s0, %s183
      %s185 = smul.u32 8, %s19
      %p186 = scmp.lt.s32.totalorder %s18, 1
      %s187 = scalar_select %p186, %s18, 1
      %p188 = scmp.lt.s32.totalorder %s185, 15
      %s189 = scalar_select %p188, %s185, 15
      %s190 = smul.addr %s189, 2
      %s191 = smul.addr %s187, 32
      %s192 = sadd.s32 %s190, %s191
      %s193 = smul.addr %s192, 4
      %s194 = scalar_lea.vmem %s3, %s193
      %s195 = smul.u32 8, %s19
      %s197 = smul.u32 %s19, 8
      %198 = vst [vmem:[#allocation2] sm:$0xff] 0.0
      %199 = vst [vmem:[#allocation2 + $0x8] sm:$0xff] 0.0
      %200 = vst [vmem:[#allocation2 + $0x10] sm:$0xff] 0.0
      %201 = vst [vmem:[#allocation2 + $0x18] sm:$0xff] 0.0
      %202 = vst [vmem:[#allocation2 + $0x20] sm:$0xff] 0.0
      %203 = vst [vmem:[#allocation2 + $0x28] sm:$0xff] 0.0
      %204 = vst [vmem:[#allocation2 + $0x30] sm:$0xff] 0.0
      %205 = vst [vmem:[#allocation2 + $0x38] sm:$0xff] 0.0
      %206 = vst [vmem:[#allocation2 + $0x40] sm:$0xff] 0.0
      %207 = vst [vmem:[#allocation2 + $0x48] sm:$0xff] 0.0
      %208 = vst [vmem:[#allocation2 + $0x50] sm:$0xff] 0.0
      %209 = vst [vmem:[#allocation2 + $0x58] sm:$0xff] 0.0
      %210 = vst [vmem:[#allocation2 + $0x60] sm:$0xff] 0.0
      %211 = vst [vmem:[#allocation2 + $0x68] sm:$0xff] 0.0
      %212 = vst [vmem:[#allocation2 + $0x70] sm:$0xff] 0.0
      %213 = vst [vmem:[#allocation2 + $0x78] sm:$0xff] 0.0
      %s214 = smul.u32 %s197, 3
      %s215 = smul.addr %s214, 4
      %s216 = scalar_lea.vmem %s184, %s215
      %v217 = vld [vmem:[%s216] sm:$0xf]
      %v218 = vld [vmem:[%s216 + $0x4] sm:$0xf]
      %v219 = vld [vmem:[%s216 + $0xc] sm:$0xf]
      %v220 = vld [vmem:[%s216 + $0x10] sm:$0xf]
      %v221 = vld [vmem:[%s216 + $0x18] sm:$0xf]
      %v222 = vld [vmem:[%s216 + $0x1c] sm:$0xf]
      %v223 = vld [vmem:[%s216 + $0x24] sm:$0xf]
      %v224 = vld [vmem:[%s216 + $0x28] sm:$0xf]
      %v225 = vld [vmem:[%s216 + $0x30] sm:$0xf]
      %v226 = vld [vmem:[%s216 + $0x34] sm:$0xf]
      %v227 = vld [vmem:[%s216 + $0x3c] sm:$0xf]
      %v228 = vld [vmem:[%s216 + $0x40] sm:$0xf]
      %v229 = vld [vmem:[%s216 + $0x48] sm:$0xf]
      %v230 = vld [vmem:[%s216 + $0x4c] sm:$0xf]
      %v231 = vld [vmem:[%s216 + $0x54] sm:$0xf]
      %v232 = vld [vmem:[%s216 + $0x58] sm:$0xf]
      %v233 = vld [vmem:[%s216 + $0x8] sm:$0x1]
      %v234 = vld [vmem:[%s216 + $0x14] sm:$0x1]
      %v235 = vld [vmem:[%s216 + $0x20] sm:$0x1]
      %v236 = vld [vmem:[%s216 + $0x2c] sm:$0x1]
      %v237 = vld [vmem:[%s216 + $0x38] sm:$0x1]
      %v238 = vld [vmem:[%s216 + $0x44] sm:$0x1]
      %v239 = vld [vmem:[%s216 + $0x50] sm:$0x1]
      %v240 = vld [vmem:[%s216 + $0x5c] sm:$0x1]
      %v241 = vld [vmem:[%s216] sm:$0xe]
      %v242 = vld [vmem:[%s216 + $0xc] sm:$0xe]
      %v243 = vld [vmem:[%s216 + $0x18] sm:$0xe]
      %v244 = vld [vmem:[%s216 + $0x24] sm:$0xe]
      %v245 = vld [vmem:[%s216 + $0x30] sm:$0xe]
      %v246 = vld [vmem:[%s216 + $0x3c] sm:$0xe]
      %v247 = vld [vmem:[%s216 + $0x48] sm:$0xe]
      %v248 = vld [vmem:[%s216 + $0x54] sm:$0xe]
      %v249 = vld [vmem:[%s216 + $0x8] sm:$0x3]
      %v250 = vld [vmem:[%s216 + $0x14] sm:$0x3]
      %v251 = vld [vmem:[%s216 + $0x20] sm:$0x3]
      %v252 = vld [vmem:[%s216 + $0x2c] sm:$0x3]
      %v253 = vld [vmem:[%s216 + $0x38] sm:$0x3]
      %v254 = vld [vmem:[%s216 + $0x44] sm:$0x3]
      %v255 = vld [vmem:[%s216 + $0x50] sm:$0x3]
      %v256 = vld [vmem:[%s216 + $0x5c] sm:$0x3]
      %v257 = vld [vmem:[%s216] sm:$0xc]
      %v258 = vld [vmem:[%s216 + $0xc] sm:$0xc]
      %v259 = vld [vmem:[%s216 + $0x18] sm:$0xc]
      %v260 = vld [vmem:[%s216 + $0x24] sm:$0xc]
      %v261 = vld [vmem:[%s216 + $0x30] sm:$0xc]
      %v262 = vld [vmem:[%s216 + $0x3c] sm:$0xc]
      %v263 = vld [vmem:[%s216 + $0x48] sm:$0xc]
      %v264 = vld [vmem:[%s216 + $0x54] sm:$0xc]
      %v281 = vunpack.c.l.b16 %v217
      %v282 = vunpack.c.l.b16 %v218
      %v283 = vunpack.c.l.b16 %v219
      %v284 = vunpack.c.l.b16 %v220
      %v285 = vunpack.c.l.b16 %v221
      %v286 = vunpack.c.l.b16 %v222
      %v287 = vunpack.c.l.b16 %v223
      %v288 = vunpack.c.l.b16 %v224
      %v289 = vunpack.c.l.b16 %v225
      %v290 = vunpack.c.l.b16 %v226
      %v291 = vunpack.c.l.b16 %v227
      %v292 = vunpack.c.l.b16 %v228
      %v293 = vunpack.c.l.b16 %v229
      %v294 = vunpack.c.l.b16 %v230
      %v295 = vunpack.c.l.b16 %v231
      %v296 = vunpack.c.l.b16 %v232
      %v297 = vpack.c.b16 %v282, %v281
      %v298 = vpack.c.b16 %v284, %v283
      %v299 = vpack.c.b16 %v286, %v285
      %v300 = vpack.c.b16 %v288, %v287
      %v301 = vpack.c.b16 %v290, %v289
      %v302 = vpack.c.b16 %v292, %v291
      %v303 = vpack.c.b16 %v294, %v293
      %v304 = vpack.c.b16 %v296, %v295
      %v313 = vunpack.c.l.b16 %v233
      %v314 = vunpack.c.l.b16 %v234
      %v315 = vunpack.c.l.b16 %v235
      %v316 = vunpack.c.l.b16 %v236
      %v317 = vunpack.c.l.b16 %v237
      %v318 = vunpack.c.l.b16 %v238
      %v319 = vunpack.c.l.b16 %v239
      %v320 = vunpack.c.l.b16 %v240
      %v321 = vpack.c.b16 %v313, %v313
      %v322 = vpack.c.b16 %v314, %v314
      %v323 = vpack.c.b16 %v315, %v315
      %v324 = vpack.c.b16 %v316, %v316
      %v325 = vpack.c.b16 %v317, %v317
      %v326 = vpack.c.b16 %v318, %v318
      %v327 = vpack.c.b16 %v319, %v319
      %v328 = vpack.c.b16 %v320, %v320
      %vm329 = vsmask.f32 7424
      %v331 = vshrl.u32 %v297, 16
      %v333 = vshll.u32 %v297, 16
      %v335 = vrot.slane %v333, 1
      %v336 = vor.u32 %v331, %v335
      %v338 = vshll.u32 %v321, 16
      %v340 = vrot.slane %v338, 1
      %v341 = vsel %vm329, %v336, %v340
      %v343 = vshrl.u32 %v298, 16
      %v345 = vshll.u32 %v298, 16
      %v347 = vrot.slane %v345, 1
      %v348 = vor.u32 %v343, %v347
      %v350 = vshll.u32 %v322, 16
      %v352 = vrot.slane %v350, 1
      %v353 = vsel %vm329, %v348, %v352
      %v355 = vshrl.u32 %v299, 16
      %v357 = vshll.u32 %v299, 16
      %v359 = vrot.slane %v357, 1
      %v360 = vor.u32 %v355, %v359
      %v362 = vshll.u32 %v323, 16
      %v364 = vrot.slane %v362, 1
      %v365 = vsel %vm329, %v360, %v364
      %v367 = vshrl.u32 %v300, 16
      %v369 = vshll.u32 %v300, 16
      %v371 = vrot.slane %v369, 1
      %v372 = vor.u32 %v367, %v371
      %v374 = vshll.u32 %v324, 16
      %v376 = vrot.slane %v374, 1
      %v377 = vsel %vm329, %v372, %v376
      %v379 = vshrl.u32 %v301, 16
      %v381 = vshll.u32 %v301, 16
      %v383 = vrot.slane %v381, 1
      %v384 = vor.u32 %v379, %v383
      %v386 = vshll.u32 %v325, 16
      %v388 = vrot.slane %v386, 1
      %v389 = vsel %vm329, %v384, %v388
      %v391 = vshrl.u32 %v302, 16
      %v393 = vshll.u32 %v302, 16
      %v395 = vrot.slane %v393, 1
      %v396 = vor.u32 %v391, %v395
      %v398 = vshll.u32 %v326, 16
      %v400 = vrot.slane %v398, 1
      %v401 = vsel %vm329, %v396, %v400
      %v403 = vshrl.u32 %v303, 16
      %v405 = vshll.u32 %v303, 16
      %v407 = vrot.slane %v405, 1
      %v408 = vor.u32 %v403, %v407
      %v410 = vshll.u32 %v327, 16
      %v412 = vrot.slane %v410, 1
      %v413 = vsel %vm329, %v408, %v412
      %v415 = vshrl.u32 %v304, 16
      %v417 = vshll.u32 %v304, 16
      %v419 = vrot.slane %v417, 1
      %v420 = vor.u32 %v415, %v419
      %v422 = vshll.u32 %v328, 16
      %v424 = vrot.slane %v422, 1
      %v425 = vsel %vm329, %v420, %v424
      %426 = vrot.lane.b32.xlu0 %v341, 48
      %v427 = vpop.permute.xlu0 %426
      %428 = vrot.lane.b32.xlu0 %v353, 48
      %v429 = vpop.permute.xlu0 %428
      %430 = vrot.lane.b32.xlu0 %v365, 48
      %v431 = vpop.permute.xlu0 %430
      %432 = vrot.lane.b32.xlu0 %v377, 48
      %v433 = vpop.permute.xlu0 %432
      %434 = vrot.lane.b32.xlu0 %v389, 48
      %v435 = vpop.permute.xlu0 %434
      %436 = vrot.lane.b32.xlu0 %v401, 48
      %v437 = vpop.permute.xlu0 %436
      %438 = vrot.lane.b32.xlu0 %v413, 48
      %v439 = vpop.permute.xlu0 %438
      %440 = vrot.lane.b32.xlu0 %v425, 48
      %v441 = vpop.permute.xlu0 %440
      %v450 = vunpack.c.l.b16 %v241
      %v451 = vunpack.c.l.b16 %v242
      %v452 = vunpack.c.l.b16 %v243
      %v453 = vunpack.c.l.b16 %v244
      %v454 = vunpack.c.l.b16 %v245
      %v455 = vunpack.c.l.b16 %v246
      %v456 = vunpack.c.l.b16 %v247
      %v457 = vunpack.c.l.b16 %v248
      %v458 = vpack.c.b16 %v282, %v450
      %v459 = vpack.c.b16 %v284, %v451
      %v460 = vpack.c.b16 %v286, %v452
      %v461 = vpack.c.b16 %v288, %v453
      %v462 = vpack.c.b16 %v290, %v454
      %v463 = vpack.c.b16 %v292, %v455
      %v464 = vpack.c.b16 %v294, %v456
      %v465 = vpack.c.b16 %v296, %v457
      %vm466 = vcmask 1046528
      %v467 = vrot.slane %v458, 1
      %v468 = vrot.slane %v321, 1
      %v469 = vsel %vm466, %v467, %v468
      %v470 = vrot.slane %v459, 1
      %v471 = vrot.slane %v322, 1
      %v472 = vsel %vm466, %v470, %v471
      %v473 = vrot.slane %v460, 1
      %v474 = vrot.slane %v323, 1
      %v475 = vsel %vm466, %v473, %v474
      %v476 = vrot.slane %v461, 1
      %v477 = vrot.slane %v324, 1
      %v478 = vsel %vm466, %v476, %v477
      %v479 = vrot.slane %v462, 1
      %v480 = vrot.slane %v325, 1
      %v481 = vsel %vm466, %v479, %v480
      %v482 = vrot.slane %v463, 1
      %v483 = vrot.slane %v326, 1
      %v484 = vsel %vm466, %v482, %v483
      %v485 = vrot.slane %v464, 1
      %v486 = vrot.slane %v327, 1
      %v487 = vsel %vm466, %v485, %v486
      %v488 = vrot.slane %v465, 1
      %v489 = vrot.slane %v328, 1
      %v490 = vsel %vm466, %v488, %v489
      %491 = vrot.lane.b32.xlu0 %v469, 96
      %v492 = vpop.permute.xlu0 %491
      %493 = vrot.lane.b32.xlu0 %v472, 96
      %v494 = vpop.permute.xlu0 %493
      %495 = vrot.lane.b32.xlu0 %v475, 96
      %v496 = vpop.permute.xlu0 %495
      %497 = vrot.lane.b32.xlu0 %v478, 96
      %v498 = vpop.permute.xlu0 %497
      %499 = vrot.lane.b32.xlu0 %v481, 96
      %v500 = vpop.permute.xlu0 %499
      %501 = vrot.lane.b32.xlu0 %v484, 96
      %v502 = vpop.permute.xlu0 %501
      %503 = vrot.lane.b32.xlu0 %v487, 96
      %v504 = vpop.permute.xlu0 %503
      %505 = vrot.lane.b32.xlu0 %v490, 96
      %v506 = vpop.permute.xlu0 %505
      %v515 = vunpack.c.l.b16 %v249
      %v516 = vunpack.c.l.b16 %v250
      %v517 = vunpack.c.l.b16 %v251
      %v518 = vunpack.c.l.b16 %v252
      %v519 = vunpack.c.l.b16 %v253
      %v520 = vunpack.c.l.b16 %v254
      %v521 = vunpack.c.l.b16 %v255
      %v522 = vunpack.c.l.b16 %v256
      %v523 = vpack.c.b16 %v515, %v515
      %v524 = vpack.c.b16 %v516, %v516
      %v525 = vpack.c.b16 %v517, %v517
      %v526 = vpack.c.b16 %v518, %v518
      %v527 = vpack.c.b16 %v519, %v519
      %v528 = vpack.c.b16 %v520, %v520
      %v529 = vpack.c.b16 %v521, %v521
      %v530 = vpack.c.b16 %v522, %v522
      %vm531 = vsmask.f32 6400
      %v533 = vshrl.u32 %v458, 16
      %v535 = vrot.slane %v533, 1
      %v536 = vshll.u32 %v458, 16
      %v538 = vrot.slane %v536, 2
      %v539 = vor.u32 %v535, %v538
      %v541 = vshrl.u32 %v523, 16
      %v543 = vrot.slane %v541, 1
      %v544 = vshll.u32 %v523, 16
      %v546 = vrot.slane %v544, 2
      %v547 = vor.u32 %v543, %v546
      %v548 = vsel %vm531, %v539, %v547
      %v550 = vshrl.u32 %v459, 16
      %v552 = vrot.slane %v550, 1
      %v553 = vshll.u32 %v459, 16
      %v555 = vrot.slane %v553, 2
      %v556 = vor.u32 %v552, %v555
      %v558 = vshrl.u32 %v524, 16
      %v560 = vrot.slane %v558, 1
      %v561 = vshll.u32 %v524, 16
      %v563 = vrot.slane %v561, 2
      %v564 = vor.u32 %v560, %v563
      %v565 = vsel %vm531, %v556, %v564
      %v567 = vshrl.u32 %v460, 16
      %v569 = vrot.slane %v567, 1
      %v570 = vshll.u32 %v460, 16
      %v572 = vrot.slane %v570, 2
      %v573 = vor.u32 %v569, %v572
      %v575 = vshrl.u32 %v525, 16
      %v577 = vrot.slane %v575, 1
      %v578 = vshll.u32 %v525, 16
      %v580 = vrot.slane %v578, 2
      %v581 = vor.u32 %v577, %v580
      %v582 = vsel %vm531, %v573, %v581
      %v584 = vshrl.u32 %v461, 16
      %v586 = vrot.slane %v584, 1
      %v587 = vshll.u32 %v461, 16
      %v589 = vrot.slane %v587, 2
      %v590 = vor.u32 %v586, %v589
      %v592 = vshrl.u32 %v526, 16
      %v594 = vrot.slane %v592, 1
      %v595 = vshll.u32 %v526, 16
      %v597 = vrot.slane %v595, 2
      %v598 = vor.u32 %v594, %v597
      %v599 = vsel %vm531, %v590, %v598
      %v601 = vshrl.u32 %v462, 16
      %v603 = vrot.slane %v601, 1
      %v604 = vshll.u32 %v462, 16
      %v606 = vrot.slane %v604, 2
      %v607 = vor.u32 %v603, %v606
      %v609 = vshrl.u32 %v527, 16
      %v611 = vrot.slane %v609, 1
      %v612 = vshll.u32 %v527, 16
      %v614 = vrot.slane %v612, 2
      %v615 = vor.u32 %v611, %v614
      %v616 = vsel %vm531, %v607, %v615
      %v618 = vshrl.u32 %v463, 16
      %v620 = vrot.slane %v618, 1
      %v621 = vshll.u32 %v463, 16
      %v623 = vrot.slane %v621, 2
      %v624 = vor.u32 %v620, %v623
      %v626 = vshrl.u32 %v528, 16
      %v628 = vrot.slane %v626, 1
      %v629 = vshll.u32 %v528, 16
      %v631 = vrot.slane %v629, 2
      %v632 = vor.u32 %v628, %v631
      %v633 = vsel %vm531, %v624, %v632
      %v635 = vshrl.u32 %v464, 16
      %v637 = vrot.slane %v635, 1
      %v638 = vshll.u32 %v464, 16
      %v640 = vrot.slane %v638, 2
      %v641 = vor.u32 %v637, %v640
      %v643 = vshrl.u32 %v529, 16
      %v645 = vrot.slane %v643, 1
      %v646 = vshll.u32 %v529, 16
      %v648 = vrot.slane %v646, 2
      %v649 = vor.u32 %v645, %v648
      %v650 = vsel %vm531, %v641, %v649
      %v652 = vshrl.u32 %v465, 16
      %v654 = vrot.slane %v652, 1
      %v655 = vshll.u32 %v465, 16
      %v657 = vrot.slane %v655, 2
      %v658 = vor.u32 %v654, %v657
      %v660 = vshrl.u32 %v530, 16
      %v662 = vrot.slane %v660, 1
      %v663 = vshll.u32 %v530, 16
      %v665 = vrot.slane %v663, 2
      %v666 = vor.u32 %v662, %v665
      %v667 = vsel %vm531, %v658, %v666
      %668 = vrot.lane.b32.xlu0 %v548, 16
      %v669 = vpop.permute.xlu0 %668
      %670 = vrot.lane.b32.xlu0 %v565, 16
      %v671 = vpop.permute.xlu0 %670
      %672 = vrot.lane.b32.xlu0 %v582, 16
      %v673 = vpop.permute.xlu0 %672
      %674 = vrot.lane.b32.xlu0 %v599, 16
      %v675 = vpop.permute.xlu0 %674
      %676 = vrot.lane.b32.xlu0 %v616, 16
      %v677 = vpop.permute.xlu0 %676
      %678 = vrot.lane.b32.xlu0 %v633, 16
      %v679 = vpop.permute.xlu0 %678
      %680 = vrot.lane.b32.xlu0 %v650, 16
      %v681 = vpop.permute.xlu0 %680
      %682 = vrot.lane.b32.xlu0 %v667, 16
      %v683 = vpop.permute.xlu0 %682
      %v692 = vunpack.c.l.b16 %v257
      %v693 = vunpack.c.l.b16 %v258
      %v694 = vunpack.c.l.b16 %v259
      %v695 = vunpack.c.l.b16 %v260
      %v696 = vunpack.c.l.b16 %v261
      %v697 = vunpack.c.l.b16 %v262
      %v698 = vunpack.c.l.b16 %v263
      %v699 = vunpack.c.l.b16 %v264
      %v700 = vpack.c.b16 %v282, %v692
      %v701 = vpack.c.b16 %v284, %v693
      %v702 = vpack.c.b16 %v286, %v694
      %v703 = vpack.c.b16 %v288, %v695
      %v704 = vpack.c.b16 %v290, %v696
      %v705 = vpack.c.b16 %v292, %v697
      %v706 = vpack.c.b16 %v294, %v698
      %v707 = vpack.c.b16 %v296, %v699
      %vm708 = vcmask 1045504
      %v709 = vrot.slane %v700, 2
      %v710 = vrot.slane %v523, 2
      %v711 = vsel %vm708, %v709, %v710
      %v712 = vrot.slane %v701, 2
      %v713 = vrot.slane %v524, 2
      %v714 = vsel %vm708, %v712, %v713
      %v715 = vrot.slane %v702, 2
      %v716 = vrot.slane %v525, 2
      %v717 = vsel %vm708, %v715, %v716
      %v718 = vrot.slane %v703, 2
      %v719 = vrot.slane %v526, 2
      %v720 = vsel %vm708, %v718, %v719
      %v721 = vrot.slane %v704, 2
      %v722 = vrot.slane %v527, 2
      %v723 = vsel %vm708, %v721, %v722
      %v724 = vrot.slane %v705, 2
      %v725 = vrot.slane %v528, 2
      %v726 = vsel %vm708, %v724, %v725
      %v727 = vrot.slane %v706, 2
      %v728 = vrot.slane %v529, 2
      %v729 = vsel %vm708, %v727, %v728
      %v730 = vrot.slane %v707, 2
      %v731 = vrot.slane %v530, 2
      %v732 = vsel %vm708, %v730, %v731
      %733 = vrot.lane.b32.xlu0 %v711, 64
      %v734 = vpop.permute.xlu0 %733
      %735 = vrot.lane.b32.xlu0 %v714, 64
      %v736 = vpop.permute.xlu0 %735
      %737 = vrot.lane.b32.xlu0 %v717, 64
      %v738 = vpop.permute.xlu0 %737
      %739 = vrot.lane.b32.xlu0 %v720, 64
      %v740 = vpop.permute.xlu0 %739
      %741 = vrot.lane.b32.xlu0 %v723, 64
      %v742 = vpop.permute.xlu0 %741
      %743 = vrot.lane.b32.xlu0 %v726, 64
      %v744 = vpop.permute.xlu0 %743
      %745 = vrot.lane.b32.xlu0 %v729, 64
      %v746 = vpop.permute.xlu0 %745
      %747 = vrot.lane.b32.xlu0 %v732, 64
      %v748 = vpop.permute.xlu0 %747
      %vm749 = vcmask 392192
      %v751 = vsel %vm749, %v297, %v427
      %v753 = vsel %vm749, %v298, %v429
      %v755 = vsel %vm749, %v299, %v431
      %v757 = vsel %vm749, %v300, %v433
      %v759 = vsel %vm749, %v301, %v435
      %v761 = vsel %vm749, %v302, %v437
      %v763 = vsel %vm749, %v303, %v439
      %v765 = vsel %vm749, %v304, %v441
      %vm766 = vcmask 785408
      %v768 = vsel %vm766, %v751, %v492
      %v771 = vsel %vm766, %v753, %v494
      %v774 = vsel %vm766, %v755, %v496
      %v777 = vsel %vm766, %v757, %v498
      %v780 = vsel %vm766, %v759, %v500
      %v783 = vsel %vm766, %v761, %v502
      %v786 = vsel %vm766, %v763, %v504
      %v789 = vsel %vm766, %v765, %v506
      %vm791 = vcmask 130048
      %v793 = vsel %vm791, %v492, %v669
      %v795 = vsel %vm791, %v494, %v671
      %v797 = vsel %vm791, %v496, %v673
      %v799 = vsel %vm791, %v498, %v675
      %v801 = vsel %vm791, %v500, %v677
      %v803 = vsel %vm791, %v502, %v679
      %v805 = vsel %vm791, %v504, %v681
      %v807 = vsel %vm791, %v506, %v683
      %vm808 = vcmask 523264
      %v810 = vsel %vm808, %v793, %v734
      %v812 = vsel %vm808, %v795, %v736
      %v814 = vsel %vm808, %v797, %v738
      %v816 = vsel %vm808, %v799, %v740
      %v818 = vsel %vm808, %v801, %v742
      %v820 = vsel %vm808, %v803, %v744
      %v822 = vsel %vm808, %v805, %v746
      %v824 = vsel %vm808, %v807, %v748
      %v825 = vld [vmem:[#allocation2] sm:$0xff]
      %v826 = vld [vmem:[#allocation2 + $0x8] sm:$0xff]
      %v827 = vld [vmem:[#allocation2 + $0x10] sm:$0xff]
      %v828 = vld [vmem:[#allocation2 + $0x18] sm:$0xff]
      %v829 = vld [vmem:[#allocation2 + $0x20] sm:$0xff]
      %v830 = vld [vmem:[#allocation2 + $0x28] sm:$0xff]
      %v831 = vld [vmem:[#allocation2 + $0x30] sm:$0xff]
      %v832 = vld [vmem:[#allocation2 + $0x38] sm:$0xff]
      %v833 = vld [vmem:[#allocation2 + $0x40] sm:$0xff]
      %v834 = vld [vmem:[#allocation2 + $0x48] sm:$0xff]
      %v835 = vld [vmem:[#allocation2 + $0x50] sm:$0xff]
      %v836 = vld [vmem:[#allocation2 + $0x58] sm:$0xff]
      %v837 = vld [vmem:[#allocation2 + $0x60] sm:$0xff]
      %v838 = vld [vmem:[#allocation2 + $0x68] sm:$0xff]
      %v839 = vld [vmem:[#allocation2 + $0x70] sm:$0xff]
      %v840 = vld [vmem:[#allocation2 + $0x78] sm:$0xff]
      %v841 = vld [vmem:[%s1] sm:$0xf]
      %v842 = vld [vmem:[%s1 + $0x4] sm:$0xf]
      %v843 = vld [vmem:[%s1 + $0x8] sm:$0xf]
      %v844 = vld [vmem:[%s1 + $0xc] sm:$0xf]
      %v845 = vld [vmem:[%s1 + $0x10] sm:$0xf]
      %v846 = vld [vmem:[%s1 + $0x14] sm:$0xf]
      %v847 = vld [vmem:[%s1 + $0x18] sm:$0xf]
      %v848 = vld [vmem:[%s1 + $0x1c] sm:$0xf]
      %v849 = vld [vmem:[%s1 + $0x20] sm:$0xf]
      %v850 = vld [vmem:[%s1 + $0x24] sm:$0xf]
      %v851 = vld [vmem:[%s1 + $0x28] sm:$0xf]
      %v852 = vld [vmem:[%s1 + $0x2c] sm:$0xf]
      %v853 = vld [vmem:[%s1 + $0x30] sm:$0xf]
      %v854 = vld [vmem:[%s1 + $0x34] sm:$0xf]
      %v855 = vld [vmem:[%s1 + $0x38] sm:$0xf]
      %v856 = vld [vmem:[%s1 + $0x3c] sm:$0xf]
      %v857 = vld [vmem:[%s1 + $0x40] sm:$0xf]
      %v858 = vld [vmem:[%s1 + $0x44] sm:$0xf]
      %v859 = vld [vmem:[%s1 + $0x48] sm:$0xf]
      %v860 = vld [vmem:[%s1 + $0x4c] sm:$0xf]
      %v861 = vld [vmem:[%s1 + $0x50] sm:$0xf]
      %v862 = vld [vmem:[%s1 + $0x54] sm:$0xf]
      %v863 = vld [vmem:[%s1 + $0x58] sm:$0xf]
      %v864 = vld [vmem:[%s1 + $0x5c] sm:$0xf]
      %v865 = vld [vmem:[%s1 + $0x60] sm:$0xf]
      %v866 = vld [vmem:[%s1 + $0x64] sm:$0xf]
      %v867 = vld [vmem:[%s1 + $0x68] sm:$0xf]
      %v868 = vld [vmem:[%s1 + $0x6c] sm:$0xf]
      %v869 = vld [vmem:[%s1 + $0x70] sm:$0xf]
      %v870 = vld [vmem:[%s1 + $0x74] sm:$0xf]
      %v901 = vunpack.c.l.b16 %v841
      %v902 = vunpack.c.l.b16 %v842
      %v903 = vunpack.c.l.b16 %v843
      %v904 = vunpack.c.l.b16 %v844
      %v905 = vunpack.c.l.b16 %v845
      %v906 = vunpack.c.l.b16 %v846
      %v907 = vunpack.c.l.b16 %v847
      %v908 = vunpack.c.l.b16 %v848
      %v909 = vunpack.c.l.b16 %v849
      %v910 = vunpack.c.l.b16 %v850
      %v911 = vunpack.c.l.b16 %v851
      %v912 = vunpack.c.l.b16 %v852
      %v913 = vunpack.c.l.b16 %v853
      %v914 = vunpack.c.l.b16 %v854
      %v915 = vunpack.c.l.b16 %v855
      %v916 = vunpack.c.l.b16 %v856
      %v917 = vunpack.c.l.b16 %v857
      %v918 = vunpack.c.l.b16 %v858
      %v919 = vunpack.c.l.b16 %v859
      %v920 = vunpack.c.l.b16 %v860
      %v921 = vunpack.c.l.b16 %v861
      %v922 = vunpack.c.l.b16 %v862
      %v923 = vunpack.c.l.b16 %v863
      %v924 = vunpack.c.l.b16 %v864
      %v925 = vunpack.c.l.b16 %v865
      %v926 = vunpack.c.l.b16 %v866
      %v927 = vunpack.c.l.b16 %v867
      %v928 = vunpack.c.l.b16 %v868
      %v929 = vunpack.c.l.b16 %v869
      %v930 = vunpack.c.l.b16 %v870
      %v931 = vpack.c.b16 %v902, %v901
      %v932 = vpack.c.b16 %v904, %v903
      %v933 = vpack.c.b16 %v906, %v905
      %v934 = vpack.c.b16 %v908, %v907
      %v935 = vpack.c.b16 %v910, %v909
      %v936 = vpack.c.b16 %v912, %v911
      %v937 = vpack.c.b16 %v914, %v913
      %v938 = vpack.c.b16 %v916, %v915
      %v939 = vpack.c.b16 %v918, %v917
      %v940 = vpack.c.b16 %v920, %v919
      %v941 = vpack.c.b16 %v922, %v921
      %v942 = vpack.c.b16 %v924, %v923
      %v943 = vpack.c.b16 %v926, %v925
      %v944 = vpack.c.b16 %v928, %v927
      %v945 = vpack.c.b16 %v930, %v929
      %vm961 = vcmask 916480
      %v962 = vsel %vm961, %v810, 0
      %v964 = vsel %vm961, %v812, 0
      %v966 = vsel %vm961, %v814, 0
      %v968 = vsel %vm961, %v816, 0
      %v970 = vsel %vm961, %v818, 0
      %v972 = vsel %vm961, %v820, 0
      %v974 = vsel %vm961, %v822, 0
      %v976 = vsel %vm961, %v824, 0
      %978 = vmatprep.subr.bf16.mxu0 0
      %979 = vmatpush1.bf16.msra.mxu0 %v938
      %980 = vmatprep.subr.bf16.mxu0 0
      %981 = vmatpush1.bf16.msra.mxu0 %v937
      %982 = vmatprep.subr.bf16.mxu0 0
      %983 = vmatpush1.bf16.msra.mxu0 %v936
      %984 = vmatprep.subr.bf16.mxu0 0
      %985 = vmatpush1.bf16.msra.mxu0 %v935
      %986 = vmatprep.subr.bf16.mxu0 0
      %987 = vmatpush1.bf16.msra.mxu0 %v934
      %988 = vmatprep.subr.bf16.mxu0 0
      %989 = vmatpush1.bf16.msra.mxu0 %v933
      %990 = vmatprep.subr.bf16.mxu0 0
      %991 = vmatpush1.bf16.msra.mxu0 %v932
      %992 = vmatprep.subr.bf16.mxu0 0
      %993 = vmatpush1.bf16.msra.mxu0 %v931
      %994 = vmatprep.subr.bf16.mxu0 0
      %995 = vmatpush2.bf16.msra.mxu0 0
      %996 = vmatprep.subr.bf16.mxu0 0
      %997 = vmatpush2.bf16.msra.mxu0 %v945
      %998 = vmatprep.subr.bf16.mxu0 0
      %999 = vmatpush2.bf16.msra.mxu0 %v944
      %1000 = vmatprep.subr.bf16.mxu0 0
      %1001 = vmatpush2.bf16.msra.mxu0 %v943
      %1002 = vmatprep.subr.bf16.mxu0 0
      %1003 = vmatpush2.bf16.msra.mxu0 %v942
      %1004 = vmatprep.subr.bf16.mxu0 0
      %1005 = vmatpush2.bf16.msra.mxu0 %v941
      %1006 = vmatprep.subr.bf16.mxu0 0
      %1007 = vmatpush2.bf16.msra.mxu0 %v940
      %1008 = vmatprep.subr.bf16.mxu0 0
      %1009 = vmatpush2.bf16.msra.mxu0 %v939
      %1010 = vmatprep.mubr.bf16.mxu0 %v962
      %1011 = vmatmul.mubr.bf16.gmra.mxu0 %v768
      %v1012 = vpop.f32.mrf.mxu0
      %v1013 = vadd.f32 0.0, %v1012
      %v1014 = vpop.f32.mrf.mxu0
      %v1015 = vpop.f32.mrf.mxu0
      %v1016 = vadd.f32 0.0, %v1015
      %v1017 = vpop.f32.mrf.mxu0
      %1018 = vmatprep.mubr.bf16.mxu0 %v964
      %1019 = vmatmul.mubr.bf16.gmra.mxu0 %v771
      %v1020 = vpop.f32.mrf.mxu0
      %v1021 = vadd.f32 0.0, %v1020
      %v1022 = vpop.f32.mrf.mxu0
      %v1023 = vpop.f32.mrf.mxu0
      %v1024 = vadd.f32 0.0, %v1023
      %v1025 = vpop.f32.mrf.mxu0
      %1026 = vmatprep.mubr.bf16.mxu0 %v966
      %1027 = vmatmul.mubr.bf16.gmra.mxu0 %v774
      %v1028 = vpop.f32.mrf.mxu0
      %v1029 = vadd.f32 0.0, %v1028
      %v1030 = vpop.f32.mrf.mxu0
      %v1031 = vpop.f32.mrf.mxu0
      %v1032 = vadd.f32 0.0, %v1031
      %v1033 = vpop.f32.mrf.mxu0
      %1034 = vmatprep.mubr.bf16.mxu0 %v968
      %1035 = vmatmul.mubr.bf16.gmra.mxu0 %v777
      %v1036 = vpop.f32.mrf.mxu0
      %v1037 = vadd.f32 0.0, %v1036
      %v1038 = vpop.f32.mrf.mxu0
      %v1039 = vpop.f32.mrf.mxu0
      %v1040 = vadd.f32 0.0, %v1039
      %v1041 = vpop.f32.mrf.mxu0
      %1042 = vmatprep.mubr.bf16.mxu0 %v970
      %1043 = vmatmul.mubr.bf16.gmra.mxu0 %v780
      %v1044 = vpop.f32.mrf.mxu0
      %v1045 = vadd.f32 0.0, %v1044
      %v1046 = vpop.f32.mrf.mxu0
      %v1047 = vpop.f32.mrf.mxu0
      %v1048 = vadd.f32 0.0, %v1047
      %v1049 = vpop.f32.mrf.mxu0
      %1050 = vmatprep.mubr.bf16.mxu0 %v972
      %1051 = vmatmul.mubr.bf16.gmra.mxu0 %v783
      %v1052 = vpop.f32.mrf.mxu0
      %v1053 = vadd.f32 0.0, %v1052
      %v1054 = vpop.f32.mrf.mxu0
      %v1055 = vpop.f32.mrf.mxu0
      %v1056 = vadd.f32 0.0, %v1055
      %v1057 = vpop.f32.mrf.mxu0
      %1058 = vmatprep.mubr.bf16.mxu0 %v974
      %1059 = vmatmul.mubr.bf16.gmra.mxu0 %v786
      %v1060 = vpop.f32.mrf.mxu0
      %v1061 = vadd.f32 0.0, %v1060
      %v1062 = vpop.f32.mrf.mxu0
      %v1063 = vpop.f32.mrf.mxu0
      %v1064 = vadd.f32 0.0, %v1063
      %v1065 = vpop.f32.mrf.mxu0
      %1066 = vmatprep.mubr.bf16.mxu0 %v976
      %1067 = vmatmul.mubr.bf16.gmra.mxu0 %v789
      %v1068 = vpop.f32.mrf.mxu0
      %v1069 = vadd.f32 0.0, %v1068
      %v1070 = vpop.f32.mrf.mxu0
      %v1071 = vpop.f32.mrf.mxu0
      %v1072 = vadd.f32 0.0, %v1071
      %v1073 = vpop.f32.mrf.mxu0
      %1074 = vdwg.mxu0
      %v1075 = vadd.f32 %v825, %v1013
      %v1076 = vadd.f32 %v826, %v1016
      %v1077 = vadd.f32 %v827, %v1021
      %v1078 = vadd.f32 %v828, %v1024
      %v1079 = vadd.f32 %v829, %v1029
      %v1080 = vadd.f32 %v830, %v1032
      %v1081 = vadd.f32 %v831, %v1037
      %v1082 = vadd.f32 %v832, %v1040
      %v1083 = vadd.f32 %v833, %v1045
      %v1084 = vadd.f32 %v834, %v1048
      %v1085 = vadd.f32 %v835, %v1053
      %v1086 = vadd.f32 %v836, %v1056
      %v1087 = vadd.f32 %v837, %v1061
      %v1088 = vadd.f32 %v838, %v1064
      %v1089 = vadd.f32 %v839, %v1069
      %v1090 = vadd.f32 %v840, %v1072
      %1091 = vst [vmem:[#allocation2] sm:$0xff] %v1075
      %1092 = vst [vmem:[#allocation2 + $0x8] sm:$0xff] %v1076
      %1093 = vst [vmem:[#allocation2 + $0x10] sm:$0xff] %v1077
      %1094 = vst [vmem:[#allocation2 + $0x18] sm:$0xff] %v1078
      %1095 = vst [vmem:[#allocation2 + $0x20] sm:$0xff] %v1079
      %1096 = vst [vmem:[#allocation2 + $0x28] sm:$0xff] %v1080
      %1097 = vst [vmem:[#allocation2 + $0x30] sm:$0xff] %v1081
      %1098 = vst [vmem:[#allocation2 + $0x38] sm:$0xff] %v1082
      %1099 = vst [vmem:[#allocation2 + $0x40] sm:$0xff] %v1083
      %1100 = vst [vmem:[#allocation2 + $0x48] sm:$0xff] %v1084
      %1101 = vst [vmem:[#allocation2 + $0x50] sm:$0xff] %v1085
      %1102 = vst [vmem:[#allocation2 + $0x58] sm:$0xff] %v1086
      %1103 = vst [vmem:[#allocation2 + $0x60] sm:$0xff] %v1087
      %1104 = vst [vmem:[#allocation2 + $0x68] sm:$0xff] %v1088
      %1105 = vst [vmem:[#allocation2 + $0x70] sm:$0xff] %v1089
      %1106 = vst [vmem:[#allocation2 + $0x78] sm:$0xff] %v1090
      %s1107 = sadd.s32 %s197, 1
      %s1108 = smul.u32 %s1107, 3
      %s1109 = smul.addr %s1108, 4
      %s1110 = scalar_lea.vmem %s184, %s1109
      %v1111 = vld [vmem:[%s1110] sm:$0xf]
      %v1112 = vld [vmem:[%s1110 + $0x4] sm:$0xf]
      %v1113 = vld [vmem:[%s1110 + $0xc] sm:$0xf]
      %v1114 = vld [vmem:[%s1110 + $0x10] sm:$0xf]
      %v1115 = vld [vmem:[%s1110 + $0x18] sm:$0xf]
      %v1116 = vld [vmem:[%s1110 + $0x1c] sm:$0xf]
      %v1117 = vld [vmem:[%s1110 + $0x24] sm:$0xf]
      %v1118 = vld [vmem:[%s1110 + $0x28] sm:$0xf]
      %v1119 = vld [vmem:[%s1110 + $0x30] sm:$0xf]
      %v1120 = vld [vmem:[%s1110 + $0x34] sm:$0xf]
      %v1121 = vld [vmem:[%s1110 + $0x3c] sm:$0xf]
      %v1122 = vld [vmem:[%s1110 + $0x40] sm:$0xf]
      %v1123 = vld [vmem:[%s1110 + $0x48] sm:$0xf]
      %v1124 = vld [vmem:[%s1110 + $0x4c] sm:$0xf]
      %v1125 = vld [vmem:[%s1110 + $0x54] sm:$0xf]
      %v1126 = vld [vmem:[%s1110 + $0x58] sm:$0xf]
      %v1127 = vld [vmem:[%s1110 + $0x8] sm:$0x1]
      %v1128 = vld [vmem:[%s1110 + $0x14] sm:$0x1]
      %v1129 = vld [vmem:[%s1110 + $0x20] sm:$0x1]
      %v1130 = vld [vmem:[%s1110 + $0x2c] sm:$0x1]
      %v1131 = vld [vmem:[%s1110 + $0x38] sm:$0x1]
      %v1132 = vld [vmem:[%s1110 + $0x44] sm:$0x1]
      %v1133 = vld [vmem:[%s1110 + $0x50] sm:$0x1]
      %v1134 = vld [vmem:[%s1110 + $0x5c] sm:$0x1]
      %v1135 = vld [vmem:[%s1110] sm:$0xe]
      %v1136 = vld [vmem:[%s1110 + $0xc] sm:$0xe]
      %v1137 = vld [vmem:[%s1110 + $0x18] sm:$0xe]
      %v1138 = vld [vmem:[%s1110 + $0x24] sm:$0xe]
      %v1139 = vld [vmem:[%s1110 + $0x30] sm:$0xe]
      %v1140 = vld [vmem:[%s1110 + $0x3c] sm:$0xe]
      %v1141 = vld [vmem:[%s1110 + $0x48] sm:$0xe]
      %v1142 = vld [vmem:[%s1110 + $0x54] sm:$0xe]
      %v1143 = vld [vmem:[%s1110 + $0x8] sm:$0x3]
      %v1144 = vld [vmem:[%s1110 + $0x14] sm:$0x3]
      %v1145 = vld [vmem:[%s1110 + $0x20] sm:$0x3]
      %v1146 = vld [vmem:[%s1110 + $0x2c] sm:$0x3]
      %v1147 = vld [vmem:[%s1110 + $0x38] sm:$0x3]
      %v1148 = vld [vmem:[%s1110 + $0x44] sm:$0x3]
      %v1149 = vld [vmem:[%s1110 + $0x50] sm:$0x3]
      %v1150 = vld [vmem:[%s1110 + $0x5c] sm:$0x3]
      %v1151 = vld [vmem:[%s1110] sm:$0xc]
      %v1152 = vld [vmem:[%s1110 + $0xc] sm:$0xc]
      %v1153 = vld [vmem:[%s1110 + $0x18] sm:$0xc]
      %v1154 = vld [vmem:[%s1110 + $0x24] sm:$0xc]
      %v1155 = vld [vmem:[%s1110 + $0x30] sm:$0xc]
      %v1156 = vld [vmem:[%s1110 + $0x3c] sm:$0xc]
      %v1157 = vld [vmem:[%s1110 + $0x48] sm:$0xc]
      %v1158 = vld [vmem:[%s1110 + $0x54] sm:$0xc]
      %v1175 = vunpack.c.l.b16 %v1111
      %v1176 = vunpack.c.l.b16 %v1112
      %v1177 = vunpack.c.l.b16 %v1113
      %v1178 = vunpack.c.l.b16 %v1114
      %v1179 = vunpack.c.l.b16 %v1115
      %v1180 = vunpack.c.l.b16 %v1116
      %v1181 = vunpack.c.l.b16 %v1117
      %v1182 = vunpack.c.l.b16 %v1118
      %v1183 = vunpack.c.l.b16 %v1119
      %v1184 = vunpack.c.l.b16 %v1120
      %v1185 = vunpack.c.l.b16 %v1121
      %v1186 = vunpack.c.l.b16 %v1122
      %v1187 = vunpack.c.l.b16 %v1123
      %v1188 = vunpack.c.l.b16 %v1124
      %v1189 = vunpack.c.l.b16 %v1125
      %v1190 = vunpack.c.l.b16 %v1126
      %v1191 = vpack.c.b16 %v1176, %v1175
      %v1192 = vpack.c.b16 %v1178, %v1177
      %v1193 = vpack.c.b16 %v1180, %v1179
      %v1194 = vpack.c.b16 %v1182, %v1181
      %v1195 = vpack.c.b16 %v1184, %v1183
      %v1196 = vpack.c.b16 %v1186, %v1185
      %v1197 = vpack.c.b16 %v1188, %v1187
      %v1198 = vpack.c.b16 %v1190, %v1189
      %v1207 = vunpack.c.l.b16 %v1127
      %v1208 = vunpack.c.l.b16 %v1128
      %v1209 = vunpack.c.l.b16 %v1129
      %v1210 = vunpack.c.l.b16 %v1130
      %v1211 = vunpack.c.l.b16 %v1131
      %v1212 = vunpack.c.l.b16 %v1132
      %v1213 = vunpack.c.l.b16 %v1133
      %v1214 = vunpack.c.l.b16 %v1134
      %v1215 = vpack.c.b16 %v1207, %v1207
      %v1216 = vpack.c.b16 %v1208, %v1208
      %v1217 = vpack.c.b16 %v1209, %v1209
      %v1218 = vpack.c.b16 %v1210, %v1210
      %v1219 = vpack.c.b16 %v1211, %v1211
      %v1220 = vpack.c.b16 %v1212, %v1212
      %v1221 = vpack.c.b16 %v1213, %v1213
      %v1222 = vpack.c.b16 %v1214, %v1214
      %v1224 = vshrl.u32 %v1191, 16
      %v1226 = vshll.u32 %v1191, 16
      %v1228 = vrot.slane %v1226, 1
      %v1229 = vor.u32 %v1224, %v1228
      %v1231 = vshll.u32 %v1215, 16
      %v1233 = vrot.slane %v1231, 1
      %v1234 = vsel %vm329, %v1229, %v1233
      %v1236 = vshrl.u32 %v1192, 16
      %v1238 = vshll.u32 %v1192, 16
      %v1240 = vrot.slane %v1238, 1
      %v1241 = vor.u32 %v1236, %v1240
      %v1243 = vshll.u32 %v1216, 16
      %v1245 = vrot.slane %v1243, 1
      %v1246 = vsel %vm329, %v1241, %v1245
      %v1248 = vshrl.u32 %v1193, 16
      %v1250 = vshll.u32 %v1193, 16
      %v1252 = vrot.slane %v1250, 1
      %v1253 = vor.u32 %v1248, %v1252
      %v1255 = vshll.u32 %v1217, 16
      %v1257 = vrot.slane %v1255, 1
      %v1258 = vsel %vm329, %v1253, %v1257
      %v1260 = vshrl.u32 %v1194, 16
      %v1262 = vshll.u32 %v1194, 16
      %v1264 = vrot.slane %v1262, 1
      %v1265 = vor.u32 %v1260, %v1264
      %v1267 = vshll.u32 %v1218, 16
      %v1269 = vrot.slane %v1267, 1
      %v1270 = vsel %vm329, %v1265, %v1269
      %v1272 = vshrl.u32 %v1195, 16
      %v1274 = vshll.u32 %v1195, 16
      %v1276 = vrot.slane %v1274, 1
      %v1277 = vor.u32 %v1272, %v1276
      %v1279 = vshll.u32 %v1219, 16
      %v1281 = vrot.slane %v1279, 1
      %v1282 = vsel %vm329, %v1277, %v1281
      %v1284 = vshrl.u32 %v1196, 16
      %v1286 = vshll.u32 %v1196, 16
      %v1288 = vrot.slane %v1286, 1
      %v1289 = vor.u32 %v1284, %v1288
      %v1291 = vshll.u32 %v1220, 16
      %v1293 = vrot.slane %v1291, 1
      %v1294 = vsel %vm329, %v1289, %v1293
      %v1296 = vshrl.u32 %v1197, 16
      %v1298 = vshll.u32 %v1197, 16
      %v1300 = vrot.slane %v1298, 1
      %v1301 = vor.u32 %v1296, %v1300
      %v1303 = vshll.u32 %v1221, 16
      %v1305 = vrot.slane %v1303, 1
      %v1306 = vsel %vm329, %v1301, %v1305
      %v1308 = vshrl.u32 %v1198, 16
      %v1310 = vshll.u32 %v1198, 16
      %v1312 = vrot.slane %v1310, 1
      %v1313 = vor.u32 %v1308, %v1312
      %v1315 = vshll.u32 %v1222, 16
      %v1317 = vrot.slane %v1315, 1
      %v1318 = vsel %vm329, %v1313, %v1317
      %1319 = vrot.lane.b32.xlu0 %v1234, 48
      %v1320 = vpop.permute.xlu0 %1319
      %1321 = vrot.lane.b32.xlu0 %v1246, 48
      %v1322 = vpop.permute.xlu0 %1321
      %1323 = vrot.lane.b32.xlu0 %v1258, 48
      %v1324 = vpop.permute.xlu0 %1323
      %1325 = vrot.lane.b32.xlu0 %v1270, 48
      %v1326 = vpop.permute.xlu0 %1325
      %1327 = vrot.lane.b32.xlu0 %v1282, 48
      %v1328 = vpop.permute.xlu0 %1327
      %1329 = vrot.lane.b32.xlu0 %v1294, 48
      %v1330 = vpop.permute.xlu0 %1329
      %1331 = vrot.lane.b32.xlu0 %v1306, 48
      %v1332 = vpop.permute.xlu0 %1331
      %1333 = vrot.lane.b32.xlu0 %v1318, 48
      %v1334 = vpop.permute.xlu0 %1333
      %v1343 = vunpack.c.l.b16 %v1135
      %v1344 = vunpack.c.l.b16 %v1136
      %v1345 = vunpack.c.l.b16 %v1137
      %v1346 = vunpack.c.l.b16 %v1138
      %v1347 = vunpack.c.l.b16 %v1139
      %v1348 = vunpack.c.l.b16 %v1140
      %v1349 = vunpack.c.l.b16 %v1141
      %v1350 = vunpack.c.l.b16 %v1142
      %v1351 = vpack.c.b16 %v1176, %v1343
      %v1352 = vpack.c.b16 %v1178, %v1344
      %v1353 = vpack.c.b16 %v1180, %v1345
      %v1354 = vpack.c.b16 %v1182, %v1346
      %v1355 = vpack.c.b16 %v1184, %v1347
      %v1356 = vpack.c.b16 %v1186, %v1348
      %v1357 = vpack.c.b16 %v1188, %v1349
      %v1358 = vpack.c.b16 %v1190, %v1350
      %v1359 = vrot.slane %v1351, 1
      %v1360 = vrot.slane %v1215, 1
      %v1361 = vsel %vm466, %v1359, %v1360
      %v1362 = vrot.slane %v1352, 1
      %v1363 = vrot.slane %v1216, 1
      %v1364 = vsel %vm466, %v1362, %v1363
      %v1365 = vrot.slane %v1353, 1
      %v1366 = vrot.slane %v1217, 1
      %v1367 = vsel %vm466, %v1365, %v1366
      %v1368 = vrot.slane %v1354, 1
      %v1369 = vrot.slane %v1218, 1
      %v1370 = vsel %vm466, %v1368, %v1369
      %v1371 = vrot.slane %v1355, 1
      %v1372 = vrot.slane %v1219, 1
      %v1373 = vsel %vm466, %v1371, %v1372
      %v1374 = vrot.slane %v1356, 1
      %v1375 = vrot.slane %v1220, 1
      %v1376 = vsel %vm466, %v1374, %v1375
      %v1377 = vrot.slane %v1357, 1
      %v1378 = vrot.slane %v1221, 1
      %v1379 = vsel %vm466, %v1377, %v1378
      %v1380 = vrot.slane %v1358, 1
      %v1381 = vrot.slane %v1222, 1
      %v1382 = vsel %vm466, %v1380, %v1381
      %1383 = vrot.lane.b32.xlu0 %v1361, 96
      %v1384 = vpop.permute.xlu0 %1383
      %1385 = vrot.lane.b32.xlu0 %v1364, 96
      %v1386 = vpop.permute.xlu0 %1385
      %1387 = vrot.lane.b32.xlu0 %v1367, 96
      %v1388 = vpop.permute.xlu0 %1387
      %1389 = vrot.lane.b32.xlu0 %v1370, 96
      %v1390 = vpop.permute.xlu0 %1389
      %1391 = vrot.lane.b32.xlu0 %v1373, 96
      %v1392 = vpop.permute.xlu0 %1391
      %1393 = vrot.lane.b32.xlu0 %v1376, 96
      %v1394 = vpop.permute.xlu0 %1393
      %1395 = vrot.lane.b32.xlu0 %v1379, 96
      %v1396 = vpop.permute.xlu0 %1395
      %1397 = vrot.lane.b32.xlu0 %v1382, 96
      %v1398 = vpop.permute.xlu0 %1397
      %v1407 = vunpack.c.l.b16 %v1143
      %v1408 = vunpack.c.l.b16 %v1144
      %v1409 = vunpack.c.l.b16 %v1145
      %v1410 = vunpack.c.l.b16 %v1146
      %v1411 = vunpack.c.l.b16 %v1147
      %v1412 = vunpack.c.l.b16 %v1148
      %v1413 = vunpack.c.l.b16 %v1149
      %v1414 = vunpack.c.l.b16 %v1150
      %v1415 = vpack.c.b16 %v1407, %v1407
      %v1416 = vpack.c.b16 %v1408, %v1408
      %v1417 = vpack.c.b16 %v1409, %v1409
      %v1418 = vpack.c.b16 %v1410, %v1410
      %v1419 = vpack.c.b16 %v1411, %v1411
      %v1420 = vpack.c.b16 %v1412, %v1412
      %v1421 = vpack.c.b16 %v1413, %v1413
      %v1422 = vpack.c.b16 %v1414, %v1414
      %v1424 = vshrl.u32 %v1351, 16
      %v1426 = vrot.slane %v1424, 1
      %v1427 = vshll.u32 %v1351, 16
      %v1429 = vrot.slane %v1427, 2
      %v1430 = vor.u32 %v1426, %v1429
      %v1432 = vshrl.u32 %v1415, 16
      %v1434 = vrot.slane %v1432, 1
      %v1435 = vshll.u32 %v1415, 16
      %v1437 = vrot.slane %v1435, 2
      %v1438 = vor.u32 %v1434, %v1437
      %v1439 = vsel %vm531, %v1430, %v1438
      %v1441 = vshrl.u32 %v1352, 16
      %v1443 = vrot.slane %v1441, 1
      %v1444 = vshll.u32 %v1352, 16
      %v1446 = vrot.slane %v1444, 2
      %v1447 = vor.u32 %v1443, %v1446
      %v1449 = vshrl.u32 %v1416, 16
      %v1451 = vrot.slane %v1449, 1
      %v1452 = vshll.u32 %v1416, 16
      %v1454 = vrot.slane %v1452, 2
      %v1455 = vor.u32 %v1451, %v1454
      %v1456 = vsel %vm531, %v1447, %v1455
      %v1458 = vshrl.u32 %v1353, 16
      %v1460 = vrot.slane %v1458, 1
      %v1461 = vshll.u32 %v1353, 16
      %v1463 = vrot.slane %v1461, 2
      %v1464 = vor.u32 %v1460, %v1463
      %v1466 = vshrl.u32 %v1417, 16
      %v1468 = vrot.slane %v1466, 1
      %v1469 = vshll.u32 %v1417, 16
      %v1471 = vrot.slane %v1469, 2
      %v1472 = vor.u32 %v1468, %v1471
      %v1473 = vsel %vm531, %v1464, %v1472
      %v1475 = vshrl.u32 %v1354, 16
      %v1477 = vrot.slane %v1475, 1
      %v1478 = vshll.u32 %v1354, 16
      %v1480 = vrot.slane %v1478, 2
      %v1481 = vor.u32 %v1477, %v1480
      %v1483 = vshrl.u32 %v1418, 16
      %v1485 = vrot.slane %v1483, 1
      %v1486 = vshll.u32 %v1418, 16
      %v1488 = vrot.slane %v1486, 2
      %v1489 = vor.u32 %v1485, %v1488
      %v1490 = vsel %vm531, %v1481, %v1489
      %v1492 = vshrl.u32 %v1355, 16
      %v1494 = vrot.slane %v1492, 1
      %v1495 = vshll.u32 %v1355, 16
      %v1497 = vrot.slane %v1495, 2
      %v1498 = vor.u32 %v1494, %v1497
      %v1500 = vshrl.u32 %v1419, 16
      %v1502 = vrot.slane %v1500, 1
      %v1503 = vshll.u32 %v1419, 16
      %v1505 = vrot.slane %v1503, 2
      %v1506 = vor.u32 %v1502, %v1505
      %v1507 = vsel %vm531, %v1498, %v1506
      %v1509 = vshrl.u32 %v1356, 16
      %v1511 = vrot.slane %v1509, 1
      %v1512 = vshll.u32 %v1356, 16
      %v1514 = vrot.slane %v1512, 2
      %v1515 = vor.u32 %v1511, %v1514
      %v1517 = vshrl.u32 %v1420, 16
      %v1519 = vrot.slane %v1517, 1
      %v1520 = vshll.u32 %v1420, 16
      %v1522 = vrot.slane %v1520, 2
      %v1523 = vor.u32 %v1519, %v1522
      %v1524 = vsel %vm531, %v1515, %v1523
      %v1526 = vshrl.u32 %v1357, 16
      %v1528 = vrot.slane %v1526, 1
      %v1529 = vshll.u32 %v1357, 16
      %v1531 = vrot.slane %v1529, 2
      %v1532 = vor.u32 %v1528, %v1531
      %v1534 = vshrl.u32 %v1421, 16
      %v1536 = vrot.slane %v1534, 1
      %v1537 = vshll.u32 %v1421, 16
      %v1539 = vrot.slane %v1537, 2
      %v1540 = vor.u32 %v1536, %v1539
      %v1541 = vsel %vm531, %v1532, %v1540
      %v1543 = vshrl.u32 %v1358, 16
      %v1545 = vrot.slane %v1543, 1
      %v1546 = vshll.u32 %v1358, 16
      %v1548 = vrot.slane %v1546, 2
      %v1549 = vor.u32 %v1545, %v1548
      %v1551 = vshrl.u32 %v1422, 16
      %v1553 = vrot.slane %v1551, 1
      %v1554 = vshll.u32 %v1422, 16
      %v1556 = vrot.slane %v1554, 2
      %v1557 = vor.u32 %v1553, %v1556
      %v1558 = vsel %vm531, %v1549, %v1557
      %1559 = vrot.lane.b32.xlu0 %v1439, 16
      %v1560 = vpop.permute.xlu0 %1559
      %1561 = vrot.lane.b32.xlu0 %v1456, 16
      %v1562 = vpop.permute.xlu0 %1561
      %1563 = vrot.lane.b32.xlu0 %v1473, 16
      %v1564 = vpop.permute.xlu0 %1563
      %1565 = vrot.lane.b32.xlu0 %v1490, 16
      %v1566 = vpop.permute.xlu0 %1565
      %1567 = vrot.lane.b32.xlu0 %v1507, 16
      %v1568 = vpop.permute.xlu0 %1567
      %1569 = vrot.lane.b32.xlu0 %v1524, 16
      %v1570 = vpop.permute.xlu0 %1569
      %1571 = vrot.lane.b32.xlu0 %v1541, 16
      %v1572 = vpop.permute.xlu0 %1571
      %1573 = vrot.lane.b32.xlu0 %v1558, 16
      %v1574 = vpop.permute.xlu0 %1573
      %v1583 = vunpack.c.l.b16 %v1151
      %v1584 = vunpack.c.l.b16 %v1152
      %v1585 = vunpack.c.l.b16 %v1153
      %v1586 = vunpack.c.l.b16 %v1154
      %v1587 = vunpack.c.l.b16 %v1155
      %v1588 = vunpack.c.l.b16 %v1156
      %v1589 = vunpack.c.l.b16 %v1157
      %v1590 = vunpack.c.l.b16 %v1158
      %v1591 = vpack.c.b16 %v1176, %v1583
      %v1592 = vpack.c.b16 %v1178, %v1584
      %v1593 = vpack.c.b16 %v1180, %v1585
      %v1594 = vpack.c.b16 %v1182, %v1586
      %v1595 = vpack.c.b16 %v1184, %v1587
      %v1596 = vpack.c.b16 %v1186, %v1588
      %v1597 = vpack.c.b16 %v1188, %v1589
      %v1598 = vpack.c.b16 %v1190, %v1590
      %v1599 = vrot.slane %v1591, 2
      %v1600 = vrot.slane %v1415, 2
      %v1601 = vsel %vm708, %v1599, %v1600
      %v1602 = vrot.slane %v1592, 2
      %v1603 = vrot.slane %v1416, 2
      %v1604 = vsel %vm708, %v1602, %v1603
      %v1605 = vrot.slane %v1593, 2
      %v1606 = vrot.slane %v1417, 2
      %v1607 = vsel %vm708, %v1605, %v1606
      %v1608 = vrot.slane %v1594, 2
      %v1609 = vrot.slane %v1418, 2
      %v1610 = vsel %vm708, %v1608, %v1609
      %v1611 = vrot.slane %v1595, 2
      %v1612 = vrot.slane %v1419, 2
      %v1613 = vsel %vm708, %v1611, %v1612
      %v1614 = vrot.slane %v1596, 2
      %v1615 = vrot.slane %v1420, 2
      %v1616 = vsel %vm708, %v1614, %v1615
      %v1617 = vrot.slane %v1597, 2
      %v1618 = vrot.slane %v1421, 2
      %v1619 = vsel %vm708, %v1617, %v1618
      %v1620 = vrot.slane %v1598, 2
      %v1621 = vrot.slane %v1422, 2
      %v1622 = vsel %vm708, %v1620, %v1621
      %1623 = vrot.lane.b32.xlu0 %v1601, 64
      %v1624 = vpop.permute.xlu0 %1623
      %1625 = vrot.lane.b32.xlu0 %v1604, 64
      %v1626 = vpop.permute.xlu0 %1625
      %1627 = vrot.lane.b32.xlu0 %v1607, 64
      %v1628 = vpop.permute.xlu0 %1627
      %1629 = vrot.lane.b32.xlu0 %v1610, 64
      %v1630 = vpop.permute.xlu0 %1629
      %1631 = vrot.lane.b32.xlu0 %v1613, 64
      %v1632 = vpop.permute.xlu0 %1631
      %1633 = vrot.lane.b32.xlu0 %v1616, 64
      %v1634 = vpop.permute.xlu0 %1633
      %1635 = vrot.lane.b32.xlu0 %v1619, 64
      %v1636 = vpop.permute.xlu0 %1635
      %1637 = vrot.lane.b32.xlu0 %v1622, 64
      %v1638 = vpop.permute.xlu0 %1637
      %v1640 = vsel %vm749, %v1191, %v1320
      %v1642 = vsel %vm749, %v1192, %v1322
      %v1644 = vsel %vm749, %v1193, %v1324
      %v1646 = vsel %vm749, %v1194, %v1326
      %v1648 = vsel %vm749, %v1195, %v1328
      %v1650 = vsel %vm749, %v1196, %v1330
      %v1652 = vsel %vm749, %v1197, %v1332
      %v1654 = vsel %vm749, %v1198, %v1334
      %v1656 = vsel %vm766, %v1640, %v1384
      %v1659 = vsel %vm766, %v1642, %v1386
      %v1662 = vsel %vm766, %v1644, %v1388
      %v1665 = vsel %vm766, %v1646, %v1390
      %v1668 = vsel %vm766, %v1648, %v1392
      %v1671 = vsel %vm766, %v1650, %v1394
      %v1674 = vsel %vm766, %v1652, %v1396
      %v1677 = vsel %vm766, %v1654, %v1398
      %v1680 = vsel %vm791, %v1384, %v1560
      %v1682 = vsel %vm791, %v1386, %v1562
      %v1684 = vsel %vm791, %v1388, %v1564
      %v1686 = vsel %vm791, %v1390, %v1566
      %v1688 = vsel %vm791, %v1392, %v1568
      %v1690 = vsel %vm791, %v1394, %v1570
      %v1692 = vsel %vm791, %v1396, %v1572
      %v1694 = vsel %vm791, %v1398, %v1574
      %v1696 = vsel %vm808, %v1680, %v1624
      %v1698 = vsel %vm808, %v1682, %v1626
      %v1700 = vsel %vm808, %v1684, %v1628
      %v1702 = vsel %vm808, %v1686, %v1630
      %v1704 = vsel %vm808, %v1688, %v1632
      %v1706 = vsel %vm808, %v1690, %v1634
      %v1708 = vsel %vm808, %v1692, %v1636
      %v1710 = vsel %vm808, %v1694, %v1638
      %v1711 = vld [vmem:[#allocation2] sm:$0xff]
      %v1712 = vld [vmem:[#allocation2 + $0x8] sm:$0xff]
      %v1713 = vld [vmem:[#allocation2 + $0x10] sm:$0xff]
      %v1714 = vld [vmem:[#allocation2 + $0x18] sm:$0xff]
      %v1715 = vld [vmem:[#allocation2 + $0x20] sm:$0xff]
      %v1716 = vld [vmem:[#allocation2 + $0x28] sm:$0xff]
      %v1717 = vld [vmem:[#allocation2 + $0x30] sm:$0xff]
      %v1718 = vld [vmem:[#allocation2 + $0x38] sm:$0xff]
      %v1719 = vld [vmem:[#allocation2 + $0x40] sm:$0xff]
      %v1720 = vld [vmem:[#allocation2 + $0x48] sm:$0xff]
      %v1721 = vld [vmem:[#allocation2 + $0x50] sm:$0xff]
      %v1722 = vld [vmem:[#allocation2 + $0x58] sm:$0xff]
      %v1723 = vld [vmem:[#allocation2 + $0x60] sm:$0xff]
      %v1724 = vld [vmem:[#allocation2 + $0x68] sm:$0xff]
      %v1725 = vld [vmem:[#allocation2 + $0x70] sm:$0xff]
      %v1726 = vld [vmem:[#allocation2 + $0x78] sm:$0xff]
      %s1727 = scalar_lea.vmem %s1, 120
      %v1728 = vld [vmem:[%s1727] sm:$0xf]
      %v1729 = vld [vmem:[%s1727 + $0x4] sm:$0xf]
      %v1730 = vld [vmem:[%s1727 + $0x8] sm:$0xf]
      %v1731 = vld [vmem:[%s1727 + $0xc] sm:$0xf]
      %v1732 = vld [vmem:[%s1727 + $0x10] sm:$0xf]
      %v1733 = vld [vmem:[%s1727 + $0x14] sm:$0xf]
      %v1734 = vld [vmem:[%s1727 + $0x18] sm:$0xf]
      %v1735 = vld [vmem:[%s1727 + $0x1c] sm:$0xf]
      %v1736 = vld [vmem:[%s1727 + $0x20] sm:$0xf]
      %v1737 = vld [vmem:[%s1727 + $0x24] sm:$0xf]
      %v1738 = vld [vmem:[%s1727 + $0x28] sm:$0xf]
      %v1739 = vld [vmem:[%s1727 + $0x2c] sm:$0xf]
      %v1740 = vld [vmem:[%s1727 + $0x30] sm:$0xf]
      %v1741 = vld [vmem:[%s1727 + $0x34] sm:$0xf]
      %v1742 = vld [vmem:[%s1727 + $0x38] sm:$0xf]
      %v1743 = vld [vmem:[%s1727 + $0x3c] sm:$0xf]
      %v1744 = vld [vmem:[%s1727 + $0x40] sm:$0xf]
      %v1745 = vld [vmem:[%s1727 + $0x44] sm:$0xf]
      %v1746 = vld [vmem:[%s1727 + $0x48] sm:$0xf]
      %v1747 = vld [vmem:[%s1727 + $0x4c] sm:$0xf]
      %v1748 = vld [vmem:[%s1727 + $0x50] sm:$0xf]
      %v1749 = vld [vmem:[%s1727 + $0x54] sm:$0xf]
      %v1750 = vld [vmem:[%s1727 + $0x58] sm:$0xf]
      %v1751 = vld [vmem:[%s1727 + $0x5c] sm:$0xf]
      %v1752 = vld [vmem:[%s1727 + $0x60] sm:$0xf]
      %v1753 = vld [vmem:[%s1727 + $0x64] sm:$0xf]
      %v1754 = vld [vmem:[%s1727 + $0x68] sm:$0xf]
      %v1755 = vld [vmem:[%s1727 + $0x6c] sm:$0xf]
      %v1756 = vld [vmem:[%s1727 + $0x70] sm:$0xf]
      %v1757 = vld [vmem:[%s1727 + $0x74] sm:$0xf]
      %v1788 = vunpack.c.l.b16 %v1728
      %v1789 = vunpack.c.l.b16 %v1729
      %v1790 = vunpack.c.l.b16 %v1730
      %v1791 = vunpack.c.l.b16 %v1731
      %v1792 = vunpack.c.l.b16 %v1732
      %v1793 = vunpack.c.l.b16 %v1733
      %v1794 = vunpack.c.l.b16 %v1734
      %v1795 = vunpack.c.l.b16 %v1735
      %v1796 = vunpack.c.l.b16 %v1736
      %v1797 = vunpack.c.l.b16 %v1737
      %v1798 = vunpack.c.l.b16 %v1738
      %v1799 = vunpack.c.l.b16 %v1739
      %v1800 = vunpack.c.l.b16 %v1740
      %v1801 = vunpack.c.l.b16 %v1741
      %v1802 = vunpack.c.l.b16 %v1742
      %v1803 = vunpack.c.l.b16 %v1743
      %v1804 = vunpack.c.l.b16 %v1744
      %v1805 = vunpack.c.l.b16 %v1745
      %v1806 = vunpack.c.l.b16 %v1746
      %v1807 = vunpack.c.l.b16 %v1747
      %v1808 = vunpack.c.l.b16 %v1748
      %v1809 = vunpack.c.l.b16 %v1749
      %v1810 = vunpack.c.l.b16 %v1750
      %v1811 = vunpack.c.l.b16 %v1751
      %v1812 = vunpack.c.l.b16 %v1752
      %v1813 = vunpack.c.l.b16 %v1753
      %v1814 = vunpack.c.l.b16 %v1754
      %v1815 = vunpack.c.l.b16 %v1755
      %v1816 = vunpack.c.l.b16 %v1756
      %v1817 = vunpack.c.l.b16 %v1757
      %v1818 = vpack.c.b16 %v1789, %v1788
      %v1819 = vpack.c.b16 %v1791, %v1790
      %v1820 = vpack.c.b16 %v1793, %v1792
      %v1821 = vpack.c.b16 %v1795, %v1794
      %v1822 = vpack.c.b16 %v1797, %v1796
      %v1823 = vpack.c.b16 %v1799, %v1798
      %v1824 = vpack.c.b16 %v1801, %v1800
      %v1825 = vpack.c.b16 %v1803, %v1802
      %v1826 = vpack.c.b16 %v1805, %v1804
      %v1827 = vpack.c.b16 %v1807, %v1806
      %v1828 = vpack.c.b16 %v1809, %v1808
      %v1829 = vpack.c.b16 %v1811, %v1810
      %v1830 = vpack.c.b16 %v1813, %v1812
      %v1831 = vpack.c.b16 %v1815, %v1814
      %v1832 = vpack.c.b16 %v1817, %v1816
      %v1848 = vsel %vm961, %v1696, 0
      %v1850 = vsel %vm961, %v1698, 0
      %v1852 = vsel %vm961, %v1700, 0
      %v1854 = vsel %vm961, %v1702, 0
      %v1856 = vsel %vm961, %v1704, 0
      %v1858 = vsel %vm961, %v1706, 0
      %v1860 = vsel %vm961, %v1708, 0
      %v1862 = vsel %vm961, %v1710, 0
      %1864 = vmatprep.subr.bf16.mxu0 0
      %1865 = vmatpush1.bf16.msra.mxu0 %v1825
      %1866 = vmatprep.subr.bf16.mxu0 0
      %1867 = vmatpush1.bf16.msra.mxu0 %v1824
      %1868 = vmatprep.subr.bf16.mxu0 0
      %1869 = vmatpush1.bf16.msra.mxu0 %v1823
      %1870 = vmatprep.subr.bf16.mxu0 0
      %1871 = vmatpush1.bf16.msra.mxu0 %v1822
      %1872 = vmatprep.subr.bf16.mxu0 0
      %1873 = vmatpush1.bf16.msra.mxu0 %v1821
      %1874 = vmatprep.subr.bf16.mxu0 0
      %1875 = vmatpush1.bf16.msra.mxu0 %v1820
      %1876 = vmatprep.subr.bf16.mxu0 0
      %1877 = vmatpush1.bf16.msra.mxu0 %v1819
      %1878 = vmatprep.subr.bf16.mxu0 0
      %1879 = vmatpush1.bf16.msra.mxu0 %v1818
      %1880 = vmatprep.subr.bf16.mxu0 0
      %1881 = vmatpush2.bf16.msra.mxu0 0
      %1882 = vmatprep.subr.bf16.mxu0 0
      %1883 = vmatpush2.bf16.msra.mxu0 %v1832
      %1884 = vmatprep.subr.bf16.mxu0 0
      %1885 = vmatpush2.bf16.msra.mxu0 %v1831
      %1886 = vmatprep.subr.bf16.mxu0 0
      %1887 = vmatpush2.bf16.msra.mxu0 %v1830
      %1888 = vmatprep.subr.bf16.mxu0 0
      %1889 = vmatpush2.bf16.msra.mxu0 %v1829
      %1890 = vmatprep.subr.bf16.mxu0 0
      %1891 = vmatpush2.bf16.msra.mxu0 %v1828
      %1892 = vmatprep.subr.bf16.mxu0 0
      %1893 = vmatpush2.bf16.msra.mxu0 %v1827
      %1894 = vmatprep.subr.bf16.mxu0 0
      %1895 = vmatpush2.bf16.msra.mxu0 %v1826
      %1896 = vmatprep.mubr.bf16.mxu0 %v1848
      %1897 = vmatmul.mubr.bf16.gmra.mxu0 %v1656
      %v1898 = vpop.f32.mrf.mxu0
      %v1899 = vadd.f32 0.0, %v1898
      %v1900 = vpop.f32.mrf.mxu0
      %v1901 = vpop.f32.mrf.mxu0
      %v1902 = vadd.f32 0.0, %v1901
      %v1903 = vpop.f32.mrf.mxu0
      %1904 = vmatprep.mubr.bf16.mxu0 %v1850
      %1905 = vmatmul.mubr.bf16.gmra.mxu0 %v1659
      %v1906 = vpop.f32.mrf.mxu0
      %v1907 = vadd.f32 0.0, %v1906
      %v1908 = vpop.f32.mrf.mxu0
      %v1909 = vpop.f32.mrf.mxu0
      %v1910 = vadd.f32 0.0, %v1909
      %v1911 = vpop.f32.mrf.mxu0
      %1912 = vmatprep.mubr.bf16.mxu0 %v1852
      %1913 = vmatmul.mubr.bf16.gmra.mxu0 %v1662
      %v1914 = vpop.f32.mrf.mxu0
      %v1915 = vadd.f32 0.0, %v1914
      %v1916 = vpop.f32.mrf.mxu0
      %v1917 = vpop.f32.mrf.mxu0
      %v1918 = vadd.f32 0.0, %v1917
      %v1919 = vpop.f32.mrf.mxu0
      %1920 = vmatprep.mubr.bf16.mxu0 %v1854
      %1921 = vmatmul.mubr.bf16.gmra.mxu0 %v1665
      %v1922 = vpop.f32.mrf.mxu0
      %v1923 = vadd.f32 0.0, %v1922
      %v1924 = vpop.f32.mrf.mxu0
      %v1925 = vpop.f32.mrf.mxu0
      %v1926 = vadd.f32 0.0, %v1925
      %v1927 = vpop.f32.mrf.mxu0
      %1928 = vmatprep.mubr.bf16.mxu0 %v1856
      %1929 = vmatmul.mubr.bf16.gmra.mxu0 %v1668
      %v1930 = vpop.f32.mrf.mxu0
      %v1931 = vadd.f32 0.0, %v1930
      %v1932 = vpop.f32.mrf.mxu0
      %v1933 = vpop.f32.mrf.mxu0
      %v1934 = vadd.f32 0.0, %v1933
      %v1935 = vpop.f32.mrf.mxu0
      %1936 = vmatprep.mubr.bf16.mxu0 %v1858
      %1937 = vmatmul.mubr.bf16.gmra.mxu0 %v1671
      %v1938 = vpop.f32.mrf.mxu0
      %v1939 = vadd.f32 0.0, %v1938
      %v1940 = vpop.f32.mrf.mxu0
      %v1941 = vpop.f32.mrf.mxu0
      %v1942 = vadd.f32 0.0, %v1941
      %v1943 = vpop.f32.mrf.mxu0
      %1944 = vmatprep.mubr.bf16.mxu0 %v1860
      %1945 = vmatmul.mubr.bf16.gmra.mxu0 %v1674
      %v1946 = vpop.f32.mrf.mxu0
      %v1947 = vadd.f32 0.0, %v1946
      %v1948 = vpop.f32.mrf.mxu0
      %v1949 = vpop.f32.mrf.mxu0
      %v1950 = vadd.f32 0.0, %v1949
      %v1951 = vpop.f32.mrf.mxu0
      %1952 = vmatprep.mubr.bf16.mxu0 %v1862
      %1953 = vmatmul.mubr.bf16.gmra.mxu0 %v1677
      %v1954 = vpop.f32.mrf.mxu0
      %v1955 = vadd.f32 0.0, %v1954
      %v1956 = vpop.f32.mrf.mxu0
      %v1957 = vpop.f32.mrf.mxu0
      %v1958 = vadd.f32 0.0, %v1957
      %v1959 = vpop.f32.mrf.mxu0
      %1960 = vdwg.mxu0
      %v1961 = vadd.f32 %v1711, %v1899
      %v1962 = vadd.f32 %v1712, %v1902
      %v1963 = vadd.f32 %v1713, %v1907
      %v1964 = vadd.f32 %v1714, %v1910
      %v1965 = vadd.f32 %v1715, %v1915
      %v1966 = vadd.f32 %v1716, %v1918
      %v1967 = vadd.f32 %v1717, %v1923
      %v1968 = vadd.f32 %v1718, %v1926
      %v1969 = vadd.f32 %v1719, %v1931
      %v1970 = vadd.f32 %v1720, %v1934
      %v1971 = vadd.f32 %v1721, %v1939
      %v1972 = vadd.f32 %v1722, %v1942
      %v1973 = vadd.f32 %v1723, %v1947
      %v1974 = vadd.f32 %v1724, %v1950
      %v1975 = vadd.f32 %v1725, %v1955
      %v1976 = vadd.f32 %v1726, %v1958
      %1977 = vst [vmem:[#allocation2] sm:$0xff] %v1961
      %1978 = vst [vmem:[#allocation2 + $0x8] sm:$0xff] %v1962
      %1979 = vst [vmem:[#allocation2 + $0x10] sm:$0xff] %v1963
      %1980 = vst [vmem:[#allocation2 + $0x18] sm:$0xff] %v1964
      %1981 = vst [vmem:[#allocation2 + $0x20] sm:$0xff] %v1965
      %1982 = vst [vmem:[#allocation2 + $0x28] sm:$0xff] %v1966
      %1983 = vst [vmem:[#allocation2 + $0x30] sm:$0xff] %v1967
      %1984 = vst [vmem:[#allocation2 + $0x38] sm:$0xff] %v1968
      %1985 = vst [vmem:[#allocation2 + $0x40] sm:$0xff] %v1969
      %1986 = vst [vmem:[#allocation2 + $0x48] sm:$0xff] %v1970
      %1987 = vst [vmem:[#allocation2 + $0x50] sm:$0xff] %v1971
      %1988 = vst [vmem:[#allocation2 + $0x58] sm:$0xff] %v1972
      %1989 = vst [vmem:[#allocation2 + $0x60] sm:$0xff] %v1973
      %1990 = vst [vmem:[#allocation2 + $0x68] sm:$0xff] %v1974
      %1991 = vst [vmem:[#allocation2 + $0x70] sm:$0xff] %v1975
      %1992 = vst [vmem:[#allocation2 + $0x78] sm:$0xff] %v1976
      %s1993 = sadd.s32 %s197, 2
      %s1994 = smul.u32 %s1993, 3
      %s1995 = smul.addr %s1994, 4
      %s1996 = scalar_lea.vmem %s184, %s1995
      %v1997 = vld [vmem:[%s1996] sm:$0xf]
      %v1998 = vld [vmem:[%s1996 + $0x4] sm:$0xf]
      %v1999 = vld [vmem:[%s1996 + $0xc] sm:$0xf]
      %v2000 = vld [vmem:[%s1996 + $0x10] sm:$0xf]
      %v2001 = vld [vmem:[%s1996 + $0x18] sm:$0xf]
      %v2002 = vld [vmem:[%s1996 + $0x1c] sm:$0xf]
      %v2003 = vld [vmem:[%s1996 + $0x24] sm:$0xf]
      %v2004 = vld [vmem:[%s1996 + $0x28] sm:$0xf]
      %v2005 = vld [vmem:[%s1996 + $0x30] sm:$0xf]
      %v2006 = vld [vmem:[%s1996 + $0x34] sm:$0xf]
      %v2007 = vld [vmem:[%s1996 + $0x3c] sm:$0xf]
      %v2008 = vld [vmem:[%s1996 + $0x40] sm:$0xf]
      %v2009 = vld [vmem:[%s1996 + $0x48] sm:$0xf]
      %v2010 = vld [vmem:[%s1996 + $0x4c] sm:$0xf]
      %v2011 = vld [vmem:[%s1996 + $0x54] sm:$0xf]
      %v2012 = vld [vmem:[%s1996 + $0x58] sm:$0xf]
      %v2013 = vld [vmem:[%s1996 + $0x8] sm:$0x1]
      %v2014 = vld [vmem:[%s1996 + $0x14] sm:$0x1]
      %v2015 = vld [vmem:[%s1996 + $0x20] sm:$0x1]
      %v2016 = vld [vmem:[%s1996 + $0x2c] sm:$0x1]
      %v2017 = vld [vmem:[%s1996 + $0x38] sm:$0x1]
      %v2018 = vld [vmem:[%s1996 + $0x44] sm:$0x1]
      %v2019 = vld [vmem:[%s1996 + $0x50] sm:$0x1]
      %v2020 = vld [vmem:[%s1996 + $0x5c] sm:$0x1]
      %v2021 = vld [vmem:[%s1996] sm:$0xe]
      %v2022 = vld [vmem:[%s1996 + $0xc] sm:$0xe]
      %v2023 = vld [vmem:[%s1996 + $0x18] sm:$0xe]
      %v2024 = vld [vmem:[%s1996 + $0x24] sm:$0xe]
      %v2025 = vld [vmem:[%s1996 + $0x30] sm:$0xe]
      %v2026 = vld [vmem:[%s1996 + $0x3c] sm:$0xe]
      %v2027 = vld [vmem:[%s1996 + $0x48] sm:$0xe]
      %v2028 = vld [vmem:[%s1996 + $0x54] sm:$0xe]
      %v2029 = vld [vmem:[%s1996 + $0x8] sm:$0x3]
      %v2030 = vld [vmem:[%s1996 + $0x14] sm:$0x3]
      %v2031 = vld [vmem:[%s1996 + $0x20] sm:$0x3]
      %v2032 = vld [vmem:[%s1996 + $0x2c] sm:$0x3]
      %v2033 = vld [vmem:[%s1996 + $0x38] sm:$0x3]
      %v2034 = vld [vmem:[%s1996 + $0x44] sm:$0x3]
      %v2035 = vld [vmem:[%s1996 + $0x50] sm:$0x3]
      %v2036 = vld [vmem:[%s1996 + $0x5c] sm:$0x3]
      %v2037 = vld [vmem:[%s1996] sm:$0xc]
      %v2038 = vld [vmem:[%s1996 + $0xc] sm:$0xc]
      %v2039 = vld [vmem:[%s1996 + $0x18] sm:$0xc]
      %v2040 = vld [vmem:[%s1996 + $0x24] sm:$0xc]
      %v2041 = vld [vmem:[%s1996 + $0x30] sm:$0xc]
      %v2042 = vld [vmem:[%s1996 + $0x3c] sm:$0xc]
      %v2043 = vld [vmem:[%s1996 + $0x48] sm:$0xc]
      %v2044 = vld [vmem:[%s1996 + $0x54] sm:$0xc]
      %v2061 = vunpack.c.l.b16 %v1997
      %v2062 = vunpack.c.l.b16 %v1998
      %v2063 = vunpack.c.l.b16 %v1999
      %v2064 = vunpack.c.l.b16 %v2000
      %v2065 = vunpack.c.l.b16 %v2001
      %v2066 = vunpack.c.l.b16 %v2002
      %v2067 = vunpack.c.l.b16 %v2003
      %v2068 = vunpack.c.l.b16 %v2004
      %v2069 = vunpack.c.l.b16 %v2005
      %v2070 = vunpack.c.l.b16 %v2006
      %v2071 = vunpack.c.l.b16 %v2007
      %v2072 = vunpack.c.l.b16 %v2008
      %v2073 = vunpack.c.l.b16 %v2009
      %v2074 = vunpack.c.l.b16 %v2010
      %v2075 = vunpack.c.l.b16 %v2011
      %v2076 = vunpack.c.l.b16 %v2012
      %v2077 = vpack.c.b16 %v2062, %v2061
      %v2078 = vpack.c.b16 %v2064, %v2063
      %v2079 = vpack.c.b16 %v2066, %v2065
      %v2080 = vpack.c.b16 %v2068, %v2067
      %v2081 = vpack.c.b16 %v2070, %v2069
      %v2082 = vpack.c.b16 %v2072, %v2071
      %v2083 = vpack.c.b16 %v2074, %v2073
      %v2084 = vpack.c.b16 %v2076, %v2075
      %v2093 = vunpack.c.l.b16 %v2013
      %v2094 = vunpack.c.l.b16 %v2014
      %v2095 = vunpack.c.l.b16 %v2015
      %v2096 = vunpack.c.l.b16 %v2016
      %v2097 = vunpack.c.l.b16 %v2017
      %v2098 = vunpack.c.l.b16 %v2018
      %v2099 = vunpack.c.l.b16 %v2019
      %v2100 = vunpack.c.l.b16 %v2020
      %v2101 = vpack.c.b16 %v2093, %v2093
      %v2102 = vpack.c.b16 %v2094, %v2094
      %v2103 = vpack.c.b16 %v2095, %v2095
      %v2104 = vpack.c.b16 %v2096, %v2096
      %v2105 = vpack.c.b16 %v2097, %v2097
      %v2106 = vpack.c.b16 %v2098, %v2098
      %v2107 = vpack.c.b16 %v2099, %v2099
      %v2108 = vpack.c.b16 %v2100, %v2100
      %v2110 = vshrl.u32 %v2077, 16
      %v2112 = vshll.u32 %v2077, 16
      %v2114 = vrot.slane %v2112, 1
      %v2115 = vor.u32 %v2110, %v2114
      %v2117 = vshll.u32 %v2101, 16
      %v2119 = vrot.slane %v2117, 1
      %v2120 = vsel %vm329, %v2115, %v2119
      %v2122 = vshrl.u32 %v2078, 16
      %v2124 = vshll.u32 %v2078, 16
      %v2126 = vrot.slane %v2124, 1
      %v2127 = vor.u32 %v2122, %v2126
      %v2129 = vshll.u32 %v2102, 16
      %v2131 = vrot.slane %v2129, 1
      %v2132 = vsel %vm329, %v2127, %v2131
      %v2134 = vshrl.u32 %v2079, 16
      %v2136 = vshll.u32 %v2079, 16
      %v2138 = vrot.slane %v2136, 1
      %v2139 = vor.u32 %v2134, %v2138
      %v2141 = vshll.u32 %v2103, 16
      %v2143 = vrot.slane %v2141, 1
      %v2144 = vsel %vm329, %v2139, %v2143
      %v2146 = vshrl.u32 %v2080, 16
      %v2148 = vshll.u32 %v2080, 16
      %v2150 = vrot.slane %v2148, 1
      %v2151 = vor.u32 %v2146, %v2150
      %v2153 = vshll.u32 %v2104, 16
      %v2155 = vrot.slane %v2153, 1
      %v2156 = vsel %vm329, %v2151, %v2155
      %v2158 = vshrl.u32 %v2081, 16
      %v2160 = vshll.u32 %v2081, 16
      %v2162 = vrot.slane %v2160, 1
      %v2163 = vor.u32 %v2158, %v2162
      %v2165 = vshll.u32 %v2105, 16
      %v2167 = vrot.slane %v2165, 1
      %v2168 = vsel %vm329, %v2163, %v2167
      %v2170 = vshrl.u32 %v2082, 16
      %v2172 = vshll.u32 %v2082, 16
      %v2174 = vrot.slane %v2172, 1
      %v2175 = vor.u32 %v2170, %v2174
      %v2177 = vshll.u32 %v2106, 16
      %v2179 = vrot.slane %v2177, 1
      %v2180 = vsel %vm329, %v2175, %v2179
      %v2182 = vshrl.u32 %v2083, 16
      %v2184 = vshll.u32 %v2083, 16
      %v2186 = vrot.slane %v2184, 1
      %v2187 = vor.u32 %v2182, %v2186
      %v2189 = vshll.u32 %v2107, 16
      %v2191 = vrot.slane %v2189, 1
      %v2192 = vsel %vm329, %v2187, %v2191
      %v2194 = vshrl.u32 %v2084, 16
      %v2196 = vshll.u32 %v2084, 16
      %v2198 = vrot.slane %v2196, 1
      %v2199 = vor.u32 %v2194, %v2198
      %v2201 = vshll.u32 %v2108, 16
      %v2203 = vrot.slane %v2201, 1
      %v2204 = vsel %vm329, %v2199, %v2203
      %2205 = vrot.lane.b32.xlu0 %v2120, 48
      %v2206 = vpop.permute.xlu0 %2205
      %2207 = vrot.lane.b32.xlu0 %v2132, 48
      %v2208 = vpop.permute.xlu0 %2207
      %2209 = vrot.lane.b32.xlu0 %v2144, 48
      %v2210 = vpop.permute.xlu0 %2209
      %2211 = vrot.lane.b32.xlu0 %v2156, 48
      %v2212 = vpop.permute.xlu0 %2211
      %2213 = vrot.lane.b32.xlu0 %v2168, 48
      %v2214 = vpop.permute.xlu0 %2213
      %2215 = vrot.lane.b32.xlu0 %v2180, 48
      %v2216 = vpop.permute.xlu0 %2215
      %2217 = vrot.lane.b32.xlu0 %v2192, 48
      %v2218 = vpop.permute.xlu0 %2217
      %2219 = vrot.lane.b32.xlu0 %v2204, 48
      %v2220 = vpop.permute.xlu0 %2219
      %v2229 = vunpack.c.l.b16 %v2021
      %v2230 = vunpack.c.l.b16 %v2022
      %v2231 = vunpack.c.l.b16 %v2023
      %v2232 = vunpack.c.l.b16 %v2024
      %v2233 = vunpack.c.l.b16 %v2025
      %v2234 = vunpack.c.l.b16 %v2026
      %v2235 = vunpack.c.l.b16 %v2027
      %v2236 = vunpack.c.l.b16 %v2028
      %v2237 = vpack.c.b16 %v2062, %v2229
      %v2238 = vpack.c.b16 %v2064, %v2230
      %v2239 = vpack.c.b16 %v2066, %v2231
      %v2240 = vpack.c.b16 %v2068, %v2232
      %v2241 = vpack.c.b16 %v2070, %v2233
      %v2242 = vpack.c.b16 %v2072, %v2234
      %v2243 = vpack.c.b16 %v2074, %v2235
      %v2244 = vpack.c.b16 %v2076, %v2236
      %v2245 = vrot.slane %v2237, 1
      %v2246 = vrot.slane %v2101, 1
      %v2247 = vsel %vm466, %v2245, %v2246
      %v2248 = vrot.slane %v2238, 1
      %v2249 = vrot.slane %v2102, 1
      %v2250 = vsel %vm466, %v2248, %v2249
      %v2251 = vrot.slane %v2239, 1
      %v2252 = vrot.slane %v2103, 1
      %v2253 = vsel %vm466, %v2251, %v2252
      %v2254 = vrot.slane %v2240, 1
      %v2255 = vrot.slane %v2104, 1
      %v2256 = vsel %vm466, %v2254, %v2255
      %v2257 = vrot.slane %v2241, 1
      %v2258 = vrot.slane %v2105, 1
      %v2259 = vsel %vm466, %v2257, %v2258
      %v2260 = vrot.slane %v2242, 1
      %v2261 = vrot.slane %v2106, 1
      %v2262 = vsel %vm466, %v2260, %v2261
      %v2263 = vrot.slane %v2243, 1
      %v2264 = vrot.slane %v2107, 1
      %v2265 = vsel %vm466, %v2263, %v2264
      %v2266 = vrot.slane %v2244, 1
      %v2267 = vrot.slane %v2108, 1
      %v2268 = vsel %vm466, %v2266, %v2267
      %2269 = vrot.lane.b32.xlu0 %v2247, 96
      %v2270 = vpop.permute.xlu0 %2269
      %2271 = vrot.lane.b32.xlu0 %v2250, 96
      %v2272 = vpop.permute.xlu0 %2271
      %2273 = vrot.lane.b32.xlu0 %v2253, 96
      %v2274 = vpop.permute.xlu0 %2273
      %2275 = vrot.lane.b32.xlu0 %v2256, 96
      %v2276 = vpop.permute.xlu0 %2275
      %2277 = vrot.lane.b32.xlu0 %v2259, 96
      %v2278 = vpop.permute.xlu0 %2277
      %2279 = vrot.lane.b32.xlu0 %v2262, 96
      %v2280 = vpop.permute.xlu0 %2279
      %2281 = vrot.lane.b32.xlu0 %v2265, 96
      %v2282 = vpop.permute.xlu0 %2281
      %2283 = vrot.lane.b32.xlu0 %v2268, 96
      %v2284 = vpop.permute.xlu0 %2283
      %v2293 = vunpack.c.l.b16 %v2029
      %v2294 = vunpack.c.l.b16 %v2030
      %v2295 = vunpack.c.l.b16 %v2031
      %v2296 = vunpack.c.l.b16 %v2032
      %v2297 = vunpack.c.l.b16 %v2033
      %v2298 = vunpack.c.l.b16 %v2034
      %v2299 = vunpack.c.l.b16 %v2035
      %v2300 = vunpack.c.l.b16 %v2036
      %v2301 = vpack.c.b16 %v2293, %v2293
      %v2302 = vpack.c.b16 %v2294, %v2294
      %v2303 = vpack.c.b16 %v2295, %v2295
      %v2304 = vpack.c.b16 %v2296, %v2296
      %v2305 = vpack.c.b16 %v2297, %v2297
      %v2306 = vpack.c.b16 %v2298, %v2298
      %v2307 = vpack.c.b16 %v2299, %v2299
      %v2308 = vpack.c.b16 %v2300, %v2300
      %v2310 = vshrl.u32 %v2237, 16
      %v2312 = vrot.slane %v2310, 1
      %v2313 = vshll.u32 %v2237, 16
      %v2315 = vrot.slane %v2313, 2
      %v2316 = vor.u32 %v2312, %v2315
      %v2318 = vshrl.u32 %v2301, 16
      %v2320 = vrot.slane %v2318, 1
      %v2321 = vshll.u32 %v2301, 16
      %v2323 = vrot.slane %v2321, 2
      %v2324 = vor.u32 %v2320, %v2323
      %v2325 = vsel %vm531, %v2316, %v2324
      %v2327 = vshrl.u32 %v2238, 16
      %v2329 = vrot.slane %v2327, 1
      %v2330 = vshll.u32 %v2238, 16
      %v2332 = vrot.slane %v2330, 2
      %v2333 = vor.u32 %v2329, %v2332
      %v2335 = vshrl.u32 %v2302, 16
      %v2337 = vrot.slane %v2335, 1
      %v2338 = vshll.u32 %v2302, 16
      %v2340 = vrot.slane %v2338, 2
      %v2341 = vor.u32 %v2337, %v2340
      %v2342 = vsel %vm531, %v2333, %v2341
      %v2344 = vshrl.u32 %v2239, 16
      %v2346 = vrot.slane %v2344, 1
      %v2347 = vshll.u32 %v2239, 16
      %v2349 = vrot.slane %v2347, 2
      %v2350 = vor.u32 %v2346, %v2349
      %v2352 = vshrl.u32 %v2303, 16
      %v2354 = vrot.slane %v2352, 1
      %v2355 = vshll.u32 %v2303, 16
      %v2357 = vrot.slane %v2355, 2
      %v2358 = vor.u32 %v2354, %v2357
      %v2359 = vsel %vm531, %v2350, %v2358
      %v2361 = vshrl.u32 %v2240, 16
      %v2363 = vrot.slane %v2361, 1
      %v2364 = vshll.u32 %v2240, 16
      %v2366 = vrot.slane %v2364, 2
      %v2367 = vor.u32 %v2363, %v2366
      %v2369 = vshrl.u32 %v2304, 16
      %v2371 = vrot.slane %v2369, 1
      %v2372 = vshll.u32 %v2304, 16
      %v2374 = vrot.slane %v2372, 2
      %v2375 = vor.u32 %v2371, %v2374
      %v2376 = vsel %vm531, %v2367, %v2375
      %v2378 = vshrl.u32 %v2241, 16
      %v2380 = vrot.slane %v2378, 1
      %v2381 = vshll.u32 %v2241, 16
      %v2383 = vrot.slane %v2381, 2
      %v2384 = vor.u32 %v2380, %v2383
      %v2386 = vshrl.u32 %v2305, 16
      %v2388 = vrot.slane %v2386, 1
      %v2389 = vshll.u32 %v2305, 16
      %v2391 = vrot.slane %v2389, 2
      %v2392 = vor.u32 %v2388, %v2391
      %v2393 = vsel %vm531, %v2384, %v2392
      %v2395 = vshrl.u32 %v2242, 16
      %v2397 = vrot.slane %v2395, 1
      %v2398 = vshll.u32 %v2242, 16
      %v2400 = vrot.slane %v2398, 2
      %v2401 = vor.u32 %v2397, %v2400
      %v2403 = vshrl.u32 %v2306, 16
      %v2405 = vrot.slane %v2403, 1
      %v2406 = vshll.u32 %v2306, 16
      %v2408 = vrot.slane %v2406, 2
      %v2409 = vor.u32 %v2405, %v2408
      %v2410 = vsel %vm531, %v2401, %v2409
      %v2412 = vshrl.u32 %v2243, 16
      %v2414 = vrot.slane %v2412, 1
      %v2415 = vshll.u32 %v2243, 16
      %v2417 = vrot.slane %v2415, 2
      %v2418 = vor.u32 %v2414, %v2417
      %v2420 = vshrl.u32 %v2307, 16
      %v2422 = vrot.slane %v2420, 1
      %v2423 = vshll.u32 %v2307, 16
      %v2425 = vrot.slane %v2423, 2
      %v2426 = vor.u32 %v2422, %v2425
      %v2427 = vsel %vm531, %v2418, %v2426
      %v2429 = vshrl.u32 %v2244, 16
      %v2431 = vrot.slane %v2429, 1
      %v2432 = vshll.u32 %v2244, 16
      %v2434 = vrot.slane %v2432, 2
      %v2435 = vor.u32 %v2431, %v2434
      %v2437 = vshrl.u32 %v2308, 16
      %v2439 = vrot.slane %v2437, 1
      %v2440 = vshll.u32 %v2308, 16
      %v2442 = vrot.slane %v2440, 2
      %v2443 = vor.u32 %v2439, %v2442
      %v2444 = vsel %vm531, %v2435, %v2443
      %2445 = vrot.lane.b32.xlu0 %v2325, 16
      %v2446 = vpop.permute.xlu0 %2445
      %2447 = vrot.lane.b32.xlu0 %v2342, 16
      %v2448 = vpop.permute.xlu0 %2447
      %2449 = vrot.lane.b32.xlu0 %v2359, 16
      %v2450 = vpop.permute.xlu0 %2449
      %2451 = vrot.lane.b32.xlu0 %v2376, 16
      %v2452 = vpop.permute.xlu0 %2451
      %2453 = vrot.lane.b32.xlu0 %v2393, 16
      %v2454 = vpop.permute.xlu0 %2453
      %2455 = vrot.lane.b32.xlu0 %v2410, 16
      %v2456 = vpop.permute.xlu0 %2455
      %2457 = vrot.lane.b32.xlu0 %v2427, 16
      %v2458 = vpop.permute.xlu0 %2457
      %2459 = vrot.lane.b32.xlu0 %v2444, 16
      %v2460 = vpop.permute.xlu0 %2459
      %v2469 = vunpack.c.l.b16 %v2037
      %v2470 = vunpack.c.l.b16 %v2038
      %v2471 = vunpack.c.l.b16 %v2039
      %v2472 = vunpack.c.l.b16 %v2040
      %v2473 = vunpack.c.l.b16 %v2041
      %v2474 = vunpack.c.l.b16 %v2042
      %v2475 = vunpack.c.l.b16 %v2043
      %v2476 = vunpack.c.l.b16 %v2044
      %v2477 = vpack.c.b16 %v2062, %v2469
      %v2478 = vpack.c.b16 %v2064, %v2470
      %v2479 = vpack.c.b16 %v2066, %v2471
      %v2480 = vpack.c.b16 %v2068, %v2472
      %v2481 = vpack.c.b16 %v2070, %v2473
      %v2482 = vpack.c.b16 %v2072, %v2474
      %v2483 = vpack.c.b16 %v2074, %v2475
      %v2484 = vpack.c.b16 %v2076, %v2476
      %v2485 = vrot.slane %v2477, 2
      %v2486 = vrot.slane %v2301, 2
      %v2487 = vsel %vm708, %v2485, %v2486
      %v2488 = vrot.slane %v2478, 2
      %v2489 = vrot.slane %v2302, 2
      %v2490 = vsel %vm708, %v2488, %v2489
      %v2491 = vrot.slane %v2479, 2
      %v2492 = vrot.slane %v2303, 2
      %v2493 = vsel %vm708, %v2491, %v2492
      %v2494 = vrot.slane %v2480, 2
      %v2495 = vrot.slane %v2304, 2
      %v2496 = vsel %vm708, %v2494, %v2495
      %v2497 = vrot.slane %v2481, 2
      %v2498 = vrot.slane %v2305, 2
      %v2499 = vsel %vm708, %v2497, %v2498
      %v2500 = vrot.slane %v2482, 2
      %v2501 = vrot.slane %v2306, 2
      %v2502 = vsel %vm708, %v2500, %v2501
      %v2503 = vrot.slane %v2483, 2
      %v2504 = vrot.slane %v2307, 2
      %v2505 = vsel %vm708, %v2503, %v2504
      %v2506 = vrot.slane %v2484, 2
      %v2507 = vrot.slane %v2308, 2
      %v2508 = vsel %vm708, %v2506, %v2507
      %2509 = vrot.lane.b32.xlu0 %v2487, 64
      %v2510 = vpop.permute.xlu0 %2509
      %2511 = vrot.lane.b32.xlu0 %v2490, 64
      %v2512 = vpop.permute.xlu0 %2511
      %2513 = vrot.lane.b32.xlu0 %v2493, 64
      %v2514 = vpop.permute.xlu0 %2513
      %2515 = vrot.lane.b32.xlu0 %v2496, 64
      %v2516 = vpop.permute.xlu0 %2515
      %2517 = vrot.lane.b32.xlu0 %v2499, 64
      %v2518 = vpop.permute.xlu0 %2517
      %2519 = vrot.lane.b32.xlu0 %v2502, 64
      %v2520 = vpop.permute.xlu0 %2519
      %2521 = vrot.lane.b32.xlu0 %v2505, 64
      %v2522 = vpop.permute.xlu0 %2521
      %2523 = vrot.lane.b32.xlu0 %v2508, 64
      %v2524 = vpop.permute.xlu0 %2523
      %v2526 = vsel %vm749, %v2077, %v2206
      %v2528 = vsel %vm749, %v2078, %v2208
      %v2530 = vsel %vm749, %v2079, %v2210
      %v2532 = vsel %vm749, %v2080, %v2212
      %v2534 = vsel %vm749, %v2081, %v2214
      %v2536 = vsel %vm749, %v2082, %v2216
      %v2538 = vsel %vm749, %v2083, %v2218
      %v2540 = vsel %vm749, %v2084, %v2220
      %v2542 = vsel %vm766, %v2526, %v2270
      %v2545 = vsel %vm766, %v2528, %v2272
      %v2548 = vsel %vm766, %v2530, %v2274
      %v2551 = vsel %vm766, %v2532, %v2276
      %v2554 = vsel %vm766, %v2534, %v2278
      %v2557 = vsel %vm766, %v2536, %v2280
      %v2560 = vsel %vm766, %v2538, %v2282
      %v2563 = vsel %vm766, %v2540, %v2284
      %v2566 = vsel %vm791, %v2270, %v2446
      %v2568 = vsel %vm791, %v2272, %v2448
      %v2570 = vsel %vm791, %v2274, %v2450
      %v2572 = vsel %vm791, %v2276, %v2452
      %v2574 = vsel %vm791, %v2278, %v2454
      %v2576 = vsel %vm791, %v2280, %v2456
      %v2578 = vsel %vm791, %v2282, %v2458
      %v2580 = vsel %vm791, %v2284, %v2460
      %v2582 = vsel %vm808, %v2566, %v2510
      %v2584 = vsel %vm808, %v2568, %v2512
      %v2586 = vsel %vm808, %v2570, %v2514
      %v2588 = vsel %vm808, %v2572, %v2516
      %v2590 = vsel %vm808, %v2574, %v2518
      %v2592 = vsel %vm808, %v2576, %v2520
      %v2594 = vsel %vm808, %v2578, %v2522
      %v2596 = vsel %vm808, %v2580, %v2524
      %v2597 = vld [vmem:[#allocation2] sm:$0xff]
      %v2598 = vld [vmem:[#allocation2 + $0x8] sm:$0xff]
      %v2599 = vld [vmem:[#allocation2 + $0x10] sm:$0xff]
      %v2600 = vld [vmem:[#allocation2 + $0x18] sm:$0xff]
      %v2601 = vld [vmem:[#allocation2 + $0x20] sm:$0xff]
      %v2602 = vld [vmem:[#allocation2 + $0x28] sm:$0xff]
      %v2603 = vld [vmem:[#allocation2 + $0x30] sm:$0xff]
      %v2604 = vld [vmem:[#allocation2 + $0x38] sm:$0xff]
      %v2605 = vld [vmem:[#allocation2 + $0x40] sm:$0xff]
      %v2606 = vld [vmem:[#allocation2 + $0x48] sm:$0xff]
      %v2607 = vld [vmem:[#allocation2 + $0x50] sm:$0xff]
      %v2608 = vld [vmem:[#allocation2 + $0x58] sm:$0xff]
      %v2609 = vld [vmem:[#allocation2 + $0x60] sm:$0xff]
      %v2610 = vld [vmem:[#allocation2 + $0x68] sm:$0xff]
      %v2611 = vld [vmem:[#allocation2 + $0x70] sm:$0xff]
      %v2612 = vld [vmem:[#allocation2 + $0x78] sm:$0xff]
      %s2613 = scalar_lea.vmem %s1, 240
      %v2614 = vld [vmem:[%s2613] sm:$0xf]
      %v2615 = vld [vmem:[%s2613 + $0x4] sm:$0xf]
      %v2616 = vld [vmem:[%s2613 + $0x8] sm:$0xf]
      %v2617 = vld [vmem:[%s2613 + $0xc] sm:$0xf]
      %v2618 = vld [vmem:[%s2613 + $0x10] sm:$0xf]
      %v2619 = vld [vmem:[%s2613 + $0x14] sm:$0xf]
      %v2620 = vld [vmem:[%s2613 + $0x18] sm:$0xf]
      %v2621 = vld [vmem:[%s2613 + $0x1c] sm:$0xf]
      %v2622 = vld [vmem:[%s2613 + $0x20] sm:$0xf]
      %v2623 = vld [vmem:[%s2613 + $0x24] sm:$0xf]
      %v2624 = vld [vmem:[%s2613 + $0x28] sm:$0xf]
      %v2625 = vld [vmem:[%s2613 + $0x2c] sm:$0xf]
      %v2626 = vld [vmem:[%s2613 + $0x30] sm:$0xf]
      %v2627 = vld [vmem:[%s2613 + $0x34] sm:$0xf]
      %v2628 = vld [vmem:[%s2613 + $0x38] sm:$0xf]
      %v2629 = vld [vmem:[%s2613 + $0x3c] sm:$0xf]
      %v2630 = vld [vmem:[%s2613 + $0x40] sm:$0xf]
      %v2631 = vld [vmem:[%s2613 + $0x44] sm:$0xf]
      %v2632 = vld [vmem:[%s2613 + $0x48] sm:$0xf]
      %v2633 = vld [vmem:[%s2613 + $0x4c] sm:$0xf]
      %v2634 = vld [vmem:[%s2613 + $0x50] sm:$0xf]
      %v2635 = vld [vmem:[%s2613 + $0x54] sm:$0xf]
      %v2636 = vld [vmem:[%s2613 + $0x58] sm:$0xf]
      %v2637 = vld [vmem:[%s2613 + $0x5c] sm:$0xf]
      %v2638 = vld [vmem:[%s2613 + $0x60] sm:$0xf]
      %v2639 = vld [vmem:[%s2613 + $0x64] sm:$0xf]
      %v2640 = vld [vmem:[%s2613 + $0x68] sm:$0xf]
      %v2641 = vld [vmem:[%s2613 + $0x6c] sm:$0xf]
      %v2642 = vld [vmem:[%s2613 + $0x70] sm:$0xf]
      %v2643 = vld [vmem:[%s2613 + $0x74] sm:$0xf]
      %v2674 = vunpack.c.l.b16 %v2614
      %v2675 = vunpack.c.l.b16 %v2615
      %v2676 = vunpack.c.l.b16 %v2616
      %v2677 = vunpack.c.l.b16 %v2617
      %v2678 = vunpack.c.l.b16 %v2618
      %v2679 = vunpack.c.l.b16 %v2619
      %v2680 = vunpack.c.l.b16 %v2620
      %v2681 = vunpack.c.l.b16 %v2621
      %v2682 = vunpack.c.l.b16 %v2622
      %v2683 = vunpack.c.l.b16 %v2623
      %v2684 = vunpack.c.l.b16 %v2624
      %v2685 = vunpack.c.l.b16 %v2625
      %v2686 = vunpack.c.l.b16 %v2626
      %v2687 = vunpack.c.l.b16 %v2627
      %v2688 = vunpack.c.l.b16 %v2628
      %v2689 = vunpack.c.l.b16 %v2629
      %v2690 = vunpack.c.l.b16 %v2630
      %v2691 = vunpack.c.l.b16 %v2631
      %v2692 = vunpack.c.l.b16 %v2632
      %v2693 = vunpack.c.l.b16 %v2633
      %v2694 = vunpack.c.l.b16 %v2634
      %v2695 = vunpack.c.l.b16 %v2635
      %v2696 = vunpack.c.l.b16 %v2636
      %v2697 = vunpack.c.l.b16 %v2637
      %v2698 = vunpack.c.l.b16 %v2638
      %v2699 = vunpack.c.l.b16 %v2639
      %v2700 = vunpack.c.l.b16 %v2640
      %v2701 = vunpack.c.l.b16 %v2641
      %v2702 = vunpack.c.l.b16 %v2642
      %v2703 = vunpack.c.l.b16 %v2643
      %v2704 = vpack.c.b16 %v2675, %v2674
      %v2705 = vpack.c.b16 %v2677, %v2676
      %v2706 = vpack.c.b16 %v2679, %v2678
      %v2707 = vpack.c.b16 %v2681, %v2680
      %v2708 = vpack.c.b16 %v2683, %v2682
      %v2709 = vpack.c.b16 %v2685, %v2684
      %v2710 = vpack.c.b16 %v2687, %v2686
      %v2711 = vpack.c.b16 %v2689, %v2688
      %v2712 = vpack.c.b16 %v2691, %v2690
      %v2713 = vpack.c.b16 %v2693, %v2692
      %v2714 = vpack.c.b16 %v2695, %v2694
      %v2715 = vpack.c.b16 %v2697, %v2696
      %v2716 = vpack.c.b16 %v2699, %v2698
      %v2717 = vpack.c.b16 %v2701, %v2700
      %v2718 = vpack.c.b16 %v2703, %v2702
      %v2734 = vsel %vm961, %v2582, 0
      %v2736 = vsel %vm961, %v2584, 0
      %v2738 = vsel %vm961, %v2586, 0
      %v2740 = vsel %vm961, %v2588, 0
      %v2742 = vsel %vm961, %v2590, 0
      %v2744 = vsel %vm961, %v2592, 0
      %v2746 = vsel %vm961, %v2594, 0
      %v2748 = vsel %vm961, %v2596, 0
      %2750 = vmatprep.subr.bf16.mxu0 0
      %2751 = vmatpush1.bf16.msra.mxu0 %v2711
      %2752 = vmatprep.subr.bf16.mxu0 0
      %2753 = vmatpush1.bf16.msra.mxu0 %v2710
      %2754 = vmatprep.subr.bf16.mxu0 0
      %2755 = vmatpush1.bf16.msra.mxu0 %v2709
      %2756 = vmatprep.subr.bf16.mxu0 0
      %2757 = vmatpush1.bf16.msra.mxu0 %v2708
      %2758 = vmatprep.subr.bf16.mxu0 0
      %2759 = vmatpush1.bf16.msra.mxu0 %v2707
      %2760 = vmatprep.subr.bf16.mxu0 0
      %2761 = vmatpush1.bf16.msra.mxu0 %v2706
      %2762 = vmatprep.subr.bf16.mxu0 0
      %2763 = vmatpush1.bf16.msra.mxu0 %v2705
      %2764 = vmatprep.subr.bf16.mxu0 0
      %2765 = vmatpush1.bf16.msra.mxu0 %v2704
      %2766 = vmatprep.subr.bf16.mxu0 0
      %2767 = vmatpush2.bf16.msra.mxu0 0
      %2768 = vmatprep.subr.bf16.mxu0 0
      %2769 = vmatpush2.bf16.msra.mxu0 %v2718
      %2770 = vmatprep.subr.bf16.mxu0 0
      %2771 = vmatpush2.bf16.msra.mxu0 %v2717
      %2772 = vmatprep.subr.bf16.mxu0 0
      %2773 = vmatpush2.bf16.msra.mxu0 %v2716
      %2774 = vmatprep.subr.bf16.mxu0 0
      %2775 = vmatpush2.bf16.msra.mxu0 %v2715
      %2776 = vmatprep.subr.bf16.mxu0 0
      %2777 = vmatpush2.bf16.msra.mxu0 %v2714
      %2778 = vmatprep.subr.bf16.mxu0 0
      %2779 = vmatpush2.bf16.msra.mxu0 %v2713
      %2780 = vmatprep.subr.bf16.mxu0 0
      %2781 = vmatpush2.bf16.msra.mxu0 %v2712
      %2782 = vmatprep.mubr.bf16.mxu0 %v2734
      %2783 = vmatmul.mubr.bf16.gmra.mxu0 %v2542
      %v2784 = vpop.f32.mrf.mxu0
      %v2785 = vadd.f32 0.0, %v2784
      %v2786 = vpop.f32.mrf.mxu0
      %v2787 = vpop.f32.mrf.mxu0
      %v2788 = vadd.f32 0.0, %v2787
      %v2789 = vpop.f32.mrf.mxu0
      %2790 = vmatprep.mubr.bf16.mxu0 %v2736
      %2791 = vmatmul.mubr.bf16.gmra.mxu0 %v2545
      %v2792 = vpop.f32.mrf.mxu0
      %v2793 = vadd.f32 0.0, %v2792
      %v2794 = vpop.f32.mrf.mxu0
      %v2795 = vpop.f32.mrf.mxu0
      %v2796 = vadd.f32 0.0, %v2795
      %v2797 = vpop.f32.mrf.mxu0
      %2798 = vmatprep.mubr.bf16.mxu0 %v2738
      %2799 = vmatmul.mubr.bf16.gmra.mxu0 %v2548
      %v2800 = vpop.f32.mrf.mxu0
      %v2801 = vadd.f32 0.0, %v2800
      %v2802 = vpop.f32.mrf.mxu0
      %v2803 = vpop.f32.mrf.mxu0
      %v2804 = vadd.f32 0.0, %v2803
      %v2805 = vpop.f32.mrf.mxu0
      %2806 = vmatprep.mubr.bf16.mxu0 %v2740
      %2807 = vmatmul.mubr.bf16.gmra.mxu0 %v2551
      %v2808 = vpop.f32.mrf.mxu0
      %v2809 = vadd.f32 0.0, %v2808
      %v2810 = vpop.f32.mrf.mxu0
      %v2811 = vpop.f32.mrf.mxu0
      %v2812 = vadd.f32 0.0, %v2811
      %v2813 = vpop.f32.mrf.mxu0
      %2814 = vmatprep.mubr.bf16.mxu0 %v2742
      %2815 = vmatmul.mubr.bf16.gmra.mxu0 %v2554
      %v2816 = vpop.f32.mrf.mxu0
      %v2817 = vadd.f32 0.0, %v2816
      %v2818 = vpop.f32.mrf.mxu0
      %v2819 = vpop.f32.mrf.mxu0
      %v2820 = vadd.f32 0.0, %v2819
      %v2821 = vpop.f32.mrf.mxu0
      %2822 = vmatprep.mubr.bf16.mxu0 %v2744
      %2823 = vmatmul.mubr.bf16.gmra.mxu0 %v2557
      %v2824 = vpop.f32.mrf.mxu0
      %v2825 = vadd.f32 0.0, %v2824
      %v2826 = vpop.f32.mrf.mxu0
      %v2827 = vpop.f32.mrf.mxu0
      %v2828 = vadd.f32 0.0, %v2827
      %v2829 = vpop.f32.mrf.mxu0
      %2830 = vmatprep.mubr.bf16.mxu0 %v2746
      %2831 = vmatmul.mubr.bf16.gmra.mxu0 %v2560
      %v2832 = vpop.f32.mrf.mxu0
      %v2833 = vadd.f32 0.0, %v2832
      %v2834 = vpop.f32.mrf.mxu0
      %v2835 = vpop.f32.mrf.mxu0
      %v2836 = vadd.f32 0.0, %v2835
      %v2837 = vpop.f32.mrf.mxu0
      %2838 = vmatprep.mubr.bf16.mxu0 %v2748
      %2839 = vmatmul.mubr.bf16.gmra.mxu0 %v2563
      %v2840 = vpop.f32.mrf.mxu0
      %v2841 = vadd.f32 0.0, %v2840
      %v2842 = vpop.f32.mrf.mxu0
      %v2843 = vpop.f32.mrf.mxu0
      %v2844 = vadd.f32 0.0, %v2843
      %v2845 = vpop.f32.mrf.mxu0
      %2846 = vdwg.mxu0
      %v2847 = vadd.f32 %v2597, %v2785
      %v2848 = vadd.f32 %v2598, %v2788
      %v2849 = vadd.f32 %v2599, %v2793
      %v2850 = vadd.f32 %v2600, %v2796
      %v2851 = vadd.f32 %v2601, %v2801
      %v2852 = vadd.f32 %v2602, %v2804
      %v2853 = vadd.f32 %v2603, %v2809
      %v2854 = vadd.f32 %v2604, %v2812
      %v2855 = vadd.f32 %v2605, %v2817
      %v2856 = vadd.f32 %v2606, %v2820
      %v2857 = vadd.f32 %v2607, %v2825
      %v2858 = vadd.f32 %v2608, %v2828
      %v2859 = vadd.f32 %v2609, %v2833
      %v2860 = vadd.f32 %v2610, %v2836
      %v2861 = vadd.f32 %v2611, %v2841
      %v2862 = vadd.f32 %v2612, %v2844
      %2863 = vst [vmem:[#allocation2] sm:$0xff] %v2847
      %2864 = vst [vmem:[#allocation2 + $0x8] sm:$0xff] %v2848
      %2865 = vst [vmem:[#allocation2 + $0x10] sm:$0xff] %v2849
      %2866 = vst [vmem:[#allocation2 + $0x18] sm:$0xff] %v2850
      %2867 = vst [vmem:[#allocation2 + $0x20] sm:$0xff] %v2851
      %2868 = vst [vmem:[#allocation2 + $0x28] sm:$0xff] %v2852
      %2869 = vst [vmem:[#allocation2 + $0x30] sm:$0xff] %v2853
      %2870 = vst [vmem:[#allocation2 + $0x38] sm:$0xff] %v2854
      %2871 = vst [vmem:[#allocation2 + $0x40] sm:$0xff] %v2855
      %2872 = vst [vmem:[#allocation2 + $0x48] sm:$0xff] %v2856
      %2873 = vst [vmem:[#allocation2 + $0x50] sm:$0xff] %v2857
      %2874 = vst [vmem:[#allocation2 + $0x58] sm:$0xff] %v2858
      %2875 = vst [vmem:[#allocation2 + $0x60] sm:$0xff] %v2859
      %2876 = vst [vmem:[#allocation2 + $0x68] sm:$0xff] %v2860
      %2877 = vst [vmem:[#allocation2 + $0x70] sm:$0xff] %v2861
      %2878 = vst [vmem:[#allocation2 + $0x78] sm:$0xff] %v2862
      %s2879 = sadd.s32 %s197, 3
      %s2880 = smul.u32 %s2879, 3
      %s2881 = smul.addr %s2880, 4
      %s2882 = scalar_lea.vmem %s184, %s2881
      %v2883 = vld [vmem:[%s2882] sm:$0xf]
      %v2884 = vld [vmem:[%s2882 + $0x4] sm:$0xf]
      %v2885 = vld [vmem:[%s2882 + $0xc] sm:$0xf]
      %v2886 = vld [vmem:[%s2882 + $0x10] sm:$0xf]
      %v2887 = vld [vmem:[%s2882 + $0x18] sm:$0xf]
      %v2888 = vld [vmem:[%s2882 + $0x1c] sm:$0xf]
      %v2889 = vld [vmem:[%s2882 + $0x24] sm:$0xf]
      %v2890 = vld [vmem:[%s2882 + $0x28] sm:$0xf]
      %v2891 = vld [vmem:[%s2882 + $0x30] sm:$0xf]
      %v2892 = vld [vmem:[%s2882 + $0x34] sm:$0xf]
      %v2893 = vld [vmem:[%s2882 + $0x3c] sm:$0xf]
      %v2894 = vld [vmem:[%s2882 + $0x40] sm:$0xf]
      %v2895 = vld [vmem:[%s2882 + $0x48] sm:$0xf]
      %v2896 = vld [vmem:[%s2882 + $0x4c] sm:$0xf]
      %v2897 = vld [vmem:[%s2882 + $0x54] sm:$0xf]
      %v2898 = vld [vmem:[%s2882 + $0x58] sm:$0xf]
      %v2899 = vld [vmem:[%s2882 + $0x8] sm:$0x1]
      %v2900 = vld [vmem:[%s2882 + $0x14] sm:$0x1]
      %v2901 = vld [vmem:[%s2882 + $0x20] sm:$0x1]
      %v2902 = vld [vmem:[%s2882 + $0x2c] sm:$0x1]
      %v2903 = vld [vmem:[%s2882 + $0x38] sm:$0x1]
      %v2904 = vld [vmem:[%s2882 + $0x44] sm:$0x1]
      %v2905 = vld [vmem:[%s2882 + $0x50] sm:$0x1]
      %v2906 = vld [vmem:[%s2882 + $0x5c] sm:$0x1]
      %v2907 = vld [vmem:[%s2882] sm:$0xe]
      %v2908 = vld [vmem:[%s2882 + $0xc] sm:$0xe]
      %v2909 = vld [vmem:[%s2882 + $0x18] sm:$0xe]
      %v2910 = vld [vmem:[%s2882 + $0x24] sm:$0xe]
      %v2911 = vld [vmem:[%s2882 + $0x30] sm:$0xe]
      %v2912 = vld [vmem:[%s2882 + $0x3c] sm:$0xe]
      %v2913 = vld [vmem:[%s2882 + $0x48] sm:$0xe]
      %v2914 = vld [vmem:[%s2882 + $0x54] sm:$0xe]
      %v2915 = vld [vmem:[%s2882 + $0x8] sm:$0x3]
      %v2916 = vld [vmem:[%s2882 + $0x14] sm:$0x3]
      %v2917 = vld [vmem:[%s2882 + $0x20] sm:$0x3]
      %v2918 = vld [vmem:[%s2882 + $0x2c] sm:$0x3]
      %v2919 = vld [vmem:[%s2882 + $0x38] sm:$0x3]
      %v2920 = vld [vmem:[%s2882 + $0x44] sm:$0x3]
      %v2921 = vld [vmem:[%s2882 + $0x50] sm:$0x3]
      %v2922 = vld [vmem:[%s2882 + $0x5c] sm:$0x3]
      %v2923 = vld [vmem:[%s2882] sm:$0xc]
      %v2924 = vld [vmem:[%s2882 + $0xc] sm:$0xc]
      %v2925 = vld [vmem:[%s2882 + $0x18] sm:$0xc]
      %v2926 = vld [vmem:[%s2882 + $0x24] sm:$0xc]
      %v2927 = vld [vmem:[%s2882 + $0x30] sm:$0xc]
      %v2928 = vld [vmem:[%s2882 + $0x3c] sm:$0xc]
      %v2929 = vld [vmem:[%s2882 + $0x48] sm:$0xc]
      %v2930 = vld [vmem:[%s2882 + $0x54] sm:$0xc]
      %v2947 = vunpack.c.l.b16 %v2883
      %v2948 = vunpack.c.l.b16 %v2884
      %v2949 = vunpack.c.l.b16 %v2885
      %v2950 = vunpack.c.l.b16 %v2886
      %v2951 = vunpack.c.l.b16 %v2887
      %v2952 = vunpack.c.l.b16 %v2888
      %v2953 = vunpack.c.l.b16 %v2889
      %v2954 = vunpack.c.l.b16 %v2890
      %v2955 = vunpack.c.l.b16 %v2891
      %v2956 = vunpack.c.l.b16 %v2892
      %v2957 = vunpack.c.l.b16 %v2893
      %v2958 = vunpack.c.l.b16 %v2894
      %v2959 = vunpack.c.l.b16 %v2895
      %v2960 = vunpack.c.l.b16 %v2896
      %v2961 = vunpack.c.l.b16 %v2897
      %v2962 = vunpack.c.l.b16 %v2898
      %v2963 = vpack.c.b16 %v2948, %v2947
      %v2964 = vpack.c.b16 %v2950, %v2949
      %v2965 = vpack.c.b16 %v2952, %v2951
      %v2966 = vpack.c.b16 %v2954, %v2953
      %v2967 = vpack.c.b16 %v2956, %v2955
      %v2968 = vpack.c.b16 %v2958, %v2957
      %v2969 = vpack.c.b16 %v2960, %v2959
      %v2970 = vpack.c.b16 %v2962, %v2961
      %v2979 = vunpack.c.l.b16 %v2899
      %v2980 = vunpack.c.l.b16 %v2900
      %v2981 = vunpack.c.l.b16 %v2901
      %v2982 = vunpack.c.l.b16 %v2902
      %v2983 = vunpack.c.l.b16 %v2903
      %v2984 = vunpack.c.l.b16 %v2904
      %v2985 = vunpack.c.l.b16 %v2905
      %v2986 = vunpack.c.l.b16 %v2906
      %v2987 = vpack.c.b16 %v2979, %v2979
      %v2988 = vpack.c.b16 %v2980, %v2980
      %v2989 = vpack.c.b16 %v2981, %v2981
      %v2990 = vpack.c.b16 %v2982, %v2982
      %v2991 = vpack.c.b16 %v2983, %v2983
      %v2992 = vpack.c.b16 %v2984, %v2984
      %v2993 = vpack.c.b16 %v2985, %v2985
      %v2994 = vpack.c.b16 %v2986, %v2986
      %v2996 = vshrl.u32 %v2963, 16
      %v2998 = vshll.u32 %v2963, 16
      %v3000 = vrot.slane %v2998, 1
      %v3001 = vor.u32 %v2996, %v3000
      %v3003 = vshll.u32 %v2987, 16
      %v3005 = vrot.slane %v3003, 1
      %v3006 = vsel %vm329, %v3001, %v3005
      %v3008 = vshrl.u32 %v2964, 16
      %v3010 = vshll.u32 %v2964, 16
      %v3012 = vrot.slane %v3010, 1
      %v3013 = vor.u32 %v3008, %v3012
      %v3015 = vshll.u32 %v2988, 16
      %v3017 = vrot.slane %v3015, 1
      %v3018 = vsel %vm329, %v3013, %v3017
      %v3020 = vshrl.u32 %v2965, 16
      %v3022 = vshll.u32 %v2965, 16
      %v3024 = vrot.slane %v3022, 1
      %v3025 = vor.u32 %v3020, %v3024
      %v3027 = vshll.u32 %v2989, 16
      %v3029 = vrot.slane %v3027, 1
      %v3030 = vsel %vm329, %v3025, %v3029
      %v3032 = vshrl.u32 %v2966, 16
      %v3034 = vshll.u32 %v2966, 16
      %v3036 = vrot.slane %v3034, 1
      %v3037 = vor.u32 %v3032, %v3036
      %v3039 = vshll.u32 %v2990, 16
      %v3041 = vrot.slane %v3039, 1
      %v3042 = vsel %vm329, %v3037, %v3041
      %v3044 = vshrl.u32 %v2967, 16
      %v3046 = vshll.u32 %v2967, 16
      %v3048 = vrot.slane %v3046, 1
      %v3049 = vor.u32 %v3044, %v3048
      %v3051 = vshll.u32 %v2991, 16
      %v3053 = vrot.slane %v3051, 1
      %v3054 = vsel %vm329, %v3049, %v3053
      %v3056 = vshrl.u32 %v2968, 16
      %v3058 = vshll.u32 %v2968, 16
      %v3060 = vrot.slane %v3058, 1
      %v3061 = vor.u32 %v3056, %v3060
      %v3063 = vshll.u32 %v2992, 16
      %v3065 = vrot.slane %v3063, 1
      %v3066 = vsel %vm329, %v3061, %v3065
      %v3068 = vshrl.u32 %v2969, 16
      %v3070 = vshll.u32 %v2969, 16
      %v3072 = vrot.slane %v3070, 1
      %v3073 = vor.u32 %v3068, %v3072
      %v3075 = vshll.u32 %v2993, 16
      %v3077 = vrot.slane %v3075, 1
      %v3078 = vsel %vm329, %v3073, %v3077
      %v3080 = vshrl.u32 %v2970, 16
      %v3082 = vshll.u32 %v2970, 16
      %v3084 = vrot.slane %v3082, 1
      %v3085 = vor.u32 %v3080, %v3084
      %v3087 = vshll.u32 %v2994, 16
      %v3089 = vrot.slane %v3087, 1
      %v3090 = vsel %vm329, %v3085, %v3089
      %3091 = vrot.lane.b32.xlu0 %v3006, 48
      %v3092 = vpop.permute.xlu0 %3091
      %3093 = vrot.lane.b32.xlu0 %v3018, 48
      %v3094 = vpop.permute.xlu0 %3093
      %3095 = vrot.lane.b32.xlu0 %v3030, 48
      %v3096 = vpop.permute.xlu0 %3095
      %3097 = vrot.lane.b32.xlu0 %v3042, 48
      %v3098 = vpop.permute.xlu0 %3097
      %3099 = vrot.lane.b32.xlu0 %v3054, 48
      %v3100 = vpop.permute.xlu0 %3099
      %3101 = vrot.lane.b32.xlu0 %v3066, 48
      %v3102 = vpop.permute.xlu0 %3101
      %3103 = vrot.lane.b32.xlu0 %v3078, 48
      %v3104 = vpop.permute.xlu0 %3103
      %3105 = vrot.lane.b32.xlu0 %v3090, 48
      %v3106 = vpop.permute.xlu0 %3105
      %v3115 = vunpack.c.l.b16 %v2907
      %v3116 = vunpack.c.l.b16 %v2908
      %v3117 = vunpack.c.l.b16 %v2909
      %v3118 = vunpack.c.l.b16 %v2910
      %v3119 = vunpack.c.l.b16 %v2911
      %v3120 = vunpack.c.l.b16 %v2912
      %v3121 = vunpack.c.l.b16 %v2913
      %v3122 = vunpack.c.l.b16 %v2914
      %v3123 = vpack.c.b16 %v2948, %v3115
      %v3124 = vpack.c.b16 %v2950, %v3116
      %v3125 = vpack.c.b16 %v2952, %v3117
      %v3126 = vpack.c.b16 %v2954, %v3118
      %v3127 = vpack.c.b16 %v2956, %v3119
      %v3128 = vpack.c.b16 %v2958, %v3120
      %v3129 = vpack.c.b16 %v2960, %v3121
      %v3130 = vpack.c.b16 %v2962, %v3122
      %v3131 = vrot.slane %v3123, 1
      %v3132 = vrot.slane %v2987, 1
      %v3133 = vsel %vm466, %v3131, %v3132
      %v3134 = vrot.slane %v3124, 1
      %v3135 = vrot.slane %v2988, 1
      %v3136 = vsel %vm466, %v3134, %v3135
      %v3137 = vrot.slane %v3125, 1
      %v3138 = vrot.slane %v2989, 1
      %v3139 = vsel %vm466, %v3137, %v3138
      %v3140 = vrot.slane %v3126, 1
      %v3141 = vrot.slane %v2990, 1
      %v3142 = vsel %vm466, %v3140, %v3141
      %v3143 = vrot.slane %v3127, 1
      %v3144 = vrot.slane %v2991, 1
      %v3145 = vsel %vm466, %v3143, %v3144
      %v3146 = vrot.slane %v3128, 1
      %v3147 = vrot.slane %v2992, 1
      %v3148 = vsel %vm466, %v3146, %v3147
      %v3149 = vrot.slane %v3129, 1
      %v3150 = vrot.slane %v2993, 1
      %v3151 = vsel %vm466, %v3149, %v3150
      %v3152 = vrot.slane %v3130, 1
      %v3153 = vrot.slane %v2994, 1
      %v3154 = vsel %vm466, %v3152, %v3153
      %3155 = vrot.lane.b32.xlu0 %v3133, 96
      %v3156 = vpop.permute.xlu0 %3155
      %3157 = vrot.lane.b32.xlu0 %v3136, 96
      %v3158 = vpop.permute.xlu0 %3157
      %3159 = vrot.lane.b32.xlu0 %v3139, 96
      %v3160 = vpop.permute.xlu0 %3159
      %3161 = vrot.lane.b32.xlu0 %v3142, 96
      %v3162 = vpop.permute.xlu0 %3161
      %3163 = vrot.lane.b32.xlu0 %v3145, 96
      %v3164 = vpop.permute.xlu0 %3163
      %3165 = vrot.lane.b32.xlu0 %v3148, 96
      %v3166 = vpop.permute.xlu0 %3165
      %3167 = vrot.lane.b32.xlu0 %v3151, 96
      %v3168 = vpop.permute.xlu0 %3167
      %3169 = vrot.lane.b32.xlu0 %v3154, 96
      %v3170 = vpop.permute.xlu0 %3169
      %v3179 = vunpack.c.l.b16 %v2915
      %v3180 = vunpack.c.l.b16 %v2916
      %v3181 = vunpack.c.l.b16 %v2917
      %v3182 = vunpack.c.l.b16 %v2918
      %v3183 = vunpack.c.l.b16 %v2919
      %v3184 = vunpack.c.l.b16 %v2920
      %v3185 = vunpack.c.l.b16 %v2921
      %v3186 = vunpack.c.l.b16 %v2922
      %v3187 = vpack.c.b16 %v3179, %v3179
      %v3188 = vpack.c.b16 %v3180, %v3180
      %v3189 = vpack.c.b16 %v3181, %v3181
      %v3190 = vpack.c.b16 %v3182, %v3182
      %v3191 = vpack.c.b16 %v3183, %v3183
      %v3192 = vpack.c.b16 %v3184, %v3184
      %v3193 = vpack.c.b16 %v3185, %v3185
      %v3194 = vpack.c.b16 %v3186, %v3186
      %v3196 = vshrl.u32 %v3123, 16
      %v3198 = vrot.slane %v3196, 1
      %v3199 = vshll.u32 %v3123, 16
      %v3201 = vrot.slane %v3199, 2
      %v3202 = vor.u32 %v3198, %v3201
      %v3204 = vshrl.u32 %v3187, 16
      %v3206 = vrot.slane %v3204, 1
      %v3207 = vshll.u32 %v3187, 16
      %v3209 = vrot.slane %v3207, 2
      %v3210 = vor.u32 %v3206, %v3209
      %v3211 = vsel %vm531, %v3202, %v3210
      %v3213 = vshrl.u32 %v3124, 16
      %v3215 = vrot.slane %v3213, 1
      %v3216 = vshll.u32 %v3124, 16
      %v3218 = vrot.slane %v3216, 2
      %v3219 = vor.u32 %v3215, %v3218
      %v3221 = vshrl.u32 %v3188, 16
      %v3223 = vrot.slane %v3221, 1
      %v3224 = vshll.u32 %v3188, 16
      %v3226 = vrot.slane %v3224, 2
      %v3227 = vor.u32 %v3223, %v3226
      %v3228 = vsel %vm531, %v3219, %v3227
      %v3230 = vshrl.u32 %v3125, 16
      %v3232 = vrot.slane %v3230, 1
      %v3233 = vshll.u32 %v3125, 16
      %v3235 = vrot.slane %v3233, 2
      %v3236 = vor.u32 %v3232, %v3235
      %v3238 = vshrl.u32 %v3189, 16
      %v3240 = vrot.slane %v3238, 1
      %v3241 = vshll.u32 %v3189, 16
      %v3243 = vrot.slane %v3241, 2
      %v3244 = vor.u32 %v3240, %v3243
      %v3245 = vsel %vm531, %v3236, %v3244
      %v3247 = vshrl.u32 %v3126, 16
      %v3249 = vrot.slane %v3247, 1
      %v3250 = vshll.u32 %v3126, 16
      %v3252 = vrot.slane %v3250, 2
      %v3253 = vor.u32 %v3249, %v3252
      %v3255 = vshrl.u32 %v3190, 16
      %v3257 = vrot.slane %v3255, 1
      %v3258 = vshll.u32 %v3190, 16
      %v3260 = vrot.slane %v3258, 2
      %v3261 = vor.u32 %v3257, %v3260
      %v3262 = vsel %vm531, %v3253, %v3261
      %v3264 = vshrl.u32 %v3127, 16
      %v3266 = vrot.slane %v3264, 1
      %v3267 = vshll.u32 %v3127, 16
      %v3269 = vrot.slane %v3267, 2
      %v3270 = vor.u32 %v3266, %v3269
      %v3272 = vshrl.u32 %v3191, 16
      %v3274 = vrot.slane %v3272, 1
      %v3275 = vshll.u32 %v3191, 16
      %v3277 = vrot.slane %v3275, 2
      %v3278 = vor.u32 %v3274, %v3277
      %v3279 = vsel %vm531, %v3270, %v3278
      %v3281 = vshrl.u32 %v3128, 16
      %v3283 = vrot.slane %v3281, 1
      %v3284 = vshll.u32 %v3128, 16
      %v3286 = vrot.slane %v3284, 2
      %v3287 = vor.u32 %v3283, %v3286
      %v3289 = vshrl.u32 %v3192, 16
      %v3291 = vrot.slane %v3289, 1
      %v3292 = vshll.u32 %v3192, 16
      %v3294 = vrot.slane %v3292, 2
      %v3295 = vor.u32 %v3291, %v3294
      %v3296 = vsel %vm531, %v3287, %v3295
      %v3298 = vshrl.u32 %v3129, 16
      %v3300 = vrot.slane %v3298, 1
      %v3301 = vshll.u32 %v3129, 16
      %v3303 = vrot.slane %v3301, 2
      %v3304 = vor.u32 %v3300, %v3303
      %v3306 = vshrl.u32 %v3193, 16
      %v3308 = vrot.slane %v3306, 1
      %v3309 = vshll.u32 %v3193, 16
      %v3311 = vrot.slane %v3309, 2
      %v3312 = vor.u32 %v3308, %v3311
      %v3313 = vsel %vm531, %v3304, %v3312
      %v3315 = vshrl.u32 %v3130, 16
      %v3317 = vrot.slane %v3315, 1
      %v3318 = vshll.u32 %v3130, 16
      %v3320 = vrot.slane %v3318, 2
      %v3321 = vor.u32 %v3317, %v3320
      %v3323 = vshrl.u32 %v3194, 16
      %v3325 = vrot.slane %v3323, 1
      %v3326 = vshll.u32 %v3194, 16
      %v3328 = vrot.slane %v3326, 2
      %v3329 = vor.u32 %v3325, %v3328
      %v3330 = vsel %vm531, %v3321, %v3329
      %3331 = vrot.lane.b32.xlu0 %v3211, 16
      %v3332 = vpop.permute.xlu0 %3331
      %3333 = vrot.lane.b32.xlu0 %v3228, 16
      %v3334 = vpop.permute.xlu0 %3333
      %3335 = vrot.lane.b32.xlu0 %v3245, 16
      %v3336 = vpop.permute.xlu0 %3335
      %3337 = vrot.lane.b32.xlu0 %v3262, 16
      %v3338 = vpop.permute.xlu0 %3337
      %3339 = vrot.lane.b32.xlu0 %v3279, 16
      %v3340 = vpop.permute.xlu0 %3339
      %3341 = vrot.lane.b32.xlu0 %v3296, 16
      %v3342 = vpop.permute.xlu0 %3341
      %3343 = vrot.lane.b32.xlu0 %v3313, 16
      %v3344 = vpop.permute.xlu0 %3343
      %3345 = vrot.lane.b32.xlu0 %v3330, 16
      %v3346 = vpop.permute.xlu0 %3345
      %v3355 = vunpack.c.l.b16 %v2923
      %v3356 = vunpack.c.l.b16 %v2924
      %v3357 = vunpack.c.l.b16 %v2925
      %v3358 = vunpack.c.l.b16 %v2926
      %v3359 = vunpack.c.l.b16 %v2927
      %v3360 = vunpack.c.l.b16 %v2928
      %v3361 = vunpack.c.l.b16 %v2929
      %v3362 = vunpack.c.l.b16 %v2930
      %v3363 = vpack.c.b16 %v2948, %v3355
      %v3364 = vpack.c.b16 %v2950, %v3356
      %v3365 = vpack.c.b16 %v2952, %v3357
      %v3366 = vpack.c.b16 %v2954, %v3358
      %v3367 = vpack.c.b16 %v2956, %v3359
      %v3368 = vpack.c.b16 %v2958, %v3360
      %v3369 = vpack.c.b16 %v2960, %v3361
      %v3370 = vpack.c.b16 %v2962, %v3362
      %v3371 = vrot.slane %v3363, 2
      %v3372 = vrot.slane %v3187, 2
      %v3373 = vsel %vm708, %v3371, %v3372
      %v3374 = vrot.slane %v3364, 2
      %v3375 = vrot.slane %v3188, 2
      %v3376 = vsel %vm708, %v3374, %v3375
      %v3377 = vrot.slane %v3365, 2
      %v3378 = vrot.slane %v3189, 2
      %v3379 = vsel %vm708, %v3377, %v3378
      %v3380 = vrot.slane %v3366, 2
      %v3381 = vrot.slane %v3190, 2
      %v3382 = vsel %vm708, %v3380, %v3381
      %v3383 = vrot.slane %v3367, 2
      %v3384 = vrot.slane %v3191, 2
      %v3385 = vsel %vm708, %v3383, %v3384
      %v3386 = vrot.slane %v3368, 2
      %v3387 = vrot.slane %v3192, 2
      %v3388 = vsel %vm708, %v3386, %v3387
      %v3389 = vrot.slane %v3369, 2
      %v3390 = vrot.slane %v3193, 2
      %v3391 = vsel %vm708, %v3389, %v3390
      %v3392 = vrot.slane %v3370, 2
      %v3393 = vrot.slane %v3194, 2
      %v3394 = vsel %vm708, %v3392, %v3393
      %3395 = vrot.lane.b32.xlu0 %v3373, 64
      %v3396 = vpop.permute.xlu0 %3395
      %3397 = vrot.lane.b32.xlu0 %v3376, 64
      %v3398 = vpop.permute.xlu0 %3397
      %3399 = vrot.lane.b32.xlu0 %v3379, 64
      %v3400 = vpop.permute.xlu0 %3399
      %3401 = vrot.lane.b32.xlu0 %v3382, 64
      %v3402 = vpop.permute.xlu0 %3401
      %3403 = vrot.lane.b32.xlu0 %v3385, 64
      %v3404 = vpop.permute.xlu0 %3403
      %3405 = vrot.lane.b32.xlu0 %v3388, 64
      %v3406 = vpop.permute.xlu0 %3405
      %3407 = vrot.lane.b32.xlu0 %v3391, 64
      %v3408 = vpop.permute.xlu0 %3407
      %3409 = vrot.lane.b32.xlu0 %v3394, 64
      %v3410 = vpop.permute.xlu0 %3409
      %v3412 = vsel %vm749, %v2963, %v3092
      %v3414 = vsel %vm749, %v2964, %v3094
      %v3416 = vsel %vm749, %v2965, %v3096
      %v3418 = vsel %vm749, %v2966, %v3098
      %v3420 = vsel %vm749, %v2967, %v3100
      %v3422 = vsel %vm749, %v2968, %v3102
      %v3424 = vsel %vm749, %v2969, %v3104
      %v3426 = vsel %vm749, %v2970, %v3106
      %v3428 = vsel %vm766, %v3412, %v3156
      %v3431 = vsel %vm766, %v3414, %v3158
      %v3434 = vsel %vm766, %v3416, %v3160
      %v3437 = vsel %vm766, %v3418, %v3162
      %v3440 = vsel %vm766, %v3420, %v3164
      %v3443 = vsel %vm766, %v3422, %v3166
      %v3446 = vsel %vm766, %v3424, %v3168
      %v3449 = vsel %vm766, %v3426, %v3170
      %v3452 = vsel %vm791, %v3156, %v3332
      %v3454 = vsel %vm791, %v3158, %v3334
      %v3456 = vsel %vm791, %v3160, %v3336
      %v3458 = vsel %vm791, %v3162, %v3338
      %v3460 = vsel %vm791, %v3164, %v3340
      %v3462 = vsel %vm791, %v3166, %v3342
      %v3464 = vsel %vm791, %v3168, %v3344
      %v3466 = vsel %vm791, %v3170, %v3346
      %v3468 = vsel %vm808, %v3452, %v3396
      %v3470 = vsel %vm808, %v3454, %v3398
      %v3472 = vsel %vm808, %v3456, %v3400
      %v3474 = vsel %vm808, %v3458, %v3402
      %v3476 = vsel %vm808, %v3460, %v3404
      %v3478 = vsel %vm808, %v3462, %v3406
      %v3480 = vsel %vm808, %v3464, %v3408
      %v3482 = vsel %vm808, %v3466, %v3410
      %v3483 = vld [vmem:[#allocation2] sm:$0xff]
      %v3484 = vld [vmem:[#allocation2 + $0x8] sm:$0xff]
      %v3485 = vld [vmem:[#allocation2 + $0x10] sm:$0xff]
      %v3486 = vld [vmem:[#allocation2 + $0x18] sm:$0xff]
      %v3487 = vld [vmem:[#allocation2 + $0x20] sm:$0xff]
      %v3488 = vld [vmem:[#allocation2 + $0x28] sm:$0xff]
      %v3489 = vld [vmem:[#allocation2 + $0x30] sm:$0xff]
      %v3490 = vld [vmem:[#allocation2 + $0x38] sm:$0xff]
      %v3491 = vld [vmem:[#allocation2 + $0x40] sm:$0xff]
      %v3492 = vld [vmem:[#allocation2 + $0x48] sm:$0xff]
      %v3493 = vld [vmem:[#allocation2 + $0x50] sm:$0xff]
      %v3494 = vld [vmem:[#allocation2 + $0x58] sm:$0xff]
      %v3495 = vld [vmem:[#allocation2 + $0x60] sm:$0xff]
      %v3496 = vld [vmem:[#allocation2 + $0x68] sm:$0xff]
      %v3497 = vld [vmem:[#allocation2 + $0x70] sm:$0xff]
      %v3498 = vld [vmem:[#allocation2 + $0x78] sm:$0xff]
      %s3499 = scalar_lea.vmem %s1, 360
      %v3500 = vld [vmem:[%s3499] sm:$0xf]
      %v3501 = vld [vmem:[%s3499 + $0x4] sm:$0xf]
      %v3502 = vld [vmem:[%s3499 + $0x8] sm:$0xf]
      %v3503 = vld [vmem:[%s3499 + $0xc] sm:$0xf]
      %v3504 = vld [vmem:[%s3499 + $0x10] sm:$0xf]
      %v3505 = vld [vmem:[%s3499 + $0x14] sm:$0xf]
      %v3506 = vld [vmem:[%s3499 + $0x18] sm:$0xf]
      %v3507 = vld [vmem:[%s3499 + $0x1c] sm:$0xf]
      %v3508 = vld [vmem:[%s3499 + $0x20] sm:$0xf]
      %v3509 = vld [vmem:[%s3499 + $0x24] sm:$0xf]
      %v3510 = vld [vmem:[%s3499 + $0x28] sm:$0xf]
      %v3511 = vld [vmem:[%s3499 + $0x2c] sm:$0xf]
      %v3512 = vld [vmem:[%s3499 + $0x30] sm:$0xf]
      %v3513 = vld [vmem:[%s3499 + $0x34] sm:$0xf]
      %v3514 = vld [vmem:[%s3499 + $0x38] sm:$0xf]
      %v3515 = vld [vmem:[%s3499 + $0x3c] sm:$0xf]
      %v3516 = vld [vmem:[%s3499 + $0x40] sm:$0xf]
      %v3517 = vld [vmem:[%s3499 + $0x44] sm:$0xf]
      %v3518 = vld [vmem:[%s3499 + $0x48] sm:$0xf]
      %v3519 = vld [vmem:[%s3499 + $0x4c] sm:$0xf]
      %v3520 = vld [vmem:[%s3499 + $0x50] sm:$0xf]
      %v3521 = vld [vmem:[%s3499 + $0x54] sm:$0xf]
      %v3522 = vld [vmem:[%s3499 + $0x58] sm:$0xf]
      %v3523 = vld [vmem:[%s3499 + $0x5c] sm:$0xf]
      %v3524 = vld [vmem:[%s3499 + $0x60] sm:$0xf]
      %v3525 = vld [vmem:[%s3499 + $0x64] sm:$0xf]
      %v3526 = vld [vmem:[%s3499 + $0x68] sm:$0xf]
      %v3527 = vld [vmem:[%s3499 + $0x6c] sm:$0xf]
      %v3528 = vld [vmem:[%s3499 + $0x70] sm:$0xf]
      %v3529 = vld [vmem:[%s3499 + $0x74] sm:$0xf]
      %v3560 = vunpack.c.l.b16 %v3500
      %v3561 = vunpack.c.l.b16 %v3501
      %v3562 = vunpack.c.l.b16 %v3502
      %v3563 = vunpack.c.l.b16 %v3503
      %v3564 = vunpack.c.l.b16 %v3504
      %v3565 = vunpack.c.l.b16 %v3505
      %v3566 = vunpack.c.l.b16 %v3506
      %v3567 = vunpack.c.l.b16 %v3507
      %v3568 = vunpack.c.l.b16 %v3508
      %v3569 = vunpack.c.l.b16 %v3509
      %v3570 = vunpack.c.l.b16 %v3510
      %v3571 = vunpack.c.l.b16 %v3511
      %v3572 = vunpack.c.l.b16 %v3512
      %v3573 = vunpack.c.l.b16 %v3513
      %v3574 = vunpack.c.l.b16 %v3514
      %v3575 = vunpack.c.l.b16 %v3515
      %v3576 = vunpack.c.l.b16 %v3516
      %v3577 = vunpack.c.l.b16 %v3517
      %v3578 = vunpack.c.l.b16 %v3518
      %v3579 = vunpack.c.l.b16 %v3519
      %v3580 = vunpack.c.l.b16 %v3520
      %v3581 = vunpack.c.l.b16 %v3521
      %v3582 = vunpack.c.l.b16 %v3522
      %v3583 = vunpack.c.l.b16 %v3523
      %v3584 = vunpack.c.l.b16 %v3524
      %v3585 = vunpack.c.l.b16 %v3525
      %v3586 = vunpack.c.l.b16 %v3526
      %v3587 = vunpack.c.l.b16 %v3527
      %v3588 = vunpack.c.l.b16 %v3528
      %v3589 = vunpack.c.l.b16 %v3529
      %v3590 = vpack.c.b16 %v3561, %v3560
      %v3591 = vpack.c.b16 %v3563, %v3562
      %v3592 = vpack.c.b16 %v3565, %v3564
      %v3593 = vpack.c.b16 %v3567, %v3566
      %v3594 = vpack.c.b16 %v3569, %v3568
      %v3595 = vpack.c.b16 %v3571, %v3570
      %v3596 = vpack.c.b16 %v3573, %v3572
      %v3597 = vpack.c.b16 %v3575, %v3574
      %v3598 = vpack.c.b16 %v3577, %v3576
      %v3599 = vpack.c.b16 %v3579, %v3578
      %v3600 = vpack.c.b16 %v3581, %v3580
      %v3601 = vpack.c.b16 %v3583, %v3582
      %v3602 = vpack.c.b16 %v3585, %v3584
      %v3603 = vpack.c.b16 %v3587, %v3586
      %v3604 = vpack.c.b16 %v3589, %v3588
      %v3620 = vsel %vm961, %v3468, 0
      %v3622 = vsel %vm961, %v3470, 0
      %v3624 = vsel %vm961, %v3472, 0
      %v3626 = vsel %vm961, %v3474, 0
      %v3628 = vsel %vm961, %v3476, 0
      %v3630 = vsel %vm961, %v3478, 0
      %v3632 = vsel %vm961, %v3480, 0
      %v3634 = vsel %vm961, %v3482, 0
      %3636 = vmatprep.subr.bf16.mxu0 0
      %3637 = vmatpush1.bf16.msra.mxu0 %v3597
      %3638 = vmatprep.subr.bf16.mxu0 0
      %3639 = vmatpush1.bf16.msra.mxu0 %v3596
      %3640 = vmatprep.subr.bf16.mxu0 0
      %3641 = vmatpush1.bf16.msra.mxu0 %v3595
      %3642 = vmatprep.subr.bf16.mxu0 0
      %3643 = vmatpush1.bf16.msra.mxu0 %v3594
      %3644 = vmatprep.subr.bf16.mxu0 0
      %3645 = vmatpush1.bf16.msra.mxu0 %v3593
      %3646 = vmatprep.subr.bf16.mxu0 0
      %3647 = vmatpush1.bf16.msra.mxu0 %v3592
      %3648 = vmatprep.subr.bf16.mxu0 0
      %3649 = vmatpush1.bf16.msra.mxu0 %v3591
      %3650 = vmatprep.subr.bf16.mxu0 0
      %3651 = vmatpush1.bf16.msra.mxu0 %v3590
      %3652 = vmatprep.subr.bf16.mxu0 0
      %3653 = vmatpush2.bf16.msra.mxu0 0
      %3654 = vmatprep.subr.bf16.mxu0 0
      %3655 = vmatpush2.bf16.msra.mxu0 %v3604
      %3656 = vmatprep.subr.bf16.mxu0 0
      %3657 = vmatpush2.bf16.msra.mxu0 %v3603
      %3658 = vmatprep.subr.bf16.mxu0 0
      %3659 = vmatpush2.bf16.msra.mxu0 %v3602
      %3660 = vmatprep.subr.bf16.mxu0 0
      %3661 = vmatpush2.bf16.msra.mxu0 %v3601
      %3662 = vmatprep.subr.bf16.mxu0 0
      %3663 = vmatpush2.bf16.msra.mxu0 %v3600
      %3664 = vmatprep.subr.bf16.mxu0 0
      %3665 = vmatpush2.bf16.msra.mxu0 %v3599
      %3666 = vmatprep.subr.bf16.mxu0 0
      %3667 = vmatpush2.bf16.msra.mxu0 %v3598
      %3668 = vmatprep.mubr.bf16.mxu0 %v3620
      %3669 = vmatmul.mubr.bf16.gmra.mxu0 %v3428
      %v3670 = vpop.f32.mrf.mxu0
      %v3671 = vadd.f32 0.0, %v3670
      %v3672 = vpop.f32.mrf.mxu0
      %v3673 = vpop.f32.mrf.mxu0
      %v3674 = vadd.f32 0.0, %v3673
      %v3675 = vpop.f32.mrf.mxu0
      %3676 = vmatprep.mubr.bf16.mxu0 %v3622
      %3677 = vmatmul.mubr.bf16.gmra.mxu0 %v3431
      %v3678 = vpop.f32.mrf.mxu0
      %v3679 = vadd.f32 0.0, %v3678
      %v3680 = vpop.f32.mrf.mxu0
      %v3681 = vpop.f32.mrf.mxu0
      %v3682 = vadd.f32 0.0, %v3681
      %v3683 = vpop.f32.mrf.mxu0
      %3684 = vmatprep.mubr.bf16.mxu0 %v3624
      %3685 = vmatmul.mubr.bf16.gmra.mxu0 %v3434
      %v3686 = vpop.f32.mrf.mxu0
      %v3687 = vadd.f32 0.0, %v3686
      %v3688 = vpop.f32.mrf.mxu0
      %v3689 = vpop.f32.mrf.mxu0
      %v3690 = vadd.f32 0.0, %v3689
      %v3691 = vpop.f32.mrf.mxu0
      %3692 = vmatprep.mubr.bf16.mxu0 %v3626
      %3693 = vmatmul.mubr.bf16.gmra.mxu0 %v3437
      %v3694 = vpop.f32.mrf.mxu0
      %v3695 = vadd.f32 0.0, %v3694
      %v3696 = vpop.f32.mrf.mxu0
      %v3697 = vpop.f32.mrf.mxu0
      %v3698 = vadd.f32 0.0, %v3697
      %v3699 = vpop.f32.mrf.mxu0
      %3700 = vmatprep.mubr.bf16.mxu0 %v3628
      %3701 = vmatmul.mubr.bf16.gmra.mxu0 %v3440
      %v3702 = vpop.f32.mrf.mxu0
      %v3703 = vadd.f32 0.0, %v3702
      %v3704 = vpop.f32.mrf.mxu0
      %v3705 = vpop.f32.mrf.mxu0
      %v3706 = vadd.f32 0.0, %v3705
      %v3707 = vpop.f32.mrf.mxu0
      %3708 = vmatprep.mubr.bf16.mxu0 %v3630
      %3709 = vmatmul.mubr.bf16.gmra.mxu0 %v3443
      %v3710 = vpop.f32.mrf.mxu0
      %v3711 = vadd.f32 0.0, %v3710
      %v3712 = vpop.f32.mrf.mxu0
      %v3713 = vpop.f32.mrf.mxu0
      %v3714 = vadd.f32 0.0, %v3713
      %v3715 = vpop.f32.mrf.mxu0
      %3716 = vmatprep.mubr.bf16.mxu0 %v3632
      %3717 = vmatmul.mubr.bf16.gmra.mxu0 %v3446
      %v3718 = vpop.f32.mrf.mxu0
      %v3719 = vadd.f32 0.0, %v3718
      %v3720 = vpop.f32.mrf.mxu0
      %v3721 = vpop.f32.mrf.mxu0
      %v3722 = vadd.f32 0.0, %v3721
      %v3723 = vpop.f32.mrf.mxu0
      %3724 = vmatprep.mubr.bf16.mxu0 %v3634
      %3725 = vmatmul.mubr.bf16.gmra.mxu0 %v3449
      %v3726 = vpop.f32.mrf.mxu0
      %v3727 = vadd.f32 0.0, %v3726
      %v3728 = vpop.f32.mrf.mxu0
      %v3729 = vpop.f32.mrf.mxu0
      %v3730 = vadd.f32 0.0, %v3729
      %v3731 = vpop.f32.mrf.mxu0
      %3732 = vdwg.mxu0
      %v3733 = vadd.f32 %v3483, %v3671
      %v3734 = vadd.f32 %v3484, %v3674
      %v3735 = vadd.f32 %v3485, %v3679
      %v3736 = vadd.f32 %v3486, %v3682
      %v3737 = vadd.f32 %v3487, %v3687
      %v3738 = vadd.f32 %v3488, %v3690
      %v3739 = vadd.f32 %v3489, %v3695
      %v3740 = vadd.f32 %v3490, %v3698
      %v3741 = vadd.f32 %v3491, %v3703
      %v3742 = vadd.f32 %v3492, %v3706
      %v3743 = vadd.f32 %v3493, %v3711
      %v3744 = vadd.f32 %v3494, %v3714
      %v3745 = vadd.f32 %v3495, %v3719
      %v3746 = vadd.f32 %v3496, %v3722
      %v3747 = vadd.f32 %v3497, %v3727
      %v3748 = vadd.f32 %v3498, %v3730
      %3749 = vst [vmem:[#allocation2] sm:$0xff] %v3733
      %3750 = vst [vmem:[#allocation2 + $0x8] sm:$0xff] %v3734
      %3751 = vst [vmem:[#allocation2 + $0x10] sm:$0xff] %v3735
      %3752 = vst [vmem:[#allocation2 + $0x18] sm:$0xff] %v3736
      %3753 = vst [vmem:[#allocation2 + $0x20] sm:$0xff] %v3737
      %3754 = vst [vmem:[#allocation2 + $0x28] sm:$0xff] %v3738
      %3755 = vst [vmem:[#allocation2 + $0x30] sm:$0xff] %v3739
      %3756 = vst [vmem:[#allocation2 + $0x38] sm:$0xff] %v3740
      %3757 = vst [vmem:[#allocation2 + $0x40] sm:$0xff] %v3741
      %3758 = vst [vmem:[#allocation2 + $0x48] sm:$0xff] %v3742
      %3759 = vst [vmem:[#allocation2 + $0x50] sm:$0xff] %v3743
      %3760 = vst [vmem:[#allocation2 + $0x58] sm:$0xff] %v3744
      %3761 = vst [vmem:[#allocation2 + $0x60] sm:$0xff] %v3745
      %3762 = vst [vmem:[#allocation2 + $0x68] sm:$0xff] %v3746
      %3763 = vst [vmem:[#allocation2 + $0x70] sm:$0xff] %v3747
      %3764 = vst [vmem:[#allocation2 + $0x78] sm:$0xff] %v3748
      %s3765 = sadd.s32 %s197, 4
      %s3766 = smul.u32 %s3765, 3
      %s3767 = smul.addr %s3766, 4
      %s3768 = scalar_lea.vmem %s184, %s3767
      %v3769 = vld [vmem:[%s3768] sm:$0xf]
      %v3770 = vld [vmem:[%s3768 + $0x4] sm:$0xf]
      %v3771 = vld [vmem:[%s3768 + $0xc] sm:$0xf]
      %v3772 = vld [vmem:[%s3768 + $0x10] sm:$0xf]
      %v3773 = vld [vmem:[%s3768 + $0x18] sm:$0xf]
      %v3774 = vld [vmem:[%s3768 + $0x1c] sm:$0xf]
      %v3775 = vld [vmem:[%s3768 + $0x24] sm:$0xf]
      %v3776 = vld [vmem:[%s3768 + $0x28] sm:$0xf]
      %v3777 = vld [vmem:[%s3768 + $0x30] sm:$0xf]
      %v3778 = vld [vmem:[%s3768 + $0x34] sm:$0xf]
      %v3779 = vld [vmem:[%s3768 + $0x3c] sm:$0xf]
      %v3780 = vld [vmem:[%s3768 + $0x40] sm:$0xf]
      %v3781 = vld [vmem:[%s3768 + $0x48] sm:$0xf]
      %v3782 = vld [vmem:[%s3768 + $0x4c] sm:$0xf]
      %v3783 = vld [vmem:[%s3768 + $0x54] sm:$0xf]
      %v3784 = vld [vmem:[%s3768 + $0x58] sm:$0xf]
      %v3785 = vld [vmem:[%s3768 + $0x8] sm:$0x1]
      %v3786 = vld [vmem:[%s3768 + $0x14] sm:$0x1]
      %v3787 = vld [vmem:[%s3768 + $0x20] sm:$0x1]
      %v3788 = vld [vmem:[%s3768 + $0x2c] sm:$0x1]
      %v3789 = vld [vmem:[%s3768 + $0x38] sm:$0x1]
      %v3790 = vld [vmem:[%s3768 + $0x44] sm:$0x1]
      %v3791 = vld [vmem:[%s3768 + $0x50] sm:$0x1]
      %v3792 = vld [vmem:[%s3768 + $0x5c] sm:$0x1]
      %v3793 = vld [vmem:[%s3768] sm:$0xe]
      %v3794 = vld [vmem:[%s3768 + $0xc] sm:$0xe]
      %v3795 = vld [vmem:[%s3768 + $0x18] sm:$0xe]
      %v3796 = vld [vmem:[%s3768 + $0x24] sm:$0xe]
      %v3797 = vld [vmem:[%s3768 + $0x30] sm:$0xe]
      %v3798 = vld [vmem:[%s3768 + $0x3c] sm:$0xe]
      %v3799 = vld [vmem:[%s3768 + $0x48] sm:$0xe]
      %v3800 = vld [vmem:[%s3768 + $0x54] sm:$0xe]
      %v3801 = vld [vmem:[%s3768 + $0x8] sm:$0x3]
      %v3802 = vld [vmem:[%s3768 + $0x14] sm:$0x3]
      %v3803 = vld [vmem:[%s3768 + $0x20] sm:$0x3]
      %v3804 = vld [vmem:[%s3768 + $0x2c] sm:$0x3]
      %v3805 = vld [vmem:[%s3768 + $0x38] sm:$0x3]
      %v3806 = vld [vmem:[%s3768 + $0x44] sm:$0x3]
      %v3807 = vld [vmem:[%s3768 + $0x50] sm:$0x3]
      %v3808 = vld [vmem:[%s3768 + $0x5c] sm:$0x3]
      %v3809 = vld [vmem:[%s3768] sm:$0xc]
      %v3810 = vld [vmem:[%s3768 + $0xc] sm:$0xc]
      %v3811 = vld [vmem:[%s3768 + $0x18] sm:$0xc]
      %v3812 = vld [vmem:[%s3768 + $0x24] sm:$0xc]
      %v3813 = vld [vmem:[%s3768 + $0x30] sm:$0xc]
      %v3814 = vld [vmem:[%s3768 + $0x3c] sm:$0xc]
      %v3815 = vld [vmem:[%s3768 + $0x48] sm:$0xc]
      %v3816 = vld [vmem:[%s3768 + $0x54] sm:$0xc]
      %v3833 = vunpack.c.l.b16 %v3769
      %v3834 = vunpack.c.l.b16 %v3770
      %v3835 = vunpack.c.l.b16 %v3771
      %v3836 = vunpack.c.l.b16 %v3772
      %v3837 = vunpack.c.l.b16 %v3773
      %v3838 = vunpack.c.l.b16 %v3774
      %v3839 = vunpack.c.l.b16 %v3775
      %v3840 = vunpack.c.l.b16 %v3776
      %v3841 = vunpack.c.l.b16 %v3777
      %v3842 = vunpack.c.l.b16 %v3778
      %v3843 = vunpack.c.l.b16 %v3779
      %v3844 = vunpack.c.l.b16 %v3780
      %v3845 = vunpack.c.l.b16 %v3781
      %v3846 = vunpack.c.l.b16 %v3782
      %v3847 = vunpack.c.l.b16 %v3783
      %v3848 = vunpack.c.l.b16 %v3784
      %v3849 = vpack.c.b16 %v3834, %v3833
      %v3850 = vpack.c.b16 %v3836, %v3835
      %v3851 = vpack.c.b16 %v3838, %v3837
      %v3852 = vpack.c.b16 %v3840, %v3839
      %v3853 = vpack.c.b16 %v3842, %v3841
      %v3854 = vpack.c.b16 %v3844, %v3843
      %v3855 = vpack.c.b16 %v3846, %v3845
      %v3856 = vpack.c.b16 %v3848, %v3847
      %v3865 = vunpack.c.l.b16 %v3785
      %v3866 = vunpack.c.l.b16 %v3786
      %v3867 = vunpack.c.l.b16 %v3787
      %v3868 = vunpack.c.l.b16 %v3788
      %v3869 = vunpack.c.l.b16 %v3789
      %v3870 = vunpack.c.l.b16 %v3790
      %v3871 = vunpack.c.l.b16 %v3791
      %v3872 = vunpack.c.l.b16 %v3792
      %v3873 = vpack.c.b16 %v3865, %v3865
      %v3874 = vpack.c.b16 %v3866, %v3866
      %v3875 = vpack.c.b16 %v3867, %v3867
      %v3876 = vpack.c.b16 %v3868, %v3868
      %v3877 = vpack.c.b16 %v3869, %v3869
      %v3878 = vpack.c.b16 %v3870, %v3870
      %v3879 = vpack.c.b16 %v3871, %v3871
      %v3880 = vpack.c.b16 %v3872, %v3872
      %v3882 = vshrl.u32 %v3849, 16
      %v3884 = vshll.u32 %v3849, 16
      %v3886 = vrot.slane %v3884, 1
      %v3887 = vor.u32 %v3882, %v3886
      %v3889 = vshll.u32 %v3873, 16
      %v3891 = vrot.slane %v3889, 1
      %v3892 = vsel %vm329, %v3887, %v3891
      %v3894 = vshrl.u32 %v3850, 16
      %v3896 = vshll.u32 %v3850, 16
      %v3898 = vrot.slane %v3896, 1
      %v3899 = vor.u32 %v3894, %v3898
      %v3901 = vshll.u32 %v3874, 16
      %v3903 = vrot.slane %v3901, 1
      %v3904 = vsel %vm329, %v3899, %v3903
      %v3906 = vshrl.u32 %v3851, 16
      %v3908 = vshll.u32 %v3851, 16
      %v3910 = vrot.slane %v3908, 1
      %v3911 = vor.u32 %v3906, %v3910
      %v3913 = vshll.u32 %v3875, 16
      %v3915 = vrot.slane %v3913, 1
      %v3916 = vsel %vm329, %v3911, %v3915
      %v3918 = vshrl.u32 %v3852, 16
      %v3920 = vshll.u32 %v3852, 16
      %v3922 = vrot.slane %v3920, 1
      %v3923 = vor.u32 %v3918, %v3922
      %v3925 = vshll.u32 %v3876, 16
      %v3927 = vrot.slane %v3925, 1
      %v3928 = vsel %vm329, %v3923, %v3927
      %v3930 = vshrl.u32 %v3853, 16
      %v3932 = vshll.u32 %v3853, 16
      %v3934 = vrot.slane %v3932, 1
      %v3935 = vor.u32 %v3930, %v3934
      %v3937 = vshll.u32 %v3877, 16
      %v3939 = vrot.slane %v3937, 1
      %v3940 = vsel %vm329, %v3935, %v3939
      %v3942 = vshrl.u32 %v3854, 16
      %v3944 = vshll.u32 %v3854, 16
      %v3946 = vrot.slane %v3944, 1
      %v3947 = vor.u32 %v3942, %v3946
      %v3949 = vshll.u32 %v3878, 16
      %v3951 = vrot.slane %v3949, 1
      %v3952 = vsel %vm329, %v3947, %v3951
      %v3954 = vshrl.u32 %v3855, 16
      %v3956 = vshll.u32 %v3855, 16
      %v3958 = vrot.slane %v3956, 1
      %v3959 = vor.u32 %v3954, %v3958
      %v3961 = vshll.u32 %v3879, 16
      %v3963 = vrot.slane %v3961, 1
      %v3964 = vsel %vm329, %v3959, %v3963
      %v3966 = vshrl.u32 %v3856, 16
      %v3968 = vshll.u32 %v3856, 16
      %v3970 = vrot.slane %v3968, 1
      %v3971 = vor.u32 %v3966, %v3970
      %v3973 = vshll.u32 %v3880, 16
      %v3975 = vrot.slane %v3973, 1
      %v3976 = vsel %vm329, %v3971, %v3975
      %3977 = vrot.lane.b32.xlu0 %v3892, 48
      %v3978 = vpop.permute.xlu0 %3977
      %3979 = vrot.lane.b32.xlu0 %v3904, 48
      %v3980 = vpop.permute.xlu0 %3979
      %3981 = vrot.lane.b32.xlu0 %v3916, 48
      %v3982 = vpop.permute.xlu0 %3981
      %3983 = vrot.lane.b32.xlu0 %v3928, 48
      %v3984 = vpop.permute.xlu0 %3983
      %3985 = vrot.lane.b32.xlu0 %v3940, 48
      %v3986 = vpop.permute.xlu0 %3985
      %3987 = vrot.lane.b32.xlu0 %v3952, 48
      %v3988 = vpop.permute.xlu0 %3987
      %3989 = vrot.lane.b32.xlu0 %v3964, 48
      %v3990 = vpop.permute.xlu0 %3989
      %3991 = vrot.lane.b32.xlu0 %v3976, 48
      %v3992 = vpop.permute.xlu0 %3991
      %v4001 = vunpack.c.l.b16 %v3793
      %v4002 = vunpack.c.l.b16 %v3794
      %v4003 = vunpack.c.l.b16 %v3795
      %v4004 = vunpack.c.l.b16 %v3796
      %v4005 = vunpack.c.l.b16 %v3797
      %v4006 = vunpack.c.l.b16 %v3798
      %v4007 = vunpack.c.l.b16 %v3799
      %v4008 = vunpack.c.l.b16 %v3800
      %v4009 = vpack.c.b16 %v3834, %v4001
      %v4010 = vpack.c.b16 %v3836, %v4002
      %v4011 = vpack.c.b16 %v3838, %v4003
      %v4012 = vpack.c.b16 %v3840, %v4004
      %v4013 = vpack.c.b16 %v3842, %v4005
      %v4014 = vpack.c.b16 %v3844, %v4006
      %v4015 = vpack.c.b16 %v3846, %v4007
      %v4016 = vpack.c.b16 %v3848, %v4008
      %v4017 = vrot.slane %v4009, 1
      %v4018 = vrot.slane %v3873, 1
      %v4019 = vsel %vm466, %v4017, %v4018
      %v4020 = vrot.slane %v4010, 1
      %v4021 = vrot.slane %v3874, 1
      %v4022 = vsel %vm466, %v4020, %v4021
      %v4023 = vrot.slane %v4011, 1
      %v4024 = vrot.slane %v3875, 1
      %v4025 = vsel %vm466, %v4023, %v4024
      %v4026 = vrot.slane %v4012, 1
      %v4027 = vrot.slane %v3876, 1
      %v4028 = vsel %vm466, %v4026, %v4027
      %v4029 = vrot.slane %v4013, 1
      %v4030 = vrot.slane %v3877, 1
      %v4031 = vsel %vm466, %v4029, %v4030
      %v4032 = vrot.slane %v4014, 1
      %v4033 = vrot.slane %v3878, 1
      %v4034 = vsel %vm466, %v4032, %v4033
      %v4035 = vrot.slane %v4015, 1
      %v4036 = vrot.slane %v3879, 1
      %v4037 = vsel %vm466, %v4035, %v4036
      %v4038 = vrot.slane %v4016, 1
      %v4039 = vrot.slane %v3880, 1
      %v4040 = vsel %vm466, %v4038, %v4039
      %4041 = vrot.lane.b32.xlu0 %v4019, 96
      %v4042 = vpop.permute.xlu0 %4041
      %4043 = vrot.lane.b32.xlu0 %v4022, 96
      %v4044 = vpop.permute.xlu0 %4043
      %4045 = vrot.lane.b32.xlu0 %v4025, 96
      %v4046 = vpop.permute.xlu0 %4045
      %4047 = vrot.lane.b32.xlu0 %v4028, 96
      %v4048 = vpop.permute.xlu0 %4047
      %4049 = vrot.lane.b32.xlu0 %v4031, 96
      %v4050 = vpop.permute.xlu0 %4049
      %4051 = vrot.lane.b32.xlu0 %v4034, 96
      %v4052 = vpop.permute.xlu0 %4051
      %4053 = vrot.lane.b32.xlu0 %v4037, 96
      %v4054 = vpop.permute.xlu0 %4053
      %4055 = vrot.lane.b32.xlu0 %v4040, 96
      %v4056 = vpop.permute.xlu0 %4055
      %v4065 = vunpack.c.l.b16 %v3801
      %v4066 = vunpack.c.l.b16 %v3802
      %v4067 = vunpack.c.l.b16 %v3803
      %v4068 = vunpack.c.l.b16 %v3804
      %v4069 = vunpack.c.l.b16 %v3805
      %v4070 = vunpack.c.l.b16 %v3806
      %v4071 = vunpack.c.l.b16 %v3807
      %v4072 = vunpack.c.l.b16 %v3808
      %v4073 = vpack.c.b16 %v4065, %v4065
      %v4074 = vpack.c.b16 %v4066, %v4066
      %v4075 = vpack.c.b16 %v4067, %v4067
      %v4076 = vpack.c.b16 %v4068, %v4068
      %v4077 = vpack.c.b16 %v4069, %v4069
      %v4078 = vpack.c.b16 %v4070, %v4070
      %v4079 = vpack.c.b16 %v4071, %v4071
      %v4080 = vpack.c.b16 %v4072, %v4072
      %v4082 = vshrl.u32 %v4009, 16
      %v4084 = vrot.slane %v4082, 1
      %v4085 = vshll.u32 %v4009, 16
      %v4087 = vrot.slane %v4085, 2
      %v4088 = vor.u32 %v4084, %v4087
      %v4090 = vshrl.u32 %v4073, 16
      %v4092 = vrot.slane %v4090, 1
      %v4093 = vshll.u32 %v4073, 16
      %v4095 = vrot.slane %v4093, 2
      %v4096 = vor.u32 %v4092, %v4095
      %v4097 = vsel %vm531, %v4088, %v4096
      %v4099 = vshrl.u32 %v4010, 16
      %v4101 = vrot.slane %v4099, 1
      %v4102 = vshll.u32 %v4010, 16
      %v4104 = vrot.slane %v4102, 2
      %v4105 = vor.u32 %v4101, %v4104
      %v4107 = vshrl.u32 %v4074, 16
      %v4109 = vrot.slane %v4107, 1
      %v4110 = vshll.u32 %v4074, 16
      %v4112 = vrot.slane %v4110, 2
      %v4113 = vor.u32 %v4109, %v4112
      %v4114 = vsel %vm531, %v4105, %v4113
      %v4116 = vshrl.u32 %v4011, 16
      %v4118 = vrot.slane %v4116, 1
      %v4119 = vshll.u32 %v4011, 16
      %v4121 = vrot.slane %v4119, 2
      %v4122 = vor.u32 %v4118, %v4121
      %v4124 = vshrl.u32 %v4075, 16
      %v4126 = vrot.slane %v4124, 1
      %v4127 = vshll.u32 %v4075, 16
      %v4129 = vrot.slane %v4127, 2
      %v4130 = vor.u32 %v4126, %v4129
      %v4131 = vsel %vm531, %v4122, %v4130
      %v4133 = vshrl.u32 %v4012, 16
      %v4135 = vrot.slane %v4133, 1
      %v4136 = vshll.u32 %v4012, 16
      %v4138 = vrot.slane %v4136, 2
      %v4139 = vor.u32 %v4135, %v4138
      %v4141 = vshrl.u32 %v4076, 16
      %v4143 = vrot.slane %v4141, 1
      %v4144 = vshll.u32 %v4076, 16
      %v4146 = vrot.slane %v4144, 2
      %v4147 = vor.u32 %v4143, %v4146
      %v4148 = vsel %vm531, %v4139, %v4147
      %v4150 = vshrl.u32 %v4013, 16
      %v4152 = vrot.slane %v4150, 1
      %v4153 = vshll.u32 %v4013, 16
      %v4155 = vrot.slane %v4153, 2
      %v4156 = vor.u32 %v4152, %v4155
      %v4158 = vshrl.u32 %v4077, 16
      %v4160 = vrot.slane %v4158, 1
      %v4161 = vshll.u32 %v4077, 16
      %v4163 = vrot.slane %v4161, 2
      %v4164 = vor.u32 %v4160, %v4163
      %v4165 = vsel %vm531, %v4156, %v4164
      %v4167 = vshrl.u32 %v4014, 16
      %v4169 = vrot.slane %v4167, 1
      %v4170 = vshll.u32 %v4014, 16
      %v4172 = vrot.slane %v4170, 2
      %v4173 = vor.u32 %v4169, %v4172
      %v4175 = vshrl.u32 %v4078, 16
      %v4177 = vrot.slane %v4175, 1
      %v4178 = vshll.u32 %v4078, 16
      %v4180 = vrot.slane %v4178, 2
      %v4181 = vor.u32 %v4177, %v4180
      %v4182 = vsel %vm531, %v4173, %v4181
      %v4184 = vshrl.u32 %v4015, 16
      %v4186 = vrot.slane %v4184, 1
      %v4187 = vshll.u32 %v4015, 16
      %v4189 = vrot.slane %v4187, 2
      %v4190 = vor.u32 %v4186, %v4189
      %v4192 = vshrl.u32 %v4079, 16
      %v4194 = vrot.slane %v4192, 1
      %v4195 = vshll.u32 %v4079, 16
      %v4197 = vrot.slane %v4195, 2
      %v4198 = vor.u32 %v4194, %v4197
      %v4199 = vsel %vm531, %v4190, %v4198
      %v4201 = vshrl.u32 %v4016, 16
      %v4203 = vrot.slane %v4201, 1
      %v4204 = vshll.u32 %v4016, 16
      %v4206 = vrot.slane %v4204, 2
      %v4207 = vor.u32 %v4203, %v4206
      %v4209 = vshrl.u32 %v4080, 16
      %v4211 = vrot.slane %v4209, 1
      %v4212 = vshll.u32 %v4080, 16
      %v4214 = vrot.slane %v4212, 2
      %v4215 = vor.u32 %v4211, %v4214
      %v4216 = vsel %vm531, %v4207, %v4215
      %4217 = vrot.lane.b32.xlu0 %v4097, 16
      %v4218 = vpop.permute.xlu0 %4217
      %4219 = vrot.lane.b32.xlu0 %v4114, 16
      %v4220 = vpop.permute.xlu0 %4219
      %4221 = vrot.lane.b32.xlu0 %v4131, 16
      %v4222 = vpop.permute.xlu0 %4221
      %4223 = vrot.lane.b32.xlu0 %v4148, 16
      %v4224 = vpop.permute.xlu0 %4223
      %4225 = vrot.lane.b32.xlu0 %v4165, 16
      %v4226 = vpop.permute.xlu0 %4225
      %4227 = vrot.lane.b32.xlu0 %v4182, 16
      %v4228 = vpop.permute.xlu0 %4227
      %4229 = vrot.lane.b32.xlu0 %v4199, 16
      %v4230 = vpop.permute.xlu0 %4229
      %4231 = vrot.lane.b32.xlu0 %v4216, 16
      %v4232 = vpop.permute.xlu0 %4231
      %v4241 = vunpack.c.l.b16 %v3809
      %v4242 = vunpack.c.l.b16 %v3810
      %v4243 = vunpack.c.l.b16 %v3811
      %v4244 = vunpack.c.l.b16 %v3812
      %v4245 = vunpack.c.l.b16 %v3813
      %v4246 = vunpack.c.l.b16 %v3814
      %v4247 = vunpack.c.l.b16 %v3815
      %v4248 = vunpack.c.l.b16 %v3816
      %v4249 = vpack.c.b16 %v3834, %v4241
      %v4250 = vpack.c.b16 %v3836, %v4242
      %v4251 = vpack.c.b16 %v3838, %v4243
      %v4252 = vpack.c.b16 %v3840, %v4244
      %v4253 = vpack.c.b16 %v3842, %v4245
      %v4254 = vpack.c.b16 %v3844, %v4246
      %v4255 = vpack.c.b16 %v3846, %v4247
      %v4256 = vpack.c.b16 %v3848, %v4248
      %v4257 = vrot.slane %v4249, 2
      %v4258 = vrot.slane %v4073, 2
      %v4259 = vsel %vm708, %v4257, %v4258
      %v4260 = vrot.slane %v4250, 2
      %v4261 = vrot.slane %v4074, 2
      %v4262 = vsel %vm708, %v4260, %v4261
      %v4263 = vrot.slane %v4251, 2
      %v4264 = vrot.slane %v4075, 2
      %v4265 = vsel %vm708, %v4263, %v4264
      %v4266 = vrot.slane %v4252, 2
      %v4267 = vrot.slane %v4076, 2
      %v4268 = vsel %vm708, %v4266, %v4267
      %v4269 = vrot.slane %v4253, 2
      %v4270 = vrot.slane %v4077, 2
      %v4271 = vsel %vm708, %v4269, %v4270
      %v4272 = vrot.slane %v4254, 2
      %v4273 = vrot.slane %v4078, 2
      %v4274 = vsel %vm708, %v4272, %v4273
      %v4275 = vrot.slane %v4255, 2
      %v4276 = vrot.slane %v4079, 2
      %v4277 = vsel %vm708, %v4275, %v4276
      %v4278 = vrot.slane %v4256, 2
      %v4279 = vrot.slane %v4080, 2
      %v4280 = vsel %vm708, %v4278, %v4279
      %4281 = vrot.lane.b32.xlu0 %v4259, 64
      %v4282 = vpop.permute.xlu0 %4281
      %4283 = vrot.lane.b32.xlu0 %v4262, 64
      %v4284 = vpop.permute.xlu0 %4283
      %4285 = vrot.lane.b32.xlu0 %v4265, 64
      %v4286 = vpop.permute.xlu0 %4285
      %4287 = vrot.lane.b32.xlu0 %v4268, 64
      %v4288 = vpop.permute.xlu0 %4287
      %4289 = vrot.lane.b32.xlu0 %v4271, 64
      %v4290 = vpop.permute.xlu0 %4289
      %4291 = vrot.lane.b32.xlu0 %v4274, 64
      %v4292 = vpop.permute.xlu0 %4291
      %4293 = vrot.lane.b32.xlu0 %v4277, 64
      %v4294 = vpop.permute.xlu0 %4293
      %4295 = vrot.lane.b32.xlu0 %v4280, 64
      %v4296 = vpop.permute.xlu0 %4295
      %v4298 = vsel %vm749, %v3849, %v3978
      %v4300 = vsel %vm749, %v3850, %v3980
      %v4302 = vsel %vm749, %v3851, %v3982
      %v4304 = vsel %vm749, %v3852, %v3984
      %v4306 = vsel %vm749, %v3853, %v3986
      %v4308 = vsel %vm749, %v3854, %v3988
      %v4310 = vsel %vm749, %v3855, %v3990
      %v4312 = vsel %vm749, %v3856, %v3992
      %v4314 = vsel %vm766, %v4298, %v4042
      %v4317 = vsel %vm766, %v4300, %v4044
      %v4320 = vsel %vm766, %v4302, %v4046
      %v4323 = vsel %vm766, %v4304, %v4048
      %v4326 = vsel %vm766, %v4306, %v4050
      %v4329 = vsel %vm766, %v4308, %v4052
      %v4332 = vsel %vm766, %v4310, %v4054
      %v4335 = vsel %vm766, %v4312, %v4056
      %v4338 = vsel %vm791, %v4042, %v4218
      %v4340 = vsel %vm791, %v4044, %v4220
      %v4342 = vsel %vm791, %v4046, %v4222
      %v4344 = vsel %vm791, %v4048, %v4224
      %v4346 = vsel %vm791, %v4050, %v4226
      %v4348 = vsel %vm791, %v4052, %v4228
      %v4350 = vsel %vm791, %v4054, %v4230
      %v4352 = vsel %vm791, %v4056, %v4232
      %v4354 = vsel %vm808, %v4338, %v4282
      %v4356 = vsel %vm808, %v4340, %v4284
      %v4358 = vsel %vm808, %v4342, %v4286
      %v4360 = vsel %vm808, %v4344, %v4288
      %v4362 = vsel %vm808, %v4346, %v4290
      %v4364 = vsel %vm808, %v4348, %v4292
      %v4366 = vsel %vm808, %v4350, %v4294
      %v4368 = vsel %vm808, %v4352, %v4296
      %v4369 = vld [vmem:[#allocation2] sm:$0xff]
      %v4370 = vld [vmem:[#allocation2 + $0x8] sm:$0xff]
      %v4371 = vld [vmem:[#allocation2 + $0x10] sm:$0xff]
      %v4372 = vld [vmem:[#allocation2 + $0x18] sm:$0xff]
      %v4373 = vld [vmem:[#allocation2 + $0x20] sm:$0xff]
      %v4374 = vld [vmem:[#allocation2 + $0x28] sm:$0xff]
      %v4375 = vld [vmem:[#allocation2 + $0x30] sm:$0xff]
      %v4376 = vld [vmem:[#allocation2 + $0x38] sm:$0xff]
      %v4377 = vld [vmem:[#allocation2 + $0x40] sm:$0xff]
      %v4378 = vld [vmem:[#allocation2 + $0x48] sm:$0xff]
      %v4379 = vld [vmem:[#allocation2 + $0x50] sm:$0xff]
      %v4380 = vld [vmem:[#allocation2 + $0x58] sm:$0xff]
      %v4381 = vld [vmem:[#allocation2 + $0x60] sm:$0xff]
      %v4382 = vld [vmem:[#allocation2 + $0x68] sm:$0xff]
      %v4383 = vld [vmem:[#allocation2 + $0x70] sm:$0xff]
      %v4384 = vld [vmem:[#allocation2 + $0x78] sm:$0xff]
      %s4385 = scalar_lea.vmem %s1, 480
      %v4386 = vld [vmem:[%s4385] sm:$0xf]
      %v4387 = vld [vmem:[%s4385 + $0x4] sm:$0xf]
      %v4388 = vld [vmem:[%s4385 + $0x8] sm:$0xf]
      %v4389 = vld [vmem:[%s4385 + $0xc] sm:$0xf]
      %v4390 = vld [vmem:[%s4385 + $0x10] sm:$0xf]
      %v4391 = vld [vmem:[%s4385 + $0x14] sm:$0xf]
      %v4392 = vld [vmem:[%s4385 + $0x18] sm:$0xf]
      %v4393 = vld [vmem:[%s4385 + $0x1c] sm:$0xf]
      %v4394 = vld [vmem:[%s4385 + $0x20] sm:$0xf]
      %v4395 = vld [vmem:[%s4385 + $0x24] sm:$0xf]
      %v4396 = vld [vmem:[%s4385 + $0x28] sm:$0xf]
      %v4397 = vld [vmem:[%s4385 + $0x2c] sm:$0xf]
      %v4398 = vld [vmem:[%s4385 + $0x30] sm:$0xf]
      %v4399 = vld [vmem:[%s4385 + $0x34] sm:$0xf]
      %v4400 = vld [vmem:[%s4385 + $0x38] sm:$0xf]
      %v4401 = vld [vmem:[%s4385 + $0x3c] sm:$0xf]
      %v4402 = vld [vmem:[%s4385 + $0x40] sm:$0xf]
      %v4403 = vld [vmem:[%s4385 + $0x44] sm:$0xf]
      %v4404 = vld [vmem:[%s4385 + $0x48] sm:$0xf]
      %v4405 = vld [vmem:[%s4385 + $0x4c] sm:$0xf]
      %v4406 = vld [vmem:[%s4385 + $0x50] sm:$0xf]
      %v4407 = vld [vmem:[%s4385 + $0x54] sm:$0xf]
      %v4408 = vld [vmem:[%s4385 + $0x58] sm:$0xf]
      %v4409 = vld [vmem:[%s4385 + $0x5c] sm:$0xf]
      %v4410 = vld [vmem:[%s4385 + $0x60] sm:$0xf]
      %v4411 = vld [vmem:[%s4385 + $0x64] sm:$0xf]
      %v4412 = vld [vmem:[%s4385 + $0x68] sm:$0xf]
      %v4413 = vld [vmem:[%s4385 + $0x6c] sm:$0xf]
      %v4414 = vld [vmem:[%s4385 + $0x70] sm:$0xf]
      %v4415 = vld [vmem:[%s4385 + $0x74] sm:$0xf]
      %v4446 = vunpack.c.l.b16 %v4386
      %v4447 = vunpack.c.l.b16 %v4387
      %v4448 = vunpack.c.l.b16 %v4388
      %v4449 = vunpack.c.l.b16 %v4389
      %v4450 = vunpack.c.l.b16 %v4390
      %v4451 = vunpack.c.l.b16 %v4391
      %v4452 = vunpack.c.l.b16 %v4392
      %v4453 = vunpack.c.l.b16 %v4393
      %v4454 = vunpack.c.l.b16 %v4394
      %v4455 = vunpack.c.l.b16 %v4395
      %v4456 = vunpack.c.l.b16 %v4396
      %v4457 = vunpack.c.l.b16 %v4397
      %v4458 = vunpack.c.l.b16 %v4398
      %v4459 = vunpack.c.l.b16 %v4399
      %v4460 = vunpack.c.l.b16 %v4400
      %v4461 = vunpack.c.l.b16 %v4401
      %v4462 = vunpack.c.l.b16 %v4402
      %v4463 = vunpack.c.l.b16 %v4403
      %v4464 = vunpack.c.l.b16 %v4404
      %v4465 = vunpack.c.l.b16 %v4405
      %v4466 = vunpack.c.l.b16 %v4406
      %v4467 = vunpack.c.l.b16 %v4407
      %v4468 = vunpack.c.l.b16 %v4408
      %v4469 = vunpack.c.l.b16 %v4409
      %v4470 = vunpack.c.l.b16 %v4410
      %v4471 = vunpack.c.l.b16 %v4411
      %v4472 = vunpack.c.l.b16 %v4412
      %v4473 = vunpack.c.l.b16 %v4413
      %v4474 = vunpack.c.l.b16 %v4414
      %v4475 = vunpack.c.l.b16 %v4415
      %v4476 = vpack.c.b16 %v4447, %v4446
      %v4477 = vpack.c.b16 %v4449, %v4448
      %v4478 = vpack.c.b16 %v4451, %v4450
      %v4479 = vpack.c.b16 %v4453, %v4452
      %v4480 = vpack.c.b16 %v4455, %v4454
      %v4481 = vpack.c.b16 %v4457, %v4456
      %v4482 = vpack.c.b16 %v4459, %v4458
      %v4483 = vpack.c.b16 %v4461, %v4460
      %v4484 = vpack.c.b16 %v4463, %v4462
      %v4485 = vpack.c.b16 %v4465, %v4464
      %v4486 = vpack.c.b16 %v4467, %v4466
      %v4487 = vpack.c.b16 %v4469, %v4468
      %v4488 = vpack.c.b16 %v4471, %v4470
      %v4489 = vpack.c.b16 %v4473, %v4472
      %v4490 = vpack.c.b16 %v4475, %v4474
      %v4506 = vsel %vm961, %v4354, 0
      %v4508 = vsel %vm961, %v4356, 0
      %v4510 = vsel %vm961, %v4358, 0
      %v4512 = vsel %vm961, %v4360, 0
      %v4514 = vsel %vm961, %v4362, 0
      %v4516 = vsel %vm961, %v4364, 0
      %v4518 = vsel %vm961, %v4366, 0
      %v4520 = vsel %vm961, %v4368, 0
      %4522 = vmatprep.subr.bf16.mxu0 0
      %4523 = vmatpush1.bf16.msra.mxu0 %v4483
      %4524 = vmatprep.subr.bf16.mxu0 0
      %4525 = vmatpush1.bf16.msra.mxu0 %v4482
      %4526 = vmatprep.subr.bf16.mxu0 0
      %4527 = vmatpush1.bf16.msra.mxu0 %v4481
      %4528 = vmatprep.subr.bf16.mxu0 0
      %4529 = vmatpush1.bf16.msra.mxu0 %v4480
      %4530 = vmatprep.subr.bf16.mxu0 0
      %4531 = vmatpush1.bf16.msra.mxu0 %v4479
      %4532 = vmatprep.subr.bf16.mxu0 0
      %4533 = vmatpush1.bf16.msra.mxu0 %v4478
      %4534 = vmatprep.subr.bf16.mxu0 0
      %4535 = vmatpush1.bf16.msra.mxu0 %v4477
      %4536 = vmatprep.subr.bf16.mxu0 0
      %4537 = vmatpush1.bf16.msra.mxu0 %v4476
      %4538 = vmatprep.subr.bf16.mxu0 0
      %4539 = vmatpush2.bf16.msra.mxu0 0
      %4540 = vmatprep.subr.bf16.mxu0 0
      %4541 = vmatpush2.bf16.msra.mxu0 %v4490
      %4542 = vmatprep.subr.bf16.mxu0 0
      %4543 = vmatpush2.bf16.msra.mxu0 %v4489
      %4544 = vmatprep.subr.bf16.mxu0 0
      %4545 = vmatpush2.bf16.msra.mxu0 %v4488
      %4546 = vmatprep.subr.bf16.mxu0 0
      %4547 = vmatpush2.bf16.msra.mxu0 %v4487
      %4548 = vmatprep.subr.bf16.mxu0 0
      %4549 = vmatpush2.bf16.msra.mxu0 %v4486
      %4550 = vmatprep.subr.bf16.mxu0 0
      %4551 = vmatpush2.bf16.msra.mxu0 %v4485
      %4552 = vmatprep.subr.bf16.mxu0 0
      %4553 = vmatpush2.bf16.msra.mxu0 %v4484
      %4554 = vmatprep.mubr.bf16.mxu0 %v4506
      %4555 = vmatmul.mubr.bf16.gmra.mxu0 %v4314
      %v4556 = vpop.f32.mrf.mxu0
      %v4557 = vadd.f32 0.0, %v4556
      %v4558 = vpop.f32.mrf.mxu0
      %v4559 = vpop.f32.mrf.mxu0
      %v4560 = vadd.f32 0.0, %v4559
      %v4561 = vpop.f32.mrf.mxu0
      %4562 = vmatprep.mubr.bf16.mxu0 %v4508
      %4563 = vmatmul.mubr.bf16.gmra.mxu0 %v4317
      %v4564 = vpop.f32.mrf.mxu0
      %v4565 = vadd.f32 0.0, %v4564
      %v4566 = vpop.f32.mrf.mxu0
      %v4567 = vpop.f32.mrf.mxu0
      %v4568 = vadd.f32 0.0, %v4567
      %v4569 = vpop.f32.mrf.mxu0
      %4570 = vmatprep.mubr.bf16.mxu0 %v4510
      %4571 = vmatmul.mubr.bf16.gmra.mxu0 %v4320
      %v4572 = vpop.f32.mrf.mxu0
      %v4573 = vadd.f32 0.0, %v4572
      %v4574 = vpop.f32.mrf.mxu0
      %v4575 = vpop.f32.mrf.mxu0
      %v4576 = vadd.f32 0.0, %v4575
      %v4577 = vpop.f32.mrf.mxu0
      %4578 = vmatprep.mubr.bf16.mxu0 %v4512
      %4579 = vmatmul.mubr.bf16.gmra.mxu0 %v4323
      %v4580 = vpop.f32.mrf.mxu0
      %v4581 = vadd.f32 0.0, %v4580
      %v4582 = vpop.f32.mrf.mxu0
      %v4583 = vpop.f32.mrf.mxu0
      %v4584 = vadd.f32 0.0, %v4583
      %v4585 = vpop.f32.mrf.mxu0
      %4586 = vmatprep.mubr.bf16.mxu0 %v4514
      %4587 = vmatmul.mubr.bf16.gmra.mxu0 %v4326
      %v4588 = vpop.f32.mrf.mxu0
      %v4589 = vadd.f32 0.0, %v4588
      %v4590 = vpop.f32.mrf.mxu0
      %v4591 = vpop.f32.mrf.mxu0
      %v4592 = vadd.f32 0.0, %v4591
      %v4593 = vpop.f32.mrf.mxu0
      %4594 = vmatprep.mubr.bf16.mxu0 %v4516
      %4595 = vmatmul.mubr.bf16.gmra.mxu0 %v4329
      %v4596 = vpop.f32.mrf.mxu0
      %v4597 = vadd.f32 0.0, %v4596
      %v4598 = vpop.f32.mrf.mxu0
      %v4599 = vpop.f32.mrf.mxu0
      %v4600 = vadd.f32 0.0, %v4599
      %v4601 = vpop.f32.mrf.mxu0
      %4602 = vmatprep.mubr.bf16.mxu0 %v4518
      %4603 = vmatmul.mubr.bf16.gmra.mxu0 %v4332
      %v4604 = vpop.f32.mrf.mxu0
      %v4605 = vadd.f32 0.0, %v4604
      %v4606 = vpop.f32.mrf.mxu0
      %v4607 = vpop.f32.mrf.mxu0
      %v4608 = vadd.f32 0.0, %v4607
      %v4609 = vpop.f32.mrf.mxu0
      %4610 = vmatprep.mubr.bf16.mxu0 %v4520
      %4611 = vmatmul.mubr.bf16.gmra.mxu0 %v4335
      %v4612 = vpop.f32.mrf.mxu0
      %v4613 = vadd.f32 0.0, %v4612
      %v4614 = vpop.f32.mrf.mxu0
      %v4615 = vpop.f32.mrf.mxu0
      %v4616 = vadd.f32 0.0, %v4615
      %v4617 = vpop.f32.mrf.mxu0
      %4618 = vdwg.mxu0
      %v4619 = vadd.f32 %v4369, %v4557
      %v4620 = vadd.f32 %v4370, %v4560
      %v4621 = vadd.f32 %v4371, %v4565
      %v4622 = vadd.f32 %v4372, %v4568
      %v4623 = vadd.f32 %v4373, %v4573
      %v4624 = vadd.f32 %v4374, %v4576
      %v4625 = vadd.f32 %v4375, %v4581
      %v4626 = vadd.f32 %v4376, %v4584
      %v4627 = vadd.f32 %v4377, %v4589
      %v4628 = vadd.f32 %v4378, %v4592
      %v4629 = vadd.f32 %v4379, %v4597
      %v4630 = vadd.f32 %v4380, %v4600
      %v4631 = vadd.f32 %v4381, %v4605
      %v4632 = vadd.f32 %v4382, %v4608
      %v4633 = vadd.f32 %v4383, %v4613
      %v4634 = vadd.f32 %v4384, %v4616
      %4635 = vst [vmem:[#allocation2] sm:$0xff] %v4619
      %4636 = vst [vmem:[#allocation2 + $0x8] sm:$0xff] %v4620
      %4637 = vst [vmem:[#allocation2 + $0x10] sm:$0xff] %v4621
      %4638 = vst [vmem:[#allocation2 + $0x18] sm:$0xff] %v4622
      %4639 = vst [vmem:[#allocation2 + $0x20] sm:$0xff] %v4623
      %4640 = vst [vmem:[#allocation2 + $0x28] sm:$0xff] %v4624
      %4641 = vst [vmem:[#allocation2 + $0x30] sm:$0xff] %v4625
      %4642 = vst [vmem:[#allocation2 + $0x38] sm:$0xff] %v4626
      %4643 = vst [vmem:[#allocation2 + $0x40] sm:$0xff] %v4627
      %4644 = vst [vmem:[#allocation2 + $0x48] sm:$0xff] %v4628
      %4645 = vst [vmem:[#allocation2 + $0x50] sm:$0xff] %v4629
      %4646 = vst [vmem:[#allocation2 + $0x58] sm:$0xff] %v4630
      %4647 = vst [vmem:[#allocation2 + $0x60] sm:$0xff] %v4631
      %4648 = vst [vmem:[#allocation2 + $0x68] sm:$0xff] %v4632
      %4649 = vst [vmem:[#allocation2 + $0x70] sm:$0xff] %v4633
      %4650 = vst [vmem:[#allocation2 + $0x78] sm:$0xff] %v4634
      %v4651 = vld [vmem:[#allocation2] sm:$0xff]
      %v4652 = vld [vmem:[#allocation2 + $0x8] sm:$0xff]
      %v4653 = vld [vmem:[#allocation2 + $0x10] sm:$0xff]
      %v4654 = vld [vmem:[#allocation2 + $0x18] sm:$0xff]
      %v4655 = vld [vmem:[#allocation2 + $0x20] sm:$0xff]
      %v4656 = vld [vmem:[#allocation2 + $0x28] sm:$0xff]
      %v4657 = vld [vmem:[#allocation2 + $0x30] sm:$0xff]
      %v4658 = vld [vmem:[#allocation2 + $0x38] sm:$0xff]
      %v4659 = vld [vmem:[#allocation2 + $0x40] sm:$0xff]
      %v4660 = vld [vmem:[#allocation2 + $0x48] sm:$0xff]
      %v4661 = vld [vmem:[#allocation2 + $0x50] sm:$0xff]
      %v4662 = vld [vmem:[#allocation2 + $0x58] sm:$0xff]
      %v4663 = vld [vmem:[#allocation2 + $0x60] sm:$0xff]
      %v4664 = vld [vmem:[#allocation2 + $0x68] sm:$0xff]
      %v4665 = vld [vmem:[#allocation2 + $0x70] sm:$0xff]
      %v4666 = vld [vmem:[#allocation2 + $0x78] sm:$0xff]
      %v4667 = vld [vmem:[%s2] sm:$0x1]
      %v4669 = vlaneseq
      %v4670 = vshrl.u32 %v4669, 7
      %v4671 = vsub.s32 0, %v4670
      %v4672 = vrot.slane %v4667, %v4671
      %v4674 = vadd.f32 %v4651, %v4672
      %v4675 = vadd.f32 %v4652, %v4672
      %v4676 = vadd.f32 %v4653, %v4672
      %v4677 = vadd.f32 %v4654, %v4672
      %v4678 = vadd.f32 %v4655, %v4672
      %v4679 = vadd.f32 %v4656, %v4672
      %v4680 = vadd.f32 %v4657, %v4672
      %v4681 = vadd.f32 %v4658, %v4672
      %v4682 = vadd.f32 %v4659, %v4672
      %v4683 = vadd.f32 %v4660, %v4672
      %v4684 = vadd.f32 %v4661, %v4672
      %v4685 = vadd.f32 %v4662, %v4672
      %v4686 = vadd.f32 %v4663, %v4672
      %v4687 = vadd.f32 %v4664, %v4672
      %v4688 = vadd.f32 %v4665, %v4672
      %v4689 = vadd.f32 %v4666, %v4672
      %v4690 = vmax.f32 %v4674, 0.0
      %v4691 = vmax.f32 %v4675, 0.0
      %v4692 = vmax.f32 %v4676, 0.0
      %v4693 = vmax.f32 %v4677, 0.0
      %v4694 = vmax.f32 %v4678, 0.0
      %v4695 = vmax.f32 %v4679, 0.0
      %v4696 = vmax.f32 %v4680, 0.0
      %v4697 = vmax.f32 %v4681, 0.0
      %v4698 = vmax.f32 %v4682, 0.0
      %v4699 = vmax.f32 %v4683, 0.0
      %v4700 = vmax.f32 %v4684, 0.0
      %v4701 = vmax.f32 %v4685, 0.0
      %v4702 = vmax.f32 %v4686, 0.0
      %v4703 = vmax.f32 %v4687, 0.0
      %v4704 = vmax.f32 %v4688, 0.0
      %v4705 = vmax.f32 %v4689, 0.0
      %v4706 = vpack.c.bf16 %v4691, %v4690
      %v4707 = vpack.c.bf16 %v4693, %v4692
      %v4708 = vpack.c.bf16 %v4695, %v4694
      %v4709 = vpack.c.bf16 %v4697, %v4696
      %v4710 = vpack.c.bf16 %v4699, %v4698
      %v4711 = vpack.c.bf16 %v4701, %v4700
      %v4712 = vpack.c.bf16 %v4703, %v4702
      %v4713 = vpack.c.bf16 %v4705, %v4704
      %v4722 = vunpack.c.l.b16 %v4706
      %v4723 = vunpack.c.h.b16 %v4706
      %v4724 = vunpack.c.l.b16 %v4707
      %v4725 = vunpack.c.h.b16 %v4707
      %v4726 = vunpack.c.l.b16 %v4708
      %v4727 = vunpack.c.h.b16 %v4708
      %v4728 = vunpack.c.l.b16 %v4709
      %v4729 = vunpack.c.h.b16 %v4709
      %v4730 = vunpack.c.l.b16 %v4710
      %v4731 = vunpack.c.h.b16 %v4710
      %v4732 = vunpack.c.l.b16 %v4711
      %v4733 = vunpack.c.h.b16 %v4711
      %v4734 = vunpack.c.l.b16 %v4712
      %v4735 = vunpack.c.h.b16 %v4712
      %v4736 = vunpack.c.l.b16 %v4713
      %v4737 = vunpack.c.h.b16 %v4713
      %v4738 = vpack.c.b16 %v4722, %v4722
      %v4739 = vpack.c.b16 %v4723, %v4723
      %v4740 = vpack.c.b16 %v4724, %v4724
      %v4741 = vpack.c.b16 %v4725, %v4725
      %v4742 = vpack.c.b16 %v4726, %v4726
      %v4743 = vpack.c.b16 %v4727, %v4727
      %v4744 = vpack.c.b16 %v4728, %v4728
      %v4745 = vpack.c.b16 %v4729, %v4729
      %v4746 = vpack.c.b16 %v4730, %v4730
      %v4747 = vpack.c.b16 %v4731, %v4731
      %v4748 = vpack.c.b16 %v4732, %v4732
      %v4749 = vpack.c.b16 %v4733, %v4733
      %v4750 = vpack.c.b16 %v4734, %v4734
      %v4751 = vpack.c.b16 %v4735, %v4735
      %v4752 = vpack.c.b16 %v4736, %v4736
      %v4753 = vpack.c.b16 %v4737, %v4737
      %4770 = vst [vmem:[%s194] sm:$0xf] %v4738
      %4771 = vst [vmem:[%s194 + $0x4] sm:$0xf] %v4739
      %4772 = vst [vmem:[%s194 + $0x8] sm:$0xf] %v4740
      %4773 = vst [vmem:[%s194 + $0xc] sm:$0xf] %v4741
      %4774 = vst [vmem:[%s194 + $0x10] sm:$0xf] %v4742
      %4775 = vst [vmem:[%s194 + $0x14] sm:$0xf] %v4743
      %4776 = vst [vmem:[%s194 + $0x18] sm:$0xf] %v4744
      %4777 = vst [vmem:[%s194 + $0x1c] sm:$0xf] %v4745
      %4778 = vst [vmem:[%s194 + $0x20] sm:$0xf] %v4746
      %4779 = vst [vmem:[%s194 + $0x24] sm:$0xf] %v4747
      %4780 = vst [vmem:[%s194 + $0x28] sm:$0xf] %v4748
      %4781 = vst [vmem:[%s194 + $0x2c] sm:$0xf] %v4749
      %4782 = vst [vmem:[%s194 + $0x30] sm:$0xf] %v4750
      %4783 = vst [vmem:[%s194 + $0x34] sm:$0xf] %v4751
      %4784 = vst [vmem:[%s194 + $0x38] sm:$0xf] %v4752
      %4785 = vst [vmem:[%s194 + $0x3c] sm:$0xf] %v4753
      %s4786 = smul.u32 8, %s19
      %p4787 = scmp.lt.s32.totalorder %s18, 1
      %s4788 = scalar_select %p4787, %s18, 1
      %p4789 = scmp.lt.s32.totalorder %s4786, 15
      %s4790 = scalar_select %p4789, %s4786, 15
      %s4791 = smul.addr %s4790, 2
      %s4792 = smul.addr %s4788, 32
      %s4793 = sadd.s32 %s4791, %s4792
      %s4794 = smul.addr %s4793, 4
      %s4795 = scalar_lea.vmem %s3, %s4794
      // Predicated region
      $region33: #{inception_a_forward.5} parent=31 // pred_check
        %p4796 = pneg %p114
      $region34: #{inception_a_forward.5} parent=31 // pred_check_branch
        %4798 = sbr.rel (%p4796) target = $region36
      $region35: #{inception_a_forward.5} parent=31 // pred_region
        %s4799 = smul.u32 8, %s19
      $region36: #{inception_a_forward.5} parent=31 // pred_fallthru
        _
    $region32: #{inception_a_forward.5} parent=5 // pred_fallthru
      _
    %p4800 = scmp.le.s32.totalorder 2, %s9
    // Predicated region
    $region37: #{inception_a_forward.5} parent=5 // pred_check
      %p4801 = pneg %p4800
    $region38: #{inception_a_forward.5} parent=5 // pred_check_branch
      %4803 = sbr.rel (%p4801) target = $region40
    $region39: #{inception_a_forward.5} parent=5 // pred_region
      %s4804 = ssub.s32 %s9, 2
      // Predicated region
      $region41: #{inception_a_forward.5} parent=39 // pred_check
        %p4805 = pneg %p120
      $region42: #{inception_a_forward.5} parent=39 // pred_check_branch
        %4807 = sbr.rel (%p4805) target = $region44
      $region43: #{inception_a_forward.5} parent=39 // pred_region
        %s4808 = smul.u32 8, %s21
        %p4809 = scmp.lt.s32.totalorder %s20, 1
        %s4810 = scalar_select %p4809, %s20, 1
        %p4811 = scmp.lt.s32.totalorder %s4808, 15
        %s4812 = scalar_select %p4811, %s4808, 15
        %s4813 = smul.addr %s4812, 2
        %s4814 = smul.addr %s4810, 32
        %s4815 = sadd.s32 %s4813, %s4814
        %s4816 = smul.addr %s4815, 4
        %s4817 = scalar_lea.vmem %s3, %s4816
      $region44: #{inception_a_forward.5} parent=39 // pred_fallthru
        _
    $region40: #{inception_a_forward.5} parent=5 // pred_fallthru
      _
  $region6: #{inception_a_forward.5} parent=0 // loop_footer
    %s13 = sadd.s32 1, %s9
  $region7: #{inception_a_forward.5} parent=0 // loop_footer_branch
    %8 = sbr.rel target = $region3
  $region8: #{inception_a_forward.5} parent=0 // loop_exit
    _

</llo_original>
